<compile_context>
chip_gen: v6e
topology: v6e:2x2x1
jax: 0.10.0
libtpu: 0.0.40
codegen_flags: <defaults>
</compile_context>

<pallas_src>
import functools

import jax
import jax.numpy as jnp
from jax import lax
from jax.experimental import pallas as pl
from jax.experimental.pallas import tpu as pltpu

ACTION_NUM = 6
CONV1_OUT_C, CONV1_K, CONV1_S = 16, 8, 4     # 4 -> 16 channels, 84 -> 20 spatial
CONV2_OUT_C, CONV2_K, CONV2_S = 32, 4, 2     # 16 -> 32 channels, 20 -> 9 spatial
OH1 = 20                                     # conv1 output spatial
OH2 = 9                                      # conv2 output spatial
GRID = 10                                    # conv1 positions split for conv2: h1 = 2*i + ph
K1 = 256                                     # conv1 im2col features = 4*8*8
K2 = 256                                     # conv2 im2col features = 16*4*4
M1_PER_B = OH1 * OH1                         # 400 conv1 outputs per sample
MG_PER_B = GRID * GRID                       # 100 = padded 10x10 conv2 grid per sample
FC1_N = 256
FC1_K_PAD = CONV2_OUT_C * MG_PER_B           # 3200 = (co, i, j) padded flatten, 25*128
FC2_N_PAD = 128


def _round_up(n, m):
    return ((n + m - 1) // m) * m


# ----------------------------------------------------------------------------
# The fused kernel
# ----------------------------------------------------------------------------
def _dqn_fused_kernel(p1_ref, w1_ref, b1_ref, w2_ref, b2_ref,
                      wfc1_ref, bfc1_ref, wfc2_ref, bfc2_ref,
                      out_ref,
                      a1_ref, p2_ref, a2_ref, flat_ref, *, batch):
    # ---- conv1 as matmul: [16, 256] @ [256, M1] -> [16, M1] (channel rows, lane-dense M) --
    acc1 = jnp.dot(w1_ref[...], p1_ref[...], preferred_element_type=jnp.float32)
    a1_ref[...] = jnp.maximum(acc1 + b1_ref[...], 0.0).astype(a1_ref.dtype)

    # ---- conv2 im2col entirely in VMEM ------------------------------------------------
    # A1 columns are ordered (b, ph, pw, i, j); for kernel offset (kh, kw) = (2qh+rh, 2qw+rw)
    # the patch values over the whole padded 10x10 output grid are the contiguous lane range
    # starting at b*400 + rh*200 + rw*100 + qh*10 + qw, so each (kh, kw, b) is ONE [16, 100]
    # slice copy.  Invalid grid columns (i==9 or j==9) pick up finite garbage that is later
    # multiplied by zero fc1 weight rows.
    p2_ref[...] = jnp.zeros_like(p2_ref)
    for kh in range(CONV2_K):
        qh, rh = divmod(kh, CONV2_S)
        for kw in range(CONV2_K):
            qw, rw = divmod(kw, CONV2_S)
            row0 = (kh * CONV2_K + kw) * CONV1_OUT_C        # W2 rows packed (kh, kw, ci)
            for b in range(batch):
                src0 = b * M1_PER_B + rh * 200 + rw * 100 + qh * GRID + qw
                p2_ref[row0:row0 + CONV1_OUT_C, b * MG_PER_B:(b + 1) * MG_PER_B] = \
                    a1_ref[:, src0:src0 + MG_PER_B]

    # ---- conv2 as matmul: [32, 256] @ [256, M2] -> [32, M2] ----------------------------
    acc2 = jnp.dot(w2_ref[...], p2_ref[...], preferred_element_type=jnp.float32)
    a2_ref[...] = jnp.maximum(acc2 + b2_ref[...], 0.0).astype(a2_ref.dtype)

    # ---- flatten: per-(batch, channel) row copies into fc1's (co, i, j) padded K layout --
    for b in range(batch):
        for co in range(CONV2_OUT_C):
            flat_ref[b:b + 1, co * MG_PER_B:(co + 1) * MG_PER_B] = \
                a2_ref[co:co + 1, b * MG_PER_B:(b + 1) * MG_PER_B]

    # ---- fc1 (+ReLU) and fc2 fused; the 256-wide hidden never leaves registers/VMEM -----
    h = jnp.dot(flat_ref[...], wfc1_ref[...], preferred_element_type=jnp.float32)
    h = jnp.maximum(h + bfc1_ref[...], 0.0)
    q = jnp.dot(h.astype(jnp.bfloat16), wfc2_ref[...], preferred_element_type=jnp.float32)
    out_ref[...] = (q + bfc2_ref[...]).astype(out_ref.dtype)


def _dqn_pallas(p1, params, *, batch):
    m1_pad = p1.shape[1]
    m2_pad = _round_up(batch * MG_PER_B, 128)

    def full(a):
        n = a.ndim
        return pl.BlockSpec(a.shape, lambda: (0,) * n)

    args = (p1, params["w1"], params["b1"], params["w2"], params["b2"],
            params["wfc1"], params["bfc1"], params["wfc2"], params["bfc2"])

    flops = 2 * (CONV1_OUT_C * K1 * m1_pad + CONV2_OUT_C * K2 * m2_pad
                 + batch * FC1_K_PAD * FC1_N + batch * FC1_N * FC2_N_PAD)
    bytes_accessed = sum(int(a.size) * a.dtype.itemsize for a in args) + batch * FC2_N_PAD * 4

    return pl.pallas_call(
        functools.partial(_dqn_fused_kernel, batch=batch),
        out_shape=jax.ShapeDtypeStruct((batch, FC2_N_PAD), jnp.float32),
        in_specs=[full(a) for a in args],
        out_specs=pl.BlockSpec((batch, FC2_N_PAD), lambda: (0, 0)),
        scratch_shapes=[
            pltpu.VMEM((CONV1_OUT_C, m1_pad), jnp.bfloat16),   # A1: conv1 activations
            pltpu.VMEM((K2, m2_pad), jnp.bfloat16),            # P2: conv2 im2col patches
            pltpu.VMEM((CONV2_OUT_C, m2_pad), jnp.bfloat16),   # A2: conv2 activations
            pltpu.VMEM((batch, FC1_K_PAD), jnp.bfloat16),      # flat: fc1 input
        ],
        cost_estimate=pl.CostEstimate(flops=int(flops), transcendentals=0,
                                      bytes_accessed=int(bytes_accessed)),
    )(*args)


# ----------------------------------------------------------------------------
# conv1 patch extraction (the only out-of-kernel layout work; one small XLA fusion)
# ----------------------------------------------------------------------------
def _conv1_patches(x):
    """x: [B, 4, 84, 84] f32 -> conv1 im2col patches [256, M1_PAD] bf16.

    Rows   : (c, kh, kw)  -- matches conv1_w.reshape(16, 256).
    Columns: (b, ph, pw, i, j) with conv1 output position h1 = 2*i + ph, w1 = 2*j + pw
             (pre-split for conv2's stride 2), zero-padded to a multiple of 128 lanes.
    """
    B = x.shape[0]
    x6 = x.reshape(B, 4, 21, 4, 21, 4)                       # b c Hb hp Wb wp; row = 4*Hb+hp
    parts = [x6[:, :, qh:qh + OH1, :, qw:qw + OH1, :]        # kh = 4*qh + rh, kw = 4*qw + rw
             for qh in range(2) for qw in range(2)]
    pat = jnp.stack(parts, axis=0).reshape(2, 2, B, 4, OH1, 4, OH1, 4)  # qh qw b c oh rh ow rw
    pat = pat.transpose(3, 0, 5, 1, 7, 2, 4, 6)              # c qh rh qw rw b oh ow
    pat = pat.reshape(K1, B, OH1, OH1)                       # feature = c*64 + kh*8 + kw
    # reorder columns (b, oh, ow) -> (b, ph, pw, i, j) with oh = 2*i + ph, ow = 2*j + pw
    pat = pat.reshape(K1, B, GRID, 2, GRID, 2).transpose(0, 1, 3, 5, 2, 4)
    pat = pat.reshape(K1, B * M1_PER_B)
    m1_pad = _round_up(B * M1_PER_B + CONV1_OUT_C, 128)      # headroom for in-kernel spill reads
    pat = jnp.pad(pat, ((0, 0), (0, m1_pad - B * M1_PER_B)))
    return pat.astype(jnp.bfloat16)


def dqn_forward(params, x):
    """dqn_net.forward: x [B, 4, 84, 84] f32 -> Q-values [B, ACTION_NUM] f32."""
    p1 = _conv1_patches(x)
    q = _dqn_pallas(p1, params, batch=x.shape[0])
    return q[:, :ACTION_NUM]


# ----------------------------------------------------------------------------
# Parameter init: PyTorch-equivalent random weights, packed ONCE into kernel layouts.
# ----------------------------------------------------------------------------
def pack_params(raw, action_num):
    w1 = raw["conv1_w"].reshape(CONV1_OUT_C, K1).astype(jnp.bfloat16)           # (c, kh, kw)
    b1 = raw["conv1_b"].reshape(CONV1_OUT_C, 1).astype(jnp.float32)
    w2 = raw["conv2_w"].transpose(0, 2, 3, 1).reshape(CONV2_OUT_C, K2)          # (kh, kw, ci)
    w2 = w2.astype(jnp.bfloat16)
    b2 = raw["conv2_b"].reshape(CONV2_OUT_C, 1).astype(jnp.float32)
    # fc1: rows permuted to the kernel's (co, i, j) 10x10-padded flatten layout; the zero
    # rows at i==9 / j==9 kill the garbage columns of the in-kernel flatten.
    wfc1 = raw["fc1_w"].reshape(FC1_N, CONV2_OUT_C, OH2, OH2)
    wfc1 = jnp.pad(wfc1, ((0, 0), (0, 0), (0, GRID - OH2), (0, GRID - OH2)))
    wfc1 = wfc1.reshape(FC1_N, FC1_K_PAD).T.astype(jnp.bfloat16)                # [3200, 256]
    bfc1 = raw["fc1_b"].reshape(1, FC1_N).astype(jnp.float32)
    wfc2 = jnp.pad(raw["fc2_w"].T, ((0, 0), (0, FC2_N_PAD - action_num))).astype(jnp.bfloat16)
    bfc2 = jnp.pad(raw["fc2_b"], (0, FC2_N_PAD - action_num)).reshape(1, FC2_N_PAD)
    bfc2 = bfc2.astype(jnp.float32)
    return dict(w1=w1, b1=b1, w2=w2, b2=b2, wfc1=wfc1, bfc1=bfc1, wfc2=wfc2, bfc2=bfc2)


def init_params(key, action_num):
    keys = jax.random.split(key, 8)

    def uinit(k, shape, fan_in):
        bound = 1.0 / jnp.sqrt(jnp.float32(fan_in))
        return jax.random.uniform(k, shape, jnp.float32, -bound, bound)

    raw = {
        "conv1_w": uinit(keys[0], (16, 4, 8, 8), 4 * 8 * 8),
        "conv1_b": uinit(keys[1], (16,), 4 * 8 * 8),
        "conv2_w": uinit(keys[2], (32, 16, 4, 4), 16 * 4 * 4),
        "conv2_b": uinit(keys[3], (32,), 16 * 4 * 4),
        "fc1_w": uinit(keys[4], (256, OH2 * OH2 * 32), OH2 * OH2 * 32),
        "fc1_b": uinit(keys[5], (256,), OH2 * OH2 * 32),
        "fc2_w": uinit(keys[6], (action_num, 256), 256),
        "fc2_b": uinit(keys[7], (action_num,), 256),
    }
    return raw, pack_params(raw, action_num)


# ----------------------------------------------------------------------------
# Pure-JAX reference (same bf16 cast points as the kernel) -- correctness check only.
# ----------------------------------------------------------------------------
def dqn_reference(raw, x):
    dn = ("NCHW", "OIHW", "NCHW")
    a1 = lax.conv_general_dilated(x.astype(jnp.bfloat16), raw["conv1_w"].astype(jnp.bfloat16),
                                  (4, 4), "VALID", dimension_numbers=dn,
                                  preferred_element_type=jnp.float32)
    a1 = jnp.maximum(a1 + raw["conv1_b"][None, :, None, None], 0.0).astype(jnp.bfloat16)
    a2 = lax.conv_general_dilated(a1, raw["conv2_w"].astype(jnp.bfloat16),
                                  (2, 2), "VALID", dimension_numbers=dn,
                                  preferred_element_type=jnp.float32)
    a2 = jnp.maximum(a2 + raw["conv2_b"][None, :, None, None], 0.0).astype(jnp.bfloat16)
    flat = a2.reshape(x.shape[0], OH2 * OH2 * 32)
    h = jnp.dot(flat, raw["fc1_w"].T.astype(jnp.bfloat16), preferred_element_type=jnp.float32)
    h = jnp.maximum(h + raw["fc1_b"][None, :], 0.0).astype(jnp.bfloat16)
    q = jnp.dot(h, raw["fc2_w"].T.astype(jnp.bfloat16), preferred_element_type=jnp.float32)
    return q + raw["fc2_b"][None, :]


if __name__ == "__main__":
    key = jax.random.PRNGKey(0)
    pkey, xkey = jax.random.split(key)
    raw, packed = init_params(pkey, ACTION_NUM)

    # Batch=2; the architecture dictates 4x84x84 inputs (fc1 expects 9*9*32 features).
    x = jax.random.normal(xkey, (2, 4, 84, 84), dtype=jnp.float32)

    q_values = jax.jit(dqn_forward)(packed, x)
    jax.block_until_ready(q_values)

    assert q_values.shape == (2, ACTION_NUM)
    assert q_values.dtype == jnp.float32
    assert bool(jnp.all(jnp.isfinite(q_values)))

    # Correctness self-check against a pure-JAX reference with matched bf16 cast points.
    q_ref = dqn_reference(raw, x)
    err = float(jnp.max(jnp.abs(q_values - q_ref)))
    assert err < 5e-2, f"mismatch vs pure-JAX reference: max abs err = {err}"

    print("KERNEL_OK")
</pallas_src>

<mosaic_0001>
module attributes {stable_mosaic.version = 11 : i64} {
  func.func @_dqn_fused_kernel(%arg0: memref<256x896xbf16, #tpu.memory_space<vmem>>, %arg1: memref<16x256xbf16, #tpu.memory_space<vmem>>, %arg2: memref<16x1xf32, #tpu.memory_space<vmem>>, %arg3: memref<32x256xbf16, #tpu.memory_space<vmem>>, %arg4: memref<32x1xf32, #tpu.memory_space<vmem>>, %arg5: memref<3200x256xbf16, #tpu.memory_space<vmem>>, %arg6: memref<1x256xf32, #tpu.memory_space<vmem>>, %arg7: memref<256x128xbf16, #tpu.memory_space<vmem>>, %arg8: memref<1x128xf32, #tpu.memory_space<vmem>>, %arg9: memref<2x128xf32, #tpu.memory_space<vmem>>, %arg10: memref<16x896xbf16, #tpu.memory_space<vmem>>, %arg11: memref<256x256xbf16, #tpu.memory_space<vmem>>, %arg12: memref<32x256xbf16, #tpu.memory_space<vmem>>, %arg13: memref<2x3200xbf16, #tpu.memory_space<vmem>>) attributes {dimension_semantics = [], scalar_prefetch = 0 : i64, scratch_operands = 4 : i64, tpu.core_type = #tpu.core_type<tc>} {
    %c0 = arith.constant 0 : index
    %c0_0 = arith.constant 0 : index
    %0 = vector.load %arg1[%c0, %c0_0] : memref<16x256xbf16, #tpu.memory_space<vmem>>, vector<16x256xbf16>
    %c0_1 = arith.constant 0 : index
    %c0_2 = arith.constant 0 : index
    %1 = vector.load %arg0[%c0_1, %c0_2] : memref<256x896xbf16, #tpu.memory_space<vmem>>, vector<256x896xbf16>
    %cst = arith.constant dense<0.000000e+00> : vector<16x896xf32>
    %2 = tpu.matmul %0, %1, %cst {dimension_numbers = #tpu.dot_dimension_numbers<[1], [0], [0], [1], [0, 0, 1, 1], [], []>} : vector<16x256xbf16>, vector<256x896xbf16>, vector<16x896xf32> -> vector<16x896xf32>
    %c0_3 = arith.constant 0 : index
    %c0_4 = arith.constant 0 : index
    %3 = vector.load %arg2[%c0_3, %c0_4] : memref<16x1xf32, #tpu.memory_space<vmem>>, vector<16x1xf32>
    %4 = vector.broadcast %3 : vector<16x1xf32> to vector<16x896xf32>
    %5 = arith.addf %2, %4 : vector<16x896xf32>
    %cst_5 = arith.constant 0.000000e+00 : f32
    %6 = vector.broadcast %cst_5 : f32 to vector<16x896xf32>
    %7 = arith.maximumf %5, %6 : vector<16x896xf32>
    %8 = arith.truncf %7 : vector<16x896xf32> to vector<16x896xbf16>
    %c0_6 = arith.constant 0 : index
    %c0_7 = arith.constant 0 : index
    %9 = vector.load %arg10[%c0_6, %c0_7] : memref<16x896xbf16, #tpu.memory_space<vmem>>, vector<16x896xbf16>
    tpu.vector_store %arg10[%c0_6, %c0_7], %8 {strides = array<i32>} : memref<16x896xbf16, #tpu.memory_space<vmem>>, vector<16x896xbf16>,
    %cst_8 = arith.constant 0.000000e+00 : bf16
    %10 = vector.broadcast %cst_8 : bf16 to vector<256x256xbf16>
    %c0_9 = arith.constant 0 : index
    %c0_10 = arith.constant 0 : index
    %11 = vector.load %arg11[%c0_9, %c0_10] : memref<256x256xbf16, #tpu.memory_space<vmem>>, vector<256x256xbf16>
    tpu.vector_store %arg11[%c0_9, %c0_10], %10 {strides = array<i32>} : memref<256x256xbf16, #tpu.memory_space<vmem>>, vector<256x256xbf16>,
    %c0_11 = arith.constant 0 : index
    %c0_12 = arith.constant 0 : index
    %12 = vector.load %arg10[%c0_11, %c0_12] : memref<16x896xbf16, #tpu.memory_space<vmem>>, vector<16x100xbf16>
    %c0_13 = arith.constant 0 : index
    %c0_14 = arith.constant 0 : index
    %13 = vector.load %arg11[%c0_13, %c0_14] : memref<256x256xbf16, #tpu.memory_space<vmem>>, vector<16x100xbf16>
    tpu.vector_store %arg11[%c0_13, %c0_14], %12 {strides = array<i32>} : memref<256x256xbf16, #tpu.memory_space<vmem>>, vector<16x100xbf16>,
    %c0_15 = arith.constant 0 : index
    %c400 = arith.constant 400 : index
    %14 = vector.load %arg10[%c0_15, %c400] : memref<16x896xbf16, #tpu.memory_space<vmem>>, vector<16x100xbf16>
    %c0_16 = arith.constant 0 : index
    %c100 = arith.constant 100 : index
    %15 = vector.load %arg11[%c0_16, %c100] : memref<256x256xbf16, #tpu.memory_space<vmem>>, vector<16x100xbf16>
    tpu.vector_store %arg11[%c0_16, %c100], %14 {strides = array<i32>} : memref<256x256xbf16, #tpu.memory_space<vmem>>, vector<16x100xbf16>,
    %c0_17 = arith.constant 0 : index
    %c100_18 = arith.constant 100 : index
    %16 = vector.load %arg10[%c0_17, %c100_18] : memref<16x896xbf16, #tpu.memory_space<vmem>>, vector<16x100xbf16>
    %c16 = arith.constant 16 : index
    %c0_19 = arith.constant 0 : index
    %17 = vector.load %arg11[%c16, %c0_19] : memref<256x256xbf16, #tpu.memory_space<vmem>>, vector<16x100xbf16>
    tpu.vector_store %arg11[%c16, %c0_19], %16 {strides = array<i32>} : memref<256x256xbf16, #tpu.memory_space<vmem>>, vector<16x100xbf16>,
    %c0_20 = arith.constant 0 : index
    %c500 = arith.constant 500 : index
    %18 = vector.load %arg10[%c0_20, %c500] : memref<16x896xbf16, #tpu.memory_space<vmem>>, vector<16x100xbf16>
    %c16_21 = arith.constant 16 : index
    %c100_22 = arith.constant 100 : index
    %19 = vector.load %arg11[%c16_21, %c100_22] : memref<256x256xbf16, #tpu.memory_space<vmem>>, vector<16x100xbf16>
    tpu.vector_store %arg11[%c16_21, %c100_22], %18 {strides = array<i32>} : memref<256x256xbf16, #tpu.memory_space<vmem>>, vector<16x100xbf16>,
    %c0_23 = arith.constant 0 : index
    %c1 = arith.constant 1 : index
    %20 = vector.load %arg10[%c0_23, %c1] : memref<16x896xbf16, #tpu.memory_space<vmem>>, vector<16x100xbf16>
    %c32 = arith.constant 32 : index
    %c0_24 = arith.constant 0 : index
    %21 = vector.load %arg11[%c32, %c0_24] : memref<256x256xbf16, #tpu.memory_space<vmem>>, vector<16x100xbf16>
    tpu.vector_store %arg11[%c32, %c0_24], %20 {strides = array<i32>} : memref<256x256xbf16, #tpu.memory_space<vmem>>, vector<16x100xbf16>,
    %c0_25 = arith.constant 0 : index
    %c401 = arith.constant 401 : index
    %22 = vector.load %arg10[%c0_25, %c401] : memref<16x896xbf16, #tpu.memory_space<vmem>>, vector<16x100xbf16>
    %c32_26 = arith.constant 32 : index
    %c100_27 = arith.constant 100 : index
    %23 = vector.load %arg11[%c32_26, %c100_27] : memref<256x256xbf16, #tpu.memory_space<vmem>>, vector<16x100xbf16>
    tpu.vector_store %arg11[%c32_26, %c100_27], %22 {strides = array<i32>} : memref<256x256xbf16, #tpu.memory_space<vmem>>, vector<16x100xbf16>,
    %c0_28 = arith.constant 0 : index
    %c101 = arith.constant 101 : index
    %24 = vector.load %arg10[%c0_28, %c101] : memref<16x896xbf16, #tpu.memory_space<vmem>>, vector<16x100xbf16>
    %c48 = arith.constant 48 : index
    %c0_29 = arith.constant 0 : index
    %25 = vector.load %arg11[%c48, %c0_29] : memref<256x256xbf16, #tpu.memory_space<vmem>>, vector<16x100xbf16>
    tpu.vector_store %arg11[%c48, %c0_29], %24 {strides = array<i32>} : memref<256x256xbf16, #tpu.memory_space<vmem>>, vector<16x100xbf16>,
    %c0_30 = arith.constant 0 : index
    %c501 = arith.constant 501 : index
    %26 = vector.load %arg10[%c0_30, %c501] : memref<16x896xbf16, #tpu.memory_space<vmem>>, vector<16x100xbf16>
    %c48_31 = arith.constant 48 : index
    %c100_32 = arith.constant 100 : index
    %27 = vector.load %arg11[%c48_31, %c100_32] : memref<256x256xbf16, #tpu.memory_space<vmem>>, vector<16x100xbf16>
    tpu.vector_store %arg11[%c48_31, %c100_32], %26 {strides = array<i32>} : memref<256x256xbf16, #tpu.memory_space<vmem>>, vector<16x100xbf16>,
    %c0_33 = arith.constant 0 : index
    %c200 = arith.constant 200 : index
    %28 = vector.load %arg10[%c0_33, %c200] : memref<16x896xbf16, #tpu.memory_space<vmem>>, vector<16x100xbf16>
    %c64 = arith.constant 64 : index
    %c0_34 = arith.constant 0 : index
    %29 = vector.load %arg11[%c64, %c0_34] : memref<256x256xbf16, #tpu.memory_space<vmem>>, vector<16x100xbf16>
    tpu.vector_store %arg11[%c64, %c0_34], %28 {strides = array<i32>} : memref<256x256xbf16, #tpu.memory_space<vmem>>, vector<16x100xbf16>,
    %c0_35 = arith.constant 0 : index
    %c600 = arith.constant 600 : index
    %30 = vector.load %arg10[%c0_35, %c600] : memref<16x896xbf16, #tpu.memory_space<vmem>>, vector<16x100xbf16>
    %c64_36 = arith.constant 64 : index
    %c100_37 = arith.constant 100 : index
    %31 = vector.load %arg11[%c64_36, %c100_37] : memref<256x256xbf16, #tpu.memory_space<vmem>>, vector<16x100xbf16>
    tpu.vector_store %arg11[%c64_36, %c100_37], %30 {strides = array<i32>} : memref<256x256xbf16, #tpu.memory_space<vmem>>, vector<16x100xbf16>,
    %c0_38 = arith.constant 0 : index
    %c300 = arith.constant 300 : index
    %32 = vector.load %arg10[%c0_38, %c300] : memref<16x896xbf16, #tpu.memory_space<vmem>>, vector<16x100xbf16>
    %c80 = arith.constant 80 : index
    %c0_39 = arith.constant 0 : index
    %33 = vector.load %arg11[%c80, %c0_39] : memref<256x256xbf16, #tpu.memory_space<vmem>>, vector<16x100xbf16>
    tpu.vector_store %arg11[%c80, %c0_39], %32 {strides = array<i32>} : memref<256x256xbf16, #tpu.memory_space<vmem>>, vector<16x100xbf16>,
    %c0_40 = arith.constant 0 : index
    %c700 = arith.constant 700 : index
    %34 = vector.load %arg10[%c0_40, %c700] : memref<16x896xbf16, #tpu.memory_space<vmem>>, vector<16x100xbf16>
    %c80_41 = arith.constant 80 : index
    %c100_42 = arith.constant 100 : index
    %35 = vector.load %arg11[%c80_41, %c100_42] : memref<256x256xbf16, #tpu.memory_space<vmem>>, vector<16x100xbf16>
    tpu.vector_store %arg11[%c80_41, %c100_42], %34 {strides = array<i32>} : memref<256x256xbf16, #tpu.memory_space<vmem>>, vector<16x100xbf16>,
    %c0_43 = arith.constant 0 : index
    %c201 = arith.constant 201 : index
    %36 = vector.load %arg10[%c0_43, %c201] : memref<16x896xbf16, #tpu.memory_space<vmem>>, vector<16x100xbf16>
    %c96 = arith.constant 96 : index
    %c0_44 = arith.constant 0 : index
    %37 = vector.load %arg11[%c96, %c0_44] : memref<256x256xbf16, #tpu.memory_space<vmem>>, vector<16x100xbf16>
    tpu.vector_store %arg11[%c96, %c0_44], %36 {strides = array<i32>} : memref<256x256xbf16, #tpu.memory_space<vmem>>, vector<16x100xbf16>,
    %c0_45 = arith.constant 0 : index
    %c601 = arith.constant 601 : index
    %38 = vector.load %arg10[%c0_45, %c601] : memref<16x896xbf16, #tpu.memory_space<vmem>>, vector<16x100xbf16>
    %c96_46 = arith.constant 96 : index
    %c100_47 = arith.constant 100 : index
    %39 = vector.load %arg11[%c96_46, %c100_47] : memref<256x256xbf16, #tpu.memory_space<vmem>>, vector<16x100xbf16>
    tpu.vector_store %arg11[%c96_46, %c100_47], %38 {strides = array<i32>} : memref<256x256xbf16, #tpu.memory_space<vmem>>, vector<16x100xbf16>,
    %c0_48 = arith.constant 0 : index
    %c301 = arith.constant 301 : index
    %40 = vector.load %arg10[%c0_48, %c301] : memref<16x896xbf16, #tpu.memory_space<vmem>>, vector<16x100xbf16>
    %c112 = arith.constant 112 : index
    %c0_49 = arith.constant 0 : index
    %41 = vector.load %arg11[%c112, %c0_49] : memref<256x256xbf16, #tpu.memory_space<vmem>>, vector<16x100xbf16>
    tpu.vector_store %arg11[%c112, %c0_49], %40 {strides = array<i32>} : memref<256x256xbf16, #tpu.memory_space<vmem>>, vector<16x100xbf16>,
    %c0_50 = arith.constant 0 : index
    %c701 = arith.constant 701 : index
    %42 = vector.load %arg10[%c0_50, %c701] : memref<16x896xbf16, #tpu.memory_space<vmem>>, vector<16x100xbf16>
    %c112_51 = arith.constant 112 : index
    %c100_52 = arith.constant 100 : index
    %43 = vector.load %arg11[%c112_51, %c100_52] : memref<256x256xbf16, #tpu.memory_space<vmem>>, vector<16x100xbf16>
    tpu.vector_store %arg11[%c112_51, %c100_52], %42 {strides = array<i32>} : memref<256x256xbf16, #tpu.memory_space<vmem>>, vector<16x100xbf16>,
    %c0_53 = arith.constant 0 : index
    %c10 = arith.constant 10 : index
    %44 = vector.load %arg10[%c0_53, %c10] : memref<16x896xbf16, #tpu.memory_space<vmem>>, vector<16x100xbf16>
    %c128 = arith.constant 128 : index
    %c0_54 = arith.constant 0 : index
    %45 = vector.load %arg11[%c128, %c0_54] : memref<256x256xbf16, #tpu.memory_space<vmem>>, vector<16x100xbf16>
    tpu.vector_store %arg11[%c128, %c0_54], %44 {strides = array<i32>} : memref<256x256xbf16, #tpu.memory_space<vmem>>, vector<16x100xbf16>,
    %c0_55 = arith.constant 0 : index
    %c410 = arith.constant 410 : index
    %46 = vector.load %arg10[%c0_55, %c410] : memref<16x896xbf16, #tpu.memory_space<vmem>>, vector<16x100xbf16>
    %c128_56 = arith.constant 128 : index
    %c100_57 = arith.constant 100 : index
    %47 = vector.load %arg11[%c128_56, %c100_57] : memref<256x256xbf16, #tpu.memory_space<vmem>>, vector<16x100xbf16>
    tpu.vector_store %arg11[%c128_56, %c100_57], %46 {strides = array<i32>} : memref<256x256xbf16, #tpu.memory_space<vmem>>, vector<16x100xbf16>,
    %c0_58 = arith.constant 0 : index
    %c110 = arith.constant 110 : index
    %48 = vector.load %arg10[%c0_58, %c110] : memref<16x896xbf16, #tpu.memory_space<vmem>>, vector<16x100xbf16>
    %c144 = arith.constant 144 : index
    %c0_59 = arith.constant 0 : index
    %49 = vector.load %arg11[%c144, %c0_59] : memref<256x256xbf16, #tpu.memory_space<vmem>>, vector<16x100xbf16>
    tpu.vector_store %arg11[%c144, %c0_59], %48 {strides = array<i32>} : memref<256x256xbf16, #tpu.memory_space<vmem>>, vector<16x100xbf16>,
    %c0_60 = arith.constant 0 : index
    %c510 = arith.constant 510 : index
    %50 = vector.load %arg10[%c0_60, %c510] : memref<16x896xbf16, #tpu.memory_space<vmem>>, vector<16x100xbf16>
    %c144_61 = arith.constant 144 : index
    %c100_62 = arith.constant 100 : index
    %51 = vector.load %arg11[%c144_61, %c100_62] : memref<256x256xbf16, #tpu.memory_space<vmem>>, vector<16x100xbf16>
    tpu.vector_store %arg11[%c144_61, %c100_62], %50 {strides = array<i32>} : memref<256x256xbf16, #tpu.memory_space<vmem>>, vector<16x100xbf16>,
    %c0_63 = arith.constant 0 : index
    %c11 = arith.constant 11 : index
    %52 = vector.load %arg10[%c0_63, %c11] : memref<16x896xbf16, #tpu.memory_space<vmem>>, vector<16x100xbf16>
    %c160 = arith.constant 160 : index
    %c0_64 = arith.constant 0 : index
    %53 = vector.load %arg11[%c160, %c0_64] : memref<256x256xbf16, #tpu.memory_space<vmem>>, vector<16x100xbf16>
    tpu.vector_store %arg11[%c160, %c0_64], %52 {strides = array<i32>} : memref<256x256xbf16, #tpu.memory_space<vmem>>, vector<16x100xbf16>,
    %c0_65 = arith.constant 0 : index
    %c411 = arith.constant 411 : index
    %54 = vector.load %arg10[%c0_65, %c411] : memref<16x896xbf16, #tpu.memory_space<vmem>>, vector<16x100xbf16>
    %c160_66 = arith.constant 160 : index
    %c100_67 = arith.constant 100 : index
    %55 = vector.load %arg11[%c160_66, %c100_67] : memref<256x256xbf16, #tpu.memory_space<vmem>>, vector<16x100xbf16>
    tpu.vector_store %arg11[%c160_66, %c100_67], %54 {strides = array<i32>} : memref<256x256xbf16, #tpu.memory_space<vmem>>, vector<16x100xbf16>,
    %c0_68 = arith.constant 0 : index
    %c111 = arith.constant 111 : index
    %56 = vector.load %arg10[%c0_68, %c111] : memref<16x896xbf16, #tpu.memory_space<vmem>>, vector<16x100xbf16>
    %c176 = arith.constant 176 : index
    %c0_69 = arith.constant 0 : index
    %57 = vector.load %arg11[%c176, %c0_69] : memref<256x256xbf16, #tpu.memory_space<vmem>>, vector<16x100xbf16>
    tpu.vector_store %arg11[%c176, %c0_69], %56 {strides = array<i32>} : memref<256x256xbf16, #tpu.memory_space<vmem>>, vector<16x100xbf16>,
    %c0_70 = arith.constant 0 : index
    %c511 = arith.constant 511 : index
    %58 = vector.load %arg10[%c0_70, %c511] : memref<16x896xbf16, #tpu.memory_space<vmem>>, vector<16x100xbf16>
    %c176_71 = arith.constant 176 : index
    %c100_72 = arith.constant 100 : index
    %59 = vector.load %arg11[%c176_71, %c100_72] : memref<256x256xbf16, #tpu.memory_space<vmem>>, vector<16x100xbf16>
    tpu.vector_store %arg11[%c176_71, %c100_72], %58 {strides = array<i32>} : memref<256x256xbf16, #tpu.memory_space<vmem>>, vector<16x100xbf16>,
    %c0_73 = arith.constant 0 : index
    %c210 = arith.constant 210 : index
    %60 = vector.load %arg10[%c0_73, %c210] : memref<16x896xbf16, #tpu.memory_space<vmem>>, vector<16x100xbf16>
    %c192 = arith.constant 192 : index
    %c0_74 = arith.constant 0 : index
    %61 = vector.load %arg11[%c192, %c0_74] : memref<256x256xbf16, #tpu.memory_space<vmem>>, vector<16x100xbf16>
    tpu.vector_store %arg11[%c192, %c0_74], %60 {strides = array<i32>} : memref<256x256xbf16, #tpu.memory_space<vmem>>, vector<16x100xbf16>,
    %c0_75 = arith.constant 0 : index
    %c610 = arith.constant 610 : index
    %62 = vector.load %arg10[%c0_75, %c610] : memref<16x896xbf16, #tpu.memory_space<vmem>>, vector<16x100xbf16>
    %c192_76 = arith.constant 192 : index
    %c100_77 = arith.constant 100 : index
    %63 = vector.load %arg11[%c192_76, %c100_77] : memref<256x256xbf16, #tpu.memory_space<vmem>>, vector<16x100xbf16>
    tpu.vector_store %arg11[%c192_76, %c100_77], %62 {strides = array<i32>} : memref<256x256xbf16, #tpu.memory_space<vmem>>, vector<16x100xbf16>,
    %c0_78 = arith.constant 0 : index
    %c310 = arith.constant 310 : index
    %64 = vector.load %arg10[%c0_78, %c310] : memref<16x896xbf16, #tpu.memory_space<vmem>>, vector<16x100xbf16>
    %c208 = arith.constant 208 : index
    %c0_79 = arith.constant 0 : index
    %65 = vector.load %arg11[%c208, %c0_79] : memref<256x256xbf16, #tpu.memory_space<vmem>>, vector<16x100xbf16>
    tpu.vector_store %arg11[%c208, %c0_79], %64 {strides = array<i32>} : memref<256x256xbf16, #tpu.memory_space<vmem>>, vector<16x100xbf16>,
    %c0_80 = arith.constant 0 : index
    %c710 = arith.constant 710 : index
    %66 = vector.load %arg10[%c0_80, %c710] : memref<16x896xbf16, #tpu.memory_space<vmem>>, vector<16x100xbf16>
    %c208_81 = arith.constant 208 : index
    %c100_82 = arith.constant 100 : index
    %67 = vector.load %arg11[%c208_81, %c100_82] : memref<256x256xbf16, #tpu.memory_space<vmem>>, vector<16x100xbf16>
    tpu.vector_store %arg11[%c208_81, %c100_82], %66 {strides = array<i32>} : memref<256x256xbf16, #tpu.memory_space<vmem>>, vector<16x100xbf16>,
    %c0_83 = arith.constant 0 : index
    %c211 = arith.constant 211 : index
    %68 = vector.load %arg10[%c0_83, %c211] : memref<16x896xbf16, #tpu.memory_space<vmem>>, vector<16x100xbf16>
    %c224 = arith.constant 224 : index
    %c0_84 = arith.constant 0 : index
    %69 = vector.load %arg11[%c224, %c0_84] : memref<256x256xbf16, #tpu.memory_space<vmem>>, vector<16x100xbf16>
    tpu.vector_store %arg11[%c224, %c0_84], %68 {strides = array<i32>} : memref<256x256xbf16, #tpu.memory_space<vmem>>, vector<16x100xbf16>,
    %c0_85 = arith.constant 0 : index
    %c611 = arith.constant 611 : index
    %70 = vector.load %arg10[%c0_85, %c611] : memref<16x896xbf16, #tpu.memory_space<vmem>>, vector<16x100xbf16>
    %c224_86 = arith.constant 224 : index
    %c100_87 = arith.constant 100 : index
    %71 = vector.load %arg11[%c224_86, %c100_87] : memref<256x256xbf16, #tpu.memory_space<vmem>>, vector<16x100xbf16>
    tpu.vector_store %arg11[%c224_86, %c100_87], %70 {strides = array<i32>} : memref<256x256xbf16, #tpu.memory_space<vmem>>, vector<16x100xbf16>,
    %c0_88 = arith.constant 0 : index
    %c311 = arith.constant 311 : index
    %72 = vector.load %arg10[%c0_88, %c311] : memref<16x896xbf16, #tpu.memory_space<vmem>>, vector<16x100xbf16>
    %c240 = arith.constant 240 : index
    %c0_89 = arith.constant 0 : index
    %73 = vector.load %arg11[%c240, %c0_89] : memref<256x256xbf16, #tpu.memory_space<vmem>>, vector<16x100xbf16>
    tpu.vector_store %arg11[%c240, %c0_89], %72 {strides = array<i32>} : memref<256x256xbf16, #tpu.memory_space<vmem>>, vector<16x100xbf16>,
    %c0_90 = arith.constant 0 : index
    %c711 = arith.constant 711 : index
    %74 = vector.load %arg10[%c0_90, %c711] : memref<16x896xbf16, #tpu.memory_space<vmem>>, vector<16x100xbf16>
    %c240_91 = arith.constant 240 : index
    %c100_92 = arith.constant 100 : index
    %75 = vector.load %arg11[%c240_91, %c100_92] : memref<256x256xbf16, #tpu.memory_space<vmem>>, vector<16x100xbf16>
    tpu.vector_store %arg11[%c240_91, %c100_92], %74 {strides = array<i32>} : memref<256x256xbf16, #tpu.memory_space<vmem>>, vector<16x100xbf16>,
    %c0_93 = arith.constant 0 : index
    %c0_94 = arith.constant 0 : index
    %76 = vector.load %arg3[%c0_93, %c0_94] : memref<32x256xbf16, #tpu.memory_space<vmem>>, vector<32x256xbf16>
    %c0_95 = arith.constant 0 : index
    %c0_96 = arith.constant 0 : index
    %77 = vector.load %arg11[%c0_95, %c0_96] : memref<256x256xbf16, #tpu.memory_space<vmem>>, vector<256x256xbf16>
    %cst_97 = arith.constant dense<0.000000e+00> : vector<32x256xf32>
    %78 = tpu.matmul %76, %77, %cst_97 {dimension_numbers = #tpu.dot_dimension_numbers<[1], [0], [0], [1], [0, 0, 1, 1], [], []>} : vector<32x256xbf16>, vector<256x256xbf16>, vector<32x256xf32> -> vector<32x256xf32>
    %c0_98 = arith.constant 0 : index
    %c0_99 = arith.constant 0 : index
    %79 = vector.load %arg4[%c0_98, %c0_99] : memref<32x1xf32, #tpu.memory_space<vmem>>, vector<32x1xf32>
    %80 = vector.broadcast %79 : vector<32x1xf32> to vector<32x256xf32>
    %81 = arith.addf %78, %80 : vector<32x256xf32>
    %cst_100 = arith.constant 0.000000e+00 : f32
    %82 = vector.broadcast %cst_100 : f32 to vector<32x256xf32>
    %83 = arith.maximumf %81, %82 : vector<32x256xf32>
    %84 = arith.truncf %83 : vector<32x256xf32> to vector<32x256xbf16>
    %c0_101 = arith.constant 0 : index
    %c0_102 = arith.constant 0 : index
    %85 = vector.load %arg12[%c0_101, %c0_102] : memref<32x256xbf16, #tpu.memory_space<vmem>>, vector<32x256xbf16>
    tpu.vector_store %arg12[%c0_101, %c0_102], %84 {strides = array<i32>} : memref<32x256xbf16, #tpu.memory_space<vmem>>, vector<32x256xbf16>,
    %c0_103 = arith.constant 0 : index
    %c0_104 = arith.constant 0 : index
    %86 = vector.load %arg12[%c0_103, %c0_104] : memref<32x256xbf16, #tpu.memory_space<vmem>>, vector<1x100xbf16>
    %c0_105 = arith.constant 0 : index
    %c0_106 = arith.constant 0 : index
    %87 = vector.load %arg13[%c0_105, %c0_106] : memref<2x3200xbf16, #tpu.memory_space<vmem>>, vector<1x100xbf16>
    tpu.vector_store %arg13[%c0_105, %c0_106], %86 {strides = array<i32>} : memref<2x3200xbf16, #tpu.memory_space<vmem>>, vector<1x100xbf16>,
    %c1_107 = arith.constant 1 : index
    %c0_108 = arith.constant 0 : index
    %88 = vector.load %arg12[%c1_107, %c0_108] : memref<32x256xbf16, #tpu.memory_space<vmem>>, vector<1x100xbf16>
    %c0_109 = arith.constant 0 : index
    %c100_110 = arith.constant 100 : index
    %89 = vector.load %arg13[%c0_109, %c100_110] : memref<2x3200xbf16, #tpu.memory_space<vmem>>, vector<1x100xbf16>
    tpu.vector_store %arg13[%c0_109, %c100_110], %88 {strides = array<i32>} : memref<2x3200xbf16, #tpu.memory_space<vmem>>, vector<1x100xbf16>,
    %c2 = arith.constant 2 : index
    %c0_111 = arith.constant 0 : index
    %90 = vector.load %arg12[%c2, %c0_111] : memref<32x256xbf16, #tpu.memory_space<vmem>>, vector<1x100xbf16>
    %c0_112 = arith.constant 0 : index
    %c200_113 = arith.constant 200 : index
    %91 = vector.load %arg13[%c0_112, %c200_113] : memref<2x3200xbf16, #tpu.memory_space<vmem>>, vector<1x100xbf16>
    tpu.vector_store %arg13[%c0_112, %c200_113], %90 {strides = array<i32>} : memref<2x3200xbf16, #tpu.memory_space<vmem>>, vector<1x100xbf16>,
    %c3 = arith.constant 3 : index
    %c0_114 = arith.constant 0 : index
    %92 = vector.load %arg12[%c3, %c0_114] : memref<32x256xbf16, #tpu.memory_space<vmem>>, vector<1x100xbf16>
    %c0_115 = arith.constant 0 : index
    %c300_116 = arith.constant 300 : index
    %93 = vector.load %arg13[%c0_115, %c300_116] : memref<2x3200xbf16, #tpu.memory_space<vmem>>, vector<1x100xbf16>
    tpu.vector_store %arg13[%c0_115, %c300_116], %92 {strides = array<i32>} : memref<2x3200xbf16, #tpu.memory_space<vmem>>, vector<1x100xbf16>,
    %c4 = arith.constant 4 : index
    %c0_117 = arith.constant 0 : index
    %94 = vector.load %arg12[%c4, %c0_117] : memref<32x256xbf16, #tpu.memory_space<vmem>>, vector<1x100xbf16>
    %c0_118 = arith.constant 0 : index
    %c400_119 = arith.constant 400 : index
    %95 = vector.load %arg13[%c0_118, %c400_119] : memref<2x3200xbf16, #tpu.memory_space<vmem>>, vector<1x100xbf16>
    tpu.vector_store %arg13[%c0_118, %c400_119], %94 {strides = array<i32>} : memref<2x3200xbf16, #tpu.memory_space<vmem>>, vector<1x100xbf16>,
    %c5 = arith.constant 5 : index
    %c0_120 = arith.constant 0 : index
    %96 = vector.load %arg12[%c5, %c0_120] : memref<32x256xbf16, #tpu.memory_space<vmem>>, vector<1x100xbf16>
    %c0_121 = arith.constant 0 : index
    %c500_122 = arith.constant 500 : index
    %97 = vector.load %arg13[%c0_121, %c500_122] : memref<2x3200xbf16, #tpu.memory_space<vmem>>, vector<1x100xbf16>
    tpu.vector_store %arg13[%c0_121, %c500_122], %96 {strides = array<i32>} : memref<2x3200xbf16, #tpu.memory_space<vmem>>, vector<1x100xbf16>,
    %c6 = arith.constant 6 : index
    %c0_123 = arith.constant 0 : index
    %98 = vector.load %arg12[%c6, %c0_123] : memref<32x256xbf16, #tpu.memory_space<vmem>>, vector<1x100xbf16>
    %c0_124 = arith.constant 0 : index
    %c600_125 = arith.constant 600 : index
    %99 = vector.load %arg13[%c0_124, %c600_125] : memref<2x3200xbf16, #tpu.memory_space<vmem>>, vector<1x100xbf16>
    tpu.vector_store %arg13[%c0_124, %c600_125], %98 {strides = array<i32>} : memref<2x3200xbf16, #tpu.memory_space<vmem>>, vector<1x100xbf16>,
    %c7 = arith.constant 7 : index
    %c0_126 = arith.constant 0 : index
    %100 = vector.load %arg12[%c7, %c0_126] : memref<32x256xbf16, #tpu.memory_space<vmem>>, vector<1x100xbf16>
    %c0_127 = arith.constant 0 : index
    %c700_128 = arith.constant 700 : index
    %101 = vector.load %arg13[%c0_127, %c700_128] : memref<2x3200xbf16, #tpu.memory_space<vmem>>, vector<1x100xbf16>
    tpu.vector_store %arg13[%c0_127, %c700_128], %100 {strides = array<i32>} : memref<2x3200xbf16, #tpu.memory_space<vmem>>, vector<1x100xbf16>,
    %c8 = arith.constant 8 : index
    %c0_129 = arith.constant 0 : index
    %102 = vector.load %arg12[%c8, %c0_129] : memref<32x256xbf16, #tpu.memory_space<vmem>>, vector<1x100xbf16>
    %c0_130 = arith.constant 0 : index
    %c800 = arith.constant 800 : index
    %103 = vector.load %arg13[%c0_130, %c800] : memref<2x3200xbf16, #tpu.memory_space<vmem>>, vector<1x100xbf16>
    tpu.vector_store %arg13[%c0_130, %c800], %102 {strides = array<i32>} : memref<2x3200xbf16, #tpu.memory_space<vmem>>, vector<1x100xbf16>,
    %c9 = arith.constant 9 : index
    %c0_131 = arith.constant 0 : index
    %104 = vector.load %arg12[%c9, %c0_131] : memref<32x256xbf16, #tpu.memory_space<vmem>>, vector<1x100xbf16>
    %c0_132 = arith.constant 0 : index
    %c900 = arith.constant 900 : index
    %105 = vector.load %arg13[%c0_132, %c900] : memref<2x3200xbf16, #tpu.memory_space<vmem>>, vector<1x100xbf16>
    tpu.vector_store %arg13[%c0_132, %c900], %104 {strides = array<i32>} : memref<2x3200xbf16, #tpu.memory_space<vmem>>, vector<1x100xbf16>,
    %c10_133 = arith.constant 10 : index
    %c0_134 = arith.constant 0 : index
    %106 = vector.load %arg12[%c10_133, %c0_134] : memref<32x256xbf16, #tpu.memory_space<vmem>>, vector<1x100xbf16>
    %c0_135 = arith.constant 0 : index
    %c1000 = arith.constant 1000 : index
    %107 = vector.load %arg13[%c0_135, %c1000] : memref<2x3200xbf16, #tpu.memory_space<vmem>>, vector<1x100xbf16>
    tpu.vector_store %arg13[%c0_135, %c1000], %106 {strides = array<i32>} : memref<2x3200xbf16, #tpu.memory_space<vmem>>, vector<1x100xbf16>,
    %c11_136 = arith.constant 11 : index
    %c0_137 = arith.constant 0 : index
    %108 = vector.load %arg12[%c11_136, %c0_137] : memref<32x256xbf16, #tpu.memory_space<vmem>>, vector<1x100xbf16>
    %c0_138 = arith.constant 0 : index
    %c1100 = arith.constant 1100 : index
    %109 = vector.load %arg13[%c0_138, %c1100] : memref<2x3200xbf16, #tpu.memory_space<vmem>>, vector<1x100xbf16>
    tpu.vector_store %arg13[%c0_138, %c1100], %108 {strides = array<i32>} : memref<2x3200xbf16, #tpu.memory_space<vmem>>, vector<1x100xbf16>,
    %c12 = arith.constant 12 : index
    %c0_139 = arith.constant 0 : index
    %110 = vector.load %arg12[%c12, %c0_139] : memref<32x256xbf16, #tpu.memory_space<vmem>>, vector<1x100xbf16>
    %c0_140 = arith.constant 0 : index
    %c1200 = arith.constant 1200 : index
    %111 = vector.load %arg13[%c0_140, %c1200] : memref<2x3200xbf16, #tpu.memory_space<vmem>>, vector<1x100xbf16>
    tpu.vector_store %arg13[%c0_140, %c1200], %110 {strides = array<i32>} : memref<2x3200xbf16, #tpu.memory_space<vmem>>, vector<1x100xbf16>,
    %c13 = arith.constant 13 : index
    %c0_141 = arith.constant 0 : index
    %112 = vector.load %arg12[%c13, %c0_141] : memref<32x256xbf16, #tpu.memory_space<vmem>>, vector<1x100xbf16>
    %c0_142 = arith.constant 0 : index
    %c1300 = arith.constant 1300 : index
    %113 = vector.load %arg13[%c0_142, %c1300] : memref<2x3200xbf16, #tpu.memory_space<vmem>>, vector<1x100xbf16>
    tpu.vector_store %arg13[%c0_142, %c1300], %112 {strides = array<i32>} : memref<2x3200xbf16, #tpu.memory_space<vmem>>, vector<1x100xbf16>,
    %c14 = arith.constant 14 : index
    %c0_143 = arith.constant 0 : index
    %114 = vector.load %arg12[%c14, %c0_143] : memref<32x256xbf16, #tpu.memory_space<vmem>>, vector<1x100xbf16>
    %c0_144 = arith.constant 0 : index
    %c1400 = arith.constant 1400 : index
    %115 = vector.load %arg13[%c0_144, %c1400] : memref<2x3200xbf16, #tpu.memory_space<vmem>>, vector<1x100xbf16>
    tpu.vector_store %arg13[%c0_144, %c1400], %114 {strides = array<i32>} : memref<2x3200xbf16, #tpu.memory_space<vmem>>, vector<1x100xbf16>,
    %c15 = arith.constant 15 : index
    %c0_145 = arith.constant 0 : index
    %116 = vector.load %arg12[%c15, %c0_145] : memref<32x256xbf16, #tpu.memory_space<vmem>>, vector<1x100xbf16>
    %c0_146 = arith.constant 0 : index
    %c1500 = arith.constant 1500 : index
    %117 = vector.load %arg13[%c0_146, %c1500] : memref<2x3200xbf16, #tpu.memory_space<vmem>>, vector<1x100xbf16>
    tpu.vector_store %arg13[%c0_146, %c1500], %116 {strides = array<i32>} : memref<2x3200xbf16, #tpu.memory_space<vmem>>, vector<1x100xbf16>,
    %c16_147 = arith.constant 16 : index
    %c0_148 = arith.constant 0 : index
    %118 = vector.load %arg12[%c16_147, %c0_148] : memref<32x256xbf16, #tpu.memory_space<vmem>>, vector<1x100xbf16>
    %c0_149 = arith.constant 0 : index
    %c1600 = arith.constant 1600 : index
    %119 = vector.load %arg13[%c0_149, %c1600] : memref<2x3200xbf16, #tpu.memory_space<vmem>>, vector<1x100xbf16>
    tpu.vector_store %arg13[%c0_149, %c1600], %118 {strides = array<i32>} : memref<2x3200xbf16, #tpu.memory_space<vmem>>, vector<1x100xbf16>,
    %c17 = arith.constant 17 : index
    %c0_150 = arith.constant 0 : index
    %120 = vector.load %arg12[%c17, %c0_150] : memref<32x256xbf16, #tpu.memory_space<vmem>>, vector<1x100xbf16>
    %c0_151 = arith.constant 0 : index
    %c1700 = arith.constant 1700 : index
    %121 = vector.load %arg13[%c0_151, %c1700] : memref<2x3200xbf16, #tpu.memory_space<vmem>>, vector<1x100xbf16>
    tpu.vector_store %arg13[%c0_151, %c1700], %120 {strides = array<i32>} : memref<2x3200xbf16, #tpu.memory_space<vmem>>, vector<1x100xbf16>,
    %c18 = arith.constant 18 : index
    %c0_152 = arith.constant 0 : index
    %122 = vector.load %arg12[%c18, %c0_152] : memref<32x256xbf16, #tpu.memory_space<vmem>>, vector<1x100xbf16>
    %c0_153 = arith.constant 0 : index
    %c1800 = arith.constant 1800 : index
    %123 = vector.load %arg13[%c0_153, %c1800] : memref<2x3200xbf16, #tpu.memory_space<vmem>>, vector<1x100xbf16>
    tpu.vector_store %arg13[%c0_153, %c1800], %122 {strides = array<i32>} : memref<2x3200xbf16, #tpu.memory_space<vmem>>, vector<1x100xbf16>,
    %c19 = arith.constant 19 : index
    %c0_154 = arith.constant 0 : index
    %124 = vector.load %arg12[%c19, %c0_154] : memref<32x256xbf16, #tpu.memory_space<vmem>>, vector<1x100xbf16>
    %c0_155 = arith.constant 0 : index
    %c1900 = arith.constant 1900 : index
    %125 = vector.load %arg13[%c0_155, %c1900] : memref<2x3200xbf16, #tpu.memory_space<vmem>>, vector<1x100xbf16>
    tpu.vector_store %arg13[%c0_155, %c1900], %124 {strides = array<i32>} : memref<2x3200xbf16, #tpu.memory_space<vmem>>, vector<1x100xbf16>,
    %c20 = arith.constant 20 : index
    %c0_156 = arith.constant 0 : index
    %126 = vector.load %arg12[%c20, %c0_156] : memref<32x256xbf16, #tpu.memory_space<vmem>>, vector<1x100xbf16>
    %c0_157 = arith.constant 0 : index
    %c2000 = arith.constant 2000 : index
    %127 = vector.load %arg13[%c0_157, %c2000] : memref<2x3200xbf16, #tpu.memory_space<vmem>>, vector<1x100xbf16>
    tpu.vector_store %arg13[%c0_157, %c2000], %126 {strides = array<i32>} : memref<2x3200xbf16, #tpu.memory_space<vmem>>, vector<1x100xbf16>,
    %c21 = arith.constant 21 : index
    %c0_158 = arith.constant 0 : index
    %128 = vector.load %arg12[%c21, %c0_158] : memref<32x256xbf16, #tpu.memory_space<vmem>>, vector<1x100xbf16>
    %c0_159 = arith.constant 0 : index
    %c2100 = arith.constant 2100 : index
    %129 = vector.load %arg13[%c0_159, %c2100] : memref<2x3200xbf16, #tpu.memory_space<vmem>>, vector<1x100xbf16>
    tpu.vector_store %arg13[%c0_159, %c2100], %128 {strides = array<i32>} : memref<2x3200xbf16, #tpu.memory_space<vmem>>, vector<1x100xbf16>,
    %c22 = arith.constant 22 : index
    %c0_160 = arith.constant 0 : index
    %130 = vector.load %arg12[%c22, %c0_160] : memref<32x256xbf16, #tpu.memory_space<vmem>>, vector<1x100xbf16>
    %c0_161 = arith.constant 0 : index
    %c2200 = arith.constant 2200 : index
    %131 = vector.load %arg13[%c0_161, %c2200] : memref<2x3200xbf16, #tpu.memory_space<vmem>>, vector<1x100xbf16>
    tpu.vector_store %arg13[%c0_161, %c2200], %130 {strides = array<i32>} : memref<2x3200xbf16, #tpu.memory_space<vmem>>, vector<1x100xbf16>,
    %c23 = arith.constant 23 : index
    %c0_162 = arith.constant 0 : index
    %132 = vector.load %arg12[%c23, %c0_162] : memref<32x256xbf16, #tpu.memory_space<vmem>>, vector<1x100xbf16>
    %c0_163 = arith.constant 0 : index
    %c2300 = arith.constant 2300 : index
    %133 = vector.load %arg13[%c0_163, %c2300] : memref<2x3200xbf16, #tpu.memory_space<vmem>>, vector<1x100xbf16>
    tpu.vector_store %arg13[%c0_163, %c2300], %132 {strides = array<i32>} : memref<2x3200xbf16, #tpu.memory_space<vmem>>, vector<1x100xbf16>,
    %c24 = arith.constant 24 : index
    %c0_164 = arith.constant 0 : index
    %134 = vector.load %arg12[%c24, %c0_164] : memref<32x256xbf16, #tpu.memory_space<vmem>>, vector<1x100xbf16>
    %c0_165 = arith.constant 0 : index
    %c2400 = arith.constant 2400 : index
    %135 = vector.load %arg13[%c0_165, %c2400] : memref<2x3200xbf16, #tpu.memory_space<vmem>>, vector<1x100xbf16>
    tpu.vector_store %arg13[%c0_165, %c2400], %134 {strides = array<i32>} : memref<2x3200xbf16, #tpu.memory_space<vmem>>, vector<1x100xbf16>,
    %c25 = arith.constant 25 : index
    %c0_166 = arith.constant 0 : index
    %136 = vector.load %arg12[%c25, %c0_166] : memref<32x256xbf16, #tpu.memory_space<vmem>>, vector<1x100xbf16>
    %c0_167 = arith.constant 0 : index
    %c2500 = arith.constant 2500 : index
    %137 = vector.load %arg13[%c0_167, %c2500] : memref<2x3200xbf16, #tpu.memory_space<vmem>>, vector<1x100xbf16>
    tpu.vector_store %arg13[%c0_167, %c2500], %136 {strides = array<i32>} : memref<2x3200xbf16, #tpu.memory_space<vmem>>, vector<1x100xbf16>,
    %c26 = arith.constant 26 : index
    %c0_168 = arith.constant 0 : index
    %138 = vector.load %arg12[%c26, %c0_168] : memref<32x256xbf16, #tpu.memory_space<vmem>>, vector<1x100xbf16>
    %c0_169 = arith.constant 0 : index
    %c2600 = arith.constant 2600 : index
    %139 = vector.load %arg13[%c0_169, %c2600] : memref<2x3200xbf16, #tpu.memory_space<vmem>>, vector<1x100xbf16>
    tpu.vector_store %arg13[%c0_169, %c2600], %138 {strides = array<i32>} : memref<2x3200xbf16, #tpu.memory_space<vmem>>, vector<1x100xbf16>,
    %c27 = arith.constant 27 : index
    %c0_170 = arith.constant 0 : index
    %140 = vector.load %arg12[%c27, %c0_170] : memref<32x256xbf16, #tpu.memory_space<vmem>>, vector<1x100xbf16>
    %c0_171 = arith.constant 0 : index
    %c2700 = arith.constant 2700 : index
    %141 = vector.load %arg13[%c0_171, %c2700] : memref<2x3200xbf16, #tpu.memory_space<vmem>>, vector<1x100xbf16>
    tpu.vector_store %arg13[%c0_171, %c2700], %140 {strides = array<i32>} : memref<2x3200xbf16, #tpu.memory_space<vmem>>, vector<1x100xbf16>,
    %c28 = arith.constant 28 : index
    %c0_172 = arith.constant 0 : index
    %142 = vector.load %arg12[%c28, %c0_172] : memref<32x256xbf16, #tpu.memory_space<vmem>>, vector<1x100xbf16>
    %c0_173 = arith.constant 0 : index
    %c2800 = arith.constant 2800 : index
    %143 = vector.load %arg13[%c0_173, %c2800] : memref<2x3200xbf16, #tpu.memory_space<vmem>>, vector<1x100xbf16>
    tpu.vector_store %arg13[%c0_173, %c2800], %142 {strides = array<i32>} : memref<2x3200xbf16, #tpu.memory_space<vmem>>, vector<1x100xbf16>,
    %c29 = arith.constant 29 : index
    %c0_174 = arith.constant 0 : index
    %144 = vector.load %arg12[%c29, %c0_174] : memref<32x256xbf16, #tpu.memory_space<vmem>>, vector<1x100xbf16>
    %c0_175 = arith.constant 0 : index
    %c2900 = arith.constant 2900 : index
    %145 = vector.load %arg13[%c0_175, %c2900] : memref<2x3200xbf16, #tpu.memory_space<vmem>>, vector<1x100xbf16>
    tpu.vector_store %arg13[%c0_175, %c2900], %144 {strides = array<i32>} : memref<2x3200xbf16, #tpu.memory_space<vmem>>, vector<1x100xbf16>,
    %c30 = arith.constant 30 : index
    %c0_176 = arith.constant 0 : index
    %146 = vector.load %arg12[%c30, %c0_176] : memref<32x256xbf16, #tpu.memory_space<vmem>>, vector<1x100xbf16>
    %c0_177 = arith.constant 0 : index
    %c3000 = arith.constant 3000 : index
    %147 = vector.load %arg13[%c0_177, %c3000] : memref<2x3200xbf16, #tpu.memory_space<vmem>>, vector<1x100xbf16>
    tpu.vector_store %arg13[%c0_177, %c3000], %146 {strides = array<i32>} : memref<2x3200xbf16, #tpu.memory_space<vmem>>, vector<1x100xbf16>,
    %c31 = arith.constant 31 : index
    %c0_178 = arith.constant 0 : index
    %148 = vector.load %arg12[%c31, %c0_178] : memref<32x256xbf16, #tpu.memory_space<vmem>>, vector<1x100xbf16>
    %c0_179 = arith.constant 0 : index
    %c3100 = arith.constant 3100 : index
    %149 = vector.load %arg13[%c0_179, %c3100] : memref<2x3200xbf16, #tpu.memory_space<vmem>>, vector<1x100xbf16>
    tpu.vector_store %arg13[%c0_179, %c3100], %148 {strides = array<i32>} : memref<2x3200xbf16, #tpu.memory_space<vmem>>, vector<1x100xbf16>,
    %c0_180 = arith.constant 0 : index
    %c100_181 = arith.constant 100 : index
    %150 = vector.load %arg12[%c0_180, %c100_181] : memref<32x256xbf16, #tpu.memory_space<vmem>>, vector<1x100xbf16>
    %c1_182 = arith.constant 1 : index
    %c0_183 = arith.constant 0 : index
    %151 = vector.load %arg13[%c1_182, %c0_183] : memref<2x3200xbf16, #tpu.memory_space<vmem>>, vector<1x100xbf16>
    tpu.vector_store %arg13[%c1_182, %c0_183], %150 {strides = array<i32>} : memref<2x3200xbf16, #tpu.memory_space<vmem>>, vector<1x100xbf16>,
    %c1_184 = arith.constant 1 : index
    %c100_185 = arith.constant 100 : index
    %152 = vector.load %arg12[%c1_184, %c100_185] : memref<32x256xbf16, #tpu.memory_space<vmem>>, vector<1x100xbf16>
    %c1_186 = arith.constant 1 : index
    %c100_187 = arith.constant 100 : index
    %153 = vector.load %arg13[%c1_186, %c100_187] : memref<2x3200xbf16, #tpu.memory_space<vmem>>, vector<1x100xbf16>
    tpu.vector_store %arg13[%c1_186, %c100_187], %152 {strides = array<i32>} : memref<2x3200xbf16, #tpu.memory_space<vmem>>, vector<1x100xbf16>,
    %c2_188 = arith.constant 2 : index
    %c100_189 = arith.constant 100 : index
    %154 = vector.load %arg12[%c2_188, %c100_189] : memref<32x256xbf16, #tpu.memory_space<vmem>>, vector<1x100xbf16>
    %c1_190 = arith.constant 1 : index
    %c200_191 = arith.constant 200 : index
    %155 = vector.load %arg13[%c1_190, %c200_191] : memref<2x3200xbf16, #tpu.memory_space<vmem>>, vector<1x100xbf16>
    tpu.vector_store %arg13[%c1_190, %c200_191], %154 {strides = array<i32>} : memref<2x3200xbf16, #tpu.memory_space<vmem>>, vector<1x100xbf16>,
    %c3_192 = arith.constant 3 : index
    %c100_193 = arith.constant 100 : index
    %156 = vector.load %arg12[%c3_192, %c100_193] : memref<32x256xbf16, #tpu.memory_space<vmem>>, vector<1x100xbf16>
    %c1_194 = arith.constant 1 : index
    %c300_195 = arith.constant 300 : index
    %157 = vector.load %arg13[%c1_194, %c300_195] : memref<2x3200xbf16, #tpu.memory_space<vmem>>, vector<1x100xbf16>
    tpu.vector_store %arg13[%c1_194, %c300_195], %156 {strides = array<i32>} : memref<2x3200xbf16, #tpu.memory_space<vmem>>, vector<1x100xbf16>,
    %c4_196 = arith.constant 4 : index
    %c100_197 = arith.constant 100 : index
    %158 = vector.load %arg12[%c4_196, %c100_197] : memref<32x256xbf16, #tpu.memory_space<vmem>>, vector<1x100xbf16>
    %c1_198 = arith.constant 1 : index
    %c400_199 = arith.constant 400 : index
    %159 = vector.load %arg13[%c1_198, %c400_199] : memref<2x3200xbf16, #tpu.memory_space<vmem>>, vector<1x100xbf16>
    tpu.vector_store %arg13[%c1_198, %c400_199], %158 {strides = array<i32>} : memref<2x3200xbf16, #tpu.memory_space<vmem>>, vector<1x100xbf16>,
    %c5_200 = arith.constant 5 : index
    %c100_201 = arith.constant 100 : index
    %160 = vector.load %arg12[%c5_200, %c100_201] : memref<32x256xbf16, #tpu.memory_space<vmem>>, vector<1x100xbf16>
    %c1_202 = arith.constant 1 : index
    %c500_203 = arith.constant 500 : index
    %161 = vector.load %arg13[%c1_202, %c500_203] : memref<2x3200xbf16, #tpu.memory_space<vmem>>, vector<1x100xbf16>
    tpu.vector_store %arg13[%c1_202, %c500_203], %160 {strides = array<i32>} : memref<2x3200xbf16, #tpu.memory_space<vmem>>, vector<1x100xbf16>,
    %c6_204 = arith.constant 6 : index
    %c100_205 = arith.constant 100 : index
    %162 = vector.load %arg12[%c6_204, %c100_205] : memref<32x256xbf16, #tpu.memory_space<vmem>>, vector<1x100xbf16>
    %c1_206 = arith.constant 1 : index
    %c600_207 = arith.constant 600 : index
    %163 = vector.load %arg13[%c1_206, %c600_207] : memref<2x3200xbf16, #tpu.memory_space<vmem>>, vector<1x100xbf16>
    tpu.vector_store %arg13[%c1_206, %c600_207], %162 {strides = array<i32>} : memref<2x3200xbf16, #tpu.memory_space<vmem>>, vector<1x100xbf16>,
    %c7_208 = arith.constant 7 : index
    %c100_209 = arith.constant 100 : index
    %164 = vector.load %arg12[%c7_208, %c100_209] : memref<32x256xbf16, #tpu.memory_space<vmem>>, vector<1x100xbf16>
    %c1_210 = arith.constant 1 : index
    %c700_211 = arith.constant 700 : index
    %165 = vector.load %arg13[%c1_210, %c700_211] : memref<2x3200xbf16, #tpu.memory_space<vmem>>, vector<1x100xbf16>
    tpu.vector_store %arg13[%c1_210, %c700_211], %164 {strides = array<i32>} : memref<2x3200xbf16, #tpu.memory_space<vmem>>, vector<1x100xbf16>,
    %c8_212 = arith.constant 8 : index
    %c100_213 = arith.constant 100 : index
    %166 = vector.load %arg12[%c8_212, %c100_213] : memref<32x256xbf16, #tpu.memory_space<vmem>>, vector<1x100xbf16>
    %c1_214 = arith.constant 1 : index
    %c800_215 = arith.constant 800 : index
    %167 = vector.load %arg13[%c1_214, %c800_215] : memref<2x3200xbf16, #tpu.memory_space<vmem>>, vector<1x100xbf16>
    tpu.vector_store %arg13[%c1_214, %c800_215], %166 {strides = array<i32>} : memref<2x3200xbf16, #tpu.memory_space<vmem>>, vector<1x100xbf16>,
    %c9_216 = arith.constant 9 : index
    %c100_217 = arith.constant 100 : index
    %168 = vector.load %arg12[%c9_216, %c100_217] : memref<32x256xbf16, #tpu.memory_space<vmem>>, vector<1x100xbf16>
    %c1_218 = arith.constant 1 : index
    %c900_219 = arith.constant 900 : index
    %169 = vector.load %arg13[%c1_218, %c900_219] : memref<2x3200xbf16, #tpu.memory_space<vmem>>, vector<1x100xbf16>
    tpu.vector_store %arg13[%c1_218, %c900_219], %168 {strides = array<i32>} : memref<2x3200xbf16, #tpu.memory_space<vmem>>, vector<1x100xbf16>,
    %c10_220 = arith.constant 10 : index
    %c100_221 = arith.constant 100 : index
    %170 = vector.load %arg12[%c10_220, %c100_221] : memref<32x256xbf16, #tpu.memory_space<vmem>>, vector<1x100xbf16>
    %c1_222 = arith.constant 1 : index
    %c1000_223 = arith.constant 1000 : index
    %171 = vector.load %arg13[%c1_222, %c1000_223] : memref<2x3200xbf16, #tpu.memory_space<vmem>>, vector<1x100xbf16>
    tpu.vector_store %arg13[%c1_222, %c1000_223], %170 {strides = array<i32>} : memref<2x3200xbf16, #tpu.memory_space<vmem>>, vector<1x100xbf16>,
    %c11_224 = arith.constant 11 : index
    %c100_225 = arith.constant 100 : index
    %172 = vector.load %arg12[%c11_224, %c100_225] : memref<32x256xbf16, #tpu.memory_space<vmem>>, vector<1x100xbf16>
    %c1_226 = arith.constant 1 : index
    %c1100_227 = arith.constant 1100 : index
    %173 = vector.load %arg13[%c1_226, %c1100_227] : memref<2x3200xbf16, #tpu.memory_space<vmem>>, vector<1x100xbf16>
    tpu.vector_store %arg13[%c1_226, %c1100_227], %172 {strides = array<i32>} : memref<2x3200xbf16, #tpu.memory_space<vmem>>, vector<1x100xbf16>,
    %c12_228 = arith.constant 12 : index
    %c100_229 = arith.constant 100 : index
    %174 = vector.load %arg12[%c12_228, %c100_229] : memref<32x256xbf16, #tpu.memory_space<vmem>>, vector<1x100xbf16>
    %c1_230 = arith.constant 1 : index
    %c1200_231 = arith.constant 1200 : index
    %175 = vector.load %arg13[%c1_230, %c1200_231] : memref<2x3200xbf16, #tpu.memory_space<vmem>>, vector<1x100xbf16>
    tpu.vector_store %arg13[%c1_230, %c1200_231], %174 {strides = array<i32>} : memref<2x3200xbf16, #tpu.memory_space<vmem>>, vector<1x100xbf16>,
    %c13_232 = arith.constant 13 : index
    %c100_233 = arith.constant 100 : index
    %176 = vector.load %arg12[%c13_232, %c100_233] : memref<32x256xbf16, #tpu.memory_space<vmem>>, vector<1x100xbf16>
    %c1_234 = arith.constant 1 : index
    %c1300_235 = arith.constant 1300 : index
    %177 = vector.load %arg13[%c1_234, %c1300_235] : memref<2x3200xbf16, #tpu.memory_space<vmem>>, vector<1x100xbf16>
    tpu.vector_store %arg13[%c1_234, %c1300_235], %176 {strides = array<i32>} : memref<2x3200xbf16, #tpu.memory_space<vmem>>, vector<1x100xbf16>,
    %c14_236 = arith.constant 14 : index
    %c100_237 = arith.constant 100 : index
    %178 = vector.load %arg12[%c14_236, %c100_237] : memref<32x256xbf16, #tpu.memory_space<vmem>>, vector<1x100xbf16>
    %c1_238 = arith.constant 1 : index
    %c1400_239 = arith.constant 1400 : index
    %179 = vector.load %arg13[%c1_238, %c1400_239] : memref<2x3200xbf16, #tpu.memory_space<vmem>>, vector<1x100xbf16>
    tpu.vector_store %arg13[%c1_238, %c1400_239], %178 {strides = array<i32>} : memref<2x3200xbf16, #tpu.memory_space<vmem>>, vector<1x100xbf16>,
    %c15_240 = arith.constant 15 : index
    %c100_241 = arith.constant 100 : index
    %180 = vector.load %arg12[%c15_240, %c100_241] : memref<32x256xbf16, #tpu.memory_space<vmem>>, vector<1x100xbf16>
    %c1_242 = arith.constant 1 : index
    %c1500_243 = arith.constant 1500 : index
    %181 = vector.load %arg13[%c1_242, %c1500_243] : memref<2x3200xbf16, #tpu.memory_space<vmem>>, vector<1x100xbf16>
    tpu.vector_store %arg13[%c1_242, %c1500_243], %180 {strides = array<i32>} : memref<2x3200xbf16, #tpu.memory_space<vmem>>, vector<1x100xbf16>,
    %c16_244 = arith.constant 16 : index
    %c100_245 = arith.constant 100 : index
    %182 = vector.load %arg12[%c16_244, %c100_245] : memref<32x256xbf16, #tpu.memory_space<vmem>>, vector<1x100xbf16>
    %c1_246 = arith.constant 1 : index
    %c1600_247 = arith.constant 1600 : index
    %183 = vector.load %arg13[%c1_246, %c1600_247] : memref<2x3200xbf16, #tpu.memory_space<vmem>>, vector<1x100xbf16>
    tpu.vector_store %arg13[%c1_246, %c1600_247], %182 {strides = array<i32>} : memref<2x3200xbf16, #tpu.memory_space<vmem>>, vector<1x100xbf16>,
    %c17_248 = arith.constant 17 : index
    %c100_249 = arith.constant 100 : index
    %184 = vector.load %arg12[%c17_248, %c100_249] : memref<32x256xbf16, #tpu.memory_space<vmem>>, vector<1x100xbf16>
    %c1_250 = arith.constant 1 : index
    %c1700_251 = arith.constant 1700 : index
    %185 = vector.load %arg13[%c1_250, %c1700_251] : memref<2x3200xbf16, #tpu.memory_space<vmem>>, vector<1x100xbf16>
    tpu.vector_store %arg13[%c1_250, %c1700_251], %184 {strides = array<i32>} : memref<2x3200xbf16, #tpu.memory_space<vmem>>, vector<1x100xbf16>,
    %c18_252 = arith.constant 18 : index
    %c100_253 = arith.constant 100 : index
    %186 = vector.load %arg12[%c18_252, %c100_253] : memref<32x256xbf16, #tpu.memory_space<vmem>>, vector<1x100xbf16>
    %c1_254 = arith.constant 1 : index
    %c1800_255 = arith.constant 1800 : index
    %187 = vector.load %arg13[%c1_254, %c1800_255] : memref<2x3200xbf16, #tpu.memory_space<vmem>>, vector<1x100xbf16>
    tpu.vector_store %arg13[%c1_254, %c1800_255], %186 {strides = array<i32>} : memref<2x3200xbf16, #tpu.memory_space<vmem>>, vector<1x100xbf16>,
    %c19_256 = arith.constant 19 : index
    %c100_257 = arith.constant 100 : index
    %188 = vector.load %arg12[%c19_256, %c100_257] : memref<32x256xbf16, #tpu.memory_space<vmem>>, vector<1x100xbf16>
    %c1_258 = arith.constant 1 : index
    %c1900_259 = arith.constant 1900 : index
    %189 = vector.load %arg13[%c1_258, %c1900_259] : memref<2x3200xbf16, #tpu.memory_space<vmem>>, vector<1x100xbf16>
    tpu.vector_store %arg13[%c1_258, %c1900_259], %188 {strides = array<i32>} : memref<2x3200xbf16, #tpu.memory_space<vmem>>, vector<1x100xbf16>,
    %c20_260 = arith.constant 20 : index
    %c100_261 = arith.constant 100 : index
    %190 = vector.load %arg12[%c20_260, %c100_261] : memref<32x256xbf16, #tpu.memory_space<vmem>>, vector<1x100xbf16>
    %c1_262 = arith.constant 1 : index
    %c2000_263 = arith.constant 2000 : index
    %191 = vector.load %arg13[%c1_262, %c2000_263] : memref<2x3200xbf16, #tpu.memory_space<vmem>>, vector<1x100xbf16>
    tpu.vector_store %arg13[%c1_262, %c2000_263], %190 {strides = array<i32>} : memref<2x3200xbf16, #tpu.memory_space<vmem>>, vector<1x100xbf16>,
    %c21_264 = arith.constant 21 : index
    %c100_265 = arith.constant 100 : index
    %192 = vector.load %arg12[%c21_264, %c100_265] : memref<32x256xbf16, #tpu.memory_space<vmem>>, vector<1x100xbf16>
    %c1_266 = arith.constant 1 : index
    %c2100_267 = arith.constant 2100 : index
    %193 = vector.load %arg13[%c1_266, %c2100_267] : memref<2x3200xbf16, #tpu.memory_space<vmem>>, vector<1x100xbf16>
    tpu.vector_store %arg13[%c1_266, %c2100_267], %192 {strides = array<i32>} : memref<2x3200xbf16, #tpu.memory_space<vmem>>, vector<1x100xbf16>,
    %c22_268 = arith.constant 22 : index
    %c100_269 = arith.constant 100 : index
    %194 = vector.load %arg12[%c22_268, %c100_269] : memref<32x256xbf16, #tpu.memory_space<vmem>>, vector<1x100xbf16>
    %c1_270 = arith.constant 1 : index
    %c2200_271 = arith.constant 2200 : index
    %195 = vector.load %arg13[%c1_270, %c2200_271] : memref<2x3200xbf16, #tpu.memory_space<vmem>>, vector<1x100xbf16>
    tpu.vector_store %arg13[%c1_270, %c2200_271], %194 {strides = array<i32>} : memref<2x3200xbf16, #tpu.memory_space<vmem>>, vector<1x100xbf16>,
    %c23_272 = arith.constant 23 : index
    %c100_273 = arith.constant 100 : index
    %196 = vector.load %arg12[%c23_272, %c100_273] : memref<32x256xbf16, #tpu.memory_space<vmem>>, vector<1x100xbf16>
    %c1_274 = arith.constant 1 : index
    %c2300_275 = arith.constant 2300 : index
    %197 = vector.load %arg13[%c1_274, %c2300_275] : memref<2x3200xbf16, #tpu.memory_space<vmem>>, vector<1x100xbf16>
    tpu.vector_store %arg13[%c1_274, %c2300_275], %196 {strides = array<i32>} : memref<2x3200xbf16, #tpu.memory_space<vmem>>, vector<1x100xbf16>,
    %c24_276 = arith.constant 24 : index
    %c100_277 = arith.constant 100 : index
    %198 = vector.load %arg12[%c24_276, %c100_277] : memref<32x256xbf16, #tpu.memory_space<vmem>>, vector<1x100xbf16>
    %c1_278 = arith.constant 1 : index
    %c2400_279 = arith.constant 2400 : index
    %199 = vector.load %arg13[%c1_278, %c2400_279] : memref<2x3200xbf16, #tpu.memory_space<vmem>>, vector<1x100xbf16>
    tpu.vector_store %arg13[%c1_278, %c2400_279], %198 {strides = array<i32>} : memref<2x3200xbf16, #tpu.memory_space<vmem>>, vector<1x100xbf16>,
    %c25_280 = arith.constant 25 : index
    %c100_281 = arith.constant 100 : index
    %200 = vector.load %arg12[%c25_280, %c100_281] : memref<32x256xbf16, #tpu.memory_space<vmem>>, vector<1x100xbf16>
    %c1_282 = arith.constant 1 : index
    %c2500_283 = arith.constant 2500 : index
    %201 = vector.load %arg13[%c1_282, %c2500_283] : memref<2x3200xbf16, #tpu.memory_space<vmem>>, vector<1x100xbf16>
    tpu.vector_store %arg13[%c1_282, %c2500_283], %200 {strides = array<i32>} : memref<2x3200xbf16, #tpu.memory_space<vmem>>, vector<1x100xbf16>,
    %c26_284 = arith.constant 26 : index
    %c100_285 = arith.constant 100 : index
    %202 = vector.load %arg12[%c26_284, %c100_285] : memref<32x256xbf16, #tpu.memory_space<vmem>>, vector<1x100xbf16>
    %c1_286 = arith.constant 1 : index
    %c2600_287 = arith.constant 2600 : index
    %203 = vector.load %arg13[%c1_286, %c2600_287] : memref<2x3200xbf16, #tpu.memory_space<vmem>>, vector<1x100xbf16>
    tpu.vector_store %arg13[%c1_286, %c2600_287], %202 {strides = array<i32>} : memref<2x3200xbf16, #tpu.memory_space<vmem>>, vector<1x100xbf16>,
    %c27_288 = arith.constant 27 : index
    %c100_289 = arith.constant 100 : index
    %204 = vector.load %arg12[%c27_288, %c100_289] : memref<32x256xbf16, #tpu.memory_space<vmem>>, vector<1x100xbf16>
    %c1_290 = arith.constant 1 : index
    %c2700_291 = arith.constant 2700 : index
    %205 = vector.load %arg13[%c1_290, %c2700_291] : memref<2x3200xbf16, #tpu.memory_space<vmem>>, vector<1x100xbf16>
    tpu.vector_store %arg13[%c1_290, %c2700_291], %204 {strides = array<i32>} : memref<2x3200xbf16, #tpu.memory_space<vmem>>, vector<1x100xbf16>,
    %c28_292 = arith.constant 28 : index
    %c100_293 = arith.constant 100 : index
    %206 = vector.load %arg12[%c28_292, %c100_293] : memref<32x256xbf16, #tpu.memory_space<vmem>>, vector<1x100xbf16>
    %c1_294 = arith.constant 1 : index
    %c2800_295 = arith.constant 2800 : index
    %207 = vector.load %arg13[%c1_294, %c2800_295] : memref<2x3200xbf16, #tpu.memory_space<vmem>>, vector<1x100xbf16>
    tpu.vector_store %arg13[%c1_294, %c2800_295], %206 {strides = array<i32>} : memref<2x3200xbf16, #tpu.memory_space<vmem>>, vector<1x100xbf16>,
    %c29_296 = arith.constant 29 : index
    %c100_297 = arith.constant 100 : index
    %208 = vector.load %arg12[%c29_296, %c100_297] : memref<32x256xbf16, #tpu.memory_space<vmem>>, vector<1x100xbf16>
    %c1_298 = arith.constant 1 : index
    %c2900_299 = arith.constant 2900 : index
    %209 = vector.load %arg13[%c1_298, %c2900_299] : memref<2x3200xbf16, #tpu.memory_space<vmem>>, vector<1x100xbf16>
    tpu.vector_store %arg13[%c1_298, %c2900_299], %208 {strides = array<i32>} : memref<2x3200xbf16, #tpu.memory_space<vmem>>, vector<1x100xbf16>,
    %c30_300 = arith.constant 30 : index
    %c100_301 = arith.constant 100 : index
    %210 = vector.load %arg12[%c30_300, %c100_301] : memref<32x256xbf16, #tpu.memory_space<vmem>>, vector<1x100xbf16>
    %c1_302 = arith.constant 1 : index
    %c3000_303 = arith.constant 3000 : index
    %211 = vector.load %arg13[%c1_302, %c3000_303] : memref<2x3200xbf16, #tpu.memory_space<vmem>>, vector<1x100xbf16>
    tpu.vector_store %arg13[%c1_302, %c3000_303], %210 {strides = array<i32>} : memref<2x3200xbf16, #tpu.memory_space<vmem>>, vector<1x100xbf16>,
    %c31_304 = arith.constant 31 : index
    %c100_305 = arith.constant 100 : index
    %212 = vector.load %arg12[%c31_304, %c100_305] : memref<32x256xbf16, #tpu.memory_space<vmem>>, vector<1x100xbf16>
    %c1_306 = arith.constant 1 : index
    %c3100_307 = arith.constant 3100 : index
    %213 = vector.load %arg13[%c1_306, %c3100_307] : memref<2x3200xbf16, #tpu.memory_space<vmem>>, vector<1x100xbf16>
    tpu.vector_store %arg13[%c1_306, %c3100_307], %212 {strides = array<i32>} : memref<2x3200xbf16, #tpu.memory_space<vmem>>, vector<1x100xbf16>,
    %c0_308 = arith.constant 0 : index
    %c0_309 = arith.constant 0 : index
    %214 = vector.load %arg13[%c0_308, %c0_309] : memref<2x3200xbf16, #tpu.memory_space<vmem>>, vector<2x3200xbf16>
    %c0_310 = arith.constant 0 : index
    %c0_311 = arith.constant 0 : index
    %215 = vector.load %arg5[%c0_310, %c0_311] : memref<3200x256xbf16, #tpu.memory_space<vmem>>, vector<3200x256xbf16>
    %cst_312 = arith.constant dense<0.000000e+00> : vector<2x256xf32>
    %216 = tpu.matmul %214, %215, %cst_312 {dimension_numbers = #tpu.dot_dimension_numbers<[1], [0], [0], [1], [0, 0, 1, 1], [], []>} : vector<2x3200xbf16>, vector<3200x256xbf16>, vector<2x256xf32> -> vector<2x256xf32>
    %c0_313 = arith.constant 0 : index
    %c0_314 = arith.constant 0 : index
    %217 = vector.load %arg6[%c0_313, %c0_314] : memref<1x256xf32, #tpu.memory_space<vmem>>, vector<1x256xf32>
    %218 = vector.broadcast %217 : vector<1x256xf32> to vector<2x256xf32>
    %219 = arith.addf %216, %218 : vector<2x256xf32>
    %cst_315 = arith.constant 0.000000e+00 : f32
    %220 = vector.broadcast %cst_315 : f32 to vector<2x256xf32>
    %221 = arith.maximumf %219, %220 : vector<2x256xf32>
    %222 = arith.truncf %221 : vector<2x256xf32> to vector<2x256xbf16>
    %c0_316 = arith.constant 0 : index
    %c0_317 = arith.constant 0 : index
    %223 = vector.load %arg7[%c0_316, %c0_317] : memref<256x128xbf16, #tpu.memory_space<vmem>>, vector<256x128xbf16>
    %cst_318 = arith.constant dense<0.000000e+00> : vector<2x128xf32>
    %224 = tpu.matmul %222, %223, %cst_318 {dimension_numbers = #tpu.dot_dimension_numbers<[1], [0], [0], [1], [0, 0, 1, 1], [], []>} : vector<2x256xbf16>, vector<256x128xbf16>, vector<2x128xf32> -> vector<2x128xf32>
    %c0_319 = arith.constant 0 : index
    %c0_320 = arith.constant 0 : index
    %225 = vector.load %arg8[%c0_319, %c0_320] : memref<1x128xf32, #tpu.memory_space<vmem>>, vector<1x128xf32>
    %226 = vector.broadcast %225 : vector<1x128xf32> to vector<2x128xf32>
    %227 = arith.addf %224, %226 : vector<2x128xf32>
    %c0_321 = arith.constant 0 : index
    %c0_322 = arith.constant 0 : index
    %228 = vector.load %arg9[%c0_321, %c0_322] : memref<2x128xf32, #tpu.memory_space<vmem>>, vector<2x128xf32>
    tpu.vector_store %arg9[%c0_321, %c0_322], %227 {strides = array<i32>} : memref<2x128xf32, #tpu.memory_space<vmem>>, vector<2x128xf32>,
    return
  }
}

</mosaic_0001>

<llo_original>
// kernel: dqn_forward.1
$region0: #{dqn_forward.1}
  #allocation0 [shape = 'u32[]', space=smem, size = 0x4, offset = 0x4, fixed_abs, tag = 'smem constant byte address 0x4 - core index']
  #allocation1 [shape = 'u32[144,128]{1,0:T(1,128)}', space=vmem, size = 0x12000, scoped, tag = 'internal scratch']
  #allocation2 [shape = 'bf16[16,896]{1,0:T(8,128)(2,1)}', space=vmem, size = 0x7000, scoped, tag = 'scratch operand']
  #allocation3 [shape = 'bf16[256,256]{1,0:T(8,128)(2,1)}', space=vmem, size = 0x20000, scoped, tag = 'scratch operand']
  #allocation4 [shape = 'bf16[32,256]{1,0:T(8,128)(2,1)}', space=vmem, size = 0x4000, scoped, tag = 'scratch operand']
  #allocation5 [shape = 'bf16[2,3200]{1,0:T(2,128)(2,1)}', space=vmem, size = 0x3200, scoped, tag = 'scratch operand']
  %s0 = inlined_call_operand.vmem [shape: bf16[256,896], index: 0, kind: input, shape index: {}]
  %s1 = inlined_call_operand.vmem [shape: bf16[16,256], index: 1, kind: input, shape index: {}]
  %s2 = inlined_call_operand.vmem [shape: f32[16,1], index: 2, kind: input, shape index: {}]
  %s3 = inlined_call_operand.vmem [shape: bf16[32,256], index: 3, kind: input, shape index: {}]
  %s4 = inlined_call_operand.vmem [shape: f32[32,1], index: 4, kind: input, shape index: {}]
  %s5 = inlined_call_operand.vmem [shape: bf16[3200,256], index: 5, kind: input, shape index: {}]
  %s6 = inlined_call_operand.vmem [shape: f32[1,256], index: 6, kind: input, shape index: {}]
  %s7 = inlined_call_operand.vmem [shape: bf16[256,128], index: 7, kind: input, shape index: {}]
  %s8 = inlined_call_operand.vmem [shape: f32[1,128], index: 8, kind: input, shape index: {}]
  %s9 = inlined_call_operand.hbm [shape: f32[2,128], index: 9, kind: output, shape index: {}]
  %s10 = sld [smem:[#allocation0]]
  $region46: #{dqn_forward.1} parent=0
    _
  %s12 = ssub.s32 1, %s10
  %s13 = scalar_select 0, %s12, %s10
  $region1: #{dqn_forward.1} parent=0
    #allocation6 [shape = 'u8[1024]{0}', space=vmem, size = 0x400, scoped, tag = 'output window, operand 0, single buffered']
    #allocation7 [shape = 's32[1]{0}', space=sflag, size = 0x4, scoped, tag = 'scoped memory for dqn_forward.1']
    %14 = vsyncpa [#allocation7], 0
    // Predicated region
    $region2: #{dqn_forward.1} parent=1 // pred_check
      _
    $region3: #{dqn_forward.1} parent=1 // pred_check_branch
      %16 = sbr.rel (0) target = $region5
    $region4: #{dqn_forward.1} parent=1 // pred_region
      _
    $region5: #{dqn_forward.1} parent=1 // pred_fallthru
      _
    // Predicated region
    $region6: #{dqn_forward.1} parent=1 // pred_check
      _
    $region7: #{dqn_forward.1} parent=1 // pred_check_branch
      %18 = sbr.rel (0) target = $region9
    $region8: #{dqn_forward.1} parent=1 // pred_region
      _
    $region9: #{dqn_forward.1} parent=1 // pred_fallthru
      _
    // Predicated region
    $region10: #{dqn_forward.1} parent=1 // pred_check
      _
    $region11: #{dqn_forward.1} parent=1 // pred_check_branch
      %20 = sbr.rel (0) target = $region13
    $region12: #{dqn_forward.1} parent=1 // pred_region
      _
    $region13: #{dqn_forward.1} parent=1 // pred_fallthru
      _
    // Predicated region
    $region14: #{dqn_forward.1} parent=1 // pred_check
      _
    $region15: #{dqn_forward.1} parent=1 // pred_check_branch
      %22 = sbr.rel (0) target = $region17
    $region16: #{dqn_forward.1} parent=1 // pred_region
      _
    $region17: #{dqn_forward.1} parent=1 // pred_fallthru
      _
    // Predicated region
    $region18: #{dqn_forward.1} parent=1 // pred_check
      _
    $region19: #{dqn_forward.1} parent=1 // pred_check_branch
      %24 = sbr.rel (0) target = $region21
    $region20: #{dqn_forward.1} parent=1 // pred_region
      _
    $region21: #{dqn_forward.1} parent=1 // pred_fallthru
      _
    // Predicated region
    $region22: #{dqn_forward.1} parent=1 // pred_check
      _
    $region23: #{dqn_forward.1} parent=1 // pred_check_branch
      %26 = sbr.rel (0) target = $region25
    $region24: #{dqn_forward.1} parent=1 // pred_region
      _
    $region25: #{dqn_forward.1} parent=1 // pred_fallthru
      _
    // Predicated region
    $region26: #{dqn_forward.1} parent=1 // pred_check
      _
    $region27: #{dqn_forward.1} parent=1 // pred_check_branch
      %28 = sbr.rel (0) target = $region29
    $region28: #{dqn_forward.1} parent=1 // pred_region
      _
    $region29: #{dqn_forward.1} parent=1 // pred_fallthru
      _
    // Predicated region
    $region30: #{dqn_forward.1} parent=1 // pred_check
      _
    $region31: #{dqn_forward.1} parent=1 // pred_check_branch
      %30 = sbr.rel (0) target = $region33
    $region32: #{dqn_forward.1} parent=1 // pred_region
      _
    $region33: #{dqn_forward.1} parent=1 // pred_fallthru
      _
    // Predicated region
    $region34: #{dqn_forward.1} parent=1 // pred_check
      _
    $region35: #{dqn_forward.1} parent=1 // pred_check_branch
      %32 = sbr.rel (0) target = $region37
    $region36: #{dqn_forward.1} parent=1 // pred_region
      _
    $region37: #{dqn_forward.1} parent=1 // pred_fallthru
      _
    %v34 = vld [vmem:[%s1] sm:$0xff]
    %v35 = vld [vmem:[%s1 + $0x8] sm:$0xff]
    %v36 = vld [vmem:[%s0] sm:$0xff]
    %v37 = vld [vmem:[%s0 + $0x8] sm:$0xff]
    %v38 = vld [vmem:[%s0 + $0x10] sm:$0xff]
    %v39 = vld [vmem:[%s0 + $0x18] sm:$0xf]
    %v40 = vld [vmem:[%s0 + $0x1c] sm:$0xff]
    %v41 = vld [vmem:[%s0 + $0x24] sm:$0xff]
    %v42 = vld [vmem:[%s0 + $0x2c] sm:$0xff]
    %v43 = vld [vmem:[%s0 + $0x34] sm:$0xf]
    %v44 = vld [vmem:[%s0 + $0x38] sm:$0xff]
    %v45 = vld [vmem:[%s0 + $0x40] sm:$0xff]
    %v46 = vld [vmem:[%s0 + $0x48] sm:$0xff]
    %v47 = vld [vmem:[%s0 + $0x50] sm:$0xf]
    %v48 = vld [vmem:[%s0 + $0x54] sm:$0xff]
    %v49 = vld [vmem:[%s0 + $0x5c] sm:$0xff]
    %v50 = vld [vmem:[%s0 + $0x64] sm:$0xff]
    %v51 = vld [vmem:[%s0 + $0x6c] sm:$0xf]
    %v52 = vld [vmem:[%s0 + $0x70] sm:$0xff]
    %v53 = vld [vmem:[%s0 + $0x78] sm:$0xff]
    %v54 = vld [vmem:[%s0 + $0x80] sm:$0xff]
    %v55 = vld [vmem:[%s0 + $0x88] sm:$0xf]
    %v56 = vld [vmem:[%s0 + $0x8c] sm:$0xff]
    %v57 = vld [vmem:[%s0 + $0x94] sm:$0xff]
    %v58 = vld [vmem:[%s0 + $0x9c] sm:$0xff]
    %v59 = vld [vmem:[%s0 + $0xa4] sm:$0xf]
    %v60 = vld [vmem:[%s0 + $0xa8] sm:$0xff]
    %v61 = vld [vmem:[%s0 + $0xb0] sm:$0xff]
    %v62 = vld [vmem:[%s0 + $0xb8] sm:$0xff]
    %v63 = vld [vmem:[%s0 + $0xc0] sm:$0xf]
    %v64 = vld [vmem:[%s0 + $0xc4] sm:$0xff]
    %v65 = vld [vmem:[%s0 + $0xcc] sm:$0xff]
    %v66 = vld [vmem:[%s0 + $0xd4] sm:$0xff]
    %v67 = vld [vmem:[%s0 + $0xdc] sm:$0xf]
    %v68 = vld [vmem:[%s0 + $0xe0] sm:$0xff]
    %v69 = vld [vmem:[%s0 + $0xe8] sm:$0xff]
    %v70 = vld [vmem:[%s0 + $0xf0] sm:$0xff]
    %v71 = vld [vmem:[%s0 + $0xf8] sm:$0xf]
    %v72 = vld [vmem:[%s0 + $0xfc] sm:$0xff]
    %v73 = vld [vmem:[%s0 + $0x104] sm:$0xff]
    %v74 = vld [vmem:[%s0 + $0x10c] sm:$0xff]
    %v75 = vld [vmem:[%s0 + $0x114] sm:$0xf]
    %v76 = vld [vmem:[%s0 + $0x118] sm:$0xff]
    %v77 = vld [vmem:[%s0 + $0x120] sm:$0xff]
    %v78 = vld [vmem:[%s0 + $0x128] sm:$0xff]
    %v79 = vld [vmem:[%s0 + $0x130] sm:$0xf]
    %v80 = vld [vmem:[%s0 + $0x134] sm:$0xff]
    %v81 = vld [vmem:[%s0 + $0x13c] sm:$0xff]
    %v82 = vld [vmem:[%s0 + $0x144] sm:$0xff]
    %v83 = vld [vmem:[%s0 + $0x14c] sm:$0xf]
    %v84 = vld [vmem:[%s0 + $0x150] sm:$0xff]
    %v85 = vld [vmem:[%s0 + $0x158] sm:$0xff]
    %v86 = vld [vmem:[%s0 + $0x160] sm:$0xff]
    %v87 = vld [vmem:[%s0 + $0x168] sm:$0xf]
    %v88 = vld [vmem:[%s0 + $0x16c] sm:$0xff]
    %v89 = vld [vmem:[%s0 + $0x174] sm:$0xff]
    %v90 = vld [vmem:[%s0 + $0x17c] sm:$0xff]
    %v91 = vld [vmem:[%s0 + $0x184] sm:$0xf]
    %v92 = vld [vmem:[%s0 + $0x188] sm:$0xff]
    %v93 = vld [vmem:[%s0 + $0x190] sm:$0xff]
    %v94 = vld [vmem:[%s0 + $0x198] sm:$0xff]
    %v95 = vld [vmem:[%s0 + $0x1a0] sm:$0xf]
    %v96 = vld [vmem:[%s0 + $0x1a4] sm:$0xff]
    %v97 = vld [vmem:[%s0 + $0x1ac] sm:$0xff]
    %v98 = vld [vmem:[%s0 + $0x1b4] sm:$0xff]
    %v99 = vld [vmem:[%s0 + $0x1bc] sm:$0xf]
    %v100 = vld [vmem:[%s0 + $0x1c0] sm:$0xff]
    %v101 = vld [vmem:[%s0 + $0x1c8] sm:$0xff]
    %v102 = vld [vmem:[%s0 + $0x1d0] sm:$0xff]
    %v103 = vld [vmem:[%s0 + $0x1d8] sm:$0xf]
    %v104 = vld [vmem:[%s0 + $0x1dc] sm:$0xff]
    %v105 = vld [vmem:[%s0 + $0x1e4] sm:$0xff]
    %v106 = vld [vmem:[%s0 + $0x1ec] sm:$0xff]
    %v107 = vld [vmem:[%s0 + $0x1f4] sm:$0xf]
    %v108 = vld [vmem:[%s0 + $0x1f8] sm:$0xff]
    %v109 = vld [vmem:[%s0 + $0x200] sm:$0xff]
    %v110 = vld [vmem:[%s0 + $0x208] sm:$0xff]
    %v111 = vld [vmem:[%s0 + $0x210] sm:$0xf]
    %v112 = vld [vmem:[%s0 + $0x214] sm:$0xff]
    %v113 = vld [vmem:[%s0 + $0x21c] sm:$0xff]
    %v114 = vld [vmem:[%s0 + $0x224] sm:$0xff]
    %v115 = vld [vmem:[%s0 + $0x22c] sm:$0xf]
    %v116 = vld [vmem:[%s0 + $0x230] sm:$0xff]
    %v117 = vld [vmem:[%s0 + $0x238] sm:$0xff]
    %v118 = vld [vmem:[%s0 + $0x240] sm:$0xff]
    %v119 = vld [vmem:[%s0 + $0x248] sm:$0xf]
    %v120 = vld [vmem:[%s0 + $0x24c] sm:$0xff]
    %v121 = vld [vmem:[%s0 + $0x254] sm:$0xff]
    %v122 = vld [vmem:[%s0 + $0x25c] sm:$0xff]
    %v123 = vld [vmem:[%s0 + $0x264] sm:$0xf]
    %v124 = vld [vmem:[%s0 + $0x268] sm:$0xff]
    %v125 = vld [vmem:[%s0 + $0x270] sm:$0xff]
    %v126 = vld [vmem:[%s0 + $0x278] sm:$0xff]
    %v127 = vld [vmem:[%s0 + $0x280] sm:$0xf]
    %v128 = vld [vmem:[%s0 + $0x284] sm:$0xff]
    %v129 = vld [vmem:[%s0 + $0x28c] sm:$0xff]
    %v130 = vld [vmem:[%s0 + $0x294] sm:$0xff]
    %v131 = vld [vmem:[%s0 + $0x29c] sm:$0xf]
    %v132 = vld [vmem:[%s0 + $0x2a0] sm:$0xff]
    %v133 = vld [vmem:[%s0 + $0x2a8] sm:$0xff]
    %v134 = vld [vmem:[%s0 + $0x2b0] sm:$0xff]
    %v135 = vld [vmem:[%s0 + $0x2b8] sm:$0xf]
    %v136 = vld [vmem:[%s0 + $0x2bc] sm:$0xff]
    %v137 = vld [vmem:[%s0 + $0x2c4] sm:$0xff]
    %v138 = vld [vmem:[%s0 + $0x2cc] sm:$0xff]
    %v139 = vld [vmem:[%s0 + $0x2d4] sm:$0xf]
    %v140 = vld [vmem:[%s0 + $0x2d8] sm:$0xff]
    %v141 = vld [vmem:[%s0 + $0x2e0] sm:$0xff]
    %v142 = vld [vmem:[%s0 + $0x2e8] sm:$0xff]
    %v143 = vld [vmem:[%s0 + $0x2f0] sm:$0xf]
    %v144 = vld [vmem:[%s0 + $0x2f4] sm:$0xff]
    %v145 = vld [vmem:[%s0 + $0x2fc] sm:$0xff]
    %v146 = vld [vmem:[%s0 + $0x304] sm:$0xff]
    %v147 = vld [vmem:[%s0 + $0x30c] sm:$0xf]
    %v148 = vld [vmem:[%s0 + $0x310] sm:$0xff]
    %v149 = vld [vmem:[%s0 + $0x318] sm:$0xff]
    %v150 = vld [vmem:[%s0 + $0x320] sm:$0xff]
    %v151 = vld [vmem:[%s0 + $0x328] sm:$0xf]
    %v152 = vld [vmem:[%s0 + $0x32c] sm:$0xff]
    %v153 = vld [vmem:[%s0 + $0x334] sm:$0xff]
    %v154 = vld [vmem:[%s0 + $0x33c] sm:$0xff]
    %v155 = vld [vmem:[%s0 + $0x344] sm:$0xf]
    %v156 = vld [vmem:[%s0 + $0x348] sm:$0xff]
    %v157 = vld [vmem:[%s0 + $0x350] sm:$0xff]
    %v158 = vld [vmem:[%s0 + $0x358] sm:$0xff]
    %v159 = vld [vmem:[%s0 + $0x360] sm:$0xf]
    %v160 = vld [vmem:[%s0 + $0x364] sm:$0xff]
    %v161 = vld [vmem:[%s0 + $0x36c] sm:$0xff]
    %v162 = vld [vmem:[%s0 + $0x374] sm:$0xff]
    %v163 = vld [vmem:[%s0 + $0x37c] sm:$0xf]
    %v164 = vld [vmem:[%s2] sm:$0xff]
    %v165 = vld [vmem:[%s2 + $0x8] sm:$0xff]
    %167 = vset.pattern.permute.xlu0 0
    %168 = vperm.xlu0 %167, %v164
    %v169 = vpop.permute.xlu0 %168
    %172 = vset.pattern.permute.xlu0 0
    %173 = vperm.xlu0 %172, %v165
    %v174 = vpop.permute.xlu0 %173
    %v178 = vunpack.c.l.b16 %v34
    %v179 = vunpack.c.h.b16 %v34
    %v180 = vunpack.c.l.b16 %v35
    %v181 = vunpack.c.h.b16 %v35
    %v182 = vpack.c.b16 %v180, %v178
    %v183 = vpack.c.b16 %v181, %v179
    %v314 = vunpack.c.l.b16 %v36
    %v315 = vunpack.c.h.b16 %v36
    %v316 = vunpack.c.l.b16 %v37
    %v317 = vunpack.c.h.b16 %v37
    %v318 = vunpack.c.l.b16 %v38
    %v319 = vunpack.c.h.b16 %v38
    %v320 = vunpack.c.l.b16 %v39
    %v321 = vunpack.c.l.b16 %v40
    %v322 = vunpack.c.h.b16 %v40
    %v323 = vunpack.c.l.b16 %v41
    %v324 = vunpack.c.h.b16 %v41
    %v325 = vunpack.c.l.b16 %v42
    %v326 = vunpack.c.h.b16 %v42
    %v327 = vunpack.c.l.b16 %v43
    %v328 = vunpack.c.l.b16 %v44
    %v329 = vunpack.c.h.b16 %v44
    %v330 = vunpack.c.l.b16 %v45
    %v331 = vunpack.c.h.b16 %v45
    %v332 = vunpack.c.l.b16 %v46
    %v333 = vunpack.c.h.b16 %v46
    %v334 = vunpack.c.l.b16 %v47
    %v335 = vunpack.c.l.b16 %v48
    %v336 = vunpack.c.h.b16 %v48
    %v337 = vunpack.c.l.b16 %v49
    %v338 = vunpack.c.h.b16 %v49
    %v339 = vunpack.c.l.b16 %v50
    %v340 = vunpack.c.h.b16 %v50
    %v341 = vunpack.c.l.b16 %v51
    %v342 = vunpack.c.l.b16 %v52
    %v343 = vunpack.c.h.b16 %v52
    %v344 = vunpack.c.l.b16 %v53
    %v345 = vunpack.c.h.b16 %v53
    %v346 = vunpack.c.l.b16 %v54
    %v347 = vunpack.c.h.b16 %v54
    %v348 = vunpack.c.l.b16 %v55
    %v349 = vunpack.c.l.b16 %v56
    %v350 = vunpack.c.h.b16 %v56
    %v351 = vunpack.c.l.b16 %v57
    %v352 = vunpack.c.h.b16 %v57
    %v353 = vunpack.c.l.b16 %v58
    %v354 = vunpack.c.h.b16 %v58
    %v355 = vunpack.c.l.b16 %v59
    %v356 = vunpack.c.l.b16 %v60
    %v357 = vunpack.c.h.b16 %v60
    %v358 = vunpack.c.l.b16 %v61
    %v359 = vunpack.c.h.b16 %v61
    %v360 = vunpack.c.l.b16 %v62
    %v361 = vunpack.c.h.b16 %v62
    %v362 = vunpack.c.l.b16 %v63
    %v363 = vunpack.c.l.b16 %v64
    %v364 = vunpack.c.h.b16 %v64
    %v365 = vunpack.c.l.b16 %v65
    %v366 = vunpack.c.h.b16 %v65
    %v367 = vunpack.c.l.b16 %v66
    %v368 = vunpack.c.h.b16 %v66
    %v369 = vunpack.c.l.b16 %v67
    %v370 = vunpack.c.l.b16 %v68
    %v371 = vunpack.c.h.b16 %v68
    %v372 = vunpack.c.l.b16 %v69
    %v373 = vunpack.c.h.b16 %v69
    %v374 = vunpack.c.l.b16 %v70
    %v375 = vunpack.c.h.b16 %v70
    %v376 = vunpack.c.l.b16 %v71
    %v377 = vunpack.c.l.b16 %v72
    %v378 = vunpack.c.h.b16 %v72
    %v379 = vunpack.c.l.b16 %v73
    %v380 = vunpack.c.h.b16 %v73
    %v381 = vunpack.c.l.b16 %v74
    %v382 = vunpack.c.h.b16 %v74
    %v383 = vunpack.c.l.b16 %v75
    %v384 = vunpack.c.l.b16 %v76
    %v385 = vunpack.c.h.b16 %v76
    %v386 = vunpack.c.l.b16 %v77
    %v387 = vunpack.c.h.b16 %v77
    %v388 = vunpack.c.l.b16 %v78
    %v389 = vunpack.c.h.b16 %v78
    %v390 = vunpack.c.l.b16 %v79
    %v391 = vunpack.c.l.b16 %v80
    %v392 = vunpack.c.h.b16 %v80
    %v393 = vunpack.c.l.b16 %v81
    %v394 = vunpack.c.h.b16 %v81
    %v395 = vunpack.c.l.b16 %v82
    %v396 = vunpack.c.h.b16 %v82
    %v397 = vunpack.c.l.b16 %v83
    %v398 = vunpack.c.l.b16 %v84
    %v399 = vunpack.c.h.b16 %v84
    %v400 = vunpack.c.l.b16 %v85
    %v401 = vunpack.c.h.b16 %v85
    %v402 = vunpack.c.l.b16 %v86
    %v403 = vunpack.c.h.b16 %v86
    %v404 = vunpack.c.l.b16 %v87
    %v405 = vunpack.c.l.b16 %v88
    %v406 = vunpack.c.h.b16 %v88
    %v407 = vunpack.c.l.b16 %v89
    %v408 = vunpack.c.h.b16 %v89
    %v409 = vunpack.c.l.b16 %v90
    %v410 = vunpack.c.h.b16 %v90
    %v411 = vunpack.c.l.b16 %v91
    %v412 = vunpack.c.l.b16 %v92
    %v413 = vunpack.c.h.b16 %v92
    %v414 = vunpack.c.l.b16 %v93
    %v415 = vunpack.c.h.b16 %v93
    %v416 = vunpack.c.l.b16 %v94
    %v417 = vunpack.c.h.b16 %v94
    %v418 = vunpack.c.l.b16 %v95
    %v419 = vunpack.c.l.b16 %v96
    %v420 = vunpack.c.h.b16 %v96
    %v421 = vunpack.c.l.b16 %v97
    %v422 = vunpack.c.h.b16 %v97
    %v423 = vunpack.c.l.b16 %v98
    %v424 = vunpack.c.h.b16 %v98
    %v425 = vunpack.c.l.b16 %v99
    %v426 = vunpack.c.l.b16 %v100
    %v427 = vunpack.c.h.b16 %v100
    %v428 = vunpack.c.l.b16 %v101
    %v429 = vunpack.c.h.b16 %v101
    %v430 = vunpack.c.l.b16 %v102
    %v431 = vunpack.c.h.b16 %v102
    %v432 = vunpack.c.l.b16 %v103
    %v433 = vunpack.c.l.b16 %v104
    %v434 = vunpack.c.h.b16 %v104
    %v435 = vunpack.c.l.b16 %v105
    %v436 = vunpack.c.h.b16 %v105
    %v437 = vunpack.c.l.b16 %v106
    %v438 = vunpack.c.h.b16 %v106
    %v439 = vunpack.c.l.b16 %v107
    %v440 = vunpack.c.l.b16 %v108
    %v441 = vunpack.c.h.b16 %v108
    %v442 = vunpack.c.l.b16 %v109
    %v443 = vunpack.c.h.b16 %v109
    %v444 = vunpack.c.l.b16 %v110
    %v445 = vunpack.c.h.b16 %v110
    %v446 = vunpack.c.l.b16 %v111
    %v447 = vunpack.c.l.b16 %v112
    %v448 = vunpack.c.h.b16 %v112
    %v449 = vunpack.c.l.b16 %v113
    %v450 = vunpack.c.h.b16 %v113
    %v451 = vunpack.c.l.b16 %v114
    %v452 = vunpack.c.h.b16 %v114
    %v453 = vunpack.c.l.b16 %v115
    %v454 = vunpack.c.l.b16 %v116
    %v455 = vunpack.c.h.b16 %v116
    %v456 = vunpack.c.l.b16 %v117
    %v457 = vunpack.c.h.b16 %v117
    %v458 = vunpack.c.l.b16 %v118
    %v459 = vunpack.c.h.b16 %v118
    %v460 = vunpack.c.l.b16 %v119
    %v461 = vunpack.c.l.b16 %v120
    %v462 = vunpack.c.h.b16 %v120
    %v463 = vunpack.c.l.b16 %v121
    %v464 = vunpack.c.h.b16 %v121
    %v465 = vunpack.c.l.b16 %v122
    %v466 = vunpack.c.h.b16 %v122
    %v467 = vunpack.c.l.b16 %v123
    %v468 = vunpack.c.l.b16 %v124
    %v469 = vunpack.c.h.b16 %v124
    %v470 = vunpack.c.l.b16 %v125
    %v471 = vunpack.c.h.b16 %v125
    %v472 = vunpack.c.l.b16 %v126
    %v473 = vunpack.c.h.b16 %v126
    %v474 = vunpack.c.l.b16 %v127
    %v475 = vunpack.c.l.b16 %v128
    %v476 = vunpack.c.h.b16 %v128
    %v477 = vunpack.c.l.b16 %v129
    %v478 = vunpack.c.h.b16 %v129
    %v479 = vunpack.c.l.b16 %v130
    %v480 = vunpack.c.h.b16 %v130
    %v481 = vunpack.c.l.b16 %v131
    %v482 = vunpack.c.l.b16 %v132
    %v483 = vunpack.c.h.b16 %v132
    %v484 = vunpack.c.l.b16 %v133
    %v485 = vunpack.c.h.b16 %v133
    %v486 = vunpack.c.l.b16 %v134
    %v487 = vunpack.c.h.b16 %v134
    %v488 = vunpack.c.l.b16 %v135
    %v489 = vunpack.c.l.b16 %v136
    %v490 = vunpack.c.h.b16 %v136
    %v491 = vunpack.c.l.b16 %v137
    %v492 = vunpack.c.h.b16 %v137
    %v493 = vunpack.c.l.b16 %v138
    %v494 = vunpack.c.h.b16 %v138
    %v495 = vunpack.c.l.b16 %v139
    %v496 = vunpack.c.l.b16 %v140
    %v497 = vunpack.c.h.b16 %v140
    %v498 = vunpack.c.l.b16 %v141
    %v499 = vunpack.c.h.b16 %v141
    %v500 = vunpack.c.l.b16 %v142
    %v501 = vunpack.c.h.b16 %v142
    %v502 = vunpack.c.l.b16 %v143
    %v503 = vunpack.c.l.b16 %v144
    %v504 = vunpack.c.h.b16 %v144
    %v505 = vunpack.c.l.b16 %v145
    %v506 = vunpack.c.h.b16 %v145
    %v507 = vunpack.c.l.b16 %v146
    %v508 = vunpack.c.h.b16 %v146
    %v509 = vunpack.c.l.b16 %v147
    %v510 = vunpack.c.l.b16 %v148
    %v511 = vunpack.c.h.b16 %v148
    %v512 = vunpack.c.l.b16 %v149
    %v513 = vunpack.c.h.b16 %v149
    %v514 = vunpack.c.l.b16 %v150
    %v515 = vunpack.c.h.b16 %v150
    %v516 = vunpack.c.l.b16 %v151
    %v517 = vunpack.c.l.b16 %v152
    %v518 = vunpack.c.h.b16 %v152
    %v519 = vunpack.c.l.b16 %v153
    %v520 = vunpack.c.h.b16 %v153
    %v521 = vunpack.c.l.b16 %v154
    %v522 = vunpack.c.h.b16 %v154
    %v523 = vunpack.c.l.b16 %v155
    %v524 = vunpack.c.l.b16 %v156
    %v525 = vunpack.c.h.b16 %v156
    %v526 = vunpack.c.l.b16 %v157
    %v527 = vunpack.c.h.b16 %v157
    %v528 = vunpack.c.l.b16 %v158
    %v529 = vunpack.c.h.b16 %v158
    %v530 = vunpack.c.l.b16 %v159
    %v531 = vunpack.c.l.b16 %v160
    %v532 = vunpack.c.h.b16 %v160
    %v533 = vunpack.c.l.b16 %v161
    %v534 = vunpack.c.h.b16 %v161
    %v535 = vunpack.c.l.b16 %v162
    %v536 = vunpack.c.h.b16 %v162
    %v537 = vunpack.c.l.b16 %v163
    %v538 = vpack.c.b16 %v321, %v314
    %v539 = vpack.c.b16 %v322, %v315
    %v540 = vpack.c.b16 %v323, %v316
    %v541 = vpack.c.b16 %v324, %v317
    %v542 = vpack.c.b16 %v325, %v318
    %v543 = vpack.c.b16 %v326, %v319
    %v544 = vpack.c.b16 %v327, %v320
    %v545 = vpack.c.b16 %v335, %v328
    %v546 = vpack.c.b16 %v336, %v329
    %v547 = vpack.c.b16 %v337, %v330
    %v548 = vpack.c.b16 %v338, %v331
    %v549 = vpack.c.b16 %v339, %v332
    %v550 = vpack.c.b16 %v340, %v333
    %v551 = vpack.c.b16 %v341, %v334
    %v552 = vpack.c.b16 %v349, %v342
    %v553 = vpack.c.b16 %v350, %v343
    %v554 = vpack.c.b16 %v351, %v344
    %v555 = vpack.c.b16 %v352, %v345
    %v556 = vpack.c.b16 %v353, %v346
    %v557 = vpack.c.b16 %v354, %v347
    %v558 = vpack.c.b16 %v355, %v348
    %v559 = vpack.c.b16 %v363, %v356
    %v560 = vpack.c.b16 %v364, %v357
    %v561 = vpack.c.b16 %v365, %v358
    %v562 = vpack.c.b16 %v366, %v359
    %v563 = vpack.c.b16 %v367, %v360
    %v564 = vpack.c.b16 %v368, %v361
    %v565 = vpack.c.b16 %v369, %v362
    %v566 = vpack.c.b16 %v377, %v370
    %v567 = vpack.c.b16 %v378, %v371
    %v568 = vpack.c.b16 %v379, %v372
    %v569 = vpack.c.b16 %v380, %v373
    %v570 = vpack.c.b16 %v381, %v374
    %v571 = vpack.c.b16 %v382, %v375
    %v572 = vpack.c.b16 %v383, %v376
    %v573 = vpack.c.b16 %v391, %v384
    %v574 = vpack.c.b16 %v392, %v385
    %v575 = vpack.c.b16 %v393, %v386
    %v576 = vpack.c.b16 %v394, %v387
    %v577 = vpack.c.b16 %v395, %v388
    %v578 = vpack.c.b16 %v396, %v389
    %v579 = vpack.c.b16 %v397, %v390
    %v580 = vpack.c.b16 %v405, %v398
    %v581 = vpack.c.b16 %v406, %v399
    %v582 = vpack.c.b16 %v407, %v400
    %v583 = vpack.c.b16 %v408, %v401
    %v584 = vpack.c.b16 %v409, %v402
    %v585 = vpack.c.b16 %v410, %v403
    %v586 = vpack.c.b16 %v411, %v404
    %v587 = vpack.c.b16 %v419, %v412
    %v588 = vpack.c.b16 %v420, %v413
    %v589 = vpack.c.b16 %v421, %v414
    %v590 = vpack.c.b16 %v422, %v415
    %v591 = vpack.c.b16 %v423, %v416
    %v592 = vpack.c.b16 %v424, %v417
    %v593 = vpack.c.b16 %v425, %v418
    %v594 = vpack.c.b16 %v433, %v426
    %v595 = vpack.c.b16 %v434, %v427
    %v596 = vpack.c.b16 %v435, %v428
    %v597 = vpack.c.b16 %v436, %v429
    %v598 = vpack.c.b16 %v437, %v430
    %v599 = vpack.c.b16 %v438, %v431
    %v600 = vpack.c.b16 %v439, %v432
    %v601 = vpack.c.b16 %v447, %v440
    %v602 = vpack.c.b16 %v448, %v441
    %v603 = vpack.c.b16 %v449, %v442
    %v604 = vpack.c.b16 %v450, %v443
    %v605 = vpack.c.b16 %v451, %v444
    %v606 = vpack.c.b16 %v452, %v445
    %v607 = vpack.c.b16 %v453, %v446
    %v608 = vpack.c.b16 %v461, %v454
    %v609 = vpack.c.b16 %v462, %v455
    %v610 = vpack.c.b16 %v463, %v456
    %v611 = vpack.c.b16 %v464, %v457
    %v612 = vpack.c.b16 %v465, %v458
    %v613 = vpack.c.b16 %v466, %v459
    %v614 = vpack.c.b16 %v467, %v460
    %v615 = vpack.c.b16 %v475, %v468
    %v616 = vpack.c.b16 %v476, %v469
    %v617 = vpack.c.b16 %v477, %v470
    %v618 = vpack.c.b16 %v478, %v471
    %v619 = vpack.c.b16 %v479, %v472
    %v620 = vpack.c.b16 %v480, %v473
    %v621 = vpack.c.b16 %v481, %v474
    %v622 = vpack.c.b16 %v489, %v482
    %v623 = vpack.c.b16 %v490, %v483
    %v624 = vpack.c.b16 %v491, %v484
    %v625 = vpack.c.b16 %v492, %v485
    %v626 = vpack.c.b16 %v493, %v486
    %v627 = vpack.c.b16 %v494, %v487
    %v628 = vpack.c.b16 %v495, %v488
    %v629 = vpack.c.b16 %v503, %v496
    %v630 = vpack.c.b16 %v504, %v497
    %v631 = vpack.c.b16 %v505, %v498
    %v632 = vpack.c.b16 %v506, %v499
    %v633 = vpack.c.b16 %v507, %v500
    %v634 = vpack.c.b16 %v508, %v501
    %v635 = vpack.c.b16 %v509, %v502
    %v636 = vpack.c.b16 %v517, %v510
    %v637 = vpack.c.b16 %v518, %v511
    %v638 = vpack.c.b16 %v519, %v512
    %v639 = vpack.c.b16 %v520, %v513
    %v640 = vpack.c.b16 %v521, %v514
    %v641 = vpack.c.b16 %v522, %v515
    %v642 = vpack.c.b16 %v523, %v516
    %v643 = vpack.c.b16 %v531, %v524
    %v644 = vpack.c.b16 %v532, %v525
    %v645 = vpack.c.b16 %v533, %v526
    %v646 = vpack.c.b16 %v534, %v527
    %v647 = vpack.c.b16 %v535, %v528
    %v648 = vpack.c.b16 %v536, %v529
    %v649 = vpack.c.b16 %v537, %v530
    %762 = vmatprep.subr.bf16.mxu0 %v588
    %763 = vmatpush1.bf16.msra.mxu0 %v587
    %764 = vmatprep.subr.bf16.mxu0 %v581
    %765 = vmatpush1.bf16.msra.mxu0 %v580
    %766 = vmatprep.subr.bf16.mxu0 %v574
    %767 = vmatpush1.bf16.msra.mxu0 %v573
    %768 = vmatprep.subr.bf16.mxu0 %v567
    %769 = vmatpush1.bf16.msra.mxu0 %v566
    %770 = vmatprep.subr.bf16.mxu0 %v560
    %771 = vmatpush1.bf16.msra.mxu0 %v559
    %772 = vmatprep.subr.bf16.mxu0 %v553
    %773 = vmatpush1.bf16.msra.mxu0 %v552
    %774 = vmatprep.subr.bf16.mxu0 %v546
    %775 = vmatpush1.bf16.msra.mxu0 %v545
    %776 = vmatprep.subr.bf16.mxu0 %v539
    %777 = vmatpush1.bf16.msra.mxu0 %v538
    %778 = vmatprep.subr.bf16.mxu0 %v644
    %779 = vmatpush2.bf16.msra.mxu0 %v643
    %780 = vmatprep.subr.bf16.mxu0 %v637
    %781 = vmatpush2.bf16.msra.mxu0 %v636
    %782 = vmatprep.subr.bf16.mxu0 %v630
    %783 = vmatpush2.bf16.msra.mxu0 %v629
    %784 = vmatprep.subr.bf16.mxu0 %v623
    %785 = vmatpush2.bf16.msra.mxu0 %v622
    %786 = vmatprep.subr.bf16.mxu0 %v616
    %787 = vmatpush2.bf16.msra.mxu0 %v615
    %788 = vmatprep.subr.bf16.mxu0 %v609
    %789 = vmatpush2.bf16.msra.mxu0 %v608
    %790 = vmatprep.subr.bf16.mxu0 %v602
    %791 = vmatpush2.bf16.msra.mxu0 %v601
    %792 = vmatprep.subr.bf16.mxu0 %v595
    %793 = vmatpush2.bf16.msra.mxu0 %v594
    %794 = vmatprep.mubr.bf16.mxu0 %v183
    %795 = vmatmul.mubr.bf16.gmra.mxu0 %v182
    %v796 = vpop.f32.mrf.mxu0
    %v797 = vadd.f32 %v169, %v796
    %v798 = vpop.f32.mrf.mxu0
    %v799 = vadd.f32 %v169, %v798
    %v800 = vpop.f32.mrf.mxu0
    %v801 = vadd.f32 %v174, %v800
    %v802 = vpop.f32.mrf.mxu0
    %v803 = vadd.f32 %v174, %v802
    %804 = vdwg.mxu0
    %805 = vmatprep.subr.bf16.mxu0 %v590
    %806 = vmatpush1.bf16.msra.mxu0 %v589
    %807 = vmatprep.subr.bf16.mxu0 %v583
    %808 = vmatpush1.bf16.msra.mxu0 %v582
    %809 = vmatprep.subr.bf16.mxu0 %v576
    %810 = vmatpush1.bf16.msra.mxu0 %v575
    %811 = vmatprep.subr.bf16.mxu0 %v569
    %812 = vmatpush1.bf16.msra.mxu0 %v568
    %813 = vmatprep.subr.bf16.mxu0 %v562
    %814 = vmatpush1.bf16.msra.mxu0 %v561
    %815 = vmatprep.subr.bf16.mxu0 %v555
    %816 = vmatpush1.bf16.msra.mxu0 %v554
    %817 = vmatprep.subr.bf16.mxu0 %v548
    %818 = vmatpush1.bf16.msra.mxu0 %v547
    %819 = vmatprep.subr.bf16.mxu0 %v541
    %820 = vmatpush1.bf16.msra.mxu0 %v540
    %821 = vmatprep.subr.bf16.mxu0 %v646
    %822 = vmatpush2.bf16.msra.mxu0 %v645
    %823 = vmatprep.subr.bf16.mxu0 %v639
    %824 = vmatpush2.bf16.msra.mxu0 %v638
    %825 = vmatprep.subr.bf16.mxu0 %v632
    %826 = vmatpush2.bf16.msra.mxu0 %v631
    %827 = vmatprep.subr.bf16.mxu0 %v625
    %828 = vmatpush2.bf16.msra.mxu0 %v624
    %829 = vmatprep.subr.bf16.mxu0 %v618
    %830 = vmatpush2.bf16.msra.mxu0 %v617
    %831 = vmatprep.subr.bf16.mxu0 %v611
    %832 = vmatpush2.bf16.msra.mxu0 %v610
    %833 = vmatprep.subr.bf16.mxu0 %v604
    %834 = vmatpush2.bf16.msra.mxu0 %v603
    %835 = vmatprep.subr.bf16.mxu0 %v597
    %836 = vmatpush2.bf16.msra.mxu0 %v596
    %837 = vmatprep.mubr.bf16.mxu0 %v183
    %838 = vmatmul.mubr.bf16.gmra.mxu0 %v182
    %v839 = vpop.f32.mrf.mxu0
    %v840 = vadd.f32 %v169, %v839
    %v841 = vpop.f32.mrf.mxu0
    %v842 = vadd.f32 %v169, %v841
    %v843 = vpop.f32.mrf.mxu0
    %v844 = vadd.f32 %v174, %v843
    %v845 = vpop.f32.mrf.mxu0
    %v846 = vadd.f32 %v174, %v845
    %847 = vdwg.mxu0
    %848 = vmatprep.subr.bf16.mxu0 %v592
    %849 = vmatpush1.bf16.msra.mxu0 %v591
    %850 = vmatprep.subr.bf16.mxu0 %v585
    %851 = vmatpush1.bf16.msra.mxu0 %v584
    %852 = vmatprep.subr.bf16.mxu0 %v578
    %853 = vmatpush1.bf16.msra.mxu0 %v577
    %854 = vmatprep.subr.bf16.mxu0 %v571
    %855 = vmatpush1.bf16.msra.mxu0 %v570
    %856 = vmatprep.subr.bf16.mxu0 %v564
    %857 = vmatpush1.bf16.msra.mxu0 %v563
    %858 = vmatprep.subr.bf16.mxu0 %v557
    %859 = vmatpush1.bf16.msra.mxu0 %v556
    %860 = vmatprep.subr.bf16.mxu0 %v550
    %861 = vmatpush1.bf16.msra.mxu0 %v549
    %862 = vmatprep.subr.bf16.mxu0 %v543
    %863 = vmatpush1.bf16.msra.mxu0 %v542
    %864 = vmatprep.subr.bf16.mxu0 %v648
    %865 = vmatpush2.bf16.msra.mxu0 %v647
    %866 = vmatprep.subr.bf16.mxu0 %v641
    %867 = vmatpush2.bf16.msra.mxu0 %v640
    %868 = vmatprep.subr.bf16.mxu0 %v634
    %869 = vmatpush2.bf16.msra.mxu0 %v633
    %870 = vmatprep.subr.bf16.mxu0 %v627
    %871 = vmatpush2.bf16.msra.mxu0 %v626
    %872 = vmatprep.subr.bf16.mxu0 %v620
    %873 = vmatpush2.bf16.msra.mxu0 %v619
    %874 = vmatprep.subr.bf16.mxu0 %v613
    %875 = vmatpush2.bf16.msra.mxu0 %v612
    %876 = vmatprep.subr.bf16.mxu0 %v606
    %877 = vmatpush2.bf16.msra.mxu0 %v605
    %878 = vmatprep.subr.bf16.mxu0 %v599
    %879 = vmatpush2.bf16.msra.mxu0 %v598
    %880 = vmatprep.mubr.bf16.mxu0 %v183
    %881 = vmatmul.mubr.bf16.gmra.mxu0 %v182
    %v882 = vpop.f32.mrf.mxu0
    %v883 = vadd.f32 %v169, %v882
    %v884 = vpop.f32.mrf.mxu0
    %v885 = vadd.f32 %v169, %v884
    %v886 = vpop.f32.mrf.mxu0
    %v887 = vadd.f32 %v174, %v886
    %v888 = vpop.f32.mrf.mxu0
    %v889 = vadd.f32 %v174, %v888
    %890 = vdwg.mxu0
    %891 = vmatprep.subr.bf16.mxu0 0
    %892 = vmatpush1.bf16.msra.mxu0 %v593
    %893 = vmatprep.subr.bf16.mxu0 0
    %894 = vmatpush1.bf16.msra.mxu0 %v586
    %895 = vmatprep.subr.bf16.mxu0 0
    %896 = vmatpush1.bf16.msra.mxu0 %v579
    %897 = vmatprep.subr.bf16.mxu0 0
    %898 = vmatpush1.bf16.msra.mxu0 %v572
    %899 = vmatprep.subr.bf16.mxu0 0
    %900 = vmatpush1.bf16.msra.mxu0 %v565
    %901 = vmatprep.subr.bf16.mxu0 0
    %902 = vmatpush1.bf16.msra.mxu0 %v558
    %903 = vmatprep.subr.bf16.mxu0 0
    %904 = vmatpush1.bf16.msra.mxu0 %v551
    %905 = vmatprep.subr.bf16.mxu0 0
    %906 = vmatpush1.bf16.msra.mxu0 %v544
    %907 = vmatprep.subr.bf16.mxu0 0
    %908 = vmatpush2.bf16.msra.mxu0 %v649
    %909 = vmatprep.subr.bf16.mxu0 0
    %910 = vmatpush2.bf16.msra.mxu0 %v642
    %911 = vmatprep.subr.bf16.mxu0 0
    %912 = vmatpush2.bf16.msra.mxu0 %v635
    %913 = vmatprep.subr.bf16.mxu0 0
    %914 = vmatpush2.bf16.msra.mxu0 %v628
    %915 = vmatprep.subr.bf16.mxu0 0
    %916 = vmatpush2.bf16.msra.mxu0 %v621
    %917 = vmatprep.subr.bf16.mxu0 0
    %918 = vmatpush2.bf16.msra.mxu0 %v614
    %919 = vmatprep.subr.bf16.mxu0 0
    %920 = vmatpush2.bf16.msra.mxu0 %v607
    %921 = vmatprep.subr.bf16.mxu0 0
    %922 = vmatpush2.bf16.msra.mxu0 %v600
    %923 = vmatprep.mubr.bf16.mxu0 %v183
    %924 = vmatmul.mubr.bf16.gmra.mxu0 %v182
    %v925 = vpop.f32.mrf.mxu0
    %v926 = vadd.f32 %v169, %v925
    %v927 = vpop.f32.mrf.mxu0
    %v928 = vpop.f32.mrf.mxu0
    %v929 = vadd.f32 %v174, %v928
    %v930 = vpop.f32.mrf.mxu0
    %931 = vdwg.mxu0
    %v932 = vmax.f32 %v797, 0.0
    %v933 = vmax.f32 %v799, 0.0
    %v934 = vmax.f32 %v840, 0.0
    %v935 = vmax.f32 %v842, 0.0
    %v936 = vmax.f32 %v883, 0.0
    %v937 = vmax.f32 %v885, 0.0
    %v938 = vmax.f32 %v926, 0.0
    %v939 = vmax.f32 %v801, 0.0
    %v940 = vmax.f32 %v803, 0.0
    %v941 = vmax.f32 %v844, 0.0
    %v942 = vmax.f32 %v846, 0.0
    %v943 = vmax.f32 %v887, 0.0
    %v944 = vmax.f32 %v889, 0.0
    %v945 = vmax.f32 %v929, 0.0
    %v946 = vpack.c.bf16 %v939, %v932
    %v947 = vpack.c.bf16 %v940, %v933
    %v948 = vpack.c.bf16 %v941, %v934
    %v949 = vpack.c.bf16 %v942, %v935
    %v950 = vpack.c.bf16 %v943, %v936
    %v951 = vpack.c.bf16 %v944, %v937
    %v952 = vpack.c.bf16 %v945, %v938
    %v960 = vunpack.c.l.b16 %v946
    %v961 = vunpack.c.l.b16 %v947
    %v962 = vunpack.c.l.b16 %v948
    %v963 = vunpack.c.l.b16 %v949
    %v964 = vunpack.c.l.b16 %v950
    %v965 = vunpack.c.l.b16 %v951
    %v966 = vunpack.c.l.b16 %v952
    %v967 = vunpack.c.h.b16 %v946
    %v968 = vunpack.c.h.b16 %v947
    %v969 = vunpack.c.h.b16 %v948
    %v970 = vunpack.c.h.b16 %v949
    %v971 = vunpack.c.h.b16 %v950
    %v972 = vunpack.c.h.b16 %v951
    %v973 = vunpack.c.h.b16 %v952
    %v974 = vpack.c.b16 %v961, %v960
    %v975 = vpack.c.b16 %v963, %v962
    %v976 = vpack.c.b16 %v965, %v964
    %v977 = vpack.c.b16 %v966, %v966
    %v978 = vpack.c.b16 %v968, %v967
    %v979 = vpack.c.b16 %v970, %v969
    %v980 = vpack.c.b16 %v972, %v971
    %v981 = vpack.c.b16 %v973, %v973
    %990 = vst [vmem:[#allocation2] sm:$0xff] %v974
    %991 = vst [vmem:[#allocation2 + $0x8] sm:$0xff] %v975
    %992 = vst [vmem:[#allocation2 + $0x10] sm:$0xff] %v976
    %993 = vst [vmem:[#allocation2 + $0x18] sm:$0xf] %v977
    %994 = vst [vmem:[#allocation2 + $0x1c] sm:$0xff] %v978
    %995 = vst [vmem:[#allocation2 + $0x24] sm:$0xff] %v979
    %996 = vst [vmem:[#allocation2 + $0x2c] sm:$0xff] %v980
    %997 = vst [vmem:[#allocation2 + $0x34] sm:$0xf] %v981
    %998 = vst [vmem:[#allocation3] sm:$0xff] 0
    %999 = vst [vmem:[#allocation3 + $0x8] sm:$0xff] 0
    %1000 = vst [vmem:[#allocation3 + $0x10] sm:$0xff] 0
    %1001 = vst [vmem:[#allocation3 + $0x18] sm:$0xff] 0
    %1002 = vst [vmem:[#allocation3 + $0x20] sm:$0xff] 0
    %1003 = vst [vmem:[#allocation3 + $0x28] sm:$0xff] 0
    %1004 = vst [vmem:[#allocation3 + $0x30] sm:$0xff] 0
    %1005 = vst [vmem:[#allocation3 + $0x38] sm:$0xff] 0
    %1006 = vst [vmem:[#allocation3 + $0x40] sm:$0xff] 0
    %1007 = vst [vmem:[#allocation3 + $0x48] sm:$0xff] 0
    %1008 = vst [vmem:[#allocation3 + $0x50] sm:$0xff] 0
    %1009 = vst [vmem:[#allocation3 + $0x58] sm:$0xff] 0
    %1010 = vst [vmem:[#allocation3 + $0x60] sm:$0xff] 0
    %1011 = vst [vmem:[#allocation3 + $0x68] sm:$0xff] 0
    %1012 = vst [vmem:[#allocation3 + $0x70] sm:$0xff] 0
    %1013 = vst [vmem:[#allocation3 + $0x78] sm:$0xff] 0
    %1014 = vst [vmem:[#allocation3 + $0x80] sm:$0xff] 0
    %1015 = vst [vmem:[#allocation3 + $0x88] sm:$0xff] 0
    %1016 = vst [vmem:[#allocation3 + $0x90] sm:$0xff] 0
    %1017 = vst [vmem:[#allocation3 + $0x98] sm:$0xff] 0
    %1018 = vst [vmem:[#allocation3 + $0xa0] sm:$0xff] 0
    %1019 = vst [vmem:[#allocation3 + $0xa8] sm:$0xff] 0
    %1020 = vst [vmem:[#allocation3 + $0xb0] sm:$0xff] 0
    %1021 = vst [vmem:[#allocation3 + $0xb8] sm:$0xff] 0
    %1022 = vst [vmem:[#allocation3 + $0xc0] sm:$0xff] 0
    %1023 = vst [vmem:[#allocation3 + $0xc8] sm:$0xff] 0
    %1024 = vst [vmem:[#allocation3 + $0xd0] sm:$0xff] 0
    %1025 = vst [vmem:[#allocation3 + $0xd8] sm:$0xff] 0
    %1026 = vst [vmem:[#allocation3 + $0xe0] sm:$0xff] 0
    %1027 = vst [vmem:[#allocation3 + $0xe8] sm:$0xff] 0
    %1028 = vst [vmem:[#allocation3 + $0xf0] sm:$0xff] 0
    %1029 = vst [vmem:[#allocation3 + $0xf8] sm:$0xff] 0
    %v1030 = vld [vmem:[#allocation2] sm:$0xf]
    %v1031 = vld [vmem:[#allocation2 + $0x1c] sm:$0xf]
    %vm1032 = vcmask 814080
    %1033 = vst.msk [vmem:[#allocation3] sm:$0xf] %vm1032, %v1030
    %1034 = vst.msk [vmem:[#allocation3 + $0x8] sm:$0xf] %vm1032, %v1031
    %v1035 = vld [vmem:[#allocation2 + $0xc] sm:$0xf]
    %v1036 = vld [vmem:[#allocation2 + $0x28] sm:$0xf]
    %1039 = vrot.lane.b32.xlu0 %v1035, 84
    %v1040 = vpop.permute.xlu0 %1039
    %1041 = vrot.lane.b32.xlu0 %v1036, 84
    %v1042 = vpop.permute.xlu0 %1041
    %v1043 = vrot.slane %v1040, 4
    %v1044 = vrot.slane %v1042, 4
    %vm1045 = vcmask 687104
    %v1046 = vsel %vm1045, %v1043, %v1040
    %v1047 = vsel %vm1045, %v1044, %v1042
    %vm1050 = vcmask 1044256
    %vm1051 = vcmask 588804
    %vm1052 = vmor %vm1051, %vm1050
    %1053 = vst.msk [vmem:[#allocation3] sm:$0xff] %vm1052, %v1046
    %1054 = vst.msk [vmem:[#allocation3 + $0x8] sm:$0xff] %vm1052, %v1047
    %v1055 = vld [vmem:[#allocation2] sm:$0xff]
    %v1056 = vld [vmem:[#allocation2 + $0x1c] sm:$0xff]
    %1059 = vrot.lane.b32.xlu0 %v1055, 28
    %v1060 = vpop.permute.xlu0 %1059
    %1061 = vrot.lane.b32.xlu0 %v1056, 28
    %v1062 = vpop.permute.xlu0 %1061
    %v1063 = vrot.slane %v1060, 4
    %v1064 = vrot.slane %v1062, 4
    %vm1065 = vcmask 228352
    %v1066 = vsel %vm1065, %v1060, %v1063
    %v1067 = vsel %vm1065, %v1062, %v1064
    %1070 = vst.msk [vmem:[#allocation3 + $0x10] sm:$0xf] %vm1032, %v1066
    %1071 = vst.msk [vmem:[#allocation3 + $0x18] sm:$0xf] %vm1032, %v1067
    %v1072 = vld [vmem:[#allocation2 + $0xc] sm:$0xff]
    %v1073 = vld [vmem:[#allocation2 + $0x28] sm:$0xff]
    %1076 = vrot.lane.b32.xlu0 %v1072, 112
    %v1077 = vpop.permute.xlu0 %1076
    %1078 = vrot.lane.b32.xlu0 %v1073, 112
    %v1079 = vpop.permute.xlu0 %1078
    %v1080 = vrot.slane %v1077, 4
    %v1081 = vrot.slane %v1079, 4
    %vm1082 = vcmask 916480
    %v1083 = vsel %vm1082, %v1077, %v1080
    %v1084 = vsel %vm1082, %v1079, %v1081
    %1087 = vst.msk [vmem:[#allocation3 + $0x10] sm:$0xff] %vm1052, %v1083
    %1088 = vst.msk [vmem:[#allocation3 + $0x18] sm:$0xff] %vm1052, %v1084
    %v1089 = vld [vmem:[#allocation2] sm:$0xf]
    %v1090 = vld [vmem:[#allocation2 + $0x1c] sm:$0xf]
    %1093 = vrot.lane.b32.xlu0 %v1089, 127
    %v1094 = vpop.permute.xlu0 %1093
    %1095 = vrot.lane.b32.xlu0 %v1090, 127
    %v1096 = vpop.permute.xlu0 %1095
    %1099 = vst.msk [vmem:[#allocation3 + $0x20] sm:$0xf] %vm1032, %v1094
    %1100 = vst.msk [vmem:[#allocation3 + $0x28] sm:$0xf] %vm1032, %v1096
    %v1101 = vld [vmem:[#allocation2 + $0xc] sm:$0xf]
    %v1102 = vld [vmem:[#allocation2 + $0x28] sm:$0xf]
    %1105 = vrot.lane.b32.xlu0 %v1101, 83
    %v1106 = vpop.permute.xlu0 %1105
    %1107 = vrot.lane.b32.xlu0 %v1102, 83
    %v1108 = vpop.permute.xlu0 %1107
    %v1109 = vrot.slane %v1106, 4
    %v1110 = vrot.slane %v1108, 4
    %vm1111 = vcmask 678912
    %v1112 = vsel %vm1111, %v1109, %v1106
    %v1113 = vsel %vm1111, %v1110, %v1108
    %1116 = vst.msk [vmem:[#allocation3 + $0x20] sm:$0xff] %vm1052, %v1112
    %1117 = vst.msk [vmem:[#allocation3 + $0x28] sm:$0xff] %vm1052, %v1113
    %v1118 = vld [vmem:[#allocation2] sm:$0xff]
    %v1119 = vld [vmem:[#allocation2 + $0x1c] sm:$0xff]
    %1122 = vrot.lane.b32.xlu0 %v1118, 27
    %v1123 = vpop.permute.xlu0 %1122
    %1124 = vrot.lane.b32.xlu0 %v1119, 27
    %v1125 = vpop.permute.xlu0 %1124
    %v1126 = vrot.slane %v1123, 4
    %v1127 = vrot.slane %v1125, 4
    %vm1128 = vcmask 220160
    %v1129 = vsel %vm1128, %v1123, %v1126
    %v1130 = vsel %vm1128, %v1125, %v1127
    %1133 = vst.msk [vmem:[#allocation3 + $0x30] sm:$0xf] %vm1032, %v1129
    %1134 = vst.msk [vmem:[#allocation3 + $0x38] sm:$0xf] %vm1032, %v1130
    %v1135 = vld [vmem:[#allocation2 + $0xc] sm:$0xff]
    %v1136 = vld [vmem:[#allocation2 + $0x28] sm:$0xff]
    %1139 = vrot.lane.b32.xlu0 %v1135, 111
    %v1140 = vpop.permute.xlu0 %1139
    %1141 = vrot.lane.b32.xlu0 %v1136, 111
    %v1142 = vpop.permute.xlu0 %1141
    %v1143 = vrot.slane %v1140, 4
    %v1144 = vrot.slane %v1142, 4
    %vm1145 = vcmask 908288
    %v1146 = vsel %vm1145, %v1140, %v1143
    %v1147 = vsel %vm1145, %v1142, %v1144
    %1150 = vst.msk [vmem:[#allocation3 + $0x30] sm:$0xff] %vm1052, %v1146
    %1151 = vst.msk [vmem:[#allocation3 + $0x38] sm:$0xff] %vm1052, %v1147
    %v1152 = vld [vmem:[#allocation2 + $0x4] sm:$0xff]
    %v1153 = vld [vmem:[#allocation2 + $0x20] sm:$0xff]
    %1156 = vrot.lane.b32.xlu0 %v1152, 56
    %v1157 = vpop.permute.xlu0 %1156
    %1158 = vrot.lane.b32.xlu0 %v1153, 56
    %v1159 = vpop.permute.xlu0 %1158
    %v1160 = vrot.slane %v1157, 4
    %v1161 = vrot.slane %v1159, 4
    %vm1162 = vcmask 457728
    %v1163 = vsel %vm1162, %v1157, %v1160
    %v1164 = vsel %vm1162, %v1159, %v1161
    %1167 = vst.msk [vmem:[#allocation3 + $0x40] sm:$0xf] %vm1032, %v1163
    %1168 = vst.msk [vmem:[#allocation3 + $0x48] sm:$0xf] %vm1032, %v1164
    %v1169 = vld [vmem:[#allocation2 + $0x10] sm:$0xff]
    %v1170 = vld [vmem:[#allocation2 + $0x2c] sm:$0xff]
    %1173 = vrot.lane.b32.xlu0 %v1169, 12
    %v1174 = vpop.permute.xlu0 %1173
    %1175 = vrot.lane.b32.xlu0 %v1170, 12
    %v1176 = vpop.permute.xlu0 %1175
    %v1177 = vrot.slane %v1174, 4
    %v1178 = vrot.slane %v1176, 4
    %vm1179 = vcmask 97280
    %v1180 = vsel %vm1179, %v1177, %v1174
    %v1181 = vsel %vm1179, %v1178, %v1176
    %1184 = vst.msk [vmem:[#allocation3 + $0x40] sm:$0xff] %vm1052, %v1180
    %1185 = vst.msk [vmem:[#allocation3 + $0x48] sm:$0xff] %vm1052, %v1181
    %v1186 = vld [vmem:[#allocation2 + $0x8] sm:$0xff]
    %v1187 = vld [vmem:[#allocation2 + $0x24] sm:$0xff]
    %1190 = vrot.lane.b32.xlu0 %v1186, 84
    %v1191 = vpop.permute.xlu0 %1190
    %1192 = vrot.lane.b32.xlu0 %v1187, 84
    %v1193 = vpop.permute.xlu0 %1192
    %v1194 = vrot.slane %v1191, 4
    %v1195 = vrot.slane %v1193, 4
    %v1196 = vsel %vm1045, %v1191, %v1194
    %v1197 = vsel %vm1045, %v1193, %v1195
    %1200 = vst.msk [vmem:[#allocation3 + $0x50] sm:$0xf] %vm1032, %v1196
    %1201 = vst.msk [vmem:[#allocation3 + $0x58] sm:$0xf] %vm1032, %v1197
    %v1202 = vld [vmem:[#allocation2 + $0x14] sm:$0xff]
    %v1203 = vld [vmem:[#allocation2 + $0x30] sm:$0xff]
    %1206 = vrot.lane.b32.xlu0 %v1202, 40
    %v1207 = vpop.permute.xlu0 %1206
    %1208 = vrot.lane.b32.xlu0 %v1203, 40
    %v1209 = vpop.permute.xlu0 %1208
    %v1210 = vrot.slane %v1207, 4
    %v1211 = vrot.slane %v1209, 4
    %vm1212 = vcmask 326656
    %v1213 = vsel %vm1212, %v1210, %v1207
    %v1214 = vsel %vm1212, %v1211, %v1209
    %1217 = vst.msk [vmem:[#allocation3 + $0x50] sm:$0xff] %vm1052, %v1213
    %1218 = vst.msk [vmem:[#allocation3 + $0x58] sm:$0xff] %vm1052, %v1214
    %v1219 = vld [vmem:[#allocation2 + $0x4] sm:$0xff]
    %v1220 = vld [vmem:[#allocation2 + $0x20] sm:$0xff]
    %1223 = vrot.lane.b32.xlu0 %v1219, 55
    %v1224 = vpop.permute.xlu0 %1223
    %1225 = vrot.lane.b32.xlu0 %v1220, 55
    %v1226 = vpop.permute.xlu0 %1225
    %v1227 = vrot.slane %v1224, 4
    %v1228 = vrot.slane %v1226, 4
    %vm1229 = vcmask 449536
    %v1230 = vsel %vm1229, %v1224, %v1227
    %v1231 = vsel %vm1229, %v1226, %v1228
    %1234 = vst.msk [vmem:[#allocation3 + $0x60] sm:$0xf] %vm1032, %v1230
    %1235 = vst.msk [vmem:[#allocation3 + $0x68] sm:$0xf] %vm1032, %v1231
    %v1236 = vld [vmem:[#allocation2 + $0x10] sm:$0xff]
    %v1237 = vld [vmem:[#allocation2 + $0x2c] sm:$0xff]
    %1240 = vrot.lane.b32.xlu0 %v1236, 11
    %v1241 = vpop.permute.xlu0 %1240
    %1242 = vrot.lane.b32.xlu0 %v1237, 11
    %v1243 = vpop.permute.xlu0 %1242
    %v1244 = vrot.slane %v1241, 4
    %v1245 = vrot.slane %v1243, 4
    %vm1246 = vcmask 89088
    %v1247 = vsel %vm1246, %v1244, %v1241
    %v1248 = vsel %vm1246, %v1245, %v1243
    %1251 = vst.msk [vmem:[#allocation3 + $0x60] sm:$0xff] %vm1052, %v1247
    %1252 = vst.msk [vmem:[#allocation3 + $0x68] sm:$0xff] %vm1052, %v1248
    %v1253 = vld [vmem:[#allocation2 + $0x8] sm:$0xff]
    %v1254 = vld [vmem:[#allocation2 + $0x24] sm:$0xff]
    %1257 = vrot.lane.b32.xlu0 %v1253, 83
    %v1258 = vpop.permute.xlu0 %1257
    %1259 = vrot.lane.b32.xlu0 %v1254, 83
    %v1260 = vpop.permute.xlu0 %1259
    %v1261 = vrot.slane %v1258, 4
    %v1262 = vrot.slane %v1260, 4
    %v1263 = vsel %vm1111, %v1258, %v1261
    %v1264 = vsel %vm1111, %v1260, %v1262
    %1267 = vst.msk [vmem:[#allocation3 + $0x70] sm:$0xf] %vm1032, %v1263
    %1268 = vst.msk [vmem:[#allocation3 + $0x78] sm:$0xf] %vm1032, %v1264
    %v1269 = vld [vmem:[#allocation2 + $0x14] sm:$0xff]
    %v1270 = vld [vmem:[#allocation2 + $0x30] sm:$0xff]
    %1273 = vrot.lane.b32.xlu0 %v1269, 39
    %v1274 = vpop.permute.xlu0 %1273
    %1275 = vrot.lane.b32.xlu0 %v1270, 39
    %v1276 = vpop.permute.xlu0 %1275
    %v1277 = vrot.slane %v1274, 4
    %v1278 = vrot.slane %v1276, 4
    %vm1279 = vcmask 318464
    %v1280 = vsel %vm1279, %v1277, %v1274
    %v1281 = vsel %vm1279, %v1278, %v1276
    %1284 = vst.msk [vmem:[#allocation3 + $0x70] sm:$0xff] %vm1052, %v1280
    %1285 = vst.msk [vmem:[#allocation3 + $0x78] sm:$0xff] %vm1052, %v1281
    %v1286 = vld [vmem:[#allocation2] sm:$0xf]
    %v1287 = vld [vmem:[#allocation2 + $0x1c] sm:$0xf]
    %1290 = vrot.lane.b32.xlu0 %v1286, 118
    %v1291 = vpop.permute.xlu0 %1290
    %1292 = vrot.lane.b32.xlu0 %v1287, 118
    %v1293 = vpop.permute.xlu0 %1292
    %1296 = vst.msk [vmem:[#allocation3 + $0x80] sm:$0xf] %vm1032, %v1291
    %1297 = vst.msk [vmem:[#allocation3 + $0x88] sm:$0xf] %vm1032, %v1293
    %v1298 = vld [vmem:[#allocation2 + $0xc] sm:$0xf]
    %v1299 = vld [vmem:[#allocation2 + $0x28] sm:$0xf]
    %1302 = vrot.lane.b32.xlu0 %v1298, 74
    %v1303 = vpop.permute.xlu0 %1302
    %1304 = vrot.lane.b32.xlu0 %v1299, 74
    %v1305 = vpop.permute.xlu0 %1304
    %v1306 = vrot.slane %v1303, 4
    %v1307 = vrot.slane %v1305, 4
    %vm1308 = vcmask 605184
    %v1309 = vsel %vm1308, %v1306, %v1303
    %v1310 = vsel %vm1308, %v1307, %v1305
    %1313 = vst.msk [vmem:[#allocation3 + $0x80] sm:$0xff] %vm1052, %v1309
    %1314 = vst.msk [vmem:[#allocation3 + $0x88] sm:$0xff] %vm1052, %v1310
    %v1315 = vld [vmem:[#allocation2] sm:$0xff]
    %v1316 = vld [vmem:[#allocation2 + $0x1c] sm:$0xff]
    %1319 = vrot.lane.b32.xlu0 %v1315, 18
    %v1320 = vpop.permute.xlu0 %1319
    %1321 = vrot.lane.b32.xlu0 %v1316, 18
    %v1322 = vpop.permute.xlu0 %1321
    %v1323 = vrot.slane %v1320, 4
    %v1324 = vrot.slane %v1322, 4
    %vm1325 = vcmask 146432
    %v1326 = vsel %vm1325, %v1320, %v1323
    %v1327 = vsel %vm1325, %v1322, %v1324
    %1330 = vst.msk [vmem:[#allocation3 + $0x90] sm:$0xf] %vm1032, %v1326
    %1331 = vst.msk [vmem:[#allocation3 + $0x98] sm:$0xf] %vm1032, %v1327
    %v1332 = vld [vmem:[#allocation2 + $0xc] sm:$0xff]
    %v1333 = vld [vmem:[#allocation2 + $0x28] sm:$0xff]
    %1336 = vrot.lane.b32.xlu0 %v1332, 102
    %v1337 = vpop.permute.xlu0 %1336
    %1338 = vrot.lane.b32.xlu0 %v1333, 102
    %v1339 = vpop.permute.xlu0 %1338
    %v1340 = vrot.slane %v1337, 4
    %v1341 = vrot.slane %v1339, 4
    %vm1342 = vcmask 834560
    %v1343 = vsel %vm1342, %v1337, %v1340
    %v1344 = vsel %vm1342, %v1339, %v1341
    %1347 = vst.msk [vmem:[#allocation3 + $0x90] sm:$0xff] %vm1052, %v1343
    %1348 = vst.msk [vmem:[#allocation3 + $0x98] sm:$0xff] %vm1052, %v1344
    %v1349 = vld [vmem:[#allocation2] sm:$0xf]
    %v1350 = vld [vmem:[#allocation2 + $0x1c] sm:$0xf]
    %1353 = vrot.lane.b32.xlu0 %v1349, 117
    %v1354 = vpop.permute.xlu0 %1353
    %1355 = vrot.lane.b32.xlu0 %v1350, 117
    %v1356 = vpop.permute.xlu0 %1355
    %1359 = vst.msk [vmem:[#allocation3 + $0xa0] sm:$0xf] %vm1032, %v1354
    %1360 = vst.msk [vmem:[#allocation3 + $0xa8] sm:$0xf] %vm1032, %v1356
    %v1361 = vld [vmem:[#allocation2 + $0xc] sm:$0xf]
    %v1362 = vld [vmem:[#allocation2 + $0x28] sm:$0xf]
    %1365 = vrot.lane.b32.xlu0 %v1361, 73
    %v1366 = vpop.permute.xlu0 %1365
    %1367 = vrot.lane.b32.xlu0 %v1362, 73
    %v1368 = vpop.permute.xlu0 %1367
    %v1369 = vrot.slane %v1366, 4
    %v1370 = vrot.slane %v1368, 4
    %vm1371 = vcmask 596992
    %v1372 = vsel %vm1371, %v1369, %v1366
    %v1373 = vsel %vm1371, %v1370, %v1368
    %1376 = vst.msk [vmem:[#allocation3 + $0xa0] sm:$0xff] %vm1052, %v1372
    %1377 = vst.msk [vmem:[#allocation3 + $0xa8] sm:$0xff] %vm1052, %v1373
    %v1378 = vld [vmem:[#allocation2] sm:$0xff]
    %v1379 = vld [vmem:[#allocation2 + $0x1c] sm:$0xff]
    %1382 = vrot.lane.b32.xlu0 %v1378, 17
    %v1383 = vpop.permute.xlu0 %1382
    %1384 = vrot.lane.b32.xlu0 %v1379, 17
    %v1385 = vpop.permute.xlu0 %1384
    %v1386 = vrot.slane %v1383, 4
    %v1387 = vrot.slane %v1385, 4
    %vm1388 = vcmask 138240
    %v1389 = vsel %vm1388, %v1383, %v1386
    %v1390 = vsel %vm1388, %v1385, %v1387
    %1393 = vst.msk [vmem:[#allocation3 + $0xb0] sm:$0xf] %vm1032, %v1389
    %1394 = vst.msk [vmem:[#allocation3 + $0xb8] sm:$0xf] %vm1032, %v1390
    %v1395 = vld [vmem:[#allocation2 + $0xc] sm:$0xff]
    %v1396 = vld [vmem:[#allocation2 + $0x28] sm:$0xff]
    %1399 = vrot.lane.b32.xlu0 %v1395, 101
    %v1400 = vpop.permute.xlu0 %1399
    %1401 = vrot.lane.b32.xlu0 %v1396, 101
    %v1402 = vpop.permute.xlu0 %1401
    %v1403 = vrot.slane %v1400, 4
    %v1404 = vrot.slane %v1402, 4
    %vm1405 = vcmask 826368
    %v1406 = vsel %vm1405, %v1400, %v1403
    %v1407 = vsel %vm1405, %v1402, %v1404
    %1410 = vst.msk [vmem:[#allocation3 + $0xb0] sm:$0xff] %vm1052, %v1406
    %1411 = vst.msk [vmem:[#allocation3 + $0xb8] sm:$0xff] %vm1052, %v1407
    %v1412 = vld [vmem:[#allocation2 + $0x4] sm:$0xff]
    %v1413 = vld [vmem:[#allocation2 + $0x20] sm:$0xff]
    %1416 = vrot.lane.b32.xlu0 %v1412, 46
    %v1417 = vpop.permute.xlu0 %1416
    %1418 = vrot.lane.b32.xlu0 %v1413, 46
    %v1419 = vpop.permute.xlu0 %1418
    %v1420 = vrot.slane %v1417, 4
    %v1421 = vrot.slane %v1419, 4
    %vm1422 = vcmask 375808
    %v1423 = vsel %vm1422, %v1417, %v1420
    %v1424 = vsel %vm1422, %v1419, %v1421
    %1427 = vst.msk [vmem:[#allocation3 + $0xc0] sm:$0xf] %vm1032, %v1423
    %1428 = vst.msk [vmem:[#allocation3 + $0xc8] sm:$0xf] %vm1032, %v1424
    %v1429 = vld [vmem:[#allocation2 + $0x10] sm:$0xff]
    %v1430 = vld [vmem:[#allocation2 + $0x2c] sm:$0xff]
    %1433 = vrot.lane.b32.xlu0 %v1429, 2
    %v1434 = vpop.permute.xlu0 %1433
    %1435 = vrot.lane.b32.xlu0 %v1430, 2
    %v1436 = vpop.permute.xlu0 %1435
    %v1437 = vrot.slane %v1434, 4
    %v1438 = vrot.slane %v1436, 4
    %vm1439 = vcmask 15360
    %v1440 = vsel %vm1439, %v1437, %v1434
    %v1441 = vsel %vm1439, %v1438, %v1436
    %1444 = vst.msk [vmem:[#allocation3 + $0xc0] sm:$0xff] %vm1052, %v1440
    %1445 = vst.msk [vmem:[#allocation3 + $0xc8] sm:$0xff] %vm1052, %v1441
    %v1446 = vld [vmem:[#allocation2 + $0x8] sm:$0xff]
    %v1447 = vld [vmem:[#allocation2 + $0x24] sm:$0xff]
    %1450 = vrot.lane.b32.xlu0 %v1446, 74
    %v1451 = vpop.permute.xlu0 %1450
    %1452 = vrot.lane.b32.xlu0 %v1447, 74
    %v1453 = vpop.permute.xlu0 %1452
    %v1454 = vrot.slane %v1451, 4
    %v1455 = vrot.slane %v1453, 4
    %v1456 = vsel %vm1308, %v1451, %v1454
    %v1457 = vsel %vm1308, %v1453, %v1455
    %1460 = vst.msk [vmem:[#allocation3 + $0xd0] sm:$0xf] %vm1032, %v1456
    %1461 = vst.msk [vmem:[#allocation3 + $0xd8] sm:$0xf] %vm1032, %v1457
    %v1462 = vld [vmem:[#allocation2 + $0x14] sm:$0xff]
    %v1463 = vld [vmem:[#allocation2 + $0x30] sm:$0xff]
    %1466 = vrot.lane.b32.xlu0 %v1462, 30
    %v1467 = vpop.permute.xlu0 %1466
    %1468 = vrot.lane.b32.xlu0 %v1463, 30
    %v1469 = vpop.permute.xlu0 %1468
    %v1470 = vrot.slane %v1467, 4
    %v1471 = vrot.slane %v1469, 4
    %vm1472 = vcmask 244736
    %v1473 = vsel %vm1472, %v1470, %v1467
    %v1474 = vsel %vm1472, %v1471, %v1469
    %1477 = vst.msk [vmem:[#allocation3 + $0xd0] sm:$0xff] %vm1052, %v1473
    %1478 = vst.msk [vmem:[#allocation3 + $0xd8] sm:$0xff] %vm1052, %v1474
    %v1479 = vld [vmem:[#allocation2 + $0x4] sm:$0xff]
    %v1480 = vld [vmem:[#allocation2 + $0x20] sm:$0xff]
    %1483 = vrot.lane.b32.xlu0 %v1479, 45
    %v1484 = vpop.permute.xlu0 %1483
    %1485 = vrot.lane.b32.xlu0 %v1480, 45
    %v1486 = vpop.permute.xlu0 %1485
    %v1487 = vrot.slane %v1484, 4
    %v1488 = vrot.slane %v1486, 4
    %vm1489 = vcmask 367616
    %v1490 = vsel %vm1489, %v1484, %v1487
    %v1491 = vsel %vm1489, %v1486, %v1488
    %1494 = vst.msk [vmem:[#allocation3 + $0xe0] sm:$0xf] %vm1032, %v1490
    %1495 = vst.msk [vmem:[#allocation3 + $0xe8] sm:$0xf] %vm1032, %v1491
    %v1496 = vld [vmem:[#allocation2 + $0x10] sm:$0xff]
    %v1497 = vld [vmem:[#allocation2 + $0x2c] sm:$0xff]
    %1500 = vrot.lane.b32.xlu0 %v1496, 1
    %v1501 = vpop.permute.xlu0 %1500
    %1502 = vrot.lane.b32.xlu0 %v1497, 1
    %v1503 = vpop.permute.xlu0 %1502
    %v1504 = vrot.slane %v1501, 4
    %v1505 = vrot.slane %v1503, 4
    %vm1506 = vcmask 7168
    %v1507 = vsel %vm1506, %v1504, %v1501
    %v1508 = vsel %vm1506, %v1505, %v1503
    %1511 = vst.msk [vmem:[#allocation3 + $0xe0] sm:$0xff] %vm1052, %v1507
    %1512 = vst.msk [vmem:[#allocation3 + $0xe8] sm:$0xff] %vm1052, %v1508
    %v1513 = vld [vmem:[#allocation2 + $0x8] sm:$0xff]
    %v1514 = vld [vmem:[#allocation2 + $0x24] sm:$0xff]
    %1517 = vrot.lane.b32.xlu0 %v1513, 73
    %v1518 = vpop.permute.xlu0 %1517
    %1519 = vrot.lane.b32.xlu0 %v1514, 73
    %v1520 = vpop.permute.xlu0 %1519
    %v1521 = vrot.slane %v1518, 4
    %v1522 = vrot.slane %v1520, 4
    %v1523 = vsel %vm1371, %v1518, %v1521
    %v1524 = vsel %vm1371, %v1520, %v1522
    %1527 = vst.msk [vmem:[#allocation3 + $0xf0] sm:$0xf] %vm1032, %v1523
    %1528 = vst.msk [vmem:[#allocation3 + $0xf8] sm:$0xf] %vm1032, %v1524
    %v1529 = vld [vmem:[#allocation2 + $0x14] sm:$0xff]
    %v1530 = vld [vmem:[#allocation2 + $0x30] sm:$0xff]
    %1533 = vrot.lane.b32.xlu0 %v1529, 29
    %v1534 = vpop.permute.xlu0 %1533
    %1535 = vrot.lane.b32.xlu0 %v1530, 29
    %v1536 = vpop.permute.xlu0 %1535
    %v1537 = vrot.slane %v1534, 4
    %v1538 = vrot.slane %v1536, 4
    %vm1539 = vcmask 236544
    %v1540 = vsel %vm1539, %v1537, %v1534
    %v1541 = vsel %vm1539, %v1538, %v1536
    %1544 = vst.msk [vmem:[#allocation3 + $0xf0] sm:$0xff] %vm1052, %v1540
    %1545 = vst.msk [vmem:[#allocation3 + $0xf8] sm:$0xff] %vm1052, %v1541
    %v1546 = vld [vmem:[%s3] sm:$0xff]
    %v1547 = vld [vmem:[%s3 + $0x8] sm:$0xff]
    %v1548 = vld [vmem:[%s3 + $0x10] sm:$0xff]
    %v1549 = vld [vmem:[%s3 + $0x18] sm:$0xff]
    %v1550 = vld [vmem:[#allocation3] sm:$0xff]
    %v1551 = vld [vmem:[#allocation3 + $0x8] sm:$0xff]
    %v1552 = vld [vmem:[#allocation3 + $0x10] sm:$0xff]
    %v1553 = vld [vmem:[#allocation3 + $0x18] sm:$0xff]
    %v1554 = vld [vmem:[#allocation3 + $0x20] sm:$0xff]
    %v1555 = vld [vmem:[#allocation3 + $0x28] sm:$0xff]
    %v1556 = vld [vmem:[#allocation3 + $0x30] sm:$0xff]
    %v1557 = vld [vmem:[#allocation3 + $0x38] sm:$0xff]
    %v1558 = vld [vmem:[#allocation3 + $0x40] sm:$0xff]
    %v1559 = vld [vmem:[#allocation3 + $0x48] sm:$0xff]
    %v1560 = vld [vmem:[#allocation3 + $0x50] sm:$0xff]
    %v1561 = vld [vmem:[#allocation3 + $0x58] sm:$0xff]
    %v1562 = vld [vmem:[#allocation3 + $0x60] sm:$0xff]
    %v1563 = vld [vmem:[#allocation3 + $0x68] sm:$0xff]
    %v1564 = vld [vmem:[#allocation3 + $0x70] sm:$0xff]
    %v1565 = vld [vmem:[#allocation3 + $0x78] sm:$0xff]
    %v1566 = vld [vmem:[#allocation3 + $0x80] sm:$0xff]
    %v1567 = vld [vmem:[#allocation3 + $0x88] sm:$0xff]
    %v1568 = vld [vmem:[#allocation3 + $0x90] sm:$0xff]
    %v1569 = vld [vmem:[#allocation3 + $0x98] sm:$0xff]
    %v1570 = vld [vmem:[#allocation3 + $0xa0] sm:$0xff]
    %v1571 = vld [vmem:[#allocation3 + $0xa8] sm:$0xff]
    %v1572 = vld [vmem:[#allocation3 + $0xb0] sm:$0xff]
    %v1573 = vld [vmem:[#allocation3 + $0xb8] sm:$0xff]
    %v1574 = vld [vmem:[#allocation3 + $0xc0] sm:$0xff]
    %v1575 = vld [vmem:[#allocation3 + $0xc8] sm:$0xff]
    %v1576 = vld [vmem:[#allocation3 + $0xd0] sm:$0xff]
    %v1577 = vld [vmem:[#allocation3 + $0xd8] sm:$0xff]
    %v1578 = vld [vmem:[#allocation3 + $0xe0] sm:$0xff]
    %v1579 = vld [vmem:[#allocation3 + $0xe8] sm:$0xff]
    %v1580 = vld [vmem:[#allocation3 + $0xf0] sm:$0xff]
    %v1581 = vld [vmem:[#allocation3 + $0xf8] sm:$0xff]
    %v1582 = vld [vmem:[%s4] sm:$0xff]
    %v1583 = vld [vmem:[%s4 + $0x8] sm:$0xff]
    %v1584 = vld [vmem:[%s4 + $0x10] sm:$0xff]
    %v1585 = vld [vmem:[%s4 + $0x18] sm:$0xff]
    %1587 = vset.pattern.permute.xlu0 0
    %1588 = vperm.xlu0 %1587, %v1582
    %v1589 = vpop.permute.xlu0 %1588
    %1592 = vset.pattern.permute.xlu0 0
    %1593 = vperm.xlu0 %1592, %v1583
    %v1594 = vpop.permute.xlu0 %1593
    %1597 = vset.pattern.permute.xlu0 0
    %1598 = vperm.xlu0 %1597, %v1584
    %v1599 = vpop.permute.xlu0 %1598
    %1602 = vset.pattern.permute.xlu0 0
    %1603 = vperm.xlu0 %1602, %v1585
    %v1604 = vpop.permute.xlu0 %1603
    %v1610 = vunpack.c.l.b16 %v1546
    %v1611 = vunpack.c.h.b16 %v1546
    %v1612 = vunpack.c.l.b16 %v1547
    %v1613 = vunpack.c.h.b16 %v1547
    %v1614 = vunpack.c.l.b16 %v1548
    %v1615 = vunpack.c.h.b16 %v1548
    %v1616 = vunpack.c.l.b16 %v1549
    %v1617 = vunpack.c.h.b16 %v1549
    %v1618 = vpack.c.b16 %v1612, %v1610
    %v1619 = vpack.c.b16 %v1613, %v1611
    %v1620 = vpack.c.b16 %v1616, %v1614
    %v1621 = vpack.c.b16 %v1617, %v1615
    %v1658 = vunpack.c.l.b16 %v1550
    %v1659 = vunpack.c.h.b16 %v1550
    %v1660 = vunpack.c.l.b16 %v1551
    %v1661 = vunpack.c.h.b16 %v1551
    %v1662 = vunpack.c.l.b16 %v1552
    %v1663 = vunpack.c.h.b16 %v1552
    %v1664 = vunpack.c.l.b16 %v1553
    %v1665 = vunpack.c.h.b16 %v1553
    %v1666 = vunpack.c.l.b16 %v1554
    %v1667 = vunpack.c.h.b16 %v1554
    %v1668 = vunpack.c.l.b16 %v1555
    %v1669 = vunpack.c.h.b16 %v1555
    %v1670 = vunpack.c.l.b16 %v1556
    %v1671 = vunpack.c.h.b16 %v1556
    %v1672 = vunpack.c.l.b16 %v1557
    %v1673 = vunpack.c.h.b16 %v1557
    %v1674 = vunpack.c.l.b16 %v1558
    %v1675 = vunpack.c.h.b16 %v1558
    %v1676 = vunpack.c.l.b16 %v1559
    %v1677 = vunpack.c.h.b16 %v1559
    %v1678 = vunpack.c.l.b16 %v1560
    %v1679 = vunpack.c.h.b16 %v1560
    %v1680 = vunpack.c.l.b16 %v1561
    %v1681 = vunpack.c.h.b16 %v1561
    %v1682 = vunpack.c.l.b16 %v1562
    %v1683 = vunpack.c.h.b16 %v1562
    %v1684 = vunpack.c.l.b16 %v1563
    %v1685 = vunpack.c.h.b16 %v1563
    %v1686 = vunpack.c.l.b16 %v1564
    %v1687 = vunpack.c.h.b16 %v1564
    %v1688 = vunpack.c.l.b16 %v1565
    %v1689 = vunpack.c.h.b16 %v1565
    %v1690 = vunpack.c.l.b16 %v1566
    %v1691 = vunpack.c.h.b16 %v1566
    %v1692 = vunpack.c.l.b16 %v1567
    %v1693 = vunpack.c.h.b16 %v1567
    %v1694 = vunpack.c.l.b16 %v1568
    %v1695 = vunpack.c.h.b16 %v1568
    %v1696 = vunpack.c.l.b16 %v1569
    %v1697 = vunpack.c.h.b16 %v1569
    %v1698 = vunpack.c.l.b16 %v1570
    %v1699 = vunpack.c.h.b16 %v1570
    %v1700 = vunpack.c.l.b16 %v1571
    %v1701 = vunpack.c.h.b16 %v1571
    %v1702 = vunpack.c.l.b16 %v1572
    %v1703 = vunpack.c.h.b16 %v1572
    %v1704 = vunpack.c.l.b16 %v1573
    %v1705 = vunpack.c.h.b16 %v1573
    %v1706 = vunpack.c.l.b16 %v1574
    %v1707 = vunpack.c.h.b16 %v1574
    %v1708 = vunpack.c.l.b16 %v1575
    %v1709 = vunpack.c.h.b16 %v1575
    %v1710 = vunpack.c.l.b16 %v1576
    %v1711 = vunpack.c.h.b16 %v1576
    %v1712 = vunpack.c.l.b16 %v1577
    %v1713 = vunpack.c.h.b16 %v1577
    %v1714 = vunpack.c.l.b16 %v1578
    %v1715 = vunpack.c.h.b16 %v1578
    %v1716 = vunpack.c.l.b16 %v1579
    %v1717 = vunpack.c.h.b16 %v1579
    %v1718 = vunpack.c.l.b16 %v1580
    %v1719 = vunpack.c.h.b16 %v1580
    %v1720 = vunpack.c.l.b16 %v1581
    %v1721 = vunpack.c.h.b16 %v1581
    %v1722 = vpack.c.b16 %v1660, %v1658
    %v1723 = vpack.c.b16 %v1661, %v1659
    %v1724 = vpack.c.b16 %v1664, %v1662
    %v1725 = vpack.c.b16 %v1665, %v1663
    %v1726 = vpack.c.b16 %v1668, %v1666
    %v1727 = vpack.c.b16 %v1669, %v1667
    %v1728 = vpack.c.b16 %v1672, %v1670
    %v1729 = vpack.c.b16 %v1673, %v1671
    %v1730 = vpack.c.b16 %v1676, %v1674
    %v1731 = vpack.c.b16 %v1677, %v1675
    %v1732 = vpack.c.b16 %v1680, %v1678
    %v1733 = vpack.c.b16 %v1681, %v1679
    %v1734 = vpack.c.b16 %v1684, %v1682
    %v1735 = vpack.c.b16 %v1685, %v1683
    %v1736 = vpack.c.b16 %v1688, %v1686
    %v1737 = vpack.c.b16 %v1689, %v1687
    %v1738 = vpack.c.b16 %v1692, %v1690
    %v1739 = vpack.c.b16 %v1693, %v1691
    %v1740 = vpack.c.b16 %v1696, %v1694
    %v1741 = vpack.c.b16 %v1697, %v1695
    %v1742 = vpack.c.b16 %v1700, %v1698
    %v1743 = vpack.c.b16 %v1701, %v1699
    %v1744 = vpack.c.b16 %v1704, %v1702
    %v1745 = vpack.c.b16 %v1705, %v1703
    %v1746 = vpack.c.b16 %v1708, %v1706
    %v1747 = vpack.c.b16 %v1709, %v1707
    %v1748 = vpack.c.b16 %v1712, %v1710
    %v1749 = vpack.c.b16 %v1713, %v1711
    %v1750 = vpack.c.b16 %v1716, %v1714
    %v1751 = vpack.c.b16 %v1717, %v1715
    %v1752 = vpack.c.b16 %v1720, %v1718
    %v1753 = vpack.c.b16 %v1721, %v1719
    %1786 = vmatprep.subr.bf16.mxu0 %v1737
    %1787 = vmatpush1.bf16.msra.mxu0 %v1736
    %1788 = vmatprep.subr.bf16.mxu0 %v1735
    %1789 = vmatpush1.bf16.msra.mxu0 %v1734
    %1790 = vmatprep.subr.bf16.mxu0 %v1733
    %1791 = vmatpush1.bf16.msra.mxu0 %v1732
    %1792 = vmatprep.subr.bf16.mxu0 %v1731
    %1793 = vmatpush1.bf16.msra.mxu0 %v1730
    %1794 = vmatprep.subr.bf16.mxu0 %v1729
    %1795 = vmatpush1.bf16.msra.mxu0 %v1728
    %1796 = vmatprep.subr.bf16.mxu0 %v1727
    %1797 = vmatpush1.bf16.msra.mxu0 %v1726
    %1798 = vmatprep.subr.bf16.mxu0 %v1725
    %1799 = vmatpush1.bf16.msra.mxu0 %v1724
    %1800 = vmatprep.subr.bf16.mxu0 %v1723
    %1801 = vmatpush1.bf16.msra.mxu0 %v1722
    %1802 = vmatprep.subr.bf16.mxu0 %v1753
    %1803 = vmatpush2.bf16.msra.mxu0 %v1752
    %1804 = vmatprep.subr.bf16.mxu0 %v1751
    %1805 = vmatpush2.bf16.msra.mxu0 %v1750
    %1806 = vmatprep.subr.bf16.mxu0 %v1749
    %1807 = vmatpush2.bf16.msra.mxu0 %v1748
    %1808 = vmatprep.subr.bf16.mxu0 %v1747
    %1809 = vmatpush2.bf16.msra.mxu0 %v1746
    %1810 = vmatprep.subr.bf16.mxu0 %v1745
    %1811 = vmatpush2.bf16.msra.mxu0 %v1744
    %1812 = vmatprep.subr.bf16.mxu0 %v1743
    %1813 = vmatpush2.bf16.msra.mxu0 %v1742
    %1814 = vmatprep.subr.bf16.mxu0 %v1741
    %1815 = vmatpush2.bf16.msra.mxu0 %v1740
    %1816 = vmatprep.subr.bf16.mxu0 %v1739
    %1817 = vmatpush2.bf16.msra.mxu0 %v1738
    %1818 = vmatprep.mubr.bf16.mxu0 %v1619
    %1819 = vmatmul.mubr.bf16.gmra.mxu0 %v1618
    %v1820 = vpop.f32.mrf.mxu0
    %v1821 = vadd.f32 %v1589, %v1820
    %v1822 = vpop.f32.mrf.mxu0
    %v1823 = vadd.f32 %v1589, %v1822
    %v1824 = vpop.f32.mrf.mxu0
    %v1825 = vadd.f32 %v1594, %v1824
    %v1826 = vpop.f32.mrf.mxu0
    %v1827 = vadd.f32 %v1594, %v1826
    %1828 = vmatprep.mubr.bf16.mxu0 %v1621
    %1829 = vmatmul.mubr.bf16.gmra.mxu0 %v1620
    %v1830 = vpop.f32.mrf.mxu0
    %v1831 = vadd.f32 %v1599, %v1830
    %v1832 = vpop.f32.mrf.mxu0
    %v1833 = vadd.f32 %v1599, %v1832
    %v1834 = vpop.f32.mrf.mxu0
    %v1835 = vadd.f32 %v1604, %v1834
    %v1836 = vpop.f32.mrf.mxu0
    %v1837 = vadd.f32 %v1604, %v1836
    %1838 = vdwg.mxu0
    %v1839 = vmax.f32 %v1821, 0.0
    %v1840 = vmax.f32 %v1823, 0.0
    %v1841 = vmax.f32 %v1825, 0.0
    %v1842 = vmax.f32 %v1827, 0.0
    %v1843 = vmax.f32 %v1831, 0.0
    %v1844 = vmax.f32 %v1833, 0.0
    %v1845 = vmax.f32 %v1835, 0.0
    %v1846 = vmax.f32 %v1837, 0.0
    %v1847 = vpack.c.bf16 %v1841, %v1839
    %v1848 = vpack.c.bf16 %v1842, %v1840
    %v1849 = vpack.c.bf16 %v1845, %v1843
    %v1850 = vpack.c.bf16 %v1846, %v1844
    %v1855 = vunpack.c.l.b16 %v1847
    %v1856 = vunpack.c.l.b16 %v1848
    %v1857 = vunpack.c.h.b16 %v1847
    %v1858 = vunpack.c.h.b16 %v1848
    %v1859 = vunpack.c.l.b16 %v1849
    %v1860 = vunpack.c.l.b16 %v1850
    %v1861 = vunpack.c.h.b16 %v1849
    %v1862 = vunpack.c.h.b16 %v1850
    %v1863 = vpack.c.b16 %v1856, %v1855
    %v1864 = vpack.c.b16 %v1858, %v1857
    %v1865 = vpack.c.b16 %v1860, %v1859
    %v1866 = vpack.c.b16 %v1862, %v1861
    %1871 = vst [vmem:[#allocation4] sm:$0xff] %v1863
    %1872 = vst [vmem:[#allocation4 + $0x8] sm:$0xff] %v1864
    %1873 = vst [vmem:[#allocation4 + $0x10] sm:$0xff] %v1865
    %1874 = vst [vmem:[#allocation4 + $0x18] sm:$0xff] %v1866
    %v1875 = vld [vmem:[#allocation4] sm:$0x1]
    %vm1876 = vcmask 811008
    %vm1877 = vsmask.f32 256
    %vm1878 = vmand %vm1876, %vm1877
    %v1879 = vld [vmem:[#allocation5] sm:$0x1]
    %v1880 = vsel %vm1878, %v1875, %v1879
    %1881 = vst [vmem:[#allocation5] sm:$0x1] %v1880
    %v1882 = vld [vmem:[#allocation4] sm:$0x1]
    %v1885 = vunpack.c.l.s4 1966171168
    %v1886 = vunpack.c.0.s8 %v1885
    %v1887 = vlaneseq
    %v1888 = vshrl.u32 %v1887, 7
    %v1889 = vsub.s32 %v1886, %v1888
    %v1890 = vrot.slane %v1882, %v1889
    %v1892 = vunpack.c.l.s4 1966171168
    %v1893 = vunpack.c.0.s8 %v1892
    %v1894 = vlaneseq
    %v1895 = vshrl.u32 %v1894, 7
    %v1896 = vsub.s32 %v1893, %v1895
    %v1897 = vrot.slane %v1890, %v1896
    %v1899 = vshrl.u32 %v1897, 16
    %v1901 = vrot.slane %v1899, 7
    %v1902 = vrot.slane %v1901, 1
    %1903 = vrot.lane.b32.xlu0 %v1902, 100
    %v1904 = vpop.permute.xlu0 %1903
    %v1905 = vrot.slane %v1904, 7
    %vm1906 = vcmask 818176
    %v1907 = vsel %vm1906, %v1905, %v1904
    %vm1909 = vcmask 1041184
    %vm1910 = vmand %vm1909, %vm1877
    %vm1911 = vcmask 582657
    %vm1912 = vsmask.f32 1280
    %vm1913 = vmand %vm1911, %vm1912
    %vm1914 = vmor %vm1913, %vm1910
    %v1915 = vld [vmem:[#allocation5] sm:$0x3]
    %v1916 = vsel %vm1914, %v1907, %v1915
    %1917 = vst [vmem:[#allocation5] sm:$0x3] %v1916
    %v1918 = vld [vmem:[#allocation4] sm:$0x2]
    %v1921 = vunpack.c.l.s4 1966171168
    %v1922 = vunpack.c.0.s8 %v1921
    %v1923 = vlaneseq
    %v1924 = vshrl.u32 %v1923, 7
    %v1925 = vsub.s32 %v1922, %v1924
    %v1926 = vrot.slane %v1918, %v1925
    %v1927 = vcombine.high %v1926, %v1926
    %v1929 = vunpack.c.l.s4 1966171168
    %v1930 = vunpack.c.0.s8 %v1929
    %v1931 = vlaneseq
    %v1932 = vshrl.u32 %v1931, 7
    %v1933 = vsub.s32 %v1930, %v1932
    %v1934 = vrot.slane %v1927, %v1933
    %1935 = vrot.lane.b32.xlu0 %v1934, 72
    %v1936 = vpop.permute.xlu0 %1935
    %v1937 = vrot.slane %v1936, 7
    %vm1938 = vcmask 588800
    %v1939 = vsel %vm1938, %v1937, %v1936
    %vm1941 = vcmask 1040960
    %vm1942 = vmand %vm1941, %vm1877
    %vm1943 = vcmask 353281
    %vm1944 = vmand %vm1943, %vm1912
    %vm1945 = vmor %vm1944, %vm1942
    %v1946 = vld [vmem:[#allocation5 + $0x1] sm:$0x3]
    %v1947 = vsel %vm1945, %v1939, %v1946
    %1948 = vst [vmem:[#allocation5 + $0x1] sm:$0x3] %v1947
    %v1949 = vld [vmem:[#allocation4] sm:$0x2]
    %v1952 = vunpack.c.l.s4 1966171168
    %v1953 = vunpack.c.0.s8 %v1952
    %v1954 = vlaneseq
    %v1955 = vshrl.u32 %v1954, 7
    %v1956 = vsub.s32 %v1953, %v1955
    %v1957 = vrot.slane %v1949, %v1956
    %v1958 = vcombine.high %v1957, %v1957
    %v1960 = vunpack.c.l.s4 1966171168
    %v1961 = vunpack.c.0.s8 %v1960
    %v1962 = vlaneseq
    %v1963 = vshrl.u32 %v1962, 7
    %v1964 = vsub.s32 %v1961, %v1963
    %v1965 = vrot.slane %v1958, %v1964
    %v1967 = vshrl.u32 %v1965, 16
    %v1969 = vrot.slane %v1967, 7
    %v1970 = vrot.slane %v1969, 1
    %1971 = vrot.lane.b32.xlu0 %v1970, 44
    %v1972 = vpop.permute.xlu0 %1971
    %v1973 = vrot.slane %v1972, 7
    %vm1974 = vcmask 359424
    %v1975 = vsel %vm1974, %v1973, %v1972
    %vm1977 = vcmask 1040736
    %vm1978 = vmand %vm1977, %vm1877
    %vm1979 = vcmask 123905
    %vm1980 = vmand %vm1979, %vm1912
    %vm1981 = vmor %vm1980, %vm1978
    %v1982 = vld [vmem:[#allocation5 + $0x2] sm:$0x3]
    %v1983 = vsel %vm1981, %v1975, %v1982
    %1984 = vst [vmem:[#allocation5 + $0x2] sm:$0x3] %v1983
    %v1985 = vld [vmem:[#allocation4] sm:$0x4]
    %v1988 = vunpack.c.l.s4 1966171168
    %v1989 = vunpack.c.0.s8 %v1988
    %v1990 = vlaneseq
    %v1991 = vshrl.u32 %v1990, 7
    %v1992 = vsub.s32 %v1989, %v1991
    %v1993 = vrot.slane %v1985, %v1992
    %v1995 = vunpack.c.l.s4 1966171168
    %v1996 = vunpack.c.0.s8 %v1995
    %v1997 = vlaneseq
    %v1998 = vshrl.u32 %v1997, 7
    %v1999 = vsub.s32 %v1996, %v1998
    %v2000 = vrot.slane %v1993, %v1999
    %v2001 = vcombine.high %v2000, %v2000
    %2002 = vrot.lane.b32.xlu0 %v2001, 16
    %v2003 = vpop.permute.xlu0 %2002
    %vm2005 = vcmask 942208
    %vm2006 = vmand %vm2005, %vm1877
    %v2007 = vld [vmem:[#allocation5 + $0x3] sm:$0x1]
    %v2008 = vsel %vm2006, %v2003, %v2007
    %2009 = vst [vmem:[#allocation5 + $0x3] sm:$0x1] %v2008
    %v2010 = vld [vmem:[#allocation4] sm:$0x4]
    %v2013 = vunpack.c.l.s4 1966171168
    %v2014 = vunpack.c.0.s8 %v2013
    %v2015 = vlaneseq
    %v2016 = vshrl.u32 %v2015, 7
    %v2017 = vsub.s32 %v2014, %v2016
    %v2018 = vrot.slane %v2010, %v2017
    %v2020 = vunpack.c.l.s4 1966171168
    %v2021 = vunpack.c.0.s8 %v2020
    %v2022 = vlaneseq
    %v2023 = vshrl.u32 %v2022, 7
    %v2024 = vsub.s32 %v2021, %v2023
    %v2025 = vrot.slane %v2018, %v2024
    %v2026 = vcombine.high %v2025, %v2025
    %v2028 = vshrl.u32 %v2026, 16
    %v2030 = vrot.slane %v2028, 7
    %v2031 = vrot.slane %v2030, 1
    %2032 = vrot.lane.b32.xlu0 %v2031, 116
    %v2033 = vpop.permute.xlu0 %2032
    %v2034 = vrot.slane %v2033, 7
    %vm2035 = vcmask 949248
    %v2036 = vsel %vm2035, %v2034, %v2033
    %vm2038 = vcmask 1041312
    %vm2039 = vmand %vm2038, %vm1877
    %vm2040 = vcmask 713729
    %vm2041 = vmand %vm2040, %vm1912
    %vm2042 = vmor %vm2041, %vm2039
    %v2043 = vld [vmem:[#allocation5 + $0x3] sm:$0x3]
    %v2044 = vsel %vm2042, %v2036, %v2043
    %2045 = vst [vmem:[#allocation5 + $0x3] sm:$0x3] %v2044
    %v2046 = vld [vmem:[#allocation4] sm:$0x8]
    %v2049 = vunpack.c.l.s4 1966171168
    %v2050 = vunpack.c.0.s8 %v2049
    %v2051 = vlaneseq
    %v2052 = vshrl.u32 %v2051, 7
    %v2053 = vsub.s32 %v2050, %v2052
    %v2054 = vrot.slane %v2046, %v2053
    %v2055 = vcombine.high %v2054, %v2054
    %v2057 = vunpack.c.l.s4 1966171168
    %v2058 = vunpack.c.0.s8 %v2057
    %v2059 = vlaneseq
    %v2060 = vshrl.u32 %v2059, 7
    %v2061 = vsub.s32 %v2058, %v2060
    %v2062 = vrot.slane %v2055, %v2061
    %v2063 = vcombine.high %v2062, %v2062
    %2064 = vrot.lane.b32.xlu0 %v2063, 88
    %v2065 = vpop.permute.xlu0 %2064
    %v2066 = vrot.slane %v2065, 7
    %vm2067 = vcmask 719872
    %v2068 = vsel %vm2067, %v2066, %v2065
    %vm2070 = vcmask 1041088
    %vm2071 = vmand %vm2070, %vm1877
    %vm2072 = vcmask 484353
    %vm2073 = vmand %vm2072, %vm1912
    %vm2074 = vmor %vm2073, %vm2071
    %v2075 = vld [vmem:[#allocation5 + $0x4] sm:$0x3]
    %v2076 = vsel %vm2074, %v2068, %v2075
    %2077 = vst [vmem:[#allocation5 + $0x4] sm:$0x3] %v2076
    %v2078 = vld [vmem:[#allocation4] sm:$0x8]
    %v2081 = vunpack.c.l.s4 1966171168
    %v2082 = vunpack.c.0.s8 %v2081
    %v2083 = vlaneseq
    %v2084 = vshrl.u32 %v2083, 7
    %v2085 = vsub.s32 %v2082, %v2084
    %v2086 = vrot.slane %v2078, %v2085
    %v2087 = vcombine.high %v2086, %v2086
    %v2089 = vunpack.c.l.s4 1966171168
    %v2090 = vunpack.c.0.s8 %v2089
    %v2091 = vlaneseq
    %v2092 = vshrl.u32 %v2091, 7
    %v2093 = vsub.s32 %v2090, %v2092
    %v2094 = vrot.slane %v2087, %v2093
    %v2095 = vcombine.high %v2094, %v2094
    %v2097 = vshrl.u32 %v2095, 16
    %v2099 = vrot.slane %v2097, 7
    %v2100 = vrot.slane %v2099, 1
    %2101 = vrot.lane.b32.xlu0 %v2100, 60
    %v2102 = vpop.permute.xlu0 %2101
    %v2103 = vrot.slane %v2102, 7
    %vm2104 = vcmask 490496
    %v2105 = vsel %vm2104, %v2103, %v2102
    %vm2107 = vcmask 1040864
    %vm2108 = vmand %vm2107, %vm1877
    %vm2109 = vcmask 254977
    %vm2110 = vmand %vm2109, %vm1912
    %vm2111 = vmor %vm2110, %vm2108
    %v2112 = vld [vmem:[#allocation5 + $0x5] sm:$0x3]
    %v2113 = vsel %vm2111, %v2105, %v2112
    %2114 = vst [vmem:[#allocation5 + $0x5] sm:$0x3] %v2113
    %v2115 = vld [vmem:[#allocation4 + $0x8] sm:$0x1]
    %v2118 = vunpack.c.l.s4 1966171168
    %v2119 = vunpack.c.0.s8 %v2118
    %v2120 = vlaneseq
    %v2121 = vshrl.u32 %v2120, 7
    %v2122 = vsub.s32 %v2119, %v2121
    %v2123 = vrot.slane %v2115, %v2122
    %v2125 = vunpack.c.l.s4 1966171168
    %v2126 = vunpack.c.0.s8 %v2125
    %v2127 = vlaneseq
    %v2128 = vshrl.u32 %v2127, 7
    %v2129 = vsub.s32 %v2126, %v2128
    %v2130 = vrot.slane %v2123, %v2129
    %2131 = vrot.lane.b32.xlu0 %v2130, 32
    %v2132 = vpop.permute.xlu0 %2131
    %v2133 = vrot.slane %v2132, 7
    %vm2134 = vcmask 261120
    %v2135 = vsel %vm2134, %v2133, %v2132
    %vm2137 = vcmask 1040640
    %vm2138 = vmand %vm2137, %vm1877
    %vm2139 = vcmask 25601
    %vm2140 = vmand %vm2139, %vm1912
    %vm2141 = vmor %vm2140, %vm2138
    %v2142 = vld [vmem:[#allocation5 + $0x6] sm:$0x3]
    %v2143 = vsel %vm2141, %v2135, %v2142
    %2144 = vst [vmem:[#allocation5 + $0x6] sm:$0x3] %v2143
    %v2145 = vld [vmem:[#allocation4 + $0x8] sm:$0x1]
    %v2148 = vunpack.c.l.s4 1966171168
    %v2149 = vunpack.c.0.s8 %v2148
    %v2150 = vlaneseq
    %v2151 = vshrl.u32 %v2150, 7
    %v2152 = vsub.s32 %v2149, %v2151
    %v2153 = vrot.slane %v2145, %v2152
    %v2155 = vunpack.c.l.s4 1966171168
    %v2156 = vunpack.c.0.s8 %v2155
    %v2157 = vlaneseq
    %v2158 = vshrl.u32 %v2157, 7
    %v2159 = vsub.s32 %v2156, %v2158
    %v2160 = vrot.slane %v2153, %v2159
    %v2162 = vshrl.u32 %v2160, 16
    %v2164 = vrot.slane %v2162, 7
    %v2165 = vrot.slane %v2164, 1
    %2166 = vrot.lane.b32.xlu0 %v2165, 4
    %v2167 = vpop.permute.xlu0 %2166
    %vm2169 = vcmask 843808
    %vm2170 = vmand %vm2169, %vm1877
    %v2171 = vld [vmem:[#allocation5 + $0x7] sm:$0x1]
    %v2172 = vsel %vm2170, %v2167, %v2171
    %2173 = vst [vmem:[#allocation5 + $0x7] sm:$0x1] %v2172
    %v2174 = vld [vmem:[#allocation4 + $0x8] sm:$0x2]
    %v2177 = vunpack.c.l.s4 1966171168
    %v2178 = vunpack.c.0.s8 %v2177
    %v2179 = vlaneseq
    %v2180 = vshrl.u32 %v2179, 7
    %v2181 = vsub.s32 %v2178, %v2180
    %v2182 = vrot.slane %v2174, %v2181
    %v2183 = vcombine.high %v2182, %v2182
    %v2185 = vunpack.c.l.s4 1966171168
    %v2186 = vunpack.c.0.s8 %v2185
    %v2187 = vlaneseq
    %v2188 = vshrl.u32 %v2187, 7
    %v2189 = vsub.s32 %v2186, %v2188
    %v2190 = vrot.slane %v2183, %v2189
    %2191 = vrot.lane.b32.xlu0 %v2190, 104
    %v2192 = vpop.permute.xlu0 %2191
    %v2193 = vrot.slane %v2192, 7
    %vm2194 = vcmask 850944
    %v2195 = vsel %vm2194, %v2193, %v2192
    %vm2197 = vcmask 1041216
    %vm2198 = vmand %vm2197, %vm1877
    %vm2199 = vcmask 615425
    %vm2200 = vmand %vm2199, %vm1912
    %vm2201 = vmor %vm2200, %vm2198
    %v2202 = vld [vmem:[#allocation5 + $0x7] sm:$0x3]
    %v2203 = vsel %vm2201, %v2195, %v2202
    %2204 = vst [vmem:[#allocation5 + $0x7] sm:$0x3] %v2203
    %v2205 = vld [vmem:[#allocation4 + $0x8] sm:$0x2]
    %v2208 = vunpack.c.l.s4 1966171168
    %v2209 = vunpack.c.0.s8 %v2208
    %v2210 = vlaneseq
    %v2211 = vshrl.u32 %v2210, 7
    %v2212 = vsub.s32 %v2209, %v2211
    %v2213 = vrot.slane %v2205, %v2212
    %v2214 = vcombine.high %v2213, %v2213
    %v2216 = vunpack.c.l.s4 1966171168
    %v2217 = vunpack.c.0.s8 %v2216
    %v2218 = vlaneseq
    %v2219 = vshrl.u32 %v2218, 7
    %v2220 = vsub.s32 %v2217, %v2219
    %v2221 = vrot.slane %v2214, %v2220
    %v2223 = vshrl.u32 %v2221, 16
    %v2225 = vrot.slane %v2223, 7
    %v2226 = vrot.slane %v2225, 1
    %2227 = vrot.lane.b32.xlu0 %v2226, 76
    %v2228 = vpop.permute.xlu0 %2227
    %v2229 = vrot.slane %v2228, 7
    %vm2230 = vcmask 621568
    %v2231 = vsel %vm2230, %v2229, %v2228
    %vm2233 = vcmask 1040992
    %vm2234 = vmand %vm2233, %vm1877
    %vm2235 = vcmask 386049
    %vm2236 = vmand %vm2235, %vm1912
    %vm2237 = vmor %vm2236, %vm2234
    %v2238 = vld [vmem:[#allocation5 + $0x8] sm:$0x3]
    %v2239 = vsel %vm2237, %v2231, %v2238
    %2240 = vst [vmem:[#allocation5 + $0x8] sm:$0x3] %v2239
    %v2241 = vld [vmem:[#allocation4 + $0x8] sm:$0x4]
    %v2244 = vunpack.c.l.s4 1966171168
    %v2245 = vunpack.c.0.s8 %v2244
    %v2246 = vlaneseq
    %v2247 = vshrl.u32 %v2246, 7
    %v2248 = vsub.s32 %v2245, %v2247
    %v2249 = vrot.slane %v2241, %v2248
    %v2251 = vunpack.c.l.s4 1966171168
    %v2252 = vunpack.c.0.s8 %v2251
    %v2253 = vlaneseq
    %v2254 = vshrl.u32 %v2253, 7
    %v2255 = vsub.s32 %v2252, %v2254
    %v2256 = vrot.slane %v2249, %v2255
    %v2257 = vcombine.high %v2256, %v2256
    %2258 = vrot.lane.b32.xlu0 %v2257, 48
    %v2259 = vpop.permute.xlu0 %2258
    %v2260 = vrot.slane %v2259, 7
    %vm2261 = vcmask 392192
    %v2262 = vsel %vm2261, %v2260, %v2259
    %vm2264 = vcmask 1040768
    %vm2265 = vmand %vm2264, %vm1877
    %vm2266 = vcmask 156673
    %vm2267 = vmand %vm2266, %vm1912
    %vm2268 = vmor %vm2267, %vm2265
    %v2269 = vld [vmem:[#allocation5 + $0x9] sm:$0x3]
    %v2270 = vsel %vm2268, %v2262, %v2269
    %2271 = vst [vmem:[#allocation5 + $0x9] sm:$0x3] %v2270
    %v2272 = vld [vmem:[#allocation4 + $0x8] sm:$0x4]
    %v2275 = vunpack.c.l.s4 1966171168
    %v2276 = vunpack.c.0.s8 %v2275
    %v2277 = vlaneseq
    %v2278 = vshrl.u32 %v2277, 7
    %v2279 = vsub.s32 %v2276, %v2278
    %v2280 = vrot.slane %v2272, %v2279
    %v2282 = vunpack.c.l.s4 1966171168
    %v2283 = vunpack.c.0.s8 %v2282
    %v2284 = vlaneseq
    %v2285 = vshrl.u32 %v2284, 7
    %v2286 = vsub.s32 %v2283, %v2285
    %v2287 = vrot.slane %v2280, %v2286
    %v2288 = vcombine.high %v2287, %v2287
    %v2290 = vshrl.u32 %v2288, 16
    %v2292 = vrot.slane %v2290, 7
    %v2293 = vrot.slane %v2292, 1
    %2294 = vrot.lane.b32.xlu0 %v2293, 20
    %v2295 = vpop.permute.xlu0 %2294
    %vm2297 = vcmask 975008
    %vm2298 = vmand %vm2297, %vm1877
    %v2299 = vld [vmem:[#allocation5 + $0xa] sm:$0x1]
    %v2300 = vsel %vm2298, %v2295, %v2299
    %2301 = vst [vmem:[#allocation5 + $0xa] sm:$0x1] %v2300
    %v2302 = vld [vmem:[#allocation4 + $0x8] sm:$0x8]
    %v2305 = vunpack.c.l.s4 1966171168
    %v2306 = vunpack.c.0.s8 %v2305
    %v2307 = vlaneseq
    %v2308 = vshrl.u32 %v2307, 7
    %v2309 = vsub.s32 %v2306, %v2308
    %v2310 = vrot.slane %v2302, %v2309
    %v2311 = vcombine.high %v2310, %v2310
    %v2313 = vunpack.c.l.s4 1966171168
    %v2314 = vunpack.c.0.s8 %v2313
    %v2315 = vlaneseq
    %v2316 = vshrl.u32 %v2315, 7
    %v2317 = vsub.s32 %v2314, %v2316
    %v2318 = vrot.slane %v2311, %v2317
    %v2319 = vcombine.high %v2318, %v2318
    %2320 = vrot.lane.b32.xlu0 %v2319, 120
    %v2321 = vpop.permute.xlu0 %2320
    %v2322 = vrot.slane %v2321, 7
    %vm2323 = vcmask 982016
    %v2324 = vsel %vm2323, %v2322, %v2321
    %vm2326 = vcmask 1041344
    %vm2327 = vmand %vm2326, %vm1877
    %vm2328 = vcmask 746497
    %vm2329 = vmand %vm2328, %vm1912
    %vm2330 = vmor %vm2329, %vm2327
    %v2331 = vld [vmem:[#allocation5 + $0xa] sm:$0x3]
    %v2332 = vsel %vm2330, %v2324, %v2331
    %2333 = vst [vmem:[#allocation5 + $0xa] sm:$0x3] %v2332
    %v2334 = vld [vmem:[#allocation4 + $0x8] sm:$0x8]
    %v2337 = vunpack.c.l.s4 1966171168
    %v2338 = vunpack.c.0.s8 %v2337
    %v2339 = vlaneseq
    %v2340 = vshrl.u32 %v2339, 7
    %v2341 = vsub.s32 %v2338, %v2340
    %v2342 = vrot.slane %v2334, %v2341
    %v2343 = vcombine.high %v2342, %v2342
    %v2345 = vunpack.c.l.s4 1966171168
    %v2346 = vunpack.c.0.s8 %v2345
    %v2347 = vlaneseq
    %v2348 = vshrl.u32 %v2347, 7
    %v2349 = vsub.s32 %v2346, %v2348
    %v2350 = vrot.slane %v2343, %v2349
    %v2351 = vcombine.high %v2350, %v2350
    %v2353 = vshrl.u32 %v2351, 16
    %v2355 = vrot.slane %v2353, 7
    %v2356 = vrot.slane %v2355, 1
    %2357 = vrot.lane.b32.xlu0 %v2356, 92
    %v2358 = vpop.permute.xlu0 %2357
    %v2359 = vrot.slane %v2358, 7
    %vm2360 = vcmask 752640
    %v2361 = vsel %vm2360, %v2359, %v2358
    %vm2363 = vcmask 1041120
    %vm2364 = vmand %vm2363, %vm1877
    %vm2365 = vcmask 517121
    %vm2366 = vmand %vm2365, %vm1912
    %vm2367 = vmor %vm2366, %vm2364
    %v2368 = vld [vmem:[#allocation5 + $0xb] sm:$0x3]
    %v2369 = vsel %vm2367, %v2361, %v2368
    %2370 = vst [vmem:[#allocation5 + $0xb] sm:$0x3] %v2369
    %v2371 = vld [vmem:[#allocation4 + $0x10] sm:$0x1]
    %v2374 = vunpack.c.l.s4 1966171168
    %v2375 = vunpack.c.0.s8 %v2374
    %v2376 = vlaneseq
    %v2377 = vshrl.u32 %v2376, 7
    %v2378 = vsub.s32 %v2375, %v2377
    %v2379 = vrot.slane %v2371, %v2378
    %v2381 = vunpack.c.l.s4 1966171168
    %v2382 = vunpack.c.0.s8 %v2381
    %v2383 = vlaneseq
    %v2384 = vshrl.u32 %v2383, 7
    %v2385 = vsub.s32 %v2382, %v2384
    %v2386 = vrot.slane %v2379, %v2385
    %2387 = vrot.lane.b32.xlu0 %v2386, 64
    %v2388 = vpop.permute.xlu0 %2387
    %v2389 = vrot.slane %v2388, 7
    %vm2390 = vcmask 523264
    %v2391 = vsel %vm2390, %v2389, %v2388
    %vm2393 = vcmask 1040896
    %vm2394 = vmand %vm2393, %vm1877
    %vm2395 = vcmask 287745
    %vm2396 = vmand %vm2395, %vm1912
    %vm2397 = vmor %vm2396, %vm2394
    %v2398 = vld [vmem:[#allocation5 + $0xc] sm:$0x3]
    %v2399 = vsel %vm2397, %v2391, %v2398
    %2400 = vst [vmem:[#allocation5 + $0xc] sm:$0x3] %v2399
    %v2401 = vld [vmem:[#allocation4 + $0x10] sm:$0x1]
    %v2404 = vunpack.c.l.s4 1966171168
    %v2405 = vunpack.c.0.s8 %v2404
    %v2406 = vlaneseq
    %v2407 = vshrl.u32 %v2406, 7
    %v2408 = vsub.s32 %v2405, %v2407
    %v2409 = vrot.slane %v2401, %v2408
    %v2411 = vunpack.c.l.s4 1966171168
    %v2412 = vunpack.c.0.s8 %v2411
    %v2413 = vlaneseq
    %v2414 = vshrl.u32 %v2413, 7
    %v2415 = vsub.s32 %v2412, %v2414
    %v2416 = vrot.slane %v2409, %v2415
    %v2418 = vshrl.u32 %v2416, 16
    %v2420 = vrot.slane %v2418, 7
    %v2421 = vrot.slane %v2420, 1
    %2422 = vrot.lane.b32.xlu0 %v2421, 36
    %v2423 = vpop.permute.xlu0 %2422
    %v2424 = vrot.slane %v2423, 7
    %vm2425 = vcmask 293888
    %v2426 = vsel %vm2425, %v2424, %v2423
    %vm2428 = vcmask 1040672
    %vm2429 = vmand %vm2428, %vm1877
    %vm2430 = vcmask 58369
    %vm2431 = vmand %vm2430, %vm1912
    %vm2432 = vmor %vm2431, %vm2429
    %v2433 = vld [vmem:[#allocation5 + $0xd] sm:$0x3]
    %v2434 = vsel %vm2432, %v2426, %v2433
    %2435 = vst [vmem:[#allocation5 + $0xd] sm:$0x3] %v2434
    %v2436 = vld [vmem:[#allocation4 + $0x10] sm:$0x2]
    %v2439 = vunpack.c.l.s4 1966171168
    %v2440 = vunpack.c.0.s8 %v2439
    %v2441 = vlaneseq
    %v2442 = vshrl.u32 %v2441, 7
    %v2443 = vsub.s32 %v2440, %v2442
    %v2444 = vrot.slane %v2436, %v2443
    %v2445 = vcombine.high %v2444, %v2444
    %v2447 = vunpack.c.l.s4 1966171168
    %v2448 = vunpack.c.0.s8 %v2447
    %v2449 = vlaneseq
    %v2450 = vshrl.u32 %v2449, 7
    %v2451 = vsub.s32 %v2448, %v2450
    %v2452 = vrot.slane %v2445, %v2451
    %2453 = vrot.lane.b32.xlu0 %v2452, 8
    %v2454 = vpop.permute.xlu0 %2453
    %vm2456 = vcmask 876608
    %vm2457 = vmand %vm2456, %vm1877
    %v2458 = vld [vmem:[#allocation5 + $0xe] sm:$0x1]
    %v2459 = vsel %vm2457, %v2454, %v2458
    %2460 = vst [vmem:[#allocation5 + $0xe] sm:$0x1] %v2459
    %v2461 = vld [vmem:[#allocation4 + $0x10] sm:$0x2]
    %v2464 = vunpack.c.l.s4 1966171168
    %v2465 = vunpack.c.0.s8 %v2464
    %v2466 = vlaneseq
    %v2467 = vshrl.u32 %v2466, 7
    %v2468 = vsub.s32 %v2465, %v2467
    %v2469 = vrot.slane %v2461, %v2468
    %v2470 = vcombine.high %v2469, %v2469
    %v2472 = vunpack.c.l.s4 1966171168
    %v2473 = vunpack.c.0.s8 %v2472
    %v2474 = vlaneseq
    %v2475 = vshrl.u32 %v2474, 7
    %v2476 = vsub.s32 %v2473, %v2475
    %v2477 = vrot.slane %v2470, %v2476
    %v2479 = vshrl.u32 %v2477, 16
    %v2481 = vrot.slane %v2479, 7
    %v2482 = vrot.slane %v2481, 1
    %2483 = vrot.lane.b32.xlu0 %v2482, 108
    %v2484 = vpop.permute.xlu0 %2483
    %v2485 = vrot.slane %v2484, 7
    %vm2486 = vcmask 883712
    %v2487 = vsel %vm2486, %v2485, %v2484
    %vm2489 = vcmask 1041248
    %vm2490 = vmand %vm2489, %vm1877
    %vm2491 = vcmask 648193
    %vm2492 = vmand %vm2491, %vm1912
    %vm2493 = vmor %vm2492, %vm2490
    %v2494 = vld [vmem:[#allocation5 + $0xe] sm:$0x3]
    %v2495 = vsel %vm2493, %v2487, %v2494
    %2496 = vst [vmem:[#allocation5 + $0xe] sm:$0x3] %v2495
    %v2497 = vld [vmem:[#allocation4 + $0x10] sm:$0x4]
    %v2500 = vunpack.c.l.s4 1966171168
    %v2501 = vunpack.c.0.s8 %v2500
    %v2502 = vlaneseq
    %v2503 = vshrl.u32 %v2502, 7
    %v2504 = vsub.s32 %v2501, %v2503
    %v2505 = vrot.slane %v2497, %v2504
    %v2507 = vunpack.c.l.s4 1966171168
    %v2508 = vunpack.c.0.s8 %v2507
    %v2509 = vlaneseq
    %v2510 = vshrl.u32 %v2509, 7
    %v2511 = vsub.s32 %v2508, %v2510
    %v2512 = vrot.slane %v2505, %v2511
    %v2513 = vcombine.high %v2512, %v2512
    %2514 = vrot.lane.b32.xlu0 %v2513, 80
    %v2515 = vpop.permute.xlu0 %2514
    %v2516 = vrot.slane %v2515, 7
    %vm2517 = vcmask 654336
    %v2518 = vsel %vm2517, %v2516, %v2515
    %vm2520 = vcmask 1041024
    %vm2521 = vmand %vm2520, %vm1877
    %vm2522 = vcmask 418817
    %vm2523 = vmand %vm2522, %vm1912
    %vm2524 = vmor %vm2523, %vm2521
    %v2525 = vld [vmem:[#allocation5 + $0xf] sm:$0x3]
    %v2526 = vsel %vm2524, %v2518, %v2525
    %2527 = vst [vmem:[#allocation5 + $0xf] sm:$0x3] %v2526
    %v2528 = vld [vmem:[#allocation4 + $0x10] sm:$0x4]
    %v2531 = vunpack.c.l.s4 1966171168
    %v2532 = vunpack.c.0.s8 %v2531
    %v2533 = vlaneseq
    %v2534 = vshrl.u32 %v2533, 7
    %v2535 = vsub.s32 %v2532, %v2534
    %v2536 = vrot.slane %v2528, %v2535
    %v2538 = vunpack.c.l.s4 1966171168
    %v2539 = vunpack.c.0.s8 %v2538
    %v2540 = vlaneseq
    %v2541 = vshrl.u32 %v2540, 7
    %v2542 = vsub.s32 %v2539, %v2541
    %v2543 = vrot.slane %v2536, %v2542
    %v2544 = vcombine.high %v2543, %v2543
    %v2546 = vshrl.u32 %v2544, 16
    %v2548 = vrot.slane %v2546, 7
    %v2549 = vrot.slane %v2548, 1
    %2550 = vrot.lane.b32.xlu0 %v2549, 52
    %v2551 = vpop.permute.xlu0 %2550
    %v2552 = vrot.slane %v2551, 7
    %vm2553 = vcmask 424960
    %v2554 = vsel %vm2553, %v2552, %v2551
    %vm2556 = vcmask 1040800
    %vm2557 = vmand %vm2556, %vm1877
    %vm2558 = vcmask 189441
    %vm2559 = vmand %vm2558, %vm1912
    %vm2560 = vmor %vm2559, %vm2557
    %v2561 = vld [vmem:[#allocation5 + $0x10] sm:$0x3]
    %v2562 = vsel %vm2560, %v2554, %v2561
    %2563 = vst [vmem:[#allocation5 + $0x10] sm:$0x3] %v2562
    %v2564 = vld [vmem:[#allocation4 + $0x10] sm:$0x8]
    %v2567 = vunpack.c.l.s4 1966171168
    %v2568 = vunpack.c.0.s8 %v2567
    %v2569 = vlaneseq
    %v2570 = vshrl.u32 %v2569, 7
    %v2571 = vsub.s32 %v2568, %v2570
    %v2572 = vrot.slane %v2564, %v2571
    %v2573 = vcombine.high %v2572, %v2572
    %v2575 = vunpack.c.l.s4 1966171168
    %v2576 = vunpack.c.0.s8 %v2575
    %v2577 = vlaneseq
    %v2578 = vshrl.u32 %v2577, 7
    %v2579 = vsub.s32 %v2576, %v2578
    %v2580 = vrot.slane %v2573, %v2579
    %v2581 = vcombine.high %v2580, %v2580
    %2582 = vrot.lane.b32.xlu0 %v2581, 24
    %v2583 = vpop.permute.xlu0 %2582
    %vm2585 = vcmask 1007808
    %vm2586 = vmand %vm2585, %vm1877
    %v2587 = vld [vmem:[#allocation5 + $0x11] sm:$0x1]
    %v2588 = vsel %vm2586, %v2583, %v2587
    %2589 = vst [vmem:[#allocation5 + $0x11] sm:$0x1] %v2588
    %v2590 = vld [vmem:[#allocation4 + $0x10] sm:$0x8]
    %v2593 = vunpack.c.l.s4 1966171168
    %v2594 = vunpack.c.0.s8 %v2593
    %v2595 = vlaneseq
    %v2596 = vshrl.u32 %v2595, 7
    %v2597 = vsub.s32 %v2594, %v2596
    %v2598 = vrot.slane %v2590, %v2597
    %v2599 = vcombine.high %v2598, %v2598
    %v2601 = vunpack.c.l.s4 1966171168
    %v2602 = vunpack.c.0.s8 %v2601
    %v2603 = vlaneseq
    %v2604 = vshrl.u32 %v2603, 7
    %v2605 = vsub.s32 %v2602, %v2604
    %v2606 = vrot.slane %v2599, %v2605
    %v2607 = vcombine.high %v2606, %v2606
    %v2609 = vshrl.u32 %v2607, 16
    %v2611 = vrot.slane %v2609, 7
    %v2612 = vrot.slane %v2611, 1
    %2613 = vrot.lane.b32.xlu0 %v2612, 124
    %v2614 = vpop.permute.xlu0 %2613
    %v2615 = vrot.slane %v2614, 7
    %vm2616 = vcmask 1014784
    %v2617 = vsel %vm2616, %v2615, %v2614
    %vm2619 = vcmask 1041376
    %vm2620 = vmand %vm2619, %vm1877
    %vm2621 = vcmask 779265
    %vm2622 = vmand %vm2621, %vm1912
    %vm2623 = vmor %vm2622, %vm2620
    %v2624 = vld [vmem:[#allocation5 + $0x11] sm:$0x3]
    %v2625 = vsel %vm2623, %v2617, %v2624
    %2626 = vst [vmem:[#allocation5 + $0x11] sm:$0x3] %v2625
    %v2627 = vld [vmem:[#allocation4 + $0x18] sm:$0x1]
    %v2630 = vunpack.c.l.s4 1966171168
    %v2631 = vunpack.c.0.s8 %v2630
    %v2632 = vlaneseq
    %v2633 = vshrl.u32 %v2632, 7
    %v2634 = vsub.s32 %v2631, %v2633
    %v2635 = vrot.slane %v2627, %v2634
    %v2637 = vunpack.c.l.s4 1966171168
    %v2638 = vunpack.c.0.s8 %v2637
    %v2639 = vlaneseq
    %v2640 = vshrl.u32 %v2639, 7
    %v2641 = vsub.s32 %v2638, %v2640
    %v2642 = vrot.slane %v2635, %v2641
    %2643 = vrot.lane.b32.xlu0 %v2642, 96
    %v2644 = vpop.permute.xlu0 %2643
    %v2645 = vrot.slane %v2644, 7
    %vm2646 = vcmask 785408
    %v2647 = vsel %vm2646, %v2645, %v2644
    %vm2649 = vcmask 1041152
    %vm2650 = vmand %vm2649, %vm1877
    %vm2651 = vcmask 549889
    %vm2652 = vmand %vm2651, %vm1912
    %vm2653 = vmor %vm2652, %vm2650
    %v2654 = vld [vmem:[#allocation5 + $0x12] sm:$0x3]
    %v2655 = vsel %vm2653, %v2647, %v2654
    %2656 = vst [vmem:[#allocation5 + $0x12] sm:$0x3] %v2655
    %v2657 = vld [vmem:[#allocation4 + $0x18] sm:$0x1]
    %v2660 = vunpack.c.l.s4 1966171168
    %v2661 = vunpack.c.0.s8 %v2660
    %v2662 = vlaneseq
    %v2663 = vshrl.u32 %v2662, 7
    %v2664 = vsub.s32 %v2661, %v2663
    %v2665 = vrot.slane %v2657, %v2664
    %v2667 = vunpack.c.l.s4 1966171168
    %v2668 = vunpack.c.0.s8 %v2667
    %v2669 = vlaneseq
    %v2670 = vshrl.u32 %v2669, 7
    %v2671 = vsub.s32 %v2668, %v2670
    %v2672 = vrot.slane %v2665, %v2671
    %v2674 = vshrl.u32 %v2672, 16
    %v2676 = vrot.slane %v2674, 7
    %v2677 = vrot.slane %v2676, 1
    %2678 = vrot.lane.b32.xlu0 %v2677, 68
    %v2679 = vpop.permute.xlu0 %2678
    %v2680 = vrot.slane %v2679, 7
    %vm2681 = vcmask 556032
    %v2682 = vsel %vm2681, %v2680, %v2679
    %vm2684 = vcmask 1040928
    %vm2685 = vmand %vm2684, %vm1877
    %vm2686 = vcmask 320513
    %vm2687 = vmand %vm2686, %vm1912
    %vm2688 = vmor %vm2687, %vm2685
    %v2689 = vld [vmem:[#allocation5 + $0x13] sm:$0x3]
    %v2690 = vsel %vm2688, %v2682, %v2689
    %2691 = vst [vmem:[#allocation5 + $0x13] sm:$0x3] %v2690
    %v2692 = vld [vmem:[#allocation4 + $0x18] sm:$0x2]
    %v2695 = vunpack.c.l.s4 1966171168
    %v2696 = vunpack.c.0.s8 %v2695
    %v2697 = vlaneseq
    %v2698 = vshrl.u32 %v2697, 7
    %v2699 = vsub.s32 %v2696, %v2698
    %v2700 = vrot.slane %v2692, %v2699
    %v2701 = vcombine.high %v2700, %v2700
    %v2703 = vunpack.c.l.s4 1966171168
    %v2704 = vunpack.c.0.s8 %v2703
    %v2705 = vlaneseq
    %v2706 = vshrl.u32 %v2705, 7
    %v2707 = vsub.s32 %v2704, %v2706
    %v2708 = vrot.slane %v2701, %v2707
    %2709 = vrot.lane.b32.xlu0 %v2708, 40
    %v2710 = vpop.permute.xlu0 %2709
    %v2711 = vrot.slane %v2710, 7
    %v2712 = vsel %vm1212, %v2711, %v2710
    %vm2714 = vcmask 1040704
    %vm2715 = vmand %vm2714, %vm1877
    %vm2716 = vcmask 91137
    %vm2717 = vmand %vm2716, %vm1912
    %vm2718 = vmor %vm2717, %vm2715
    %v2719 = vld [vmem:[#allocation5 + $0x14] sm:$0x3]
    %v2720 = vsel %vm2718, %v2712, %v2719
    %2721 = vst [vmem:[#allocation5 + $0x14] sm:$0x3] %v2720
    %v2722 = vld [vmem:[#allocation4 + $0x18] sm:$0x2]
    %v2725 = vunpack.c.l.s4 1966171168
    %v2726 = vunpack.c.0.s8 %v2725
    %v2727 = vlaneseq
    %v2728 = vshrl.u32 %v2727, 7
    %v2729 = vsub.s32 %v2726, %v2728
    %v2730 = vrot.slane %v2722, %v2729
    %v2731 = vcombine.high %v2730, %v2730
    %v2733 = vunpack.c.l.s4 1966171168
    %v2734 = vunpack.c.0.s8 %v2733
    %v2735 = vlaneseq
    %v2736 = vshrl.u32 %v2735, 7
    %v2737 = vsub.s32 %v2734, %v2736
    %v2738 = vrot.slane %v2731, %v2737
    %v2740 = vshrl.u32 %v2738, 16
    %v2742 = vrot.slane %v2740, 7
    %v2743 = vrot.slane %v2742, 1
    %2744 = vrot.lane.b32.xlu0 %v2743, 12
    %v2745 = vpop.permute.xlu0 %2744
    %vm2747 = vcmask 909408
    %vm2748 = vmand %vm2747, %vm1877
    %v2749 = vld [vmem:[#allocation5 + $0x15] sm:$0x1]
    %v2750 = vsel %vm2748, %v2745, %v2749
    %2751 = vst [vmem:[#allocation5 + $0x15] sm:$0x1] %v2750
    %v2752 = vld [vmem:[#allocation4 + $0x18] sm:$0x4]
    %v2755 = vunpack.c.l.s4 1966171168
    %v2756 = vunpack.c.0.s8 %v2755
    %v2757 = vlaneseq
    %v2758 = vshrl.u32 %v2757, 7
    %v2759 = vsub.s32 %v2756, %v2758
    %v2760 = vrot.slane %v2752, %v2759
    %v2762 = vunpack.c.l.s4 1966171168
    %v2763 = vunpack.c.0.s8 %v2762
    %v2764 = vlaneseq
    %v2765 = vshrl.u32 %v2764, 7
    %v2766 = vsub.s32 %v2763, %v2765
    %v2767 = vrot.slane %v2760, %v2766
    %v2768 = vcombine.high %v2767, %v2767
    %2769 = vrot.lane.b32.xlu0 %v2768, 112
    %v2770 = vpop.permute.xlu0 %2769
    %v2771 = vrot.slane %v2770, 7
    %v2772 = vsel %vm1082, %v2771, %v2770
    %vm2774 = vcmask 1041280
    %vm2775 = vmand %vm2774, %vm1877
    %vm2776 = vcmask 680961
    %vm2777 = vmand %vm2776, %vm1912
    %vm2778 = vmor %vm2777, %vm2775
    %v2779 = vld [vmem:[#allocation5 + $0x15] sm:$0x3]
    %v2780 = vsel %vm2778, %v2772, %v2779
    %2781 = vst [vmem:[#allocation5 + $0x15] sm:$0x3] %v2780
    %v2782 = vld [vmem:[#allocation4 + $0x18] sm:$0x4]
    %v2785 = vunpack.c.l.s4 1966171168
    %v2786 = vunpack.c.0.s8 %v2785
    %v2787 = vlaneseq
    %v2788 = vshrl.u32 %v2787, 7
    %v2789 = vsub.s32 %v2786, %v2788
    %v2790 = vrot.slane %v2782, %v2789
    %v2792 = vunpack.c.l.s4 1966171168
    %v2793 = vunpack.c.0.s8 %v2792
    %v2794 = vlaneseq
    %v2795 = vshrl.u32 %v2794, 7
    %v2796 = vsub.s32 %v2793, %v2795
    %v2797 = vrot.slane %v2790, %v2796
    %v2798 = vcombine.high %v2797, %v2797
    %v2800 = vshrl.u32 %v2798, 16
    %v2802 = vrot.slane %v2800, 7
    %v2803 = vrot.slane %v2802, 1
    %2804 = vrot.lane.b32.xlu0 %v2803, 84
    %v2805 = vpop.permute.xlu0 %2804
    %v2806 = vrot.slane %v2805, 7
    %v2807 = vsel %vm1045, %v2806, %v2805
    %vm2809 = vcmask 1041056
    %vm2810 = vmand %vm2809, %vm1877
    %vm2811 = vcmask 451585
    %vm2812 = vmand %vm2811, %vm1912
    %vm2813 = vmor %vm2812, %vm2810
    %v2814 = vld [vmem:[#allocation5 + $0x16] sm:$0x3]
    %v2815 = vsel %vm2813, %v2807, %v2814
    %2816 = vst [vmem:[#allocation5 + $0x16] sm:$0x3] %v2815
    %v2817 = vld [vmem:[#allocation4 + $0x18] sm:$0x8]
    %v2820 = vunpack.c.l.s4 1966171168
    %v2821 = vunpack.c.0.s8 %v2820
    %v2822 = vlaneseq
    %v2823 = vshrl.u32 %v2822, 7
    %v2824 = vsub.s32 %v2821, %v2823
    %v2825 = vrot.slane %v2817, %v2824
    %v2826 = vcombine.high %v2825, %v2825
    %v2828 = vunpack.c.l.s4 1966171168
    %v2829 = vunpack.c.0.s8 %v2828
    %v2830 = vlaneseq
    %v2831 = vshrl.u32 %v2830, 7
    %v2832 = vsub.s32 %v2829, %v2831
    %v2833 = vrot.slane %v2826, %v2832
    %v2834 = vcombine.high %v2833, %v2833
    %2835 = vrot.lane.b32.xlu0 %v2834, 56
    %v2836 = vpop.permute.xlu0 %2835
    %v2837 = vrot.slane %v2836, 7
    %v2838 = vsel %vm1162, %v2837, %v2836
    %vm2840 = vcmask 1040832
    %vm2841 = vmand %vm2840, %vm1877
    %vm2842 = vcmask 222209
    %vm2843 = vmand %vm2842, %vm1912
    %vm2844 = vmor %vm2843, %vm2841
    %v2845 = vld [vmem:[#allocation5 + $0x17] sm:$0x3]
    %v2846 = vsel %vm2844, %v2838, %v2845
    %2847 = vst [vmem:[#allocation5 + $0x17] sm:$0x3] %v2846
    %v2848 = vld [vmem:[#allocation4 + $0x18] sm:$0x8]
    %v2851 = vunpack.c.l.s4 1966171168
    %v2852 = vunpack.c.0.s8 %v2851
    %v2853 = vlaneseq
    %v2854 = vshrl.u32 %v2853, 7
    %v2855 = vsub.s32 %v2852, %v2854
    %v2856 = vrot.slane %v2848, %v2855
    %v2857 = vcombine.high %v2856, %v2856
    %v2859 = vunpack.c.l.s4 1966171168
    %v2860 = vunpack.c.0.s8 %v2859
    %v2861 = vlaneseq
    %v2862 = vshrl.u32 %v2861, 7
    %v2863 = vsub.s32 %v2860, %v2862
    %v2864 = vrot.slane %v2857, %v2863
    %v2865 = vcombine.high %v2864, %v2864
    %v2867 = vshrl.u32 %v2865, 16
    %v2869 = vrot.slane %v2867, 7
    %v2870 = vrot.slane %v2869, 1
    %2871 = vrot.lane.b32.xlu0 %v2870, 28
    %v2872 = vpop.permute.xlu0 %2871
    %vm2874 = vcmask 1040608
    %vm2875 = vmand %vm2874, %vm1877
    %v2876 = vld [vmem:[#allocation5 + $0x18] sm:$0x1]
    %v2877 = vsel %vm2875, %v2872, %v2876
    %2878 = vst [vmem:[#allocation5 + $0x18] sm:$0x1] %v2877
    %v2879 = vld [vmem:[#allocation4] sm:$0x11]
    %v2882 = vunpack.c.l.s4 1966171168
    %v2883 = vunpack.c.0.s8 %v2882
    %v2884 = vlaneseq
    %v2885 = vshrl.u32 %v2884, 7
    %v2886 = vsub.s32 %v2883, %v2885
    %v2887 = vrot.slane %v2879, %v2886
    %v2889 = vunpack.c.l.s4 1966171168
    %v2890 = vunpack.c.0.s8 %v2889
    %v2891 = vlaneseq
    %v2892 = vshrl.u32 %v2891, 7
    %v2893 = vsub.s32 %v2890, %v2892
    %v2894 = vrot.slane %v2887, %v2893
    %v2896 = vshll.u32 %v2894, 16
    %2898 = vrot.lane.b32.xlu0 %v2896, 28
    %v2899 = vpop.permute.xlu0 %2898
    %v2900 = vrot.slane %v2899, 1
    %v2901 = vsel %vm1065, %v2899, %v2900
    %vm2903 = vsmask.f32 7938
    %vm2904 = vmand %vm1876, %vm2903
    %v2905 = vld [vmem:[#allocation5] sm:$0x1]
    %v2906 = vsel %vm2904, %v2901, %v2905
    %2907 = vst [vmem:[#allocation5] sm:$0x1] %v2906
    %v2908 = vld [vmem:[#allocation4] sm:$0x11]
    %v2911 = vunpack.c.l.s4 1966171168
    %v2912 = vunpack.c.0.s8 %v2911
    %v2913 = vlaneseq
    %v2914 = vshrl.u32 %v2913, 7
    %v2915 = vsub.s32 %v2912, %v2914
    %v2916 = vrot.slane %v2908, %v2915
    %v2918 = vunpack.c.l.s4 1966171168
    %v2919 = vunpack.c.0.s8 %v2918
    %v2920 = vlaneseq
    %v2921 = vshrl.u32 %v2920, 7
    %v2922 = vsub.s32 %v2919, %v2921
    %v2923 = vrot.slane %v2916, %v2922
    %vm2925 = vmand %vm1909, %vm2903
    %vm2926 = vsmask.f32 7942
    %vm2927 = vmand %vm1911, %vm2926
    %vm2928 = vmor %vm2927, %vm2925
    %v2929 = vld [vmem:[#allocation5] sm:$0x3]
    %v2930 = vsel %vm2928, %v2923, %v2929
    %2931 = vst [vmem:[#allocation5] sm:$0x3] %v2930
    %v2932 = vld [vmem:[#allocation4] sm:$0x22]
    %v2935 = vunpack.c.l.s4 1966171168
    %v2936 = vunpack.c.0.s8 %v2935
    %v2937 = vlaneseq
    %v2938 = vshrl.u32 %v2937, 7
    %v2939 = vsub.s32 %v2936, %v2938
    %v2940 = vrot.slane %v2932, %v2939
    %v2941 = vcombine.high %v2940, %v2940
    %v2943 = vunpack.c.l.s4 1966171168
    %v2944 = vunpack.c.0.s8 %v2943
    %v2945 = vlaneseq
    %v2946 = vshrl.u32 %v2945, 7
    %v2947 = vsub.s32 %v2944, %v2946
    %v2948 = vrot.slane %v2941, %v2947
    %v2950 = vshll.u32 %v2948, 16
    %2952 = vrot.lane.b32.xlu0 %v2950, 100
    %v2953 = vpop.permute.xlu0 %2952
    %v2954 = vrot.slane %v2953, 1
    %v2955 = vsel %vm1906, %v2953, %v2954
    %vm2957 = vmand %vm1941, %vm2903
    %vm2958 = vmand %vm1943, %vm2926
    %vm2959 = vmor %vm2958, %vm2957
    %v2960 = vld [vmem:[#allocation5 + $0x1] sm:$0x3]
    %v2961 = vsel %vm2959, %v2955, %v2960
    %2962 = vst [vmem:[#allocation5 + $0x1] sm:$0x3] %v2961
    %v2963 = vld [vmem:[#allocation4] sm:$0x22]
    %v2966 = vunpack.c.l.s4 1966171168
    %v2967 = vunpack.c.0.s8 %v2966
    %v2968 = vlaneseq
    %v2969 = vshrl.u32 %v2968, 7
    %v2970 = vsub.s32 %v2967, %v2969
    %v2971 = vrot.slane %v2963, %v2970
    %v2972 = vcombine.high %v2971, %v2971
    %v2974 = vunpack.c.l.s4 1966171168
    %v2975 = vunpack.c.0.s8 %v2974
    %v2976 = vlaneseq
    %v2977 = vshrl.u32 %v2976, 7
    %v2978 = vsub.s32 %v2975, %v2977
    %v2979 = vrot.slane %v2972, %v2978
    %2980 = vrot.lane.b32.xlu0 %v2979, 72
    %v2981 = vpop.permute.xlu0 %2980
    %v2982 = vrot.slane %v2981, 1
    %v2983 = vsel %vm1938, %v2981, %v2982
    %vm2985 = vmand %vm1977, %vm2903
    %vm2986 = vmand %vm1979, %vm2926
    %vm2987 = vmor %vm2986, %vm2985
    %v2988 = vld [vmem:[#allocation5 + $0x2] sm:$0x3]
    %v2989 = vsel %vm2987, %v2983, %v2988
    %2990 = vst [vmem:[#allocation5 + $0x2] sm:$0x3] %v2989
    %v2991 = vld [vmem:[#allocation4] sm:$0x44]
    %v2994 = vunpack.c.l.s4 1966171168
    %v2995 = vunpack.c.0.s8 %v2994
    %v2996 = vlaneseq
    %v2997 = vshrl.u32 %v2996, 7
    %v2998 = vsub.s32 %v2995, %v2997
    %v2999 = vrot.slane %v2991, %v2998
    %v3001 = vunpack.c.l.s4 1966171168
    %v3002 = vunpack.c.0.s8 %v3001
    %v3003 = vlaneseq
    %v3004 = vshrl.u32 %v3003, 7
    %v3005 = vsub.s32 %v3002, %v3004
    %v3006 = vrot.slane %v2999, %v3005
    %v3007 = vcombine.high %v3006, %v3006
    %v3009 = vshll.u32 %v3007, 16
    %3011 = vrot.lane.b32.xlu0 %v3009, 44
    %v3012 = vpop.permute.xlu0 %3011
    %v3013 = vrot.slane %v3012, 1
    %v3014 = vsel %vm1974, %v3012, %v3013
    %vm3016 = vmand %vm2005, %vm2903
    %v3017 = vld [vmem:[#allocation5 + $0x3] sm:$0x1]
    %v3018 = vsel %vm3016, %v3014, %v3017
    %3019 = vst [vmem:[#allocation5 + $0x3] sm:$0x1] %v3018
    %v3020 = vld [vmem:[#allocation4] sm:$0x44]
    %v3023 = vunpack.c.l.s4 1966171168
    %v3024 = vunpack.c.0.s8 %v3023
    %v3025 = vlaneseq
    %v3026 = vshrl.u32 %v3025, 7
    %v3027 = vsub.s32 %v3024, %v3026
    %v3028 = vrot.slane %v3020, %v3027
    %v3030 = vunpack.c.l.s4 1966171168
    %v3031 = vunpack.c.0.s8 %v3030
    %v3032 = vlaneseq
    %v3033 = vshrl.u32 %v3032, 7
    %v3034 = vsub.s32 %v3031, %v3033
    %v3035 = vrot.slane %v3028, %v3034
    %v3036 = vcombine.high %v3035, %v3035
    %3037 = vrot.lane.b32.xlu0 %v3036, 16
    %v3038 = vpop.permute.xlu0 %3037
    %v3039 = vrot.slane %v3038, 7
    %vm3040 = vcmask 130048
    %v3041 = vsel %vm3040, %v3039, %v3038
    %vm3043 = vmand %vm2038, %vm2903
    %vm3044 = vmand %vm2040, %vm2926
    %vm3045 = vmor %vm3044, %vm3043
    %v3046 = vld [vmem:[#allocation5 + $0x3] sm:$0x3]
    %v3047 = vsel %vm3045, %v3041, %v3046
    %3048 = vst [vmem:[#allocation5 + $0x3] sm:$0x3] %v3047
    %v3049 = vld [vmem:[#allocation4] sm:$0x88]
    %v3052 = vunpack.c.l.s4 1966171168
    %v3053 = vunpack.c.0.s8 %v3052
    %v3054 = vlaneseq
    %v3055 = vshrl.u32 %v3054, 7
    %v3056 = vsub.s32 %v3053, %v3055
    %v3057 = vrot.slane %v3049, %v3056
    %v3058 = vcombine.high %v3057, %v3057
    %v3060 = vunpack.c.l.s4 1966171168
    %v3061 = vunpack.c.0.s8 %v3060
    %v3062 = vlaneseq
    %v3063 = vshrl.u32 %v3062, 7
    %v3064 = vsub.s32 %v3061, %v3063
    %v3065 = vrot.slane %v3058, %v3064
    %v3066 = vcombine.high %v3065, %v3065
    %v3068 = vshll.u32 %v3066, 16
    %3070 = vrot.lane.b32.xlu0 %v3068, 116
    %v3071 = vpop.permute.xlu0 %3070
    %v3072 = vrot.slane %v3071, 1
    %v3073 = vsel %vm2035, %v3071, %v3072
    %vm3075 = vmand %vm2070, %vm2903
    %vm3076 = vmand %vm2072, %vm2926
    %vm3077 = vmor %vm3076, %vm3075
    %v3078 = vld [vmem:[#allocation5 + $0x4] sm:$0x3]
    %v3079 = vsel %vm3077, %v3073, %v3078
    %3080 = vst [vmem:[#allocation5 + $0x4] sm:$0x3] %v3079
    %v3081 = vld [vmem:[#allocation4] sm:$0x88]
    %v3084 = vunpack.c.l.s4 1966171168
    %v3085 = vunpack.c.0.s8 %v3084
    %v3086 = vlaneseq
    %v3087 = vshrl.u32 %v3086, 7
    %v3088 = vsub.s32 %v3085, %v3087
    %v3089 = vrot.slane %v3081, %v3088
    %v3090 = vcombine.high %v3089, %v3089
    %v3092 = vunpack.c.l.s4 1966171168
    %v3093 = vunpack.c.0.s8 %v3092
    %v3094 = vlaneseq
    %v3095 = vshrl.u32 %v3094, 7
    %v3096 = vsub.s32 %v3093, %v3095
    %v3097 = vrot.slane %v3090, %v3096
    %v3098 = vcombine.high %v3097, %v3097
    %3099 = vrot.lane.b32.xlu0 %v3098, 88
    %v3100 = vpop.permute.xlu0 %3099
    %v3101 = vrot.slane %v3100, 1
    %v3102 = vsel %vm2067, %v3100, %v3101
    %vm3104 = vmand %vm2107, %vm2903
    %vm3105 = vmand %vm2109, %vm2926
    %vm3106 = vmor %vm3105, %vm3104
    %v3107 = vld [vmem:[#allocation5 + $0x5] sm:$0x3]
    %v3108 = vsel %vm3106, %v3102, %v3107
    %3109 = vst [vmem:[#allocation5 + $0x5] sm:$0x3] %v3108
    %v3110 = vld [vmem:[#allocation4 + $0x8] sm:$0x11]
    %v3113 = vunpack.c.l.s4 1966171168
    %v3114 = vunpack.c.0.s8 %v3113
    %v3115 = vlaneseq
    %v3116 = vshrl.u32 %v3115, 7
    %v3117 = vsub.s32 %v3114, %v3116
    %v3118 = vrot.slane %v3110, %v3117
    %v3120 = vunpack.c.l.s4 1966171168
    %v3121 = vunpack.c.0.s8 %v3120
    %v3122 = vlaneseq
    %v3123 = vshrl.u32 %v3122, 7
    %v3124 = vsub.s32 %v3121, %v3123
    %v3125 = vrot.slane %v3118, %v3124
    %v3127 = vshll.u32 %v3125, 16
    %3129 = vrot.lane.b32.xlu0 %v3127, 60
    %v3130 = vpop.permute.xlu0 %3129
    %v3131 = vrot.slane %v3130, 1
    %v3132 = vsel %vm2104, %v3130, %v3131
    %vm3134 = vmand %vm2137, %vm2903
    %vm3135 = vmand %vm2139, %vm2926
    %vm3136 = vmor %vm3135, %vm3134
    %v3137 = vld [vmem:[#allocation5 + $0x6] sm:$0x3]
    %v3138 = vsel %vm3136, %v3132, %v3137
    %3139 = vst [vmem:[#allocation5 + $0x6] sm:$0x3] %v3138
    %v3140 = vld [vmem:[#allocation4 + $0x8] sm:$0x11]
    %v3143 = vunpack.c.l.s4 1966171168
    %v3144 = vunpack.c.0.s8 %v3143
    %v3145 = vlaneseq
    %v3146 = vshrl.u32 %v3145, 7
    %v3147 = vsub.s32 %v3144, %v3146
    %v3148 = vrot.slane %v3140, %v3147
    %v3150 = vunpack.c.l.s4 1966171168
    %v3151 = vunpack.c.0.s8 %v3150
    %v3152 = vlaneseq
    %v3153 = vshrl.u32 %v3152, 7
    %v3154 = vsub.s32 %v3151, %v3153
    %v3155 = vrot.slane %v3148, %v3154
    %3156 = vrot.lane.b32.xlu0 %v3155, 32
    %v3157 = vpop.permute.xlu0 %3156
    %v3158 = vrot.slane %v3157, 1
    %v3159 = vsel %vm2134, %v3157, %v3158
    %vm3161 = vmand %vm2169, %vm2903
    %v3162 = vld [vmem:[#allocation5 + $0x7] sm:$0x1]
    %v3163 = vsel %vm3161, %v3159, %v3162
    %3164 = vst [vmem:[#allocation5 + $0x7] sm:$0x1] %v3163
    %v3165 = vld [vmem:[#allocation4 + $0x8] sm:$0x22]
    %v3168 = vunpack.c.l.s4 1966171168
    %v3169 = vunpack.c.0.s8 %v3168
    %v3170 = vlaneseq
    %v3171 = vshrl.u32 %v3170, 7
    %v3172 = vsub.s32 %v3169, %v3171
    %v3173 = vrot.slane %v3165, %v3172
    %v3174 = vcombine.high %v3173, %v3173
    %v3176 = vunpack.c.l.s4 1966171168
    %v3177 = vunpack.c.0.s8 %v3176
    %v3178 = vlaneseq
    %v3179 = vshrl.u32 %v3178, 7
    %v3180 = vsub.s32 %v3177, %v3179
    %v3181 = vrot.slane %v3174, %v3180
    %v3183 = vshll.u32 %v3181, 16
    %3185 = vrot.lane.b32.xlu0 %v3183, 4
    %v3186 = vpop.permute.xlu0 %3185
    %v3187 = vrot.slane %v3186, 7
    %vm3188 = vcmask 31744
    %v3189 = vsel %vm3188, %v3187, %v3186
    %vm3191 = vmand %vm2197, %vm2903
    %vm3192 = vmand %vm2199, %vm2926
    %vm3193 = vmor %vm3192, %vm3191
    %v3194 = vld [vmem:[#allocation5 + $0x7] sm:$0x3]
    %v3195 = vsel %vm3193, %v3189, %v3194
    %3196 = vst [vmem:[#allocation5 + $0x7] sm:$0x3] %v3195
    %v3197 = vld [vmem:[#allocation4 + $0x8] sm:$0x22]
    %v3200 = vunpack.c.l.s4 1966171168
    %v3201 = vunpack.c.0.s8 %v3200
    %v3202 = vlaneseq
    %v3203 = vshrl.u32 %v3202, 7
    %v3204 = vsub.s32 %v3201, %v3203
    %v3205 = vrot.slane %v3197, %v3204
    %v3206 = vcombine.high %v3205, %v3205
    %v3208 = vunpack.c.l.s4 1966171168
    %v3209 = vunpack.c.0.s8 %v3208
    %v3210 = vlaneseq
    %v3211 = vshrl.u32 %v3210, 7
    %v3212 = vsub.s32 %v3209, %v3211
    %v3213 = vrot.slane %v3206, %v3212
    %3214 = vrot.lane.b32.xlu0 %v3213, 104
    %v3215 = vpop.permute.xlu0 %3214
    %v3216 = vrot.slane %v3215, 1
    %v3217 = vsel %vm2194, %v3215, %v3216
    %vm3219 = vmand %vm2233, %vm2903
    %vm3220 = vmand %vm2235, %vm2926
    %vm3221 = vmor %vm3220, %vm3219
    %v3222 = vld [vmem:[#allocation5 + $0x8] sm:$0x3]
    %v3223 = vsel %vm3221, %v3217, %v3222
    %3224 = vst [vmem:[#allocation5 + $0x8] sm:$0x3] %v3223
    %v3225 = vld [vmem:[#allocation4 + $0x8] sm:$0x44]
    %v3228 = vunpack.c.l.s4 1966171168
    %v3229 = vunpack.c.0.s8 %v3228
    %v3230 = vlaneseq
    %v3231 = vshrl.u32 %v3230, 7
    %v3232 = vsub.s32 %v3229, %v3231
    %v3233 = vrot.slane %v3225, %v3232
    %v3235 = vunpack.c.l.s4 1966171168
    %v3236 = vunpack.c.0.s8 %v3235
    %v3237 = vlaneseq
    %v3238 = vshrl.u32 %v3237, 7
    %v3239 = vsub.s32 %v3236, %v3238
    %v3240 = vrot.slane %v3233, %v3239
    %v3241 = vcombine.high %v3240, %v3240
    %v3243 = vshll.u32 %v3241, 16
    %3245 = vrot.lane.b32.xlu0 %v3243, 76
    %v3246 = vpop.permute.xlu0 %3245
    %v3247 = vrot.slane %v3246, 1
    %v3248 = vsel %vm2230, %v3246, %v3247
    %vm3250 = vmand %vm2264, %vm2903
    %vm3251 = vmand %vm2266, %vm2926
    %vm3252 = vmor %vm3251, %vm3250
    %v3253 = vld [vmem:[#allocation5 + $0x9] sm:$0x3]
    %v3254 = vsel %vm3252, %v3248, %v3253
    %3255 = vst [vmem:[#allocation5 + $0x9] sm:$0x3] %v3254
    %v3256 = vld [vmem:[#allocation4 + $0x8] sm:$0x44]
    %v3259 = vunpack.c.l.s4 1966171168
    %v3260 = vunpack.c.0.s8 %v3259
    %v3261 = vlaneseq
    %v3262 = vshrl.u32 %v3261, 7
    %v3263 = vsub.s32 %v3260, %v3262
    %v3264 = vrot.slane %v3256, %v3263
    %v3266 = vunpack.c.l.s4 1966171168
    %v3267 = vunpack.c.0.s8 %v3266
    %v3268 = vlaneseq
    %v3269 = vshrl.u32 %v3268, 7
    %v3270 = vsub.s32 %v3267, %v3269
    %v3271 = vrot.slane %v3264, %v3270
    %v3272 = vcombine.high %v3271, %v3271
    %3273 = vrot.lane.b32.xlu0 %v3272, 48
    %v3274 = vpop.permute.xlu0 %3273
    %v3275 = vrot.slane %v3274, 1
    %v3276 = vsel %vm2261, %v3274, %v3275
    %vm3278 = vmand %vm2297, %vm2903
    %v3279 = vld [vmem:[#allocation5 + $0xa] sm:$0x1]
    %v3280 = vsel %vm3278, %v3276, %v3279
    %3281 = vst [vmem:[#allocation5 + $0xa] sm:$0x1] %v3280
    %v3282 = vld [vmem:[#allocation4 + $0x8] sm:$0x88]
    %v3285 = vunpack.c.l.s4 1966171168
    %v3286 = vunpack.c.0.s8 %v3285
    %v3287 = vlaneseq
    %v3288 = vshrl.u32 %v3287, 7
    %v3289 = vsub.s32 %v3286, %v3288
    %v3290 = vrot.slane %v3282, %v3289
    %v3291 = vcombine.high %v3290, %v3290
    %v3293 = vunpack.c.l.s4 1966171168
    %v3294 = vunpack.c.0.s8 %v3293
    %v3295 = vlaneseq
    %v3296 = vshrl.u32 %v3295, 7
    %v3297 = vsub.s32 %v3294, %v3296
    %v3298 = vrot.slane %v3291, %v3297
    %v3299 = vcombine.high %v3298, %v3298
    %v3301 = vshll.u32 %v3299, 16
    %3303 = vrot.lane.b32.xlu0 %v3301, 20
    %v3304 = vpop.permute.xlu0 %3303
    %v3305 = vrot.slane %v3304, 7
    %vm3306 = vcmask 162816
    %v3307 = vsel %vm3306, %v3305, %v3304
    %vm3309 = vmand %vm2326, %vm2903
    %vm3310 = vmand %vm2328, %vm2926
    %vm3311 = vmor %vm3310, %vm3309
    %v3312 = vld [vmem:[#allocation5 + $0xa] sm:$0x3]
    %v3313 = vsel %vm3311, %v3307, %v3312
    %3314 = vst [vmem:[#allocation5 + $0xa] sm:$0x3] %v3313
    %v3315 = vld [vmem:[#allocation4 + $0x8] sm:$0x88]
    %v3318 = vunpack.c.l.s4 1966171168
    %v3319 = vunpack.c.0.s8 %v3318
    %v3320 = vlaneseq
    %v3321 = vshrl.u32 %v3320, 7
    %v3322 = vsub.s32 %v3319, %v3321
    %v3323 = vrot.slane %v3315, %v3322
    %v3324 = vcombine.high %v3323, %v3323
    %v3326 = vunpack.c.l.s4 1966171168
    %v3327 = vunpack.c.0.s8 %v3326
    %v3328 = vlaneseq
    %v3329 = vshrl.u32 %v3328, 7
    %v3330 = vsub.s32 %v3327, %v3329
    %v3331 = vrot.slane %v3324, %v3330
    %v3332 = vcombine.high %v3331, %v3331
    %3333 = vrot.lane.b32.xlu0 %v3332, 120
    %v3334 = vpop.permute.xlu0 %3333
    %v3335 = vrot.slane %v3334, 1
    %v3336 = vsel %vm2323, %v3334, %v3335
    %vm3338 = vmand %vm2363, %vm2903
    %vm3339 = vmand %vm2365, %vm2926
    %vm3340 = vmor %vm3339, %vm3338
    %v3341 = vld [vmem:[#allocation5 + $0xb] sm:$0x3]
    %v3342 = vsel %vm3340, %v3336, %v3341
    %3343 = vst [vmem:[#allocation5 + $0xb] sm:$0x3] %v3342
    %v3344 = vld [vmem:[#allocation4 + $0x10] sm:$0x11]
    %v3347 = vunpack.c.l.s4 1966171168
    %v3348 = vunpack.c.0.s8 %v3347
    %v3349 = vlaneseq
    %v3350 = vshrl.u32 %v3349, 7
    %v3351 = vsub.s32 %v3348, %v3350
    %v3352 = vrot.slane %v3344, %v3351
    %v3354 = vunpack.c.l.s4 1966171168
    %v3355 = vunpack.c.0.s8 %v3354
    %v3356 = vlaneseq
    %v3357 = vshrl.u32 %v3356, 7
    %v3358 = vsub.s32 %v3355, %v3357
    %v3359 = vrot.slane %v3352, %v3358
    %v3361 = vshll.u32 %v3359, 16
    %3363 = vrot.lane.b32.xlu0 %v3361, 92
    %v3364 = vpop.permute.xlu0 %3363
    %v3365 = vrot.slane %v3364, 1
    %v3366 = vsel %vm2360, %v3364, %v3365
    %vm3368 = vmand %vm2393, %vm2903
    %vm3369 = vmand %vm2395, %vm2926
    %vm3370 = vmor %vm3369, %vm3368
    %v3371 = vld [vmem:[#allocation5 + $0xc] sm:$0x3]
    %v3372 = vsel %vm3370, %v3366, %v3371
    %3373 = vst [vmem:[#allocation5 + $0xc] sm:$0x3] %v3372
    %v3374 = vld [vmem:[#allocation4 + $0x10] sm:$0x11]
    %v3377 = vunpack.c.l.s4 1966171168
    %v3378 = vunpack.c.0.s8 %v3377
    %v3379 = vlaneseq
    %v3380 = vshrl.u32 %v3379, 7
    %v3381 = vsub.s32 %v3378, %v3380
    %v3382 = vrot.slane %v3374, %v3381
    %v3384 = vunpack.c.l.s4 1966171168
    %v3385 = vunpack.c.0.s8 %v3384
    %v3386 = vlaneseq
    %v3387 = vshrl.u32 %v3386, 7
    %v3388 = vsub.s32 %v3385, %v3387
    %v3389 = vrot.slane %v3382, %v3388
    %3390 = vrot.lane.b32.xlu0 %v3389, 64
    %v3391 = vpop.permute.xlu0 %3390
    %v3392 = vrot.slane %v3391, 1
    %v3393 = vsel %vm2390, %v3391, %v3392
    %vm3395 = vmand %vm2428, %vm2903
    %vm3396 = vmand %vm2430, %vm2926
    %vm3397 = vmor %vm3396, %vm3395
    %v3398 = vld [vmem:[#allocation5 + $0xd] sm:$0x3]
    %v3399 = vsel %vm3397, %v3393, %v3398
    %3400 = vst [vmem:[#allocation5 + $0xd] sm:$0x3] %v3399
    %v3401 = vld [vmem:[#allocation4 + $0x10] sm:$0x22]
    %v3404 = vunpack.c.l.s4 1966171168
    %v3405 = vunpack.c.0.s8 %v3404
    %v3406 = vlaneseq
    %v3407 = vshrl.u32 %v3406, 7
    %v3408 = vsub.s32 %v3405, %v3407
    %v3409 = vrot.slane %v3401, %v3408
    %v3410 = vcombine.high %v3409, %v3409
    %v3412 = vunpack.c.l.s4 1966171168
    %v3413 = vunpack.c.0.s8 %v3412
    %v3414 = vlaneseq
    %v3415 = vshrl.u32 %v3414, 7
    %v3416 = vsub.s32 %v3413, %v3415
    %v3417 = vrot.slane %v3410, %v3416
    %v3419 = vshll.u32 %v3417, 16
    %3421 = vrot.lane.b32.xlu0 %v3419, 36
    %v3422 = vpop.permute.xlu0 %3421
    %v3423 = vrot.slane %v3422, 1
    %v3424 = vsel %vm2425, %v3422, %v3423
    %vm3426 = vmand %vm2456, %vm2903
    %v3427 = vld [vmem:[#allocation5 + $0xe] sm:$0x1]
    %v3428 = vsel %vm3426, %v3424, %v3427
    %3429 = vst [vmem:[#allocation5 + $0xe] sm:$0x1] %v3428
    %v3430 = vld [vmem:[#allocation4 + $0x10] sm:$0x22]
    %v3433 = vunpack.c.l.s4 1966171168
    %v3434 = vunpack.c.0.s8 %v3433
    %v3435 = vlaneseq
    %v3436 = vshrl.u32 %v3435, 7
    %v3437 = vsub.s32 %v3434, %v3436
    %v3438 = vrot.slane %v3430, %v3437
    %v3439 = vcombine.high %v3438, %v3438
    %v3441 = vunpack.c.l.s4 1966171168
    %v3442 = vunpack.c.0.s8 %v3441
    %v3443 = vlaneseq
    %v3444 = vshrl.u32 %v3443, 7
    %v3445 = vsub.s32 %v3442, %v3444
    %v3446 = vrot.slane %v3439, %v3445
    %3447 = vrot.lane.b32.xlu0 %v3446, 8
    %v3448 = vpop.permute.xlu0 %3447
    %v3449 = vrot.slane %v3448, 7
    %vm3450 = vcmask 64512
    %v3451 = vsel %vm3450, %v3449, %v3448
    %vm3453 = vmand %vm2489, %vm2903
    %vm3454 = vmand %vm2491, %vm2926
    %vm3455 = vmor %vm3454, %vm3453
    %v3456 = vld [vmem:[#allocation5 + $0xe] sm:$0x3]
    %v3457 = vsel %vm3455, %v3451, %v3456
    %3458 = vst [vmem:[#allocation5 + $0xe] sm:$0x3] %v3457
    %v3459 = vld [vmem:[#allocation4 + $0x10] sm:$0x44]
    %v3462 = vunpack.c.l.s4 1966171168
    %v3463 = vunpack.c.0.s8 %v3462
    %v3464 = vlaneseq
    %v3465 = vshrl.u32 %v3464, 7
    %v3466 = vsub.s32 %v3463, %v3465
    %v3467 = vrot.slane %v3459, %v3466
    %v3469 = vunpack.c.l.s4 1966171168
    %v3470 = vunpack.c.0.s8 %v3469
    %v3471 = vlaneseq
    %v3472 = vshrl.u32 %v3471, 7
    %v3473 = vsub.s32 %v3470, %v3472
    %v3474 = vrot.slane %v3467, %v3473
    %v3475 = vcombine.high %v3474, %v3474
    %v3477 = vshll.u32 %v3475, 16
    %3479 = vrot.lane.b32.xlu0 %v3477, 108
    %v3480 = vpop.permute.xlu0 %3479
    %v3481 = vrot.slane %v3480, 1
    %v3482 = vsel %vm2486, %v3480, %v3481
    %vm3484 = vmand %vm2520, %vm2903
    %vm3485 = vmand %vm2522, %vm2926
    %vm3486 = vmor %vm3485, %vm3484
    %v3487 = vld [vmem:[#allocation5 + $0xf] sm:$0x3]
    %v3488 = vsel %vm3486, %v3482, %v3487
    %3489 = vst [vmem:[#allocation5 + $0xf] sm:$0x3] %v3488
    %v3490 = vld [vmem:[#allocation4 + $0x10] sm:$0x44]
    %v3493 = vunpack.c.l.s4 1966171168
    %v3494 = vunpack.c.0.s8 %v3493
    %v3495 = vlaneseq
    %v3496 = vshrl.u32 %v3495, 7
    %v3497 = vsub.s32 %v3494, %v3496
    %v3498 = vrot.slane %v3490, %v3497
    %v3500 = vunpack.c.l.s4 1966171168
    %v3501 = vunpack.c.0.s8 %v3500
    %v3502 = vlaneseq
    %v3503 = vshrl.u32 %v3502, 7
    %v3504 = vsub.s32 %v3501, %v3503
    %v3505 = vrot.slane %v3498, %v3504
    %v3506 = vcombine.high %v3505, %v3505
    %3507 = vrot.lane.b32.xlu0 %v3506, 80
    %v3508 = vpop.permute.xlu0 %3507
    %v3509 = vrot.slane %v3508, 1
    %v3510 = vsel %vm2517, %v3508, %v3509
    %vm3512 = vmand %vm2556, %vm2903
    %vm3513 = vmand %vm2558, %vm2926
    %vm3514 = vmor %vm3513, %vm3512
    %v3515 = vld [vmem:[#allocation5 + $0x10] sm:$0x3]
    %v3516 = vsel %vm3514, %v3510, %v3515
    %3517 = vst [vmem:[#allocation5 + $0x10] sm:$0x3] %v3516
    %v3518 = vld [vmem:[#allocation4 + $0x10] sm:$0x88]
    %v3521 = vunpack.c.l.s4 1966171168
    %v3522 = vunpack.c.0.s8 %v3521
    %v3523 = vlaneseq
    %v3524 = vshrl.u32 %v3523, 7
    %v3525 = vsub.s32 %v3522, %v3524
    %v3526 = vrot.slane %v3518, %v3525
    %v3527 = vcombine.high %v3526, %v3526
    %v3529 = vunpack.c.l.s4 1966171168
    %v3530 = vunpack.c.0.s8 %v3529
    %v3531 = vlaneseq
    %v3532 = vshrl.u32 %v3531, 7
    %v3533 = vsub.s32 %v3530, %v3532
    %v3534 = vrot.slane %v3527, %v3533
    %v3535 = vcombine.high %v3534, %v3534
    %v3537 = vshll.u32 %v3535, 16
    %3539 = vrot.lane.b32.xlu0 %v3537, 52
    %v3540 = vpop.permute.xlu0 %3539
    %v3541 = vrot.slane %v3540, 1
    %v3542 = vsel %vm2553, %v3540, %v3541
    %vm3544 = vmand %vm2585, %vm2903
    %v3545 = vld [vmem:[#allocation5 + $0x11] sm:$0x1]
    %v3546 = vsel %vm3544, %v3542, %v3545
    %3547 = vst [vmem:[#allocation5 + $0x11] sm:$0x1] %v3546
    %v3548 = vld [vmem:[#allocation4 + $0x10] sm:$0x88]
    %v3551 = vunpack.c.l.s4 1966171168
    %v3552 = vunpack.c.0.s8 %v3551
    %v3553 = vlaneseq
    %v3554 = vshrl.u32 %v3553, 7
    %v3555 = vsub.s32 %v3552, %v3554
    %v3556 = vrot.slane %v3548, %v3555
    %v3557 = vcombine.high %v3556, %v3556
    %v3559 = vunpack.c.l.s4 1966171168
    %v3560 = vunpack.c.0.s8 %v3559
    %v3561 = vlaneseq
    %v3562 = vshrl.u32 %v3561, 7
    %v3563 = vsub.s32 %v3560, %v3562
    %v3564 = vrot.slane %v3557, %v3563
    %v3565 = vcombine.high %v3564, %v3564
    %3566 = vrot.lane.b32.xlu0 %v3565, 24
    %v3567 = vpop.permute.xlu0 %3566
    %v3568 = vrot.slane %v3567, 7
    %vm3569 = vcmask 195584
    %v3570 = vsel %vm3569, %v3568, %v3567
    %vm3572 = vmand %vm2619, %vm2903
    %vm3573 = vmand %vm2621, %vm2926
    %vm3574 = vmor %vm3573, %vm3572
    %v3575 = vld [vmem:[#allocation5 + $0x11] sm:$0x3]
    %v3576 = vsel %vm3574, %v3570, %v3575
    %3577 = vst [vmem:[#allocation5 + $0x11] sm:$0x3] %v3576
    %v3578 = vld [vmem:[#allocation4 + $0x18] sm:$0x11]
    %v3581 = vunpack.c.l.s4 1966171168
    %v3582 = vunpack.c.0.s8 %v3581
    %v3583 = vlaneseq
    %v3584 = vshrl.u32 %v3583, 7
    %v3585 = vsub.s32 %v3582, %v3584
    %v3586 = vrot.slane %v3578, %v3585
    %v3588 = vunpack.c.l.s4 1966171168
    %v3589 = vunpack.c.0.s8 %v3588
    %v3590 = vlaneseq
    %v3591 = vshrl.u32 %v3590, 7
    %v3592 = vsub.s32 %v3589, %v3591
    %v3593 = vrot.slane %v3586, %v3592
    %v3595 = vshll.u32 %v3593, 16
    %3597 = vrot.lane.b32.xlu0 %v3595, 124
    %v3598 = vpop.permute.xlu0 %3597
    %v3599 = vrot.slane %v3598, 1
    %v3600 = vsel %vm2616, %v3598, %v3599
    %vm3602 = vmand %vm2649, %vm2903
    %vm3603 = vmand %vm2651, %vm2926
    %vm3604 = vmor %vm3603, %vm3602
    %v3605 = vld [vmem:[#allocation5 + $0x12] sm:$0x3]
    %v3606 = vsel %vm3604, %v3600, %v3605
    %3607 = vst [vmem:[#allocation5 + $0x12] sm:$0x3] %v3606
    %v3608 = vld [vmem:[#allocation4 + $0x18] sm:$0x11]
    %v3611 = vunpack.c.l.s4 1966171168
    %v3612 = vunpack.c.0.s8 %v3611
    %v3613 = vlaneseq
    %v3614 = vshrl.u32 %v3613, 7
    %v3615 = vsub.s32 %v3612, %v3614
    %v3616 = vrot.slane %v3608, %v3615
    %v3618 = vunpack.c.l.s4 1966171168
    %v3619 = vunpack.c.0.s8 %v3618
    %v3620 = vlaneseq
    %v3621 = vshrl.u32 %v3620, 7
    %v3622 = vsub.s32 %v3619, %v3621
    %v3623 = vrot.slane %v3616, %v3622
    %3624 = vrot.lane.b32.xlu0 %v3623, 96
    %v3625 = vpop.permute.xlu0 %3624
    %v3626 = vrot.slane %v3625, 1
    %v3627 = vsel %vm2646, %v3625, %v3626
    %vm3629 = vmand %vm2684, %vm2903
    %vm3630 = vmand %vm2686, %vm2926
    %vm3631 = vmor %vm3630, %vm3629
    %v3632 = vld [vmem:[#allocation5 + $0x13] sm:$0x3]
    %v3633 = vsel %vm3631, %v3627, %v3632
    %3634 = vst [vmem:[#allocation5 + $0x13] sm:$0x3] %v3633
    %v3635 = vld [vmem:[#allocation4 + $0x18] sm:$0x22]
    %v3638 = vunpack.c.l.s4 1966171168
    %v3639 = vunpack.c.0.s8 %v3638
    %v3640 = vlaneseq
    %v3641 = vshrl.u32 %v3640, 7
    %v3642 = vsub.s32 %v3639, %v3641
    %v3643 = vrot.slane %v3635, %v3642
    %v3644 = vcombine.high %v3643, %v3643
    %v3646 = vunpack.c.l.s4 1966171168
    %v3647 = vunpack.c.0.s8 %v3646
    %v3648 = vlaneseq
    %v3649 = vshrl.u32 %v3648, 7
    %v3650 = vsub.s32 %v3647, %v3649
    %v3651 = vrot.slane %v3644, %v3650
    %v3653 = vshll.u32 %v3651, 16
    %3655 = vrot.lane.b32.xlu0 %v3653, 68
    %v3656 = vpop.permute.xlu0 %3655
    %v3657 = vrot.slane %v3656, 1
    %v3658 = vsel %vm2681, %v3656, %v3657
    %vm3660 = vmand %vm2714, %vm2903
    %vm3661 = vmand %vm2716, %vm2926
    %vm3662 = vmor %vm3661, %vm3660
    %v3663 = vld [vmem:[#allocation5 + $0x14] sm:$0x3]
    %v3664 = vsel %vm3662, %v3658, %v3663
    %3665 = vst [vmem:[#allocation5 + $0x14] sm:$0x3] %v3664
    %v3666 = vld [vmem:[#allocation4 + $0x18] sm:$0x22]
    %v3669 = vunpack.c.l.s4 1966171168
    %v3670 = vunpack.c.0.s8 %v3669
    %v3671 = vlaneseq
    %v3672 = vshrl.u32 %v3671, 7
    %v3673 = vsub.s32 %v3670, %v3672
    %v3674 = vrot.slane %v3666, %v3673
    %v3675 = vcombine.high %v3674, %v3674
    %v3677 = vunpack.c.l.s4 1966171168
    %v3678 = vunpack.c.0.s8 %v3677
    %v3679 = vlaneseq
    %v3680 = vshrl.u32 %v3679, 7
    %v3681 = vsub.s32 %v3678, %v3680
    %v3682 = vrot.slane %v3675, %v3681
    %3683 = vrot.lane.b32.xlu0 %v3682, 40
    %v3684 = vpop.permute.xlu0 %3683
    %v3685 = vrot.slane %v3684, 1
    %v3686 = vsel %vm1212, %v3684, %v3685
    %vm3688 = vmand %vm2747, %vm2903
    %v3689 = vld [vmem:[#allocation5 + $0x15] sm:$0x1]
    %v3690 = vsel %vm3688, %v3686, %v3689
    %3691 = vst [vmem:[#allocation5 + $0x15] sm:$0x1] %v3690
    %v3692 = vld [vmem:[#allocation4 + $0x18] sm:$0x44]
    %v3695 = vunpack.c.l.s4 1966171168
    %v3696 = vunpack.c.0.s8 %v3695
    %v3697 = vlaneseq
    %v3698 = vshrl.u32 %v3697, 7
    %v3699 = vsub.s32 %v3696, %v3698
    %v3700 = vrot.slane %v3692, %v3699
    %v3702 = vunpack.c.l.s4 1966171168
    %v3703 = vunpack.c.0.s8 %v3702
    %v3704 = vlaneseq
    %v3705 = vshrl.u32 %v3704, 7
    %v3706 = vsub.s32 %v3703, %v3705
    %v3707 = vrot.slane %v3700, %v3706
    %v3708 = vcombine.high %v3707, %v3707
    %v3710 = vshll.u32 %v3708, 16
    %3712 = vrot.lane.b32.xlu0 %v3710, 12
    %v3713 = vpop.permute.xlu0 %3712
    %v3714 = vrot.slane %v3713, 7
    %v3715 = vsel %vm1179, %v3714, %v3713
    %vm3717 = vmand %vm2774, %vm2903
    %vm3718 = vmand %vm2776, %vm2926
    %vm3719 = vmor %vm3718, %vm3717
    %v3720 = vld [vmem:[#allocation5 + $0x15] sm:$0x3]
    %v3721 = vsel %vm3719, %v3715, %v3720
    %3722 = vst [vmem:[#allocation5 + $0x15] sm:$0x3] %v3721
    %v3723 = vld [vmem:[#allocation4 + $0x18] sm:$0x44]
    %v3726 = vunpack.c.l.s4 1966171168
    %v3727 = vunpack.c.0.s8 %v3726
    %v3728 = vlaneseq
    %v3729 = vshrl.u32 %v3728, 7
    %v3730 = vsub.s32 %v3727, %v3729
    %v3731 = vrot.slane %v3723, %v3730
    %v3733 = vunpack.c.l.s4 1966171168
    %v3734 = vunpack.c.0.s8 %v3733
    %v3735 = vlaneseq
    %v3736 = vshrl.u32 %v3735, 7
    %v3737 = vsub.s32 %v3734, %v3736
    %v3738 = vrot.slane %v3731, %v3737
    %v3739 = vcombine.high %v3738, %v3738
    %3740 = vrot.lane.b32.xlu0 %v3739, 112
    %v3741 = vpop.permute.xlu0 %3740
    %v3742 = vrot.slane %v3741, 1
    %v3743 = vsel %vm1082, %v3741, %v3742
    %vm3745 = vmand %vm2809, %vm2903
    %vm3746 = vmand %vm2811, %vm2926
    %vm3747 = vmor %vm3746, %vm3745
    %v3748 = vld [vmem:[#allocation5 + $0x16] sm:$0x3]
    %v3749 = vsel %vm3747, %v3743, %v3748
    %3750 = vst [vmem:[#allocation5 + $0x16] sm:$0x3] %v3749
    %v3751 = vld [vmem:[#allocation4 + $0x18] sm:$0x88]
    %v3754 = vunpack.c.l.s4 1966171168
    %v3755 = vunpack.c.0.s8 %v3754
    %v3756 = vlaneseq
    %v3757 = vshrl.u32 %v3756, 7
    %v3758 = vsub.s32 %v3755, %v3757
    %v3759 = vrot.slane %v3751, %v3758
    %v3760 = vcombine.high %v3759, %v3759
    %v3762 = vunpack.c.l.s4 1966171168
    %v3763 = vunpack.c.0.s8 %v3762
    %v3764 = vlaneseq
    %v3765 = vshrl.u32 %v3764, 7
    %v3766 = vsub.s32 %v3763, %v3765
    %v3767 = vrot.slane %v3760, %v3766
    %v3768 = vcombine.high %v3767, %v3767
    %v3770 = vshll.u32 %v3768, 16
    %3772 = vrot.lane.b32.xlu0 %v3770, 84
    %v3773 = vpop.permute.xlu0 %3772
    %v3774 = vrot.slane %v3773, 1
    %v3775 = vsel %vm1045, %v3773, %v3774
    %vm3777 = vmand %vm2840, %vm2903
    %vm3778 = vmand %vm2842, %vm2926
    %vm3779 = vmor %vm3778, %vm3777
    %v3780 = vld [vmem:[#allocation5 + $0x17] sm:$0x3]
    %v3781 = vsel %vm3779, %v3775, %v3780
    %3782 = vst [vmem:[#allocation5 + $0x17] sm:$0x3] %v3781
    %v3783 = vld [vmem:[#allocation4 + $0x18] sm:$0x88]
    %v3786 = vunpack.c.l.s4 1966171168
    %v3787 = vunpack.c.0.s8 %v3786
    %v3788 = vlaneseq
    %v3789 = vshrl.u32 %v3788, 7
    %v3790 = vsub.s32 %v3787, %v3789
    %v3791 = vrot.slane %v3783, %v3790
    %v3792 = vcombine.high %v3791, %v3791
    %v3794 = vunpack.c.l.s4 1966171168
    %v3795 = vunpack.c.0.s8 %v3794
    %v3796 = vlaneseq
    %v3797 = vshrl.u32 %v3796, 7
    %v3798 = vsub.s32 %v3795, %v3797
    %v3799 = vrot.slane %v3792, %v3798
    %v3800 = vcombine.high %v3799, %v3799
    %3801 = vrot.lane.b32.xlu0 %v3800, 56
    %v3802 = vpop.permute.xlu0 %3801
    %v3803 = vrot.slane %v3802, 1
    %v3804 = vsel %vm1162, %v3802, %v3803
    %vm3806 = vmand %vm2874, %vm2903
    %v3807 = vld [vmem:[#allocation5 + $0x18] sm:$0x1]
    %v3808 = vsel %vm3806, %v3804, %v3807
    %3809 = vst [vmem:[#allocation5 + $0x18] sm:$0x1] %v3808
    %v3810 = vld [vmem:[#allocation5] sm:$0xff]
    %v3811 = vld [vmem:[#allocation5 + $0x8] sm:$0xff]
    %v3812 = vld [vmem:[#allocation5 + $0x10] sm:$0xff]
    %v3813 = vld [vmem:[#allocation5 + $0x18] sm:$0x1]
    %v3814 = vld [vmem:[%s5] sm:$0xff]
    %v3815 = vld [vmem:[%s5 + $0x8] sm:$0xff]
    %v3816 = vld [vmem:[%s5 + $0x10] sm:$0xff]
    %v3817 = vld [vmem:[%s5 + $0x18] sm:$0xff]
    %v3818 = vld [vmem:[%s5 + $0x20] sm:$0xff]
    %v3819 = vld [vmem:[%s5 + $0x28] sm:$0xff]
    %v3820 = vld [vmem:[%s5 + $0x30] sm:$0xff]
    %v3821 = vld [vmem:[%s5 + $0x38] sm:$0xff]
    %v3822 = vld [vmem:[%s5 + $0x40] sm:$0xff]
    %v3823 = vld [vmem:[%s5 + $0x48] sm:$0xff]
    %v3824 = vld [vmem:[%s5 + $0x50] sm:$0xff]
    %v3825 = vld [vmem:[%s5 + $0x58] sm:$0xff]
    %v3826 = vld [vmem:[%s5 + $0x60] sm:$0xff]
    %v3827 = vld [vmem:[%s5 + $0x68] sm:$0xff]
    %v3828 = vld [vmem:[%s5 + $0x70] sm:$0xff]
    %v3829 = vld [vmem:[%s5 + $0x78] sm:$0xff]
    %v3830 = vld [vmem:[%s5 + $0x80] sm:$0xff]
    %v3831 = vld [vmem:[%s5 + $0x88] sm:$0xff]
    %v3832 = vld [vmem:[%s5 + $0x90] sm:$0xff]
    %v3833 = vld [vmem:[%s5 + $0x98] sm:$0xff]
    %v3834 = vld [vmem:[%s5 + $0xa0] sm:$0xff]
    %v3835 = vld [vmem:[%s5 + $0xa8] sm:$0xff]
    %v3836 = vld [vmem:[%s5 + $0xb0] sm:$0xff]
    %v3837 = vld [vmem:[%s5 + $0xb8] sm:$0xff]
    %v3838 = vld [vmem:[%s5 + $0xc0] sm:$0xff]
    %v3839 = vld [vmem:[%s5 + $0xc8] sm:$0xff]
    %v3840 = vld [vmem:[%s5 + $0xd0] sm:$0xff]
    %v3841 = vld [vmem:[%s5 + $0xd8] sm:$0xff]
    %v3842 = vld [vmem:[%s5 + $0xe0] sm:$0xff]
    %v3843 = vld [vmem:[%s5 + $0xe8] sm:$0xff]
    %v3844 = vld [vmem:[%s5 + $0xf0] sm:$0xff]
    %v3845 = vld [vmem:[%s5 + $0xf8] sm:$0xff]
    %v3846 = vld [vmem:[%s5 + $0x100] sm:$0xff]
    %v3847 = vld [vmem:[%s5 + $0x108] sm:$0xff]
    %v3848 = vld [vmem:[%s5 + $0x110] sm:$0xff]
    %v3849 = vld [vmem:[%s5 + $0x118] sm:$0xff]
    %v3850 = vld [vmem:[%s5 + $0x120] sm:$0xff]
    %v3851 = vld [vmem:[%s5 + $0x128] sm:$0xff]
    %v3852 = vld [vmem:[%s5 + $0x130] sm:$0xff]
    %v3853 = vld [vmem:[%s5 + $0x138] sm:$0xff]
    %v3854 = vld [vmem:[%s5 + $0x140] sm:$0xff]
    %v3855 = vld [vmem:[%s5 + $0x148] sm:$0xff]
    %v3856 = vld [vmem:[%s5 + $0x150] sm:$0xff]
    %v3857 = vld [vmem:[%s5 + $0x158] sm:$0xff]
    %v3858 = vld [vmem:[%s5 + $0x160] sm:$0xff]
    %v3859 = vld [vmem:[%s5 + $0x168] sm:$0xff]
    %v3860 = vld [vmem:[%s5 + $0x170] sm:$0xff]
    %v3861 = vld [vmem:[%s5 + $0x178] sm:$0xff]
    %v3862 = vld [vmem:[%s5 + $0x180] sm:$0xff]
    %v3863 = vld [vmem:[%s5 + $0x188] sm:$0xff]
    %v3864 = vld [vmem:[%s5 + $0x190] sm:$0xff]
    %v3865 = vld [vmem:[%s5 + $0x198] sm:$0xff]
    %v3866 = vld [vmem:[%s5 + $0x1a0] sm:$0xff]
    %v3867 = vld [vmem:[%s5 + $0x1a8] sm:$0xff]
    %v3868 = vld [vmem:[%s5 + $0x1b0] sm:$0xff]
    %v3869 = vld [vmem:[%s5 + $0x1b8] sm:$0xff]
    %v3870 = vld [vmem:[%s5 + $0x1c0] sm:$0xff]
    %v3871 = vld [vmem:[%s5 + $0x1c8] sm:$0xff]
    %v3872 = vld [vmem:[%s5 + $0x1d0] sm:$0xff]
    %v3873 = vld [vmem:[%s5 + $0x1d8] sm:$0xff]
    %v3874 = vld [vmem:[%s5 + $0x1e0] sm:$0xff]
    %v3875 = vld [vmem:[%s5 + $0x1e8] sm:$0xff]
    %v3876 = vld [vmem:[%s5 + $0x1f0] sm:$0xff]
    %v3877 = vld [vmem:[%s5 + $0x1f8] sm:$0xff]
    %v3878 = vld [vmem:[%s5 + $0x200] sm:$0xff]
    %v3879 = vld [vmem:[%s5 + $0x208] sm:$0xff]
    %v3880 = vld [vmem:[%s5 + $0x210] sm:$0xff]
    %v3881 = vld [vmem:[%s5 + $0x218] sm:$0xff]
    %v3882 = vld [vmem:[%s5 + $0x220] sm:$0xff]
    %v3883 = vld [vmem:[%s5 + $0x228] sm:$0xff]
    %v3884 = vld [vmem:[%s5 + $0x230] sm:$0xff]
    %v3885 = vld [vmem:[%s5 + $0x238] sm:$0xff]
    %v3886 = vld [vmem:[%s5 + $0x240] sm:$0xff]
    %v3887 = vld [vmem:[%s5 + $0x248] sm:$0xff]
    %v3888 = vld [vmem:[%s5 + $0x250] sm:$0xff]
    %v3889 = vld [vmem:[%s5 + $0x258] sm:$0xff]
    %v3890 = vld [vmem:[%s5 + $0x260] sm:$0xff]
    %v3891 = vld [vmem:[%s5 + $0x268] sm:$0xff]
    %v3892 = vld [vmem:[%s5 + $0x270] sm:$0xff]
    %v3893 = vld [vmem:[%s5 + $0x278] sm:$0xff]
    %v3894 = vld [vmem:[%s5 + $0x280] sm:$0xff]
    %v3895 = vld [vmem:[%s5 + $0x288] sm:$0xff]
    %v3896 = vld [vmem:[%s5 + $0x290] sm:$0xff]
    %v3897 = vld [vmem:[%s5 + $0x298] sm:$0xff]
    %v3898 = vld [vmem:[%s5 + $0x2a0] sm:$0xff]
    %v3899 = vld [vmem:[%s5 + $0x2a8] sm:$0xff]
    %v3900 = vld [vmem:[%s5 + $0x2b0] sm:$0xff]
    %v3901 = vld [vmem:[%s5 + $0x2b8] sm:$0xff]
    %v3902 = vld [vmem:[%s5 + $0x2c0] sm:$0xff]
    %v3903 = vld [vmem:[%s5 + $0x2c8] sm:$0xff]
    %v3904 = vld [vmem:[%s5 + $0x2d0] sm:$0xff]
    %v3905 = vld [vmem:[%s5 + $0x2d8] sm:$0xff]
    %v3906 = vld [vmem:[%s5 + $0x2e0] sm:$0xff]
    %v3907 = vld [vmem:[%s5 + $0x2e8] sm:$0xff]
    %v3908 = vld [vmem:[%s5 + $0x2f0] sm:$0xff]
    %v3909 = vld [vmem:[%s5 + $0x2f8] sm:$0xff]
    %v3910 = vld [vmem:[%s5 + $0x300] sm:$0xff]
    %v3911 = vld [vmem:[%s5 + $0x308] sm:$0xff]
    %v3912 = vld [vmem:[%s5 + $0x310] sm:$0xff]
    %v3913 = vld [vmem:[%s5 + $0x318] sm:$0xff]
    %v3914 = vld [vmem:[%s5 + $0x320] sm:$0xff]
    %v3915 = vld [vmem:[%s5 + $0x328] sm:$0xff]
    %v3916 = vld [vmem:[%s5 + $0x330] sm:$0xff]
    %v3917 = vld [vmem:[%s5 + $0x338] sm:$0xff]
    %v3918 = vld [vmem:[%s5 + $0x340] sm:$0xff]
    %v3919 = vld [vmem:[%s5 + $0x348] sm:$0xff]
    %v3920 = vld [vmem:[%s5 + $0x350] sm:$0xff]
    %v3921 = vld [vmem:[%s5 + $0x358] sm:$0xff]
    %v3922 = vld [vmem:[%s5 + $0x360] sm:$0xff]
    %v3923 = vld [vmem:[%s5 + $0x368] sm:$0xff]
    %v3924 = vld [vmem:[%s5 + $0x370] sm:$0xff]
    %v3925 = vld [vmem:[%s5 + $0x378] sm:$0xff]
    %v3926 = vld [vmem:[%s5 + $0x380] sm:$0xff]
    %v3927 = vld [vmem:[%s5 + $0x388] sm:$0xff]
    %v3928 = vld [vmem:[%s5 + $0x390] sm:$0xff]
    %v3929 = vld [vmem:[%s5 + $0x398] sm:$0xff]
    %v3930 = vld [vmem:[%s5 + $0x3a0] sm:$0xff]
    %v3931 = vld [vmem:[%s5 + $0x3a8] sm:$0xff]
    %v3932 = vld [vmem:[%s5 + $0x3b0] sm:$0xff]
    %v3933 = vld [vmem:[%s5 + $0x3b8] sm:$0xff]
    %v3934 = vld [vmem:[%s5 + $0x3c0] sm:$0xff]
    %v3935 = vld [vmem:[%s5 + $0x3c8] sm:$0xff]
    %v3936 = vld [vmem:[%s5 + $0x3d0] sm:$0xff]
    %v3937 = vld [vmem:[%s5 + $0x3d8] sm:$0xff]
    %v3938 = vld [vmem:[%s5 + $0x3e0] sm:$0xff]
    %v3939 = vld [vmem:[%s5 + $0x3e8] sm:$0xff]
    %v3940 = vld [vmem:[%s5 + $0x3f0] sm:$0xff]
    %v3941 = vld [vmem:[%s5 + $0x3f8] sm:$0xff]
    %v3942 = vld [vmem:[%s5 + $0x400] sm:$0xff]
    %v3943 = vld [vmem:[%s5 + $0x408] sm:$0xff]
    %v3944 = vld [vmem:[%s5 + $0x410] sm:$0xff]
    %v3945 = vld [vmem:[%s5 + $0x418] sm:$0xff]
    %v3946 = vld [vmem:[%s5 + $0x420] sm:$0xff]
    %v3947 = vld [vmem:[%s5 + $0x428] sm:$0xff]
    %v3948 = vld [vmem:[%s5 + $0x430] sm:$0xff]
    %v3949 = vld [vmem:[%s5 + $0x438] sm:$0xff]
    %v3950 = vld [vmem:[%s5 + $0x440] sm:$0xff]
    %v3951 = vld [vmem:[%s5 + $0x448] sm:$0xff]
    %v3952 = vld [vmem:[%s5 + $0x450] sm:$0xff]
    %v3953 = vld [vmem:[%s5 + $0x458] sm:$0xff]
    %v3954 = vld [vmem:[%s5 + $0x460] sm:$0xff]
    %v3955 = vld [vmem:[%s5 + $0x468] sm:$0xff]
    %v3956 = vld [vmem:[%s5 + $0x470] sm:$0xff]
    %v3957 = vld [vmem:[%s5 + $0x478] sm:$0xff]
    %v3958 = vld [vmem:[%s5 + $0x480] sm:$0xff]
    %v3959 = vld [vmem:[%s5 + $0x488] sm:$0xff]
    %v3960 = vld [vmem:[%s5 + $0x490] sm:$0xff]
    %v3961 = vld [vmem:[%s5 + $0x498] sm:$0xff]
    %v3962 = vld [vmem:[%s5 + $0x4a0] sm:$0xff]
    %v3963 = vld [vmem:[%s5 + $0x4a8] sm:$0xff]
    %v3964 = vld [vmem:[%s5 + $0x4b0] sm:$0xff]
    %v3965 = vld [vmem:[%s5 + $0x4b8] sm:$0xff]
    %v3966 = vld [vmem:[%s5 + $0x4c0] sm:$0xff]
    %v3967 = vld [vmem:[%s5 + $0x4c8] sm:$0xff]
    %v3968 = vld [vmem:[%s5 + $0x4d0] sm:$0xff]
    %v3969 = vld [vmem:[%s5 + $0x4d8] sm:$0xff]
    %v3970 = vld [vmem:[%s5 + $0x4e0] sm:$0xff]
    %v3971 = vld [vmem:[%s5 + $0x4e8] sm:$0xff]
    %v3972 = vld [vmem:[%s5 + $0x4f0] sm:$0xff]
    %v3973 = vld [vmem:[%s5 + $0x4f8] sm:$0xff]
    %v3974 = vld [vmem:[%s5 + $0x500] sm:$0xff]
    %v3975 = vld [vmem:[%s5 + $0x508] sm:$0xff]
    %v3976 = vld [vmem:[%s5 + $0x510] sm:$0xff]
    %v3977 = vld [vmem:[%s5 + $0x518] sm:$0xff]
    %v3978 = vld [vmem:[%s5 + $0x520] sm:$0xff]
    %v3979 = vld [vmem:[%s5 + $0x528] sm:$0xff]
    %v3980 = vld [vmem:[%s5 + $0x530] sm:$0xff]
    %v3981 = vld [vmem:[%s5 + $0x538] sm:$0xff]
    %v3982 = vld [vmem:[%s5 + $0x540] sm:$0xff]
    %v3983 = vld [vmem:[%s5 + $0x548] sm:$0xff]
    %v3984 = vld [vmem:[%s5 + $0x550] sm:$0xff]
    %v3985 = vld [vmem:[%s5 + $0x558] sm:$0xff]
    %v3986 = vld [vmem:[%s5 + $0x560] sm:$0xff]
    %v3987 = vld [vmem:[%s5 + $0x568] sm:$0xff]
    %v3988 = vld [vmem:[%s5 + $0x570] sm:$0xff]
    %v3989 = vld [vmem:[%s5 + $0x578] sm:$0xff]
    %v3990 = vld [vmem:[%s5 + $0x580] sm:$0xff]
    %v3991 = vld [vmem:[%s5 + $0x588] sm:$0xff]
    %v3992 = vld [vmem:[%s5 + $0x590] sm:$0xff]
    %v3993 = vld [vmem:[%s5 + $0x598] sm:$0xff]
    %v3994 = vld [vmem:[%s5 + $0x5a0] sm:$0xff]
    %v3995 = vld [vmem:[%s5 + $0x5a8] sm:$0xff]
    %v3996 = vld [vmem:[%s5 + $0x5b0] sm:$0xff]
    %v3997 = vld [vmem:[%s5 + $0x5b8] sm:$0xff]
    %v3998 = vld [vmem:[%s5 + $0x5c0] sm:$0xff]
    %v3999 = vld [vmem:[%s5 + $0x5c8] sm:$0xff]
    %v4000 = vld [vmem:[%s5 + $0x5d0] sm:$0xff]
    %v4001 = vld [vmem:[%s5 + $0x5d8] sm:$0xff]
    %v4002 = vld [vmem:[%s5 + $0x5e0] sm:$0xff]
    %v4003 = vld [vmem:[%s5 + $0x5e8] sm:$0xff]
    %v4004 = vld [vmem:[%s5 + $0x5f0] sm:$0xff]
    %v4005 = vld [vmem:[%s5 + $0x5f8] sm:$0xff]
    %v4006 = vld [vmem:[%s5 + $0x600] sm:$0xff]
    %v4007 = vld [vmem:[%s5 + $0x608] sm:$0xff]
    %v4008 = vld [vmem:[%s5 + $0x610] sm:$0xff]
    %v4009 = vld [vmem:[%s5 + $0x618] sm:$0xff]
    %v4010 = vld [vmem:[%s5 + $0x620] sm:$0xff]
    %v4011 = vld [vmem:[%s5 + $0x628] sm:$0xff]
    %v4012 = vld [vmem:[%s5 + $0x630] sm:$0xff]
    %v4013 = vld [vmem:[%s5 + $0x638] sm:$0xff]
    %v4014 = vld [vmem:[%s5 + $0x640] sm:$0xff]
    %v4015 = vld [vmem:[%s5 + $0x648] sm:$0xff]
    %v4016 = vld [vmem:[%s5 + $0x650] sm:$0xff]
    %v4017 = vld [vmem:[%s5 + $0x658] sm:$0xff]
    %v4018 = vld [vmem:[%s5 + $0x660] sm:$0xff]
    %v4019 = vld [vmem:[%s5 + $0x668] sm:$0xff]
    %v4020 = vld [vmem:[%s5 + $0x670] sm:$0xff]
    %v4021 = vld [vmem:[%s5 + $0x678] sm:$0xff]
    %v4022 = vld [vmem:[%s5 + $0x680] sm:$0xff]
    %v4023 = vld [vmem:[%s5 + $0x688] sm:$0xff]
    %v4024 = vld [vmem:[%s5 + $0x690] sm:$0xff]
    %v4025 = vld [vmem:[%s5 + $0x698] sm:$0xff]
    %v4026 = vld [vmem:[%s5 + $0x6a0] sm:$0xff]
    %v4027 = vld [vmem:[%s5 + $0x6a8] sm:$0xff]
    %v4028 = vld [vmem:[%s5 + $0x6b0] sm:$0xff]
    %v4029 = vld [vmem:[%s5 + $0x6b8] sm:$0xff]
    %v4030 = vld [vmem:[%s5 + $0x6c0] sm:$0xff]
    %v4031 = vld [vmem:[%s5 + $0x6c8] sm:$0xff]
    %v4032 = vld [vmem:[%s5 + $0x6d0] sm:$0xff]
    %v4033 = vld [vmem:[%s5 + $0x6d8] sm:$0xff]
    %v4034 = vld [vmem:[%s5 + $0x6e0] sm:$0xff]
    %v4035 = vld [vmem:[%s5 + $0x6e8] sm:$0xff]
    %v4036 = vld [vmem:[%s5 + $0x6f0] sm:$0xff]
    %v4037 = vld [vmem:[%s5 + $0x6f8] sm:$0xff]
    %v4038 = vld [vmem:[%s5 + $0x700] sm:$0xff]
    %v4039 = vld [vmem:[%s5 + $0x708] sm:$0xff]
    %v4040 = vld [vmem:[%s5 + $0x710] sm:$0xff]
    %v4041 = vld [vmem:[%s5 + $0x718] sm:$0xff]
    %v4042 = vld [vmem:[%s5 + $0x720] sm:$0xff]
    %v4043 = vld [vmem:[%s5 + $0x728] sm:$0xff]
    %v4044 = vld [vmem:[%s5 + $0x730] sm:$0xff]
    %v4045 = vld [vmem:[%s5 + $0x738] sm:$0xff]
    %v4046 = vld [vmem:[%s5 + $0x740] sm:$0xff]
    %v4047 = vld [vmem:[%s5 + $0x748] sm:$0xff]
    %v4048 = vld [vmem:[%s5 + $0x750] sm:$0xff]
    %v4049 = vld [vmem:[%s5 + $0x758] sm:$0xff]
    %v4050 = vld [vmem:[%s5 + $0x760] sm:$0xff]
    %v4051 = vld [vmem:[%s5 + $0x768] sm:$0xff]
    %v4052 = vld [vmem:[%s5 + $0x770] sm:$0xff]
    %v4053 = vld [vmem:[%s5 + $0x778] sm:$0xff]
    %v4054 = vld [vmem:[%s5 + $0x780] sm:$0xff]
    %v4055 = vld [vmem:[%s5 + $0x788] sm:$0xff]
    %v4056 = vld [vmem:[%s5 + $0x790] sm:$0xff]
    %v4057 = vld [vmem:[%s5 + $0x798] sm:$0xff]
    %v4058 = vld [vmem:[%s5 + $0x7a0] sm:$0xff]
    %v4059 = vld [vmem:[%s5 + $0x7a8] sm:$0xff]
    %v4060 = vld [vmem:[%s5 + $0x7b0] sm:$0xff]
    %v4061 = vld [vmem:[%s5 + $0x7b8] sm:$0xff]
    %v4062 = vld [vmem:[%s5 + $0x7c0] sm:$0xff]
    %v4063 = vld [vmem:[%s5 + $0x7c8] sm:$0xff]
    %v4064 = vld [vmem:[%s5 + $0x7d0] sm:$0xff]
    %v4065 = vld [vmem:[%s5 + $0x7d8] sm:$0xff]
    %v4066 = vld [vmem:[%s5 + $0x7e0] sm:$0xff]
    %v4067 = vld [vmem:[%s5 + $0x7e8] sm:$0xff]
    %v4068 = vld [vmem:[%s5 + $0x7f0] sm:$0xff]
    %v4069 = vld [vmem:[%s5 + $0x7f8] sm:$0xff]
    %v4070 = vld [vmem:[%s5 + $0x800] sm:$0xff]
    %v4071 = vld [vmem:[%s5 + $0x808] sm:$0xff]
    %v4072 = vld [vmem:[%s5 + $0x810] sm:$0xff]
    %v4073 = vld [vmem:[%s5 + $0x818] sm:$0xff]
    %v4074 = vld [vmem:[%s5 + $0x820] sm:$0xff]
    %v4075 = vld [vmem:[%s5 + $0x828] sm:$0xff]
    %v4076 = vld [vmem:[%s5 + $0x830] sm:$0xff]
    %v4077 = vld [vmem:[%s5 + $0x838] sm:$0xff]
    %v4078 = vld [vmem:[%s5 + $0x840] sm:$0xff]
    %v4079 = vld [vmem:[%s5 + $0x848] sm:$0xff]
    %v4080 = vld [vmem:[%s5 + $0x850] sm:$0xff]
    %v4081 = vld [vmem:[%s5 + $0x858] sm:$0xff]
    %v4082 = vld [vmem:[%s5 + $0x860] sm:$0xff]
    %v4083 = vld [vmem:[%s5 + $0x868] sm:$0xff]
    %v4084 = vld [vmem:[%s5 + $0x870] sm:$0xff]
    %v4085 = vld [vmem:[%s5 + $0x878] sm:$0xff]
    %v4086 = vld [vmem:[%s5 + $0x880] sm:$0xff]
    %v4087 = vld [vmem:[%s5 + $0x888] sm:$0xff]
    %v4088 = vld [vmem:[%s5 + $0x890] sm:$0xff]
    %v4089 = vld [vmem:[%s5 + $0x898] sm:$0xff]
    %v4090 = vld [vmem:[%s5 + $0x8a0] sm:$0xff]
    %v4091 = vld [vmem:[%s5 + $0x8a8] sm:$0xff]
    %v4092 = vld [vmem:[%s5 + $0x8b0] sm:$0xff]
    %v4093 = vld [vmem:[%s5 + $0x8b8] sm:$0xff]
    %v4094 = vld [vmem:[%s5 + $0x8c0] sm:$0xff]
    %v4095 = vld [vmem:[%s5 + $0x8c8] sm:$0xff]
    %v4096 = vld [vmem:[%s5 + $0x8d0] sm:$0xff]
    %v4097 = vld [vmem:[%s5 + $0x8d8] sm:$0xff]
    %v4098 = vld [vmem:[%s5 + $0x8e0] sm:$0xff]
    %v4099 = vld [vmem:[%s5 + $0x8e8] sm:$0xff]
    %v4100 = vld [vmem:[%s5 + $0x8f0] sm:$0xff]
    %v4101 = vld [vmem:[%s5 + $0x8f8] sm:$0xff]
    %v4102 = vld [vmem:[%s5 + $0x900] sm:$0xff]
    %v4103 = vld [vmem:[%s5 + $0x908] sm:$0xff]
    %v4104 = vld [vmem:[%s5 + $0x910] sm:$0xff]
    %v4105 = vld [vmem:[%s5 + $0x918] sm:$0xff]
    %v4106 = vld [vmem:[%s5 + $0x920] sm:$0xff]
    %v4107 = vld [vmem:[%s5 + $0x928] sm:$0xff]
    %v4108 = vld [vmem:[%s5 + $0x930] sm:$0xff]
    %v4109 = vld [vmem:[%s5 + $0x938] sm:$0xff]
    %v4110 = vld [vmem:[%s5 + $0x940] sm:$0xff]
    %v4111 = vld [vmem:[%s5 + $0x948] sm:$0xff]
    %v4112 = vld [vmem:[%s5 + $0x950] sm:$0xff]
    %v4113 = vld [vmem:[%s5 + $0x958] sm:$0xff]
    %v4114 = vld [vmem:[%s5 + $0x960] sm:$0xff]
    %v4115 = vld [vmem:[%s5 + $0x968] sm:$0xff]
    %v4116 = vld [vmem:[%s5 + $0x970] sm:$0xff]
    %v4117 = vld [vmem:[%s5 + $0x978] sm:$0xff]
    %v4118 = vld [vmem:[%s5 + $0x980] sm:$0xff]
    %v4119 = vld [vmem:[%s5 + $0x988] sm:$0xff]
    %v4120 = vld [vmem:[%s5 + $0x990] sm:$0xff]
    %v4121 = vld [vmem:[%s5 + $0x998] sm:$0xff]
    %v4122 = vld [vmem:[%s5 + $0x9a0] sm:$0xff]
    %v4123 = vld [vmem:[%s5 + $0x9a8] sm:$0xff]
    %v4124 = vld [vmem:[%s5 + $0x9b0] sm:$0xff]
    %v4125 = vld [vmem:[%s5 + $0x9b8] sm:$0xff]
    %v4126 = vld [vmem:[%s5 + $0x9c0] sm:$0xff]
    %v4127 = vld [vmem:[%s5 + $0x9c8] sm:$0xff]
    %v4128 = vld [vmem:[%s5 + $0x9d0] sm:$0xff]
    %v4129 = vld [vmem:[%s5 + $0x9d8] sm:$0xff]
    %v4130 = vld [vmem:[%s5 + $0x9e0] sm:$0xff]
    %v4131 = vld [vmem:[%s5 + $0x9e8] sm:$0xff]
    %v4132 = vld [vmem:[%s5 + $0x9f0] sm:$0xff]
    %v4133 = vld [vmem:[%s5 + $0x9f8] sm:$0xff]
    %v4134 = vld [vmem:[%s5 + $0xa00] sm:$0xff]
    %v4135 = vld [vmem:[%s5 + $0xa08] sm:$0xff]
    %v4136 = vld [vmem:[%s5 + $0xa10] sm:$0xff]
    %v4137 = vld [vmem:[%s5 + $0xa18] sm:$0xff]
    %v4138 = vld [vmem:[%s5 + $0xa20] sm:$0xff]
    %v4139 = vld [vmem:[%s5 + $0xa28] sm:$0xff]
    %v4140 = vld [vmem:[%s5 + $0xa30] sm:$0xff]
    %v4141 = vld [vmem:[%s5 + $0xa38] sm:$0xff]
    %v4142 = vld [vmem:[%s5 + $0xa40] sm:$0xff]
    %v4143 = vld [vmem:[%s5 + $0xa48] sm:$0xff]
    %v4144 = vld [vmem:[%s5 + $0xa50] sm:$0xff]
    %v4145 = vld [vmem:[%s5 + $0xa58] sm:$0xff]
    %v4146 = vld [vmem:[%s5 + $0xa60] sm:$0xff]
    %v4147 = vld [vmem:[%s5 + $0xa68] sm:$0xff]
    %v4148 = vld [vmem:[%s5 + $0xa70] sm:$0xff]
    %v4149 = vld [vmem:[%s5 + $0xa78] sm:$0xff]
    %v4150 = vld [vmem:[%s5 + $0xa80] sm:$0xff]
    %v4151 = vld [vmem:[%s5 + $0xa88] sm:$0xff]
    %v4152 = vld [vmem:[%s5 + $0xa90] sm:$0xff]
    %v4153 = vld [vmem:[%s5 + $0xa98] sm:$0xff]
    %v4154 = vld [vmem:[%s5 + $0xaa0] sm:$0xff]
    %v4155 = vld [vmem:[%s5 + $0xaa8] sm:$0xff]
    %v4156 = vld [vmem:[%s5 + $0xab0] sm:$0xff]
    %v4157 = vld [vmem:[%s5 + $0xab8] sm:$0xff]
    %v4158 = vld [vmem:[%s5 + $0xac0] sm:$0xff]
    %v4159 = vld [vmem:[%s5 + $0xac8] sm:$0xff]
    %v4160 = vld [vmem:[%s5 + $0xad0] sm:$0xff]
    %v4161 = vld [vmem:[%s5 + $0xad8] sm:$0xff]
    %v4162 = vld [vmem:[%s5 + $0xae0] sm:$0xff]
    %v4163 = vld [vmem:[%s5 + $0xae8] sm:$0xff]
    %v4164 = vld [vmem:[%s5 + $0xaf0] sm:$0xff]
    %v4165 = vld [vmem:[%s5 + $0xaf8] sm:$0xff]
    %v4166 = vld [vmem:[%s5 + $0xb00] sm:$0xff]
    %v4167 = vld [vmem:[%s5 + $0xb08] sm:$0xff]
    %v4168 = vld [vmem:[%s5 + $0xb10] sm:$0xff]
    %v4169 = vld [vmem:[%s5 + $0xb18] sm:$0xff]
    %v4170 = vld [vmem:[%s5 + $0xb20] sm:$0xff]
    %v4171 = vld [vmem:[%s5 + $0xb28] sm:$0xff]
    %v4172 = vld [vmem:[%s5 + $0xb30] sm:$0xff]
    %v4173 = vld [vmem:[%s5 + $0xb38] sm:$0xff]
    %v4174 = vld [vmem:[%s5 + $0xb40] sm:$0xff]
    %v4175 = vld [vmem:[%s5 + $0xb48] sm:$0xff]
    %v4176 = vld [vmem:[%s5 + $0xb50] sm:$0xff]
    %v4177 = vld [vmem:[%s5 + $0xb58] sm:$0xff]
    %v4178 = vld [vmem:[%s5 + $0xb60] sm:$0xff]
    %v4179 = vld [vmem:[%s5 + $0xb68] sm:$0xff]
    %v4180 = vld [vmem:[%s5 + $0xb70] sm:$0xff]
    %v4181 = vld [vmem:[%s5 + $0xb78] sm:$0xff]
    %v4182 = vld [vmem:[%s5 + $0xb80] sm:$0xff]
    %v4183 = vld [vmem:[%s5 + $0xb88] sm:$0xff]
    %v4184 = vld [vmem:[%s5 + $0xb90] sm:$0xff]
    %v4185 = vld [vmem:[%s5 + $0xb98] sm:$0xff]
    %v4186 = vld [vmem:[%s5 + $0xba0] sm:$0xff]
    %v4187 = vld [vmem:[%s5 + $0xba8] sm:$0xff]
    %v4188 = vld [vmem:[%s5 + $0xbb0] sm:$0xff]
    %v4189 = vld [vmem:[%s5 + $0xbb8] sm:$0xff]
    %v4190 = vld [vmem:[%s5 + $0xbc0] sm:$0xff]
    %v4191 = vld [vmem:[%s5 + $0xbc8] sm:$0xff]
    %v4192 = vld [vmem:[%s5 + $0xbd0] sm:$0xff]
    %v4193 = vld [vmem:[%s5 + $0xbd8] sm:$0xff]
    %v4194 = vld [vmem:[%s5 + $0xbe0] sm:$0xff]
    %v4195 = vld [vmem:[%s5 + $0xbe8] sm:$0xff]
    %v4196 = vld [vmem:[%s5 + $0xbf0] sm:$0xff]
    %v4197 = vld [vmem:[%s5 + $0xbf8] sm:$0xff]
    %v4198 = vld [vmem:[%s5 + $0xc00] sm:$0xff]
    %v4199 = vld [vmem:[%s5 + $0xc08] sm:$0xff]
    %v4200 = vld [vmem:[%s5 + $0xc10] sm:$0xff]
    %v4201 = vld [vmem:[%s5 + $0xc18] sm:$0xff]
    %v4202 = vld [vmem:[%s5 + $0xc20] sm:$0xff]
    %v4203 = vld [vmem:[%s5 + $0xc28] sm:$0xff]
    %v4204 = vld [vmem:[%s5 + $0xc30] sm:$0xff]
    %v4205 = vld [vmem:[%s5 + $0xc38] sm:$0xff]
    %v4206 = vld [vmem:[%s5 + $0xc40] sm:$0xff]
    %v4207 = vld [vmem:[%s5 + $0xc48] sm:$0xff]
    %v4208 = vld [vmem:[%s5 + $0xc50] sm:$0xff]
    %v4209 = vld [vmem:[%s5 + $0xc58] sm:$0xff]
    %v4210 = vld [vmem:[%s5 + $0xc60] sm:$0xff]
    %v4211 = vld [vmem:[%s5 + $0xc68] sm:$0xff]
    %v4212 = vld [vmem:[%s5 + $0xc70] sm:$0xff]
    %v4213 = vld [vmem:[%s5 + $0xc78] sm:$0xff]
    %v4214 = vld [vmem:[%s6] sm:$0x3]
    %v4216 = vlaneseq
    %v4217 = vshrl.u32 %v4216, 7
    %v4218 = vsub.s32 0, %v4217
    %v4219 = vrot.slane %v4214, %v4218
    %v4220 = vlaneseq
    %v4221 = vshrl.u32 %v4220, 7
    %v4222 = vsub.s32 1, %v4221
    %v4223 = vrot.slane %v4214, %v4222
    %v4230 = vcombine.high %v3810, %v3810
    %v4232 = vunpack.c.l.s4 1966171168
    %v4233 = vunpack.c.0.s8 %v4232
    %v4234 = vlaneseq
    %v4235 = vshrl.u32 %v4234, 7
    %v4236 = vsub.s32 %v4233, %v4235
    %v4237 = vrot.slane %v3810, %v4236
    %v4239 = vunpack.c.l.s4 1966171168
    %v4240 = vunpack.c.0.s8 %v4239
    %v4241 = vlaneseq
    %v4242 = vshrl.u32 %v4241, 7
    %v4243 = vsub.s32 %v4240, %v4242
    %v4244 = vrot.slane %v4230, %v4243
    %v4245 = vcombine.high %v4237, %v4237
    %v4246 = vcombine.high %v4244, %v4244
    %v4248 = vunpack.c.l.s4 1966171168
    %v4249 = vunpack.c.0.s8 %v4248
    %v4250 = vlaneseq
    %v4251 = vshrl.u32 %v4250, 7
    %v4252 = vsub.s32 %v4249, %v4251
    %v4253 = vrot.slane %v4237, %v4252
    %v4255 = vunpack.c.l.s4 1966171168
    %v4256 = vunpack.c.0.s8 %v4255
    %v4257 = vlaneseq
    %v4258 = vshrl.u32 %v4257, 7
    %v4259 = vsub.s32 %v4256, %v4258
    %v4260 = vrot.slane %v4244, %v4259
    %v4262 = vunpack.c.l.s4 1966171168
    %v4263 = vunpack.c.0.s8 %v4262
    %v4264 = vlaneseq
    %v4265 = vshrl.u32 %v4264, 7
    %v4266 = vsub.s32 %v4263, %v4265
    %v4267 = vrot.slane %v4245, %v4266
    %v4269 = vunpack.c.l.s4 1966171168
    %v4270 = vunpack.c.0.s8 %v4269
    %v4271 = vlaneseq
    %v4272 = vshrl.u32 %v4271, 7
    %v4273 = vsub.s32 %v4270, %v4272
    %v4274 = vrot.slane %v4246, %v4273
    %v4275 = vcombine.high %v4253, %v4253
    %v4276 = vcombine.high %v4260, %v4260
    %v4277 = vcombine.high %v4267, %v4267
    %v4278 = vcombine.high %v4274, %v4274
    %v4279 = vcombine.high %v3811, %v3811
    %v4281 = vunpack.c.l.s4 1966171168
    %v4282 = vunpack.c.0.s8 %v4281
    %v4283 = vlaneseq
    %v4284 = vshrl.u32 %v4283, 7
    %v4285 = vsub.s32 %v4282, %v4284
    %v4286 = vrot.slane %v3811, %v4285
    %v4288 = vunpack.c.l.s4 1966171168
    %v4289 = vunpack.c.0.s8 %v4288
    %v4290 = vlaneseq
    %v4291 = vshrl.u32 %v4290, 7
    %v4292 = vsub.s32 %v4289, %v4291
    %v4293 = vrot.slane %v4279, %v4292
    %v4294 = vcombine.high %v4286, %v4286
    %v4295 = vcombine.high %v4293, %v4293
    %v4297 = vunpack.c.l.s4 1966171168
    %v4298 = vunpack.c.0.s8 %v4297
    %v4299 = vlaneseq
    %v4300 = vshrl.u32 %v4299, 7
    %v4301 = vsub.s32 %v4298, %v4300
    %v4302 = vrot.slane %v4286, %v4301
    %v4304 = vunpack.c.l.s4 1966171168
    %v4305 = vunpack.c.0.s8 %v4304
    %v4306 = vlaneseq
    %v4307 = vshrl.u32 %v4306, 7
    %v4308 = vsub.s32 %v4305, %v4307
    %v4309 = vrot.slane %v4293, %v4308
    %v4311 = vunpack.c.l.s4 1966171168
    %v4312 = vunpack.c.0.s8 %v4311
    %v4313 = vlaneseq
    %v4314 = vshrl.u32 %v4313, 7
    %v4315 = vsub.s32 %v4312, %v4314
    %v4316 = vrot.slane %v4294, %v4315
    %v4318 = vunpack.c.l.s4 1966171168
    %v4319 = vunpack.c.0.s8 %v4318
    %v4320 = vlaneseq
    %v4321 = vshrl.u32 %v4320, 7
    %v4322 = vsub.s32 %v4319, %v4321
    %v4323 = vrot.slane %v4295, %v4322
    %v4324 = vcombine.high %v4302, %v4302
    %v4325 = vcombine.high %v4309, %v4309
    %v4326 = vcombine.high %v4316, %v4316
    %v4327 = vcombine.high %v4323, %v4323
    %v4328 = vcombine.high %v3812, %v3812
    %v4330 = vunpack.c.l.s4 1966171168
    %v4331 = vunpack.c.0.s8 %v4330
    %v4332 = vlaneseq
    %v4333 = vshrl.u32 %v4332, 7
    %v4334 = vsub.s32 %v4331, %v4333
    %v4335 = vrot.slane %v3812, %v4334
    %v4337 = vunpack.c.l.s4 1966171168
    %v4338 = vunpack.c.0.s8 %v4337
    %v4339 = vlaneseq
    %v4340 = vshrl.u32 %v4339, 7
    %v4341 = vsub.s32 %v4338, %v4340
    %v4342 = vrot.slane %v4328, %v4341
    %v4343 = vcombine.high %v4335, %v4335
    %v4344 = vcombine.high %v4342, %v4342
    %v4346 = vunpack.c.l.s4 1966171168
    %v4347 = vunpack.c.0.s8 %v4346
    %v4348 = vlaneseq
    %v4349 = vshrl.u32 %v4348, 7
    %v4350 = vsub.s32 %v4347, %v4349
    %v4351 = vrot.slane %v4335, %v4350
    %v4353 = vunpack.c.l.s4 1966171168
    %v4354 = vunpack.c.0.s8 %v4353
    %v4355 = vlaneseq
    %v4356 = vshrl.u32 %v4355, 7
    %v4357 = vsub.s32 %v4354, %v4356
    %v4358 = vrot.slane %v4342, %v4357
    %v4360 = vunpack.c.l.s4 1966171168
    %v4361 = vunpack.c.0.s8 %v4360
    %v4362 = vlaneseq
    %v4363 = vshrl.u32 %v4362, 7
    %v4364 = vsub.s32 %v4361, %v4363
    %v4365 = vrot.slane %v4343, %v4364
    %v4367 = vunpack.c.l.s4 1966171168
    %v4368 = vunpack.c.0.s8 %v4367
    %v4369 = vlaneseq
    %v4370 = vshrl.u32 %v4369, 7
    %v4371 = vsub.s32 %v4368, %v4370
    %v4372 = vrot.slane %v4344, %v4371
    %v4373 = vcombine.high %v4351, %v4351
    %v4374 = vcombine.high %v4358, %v4358
    %v4375 = vcombine.high %v4365, %v4365
    %v4376 = vcombine.high %v4372, %v4372
    %v4378 = vunpack.c.l.s4 1966171168
    %v4379 = vunpack.c.0.s8 %v4378
    %v4380 = vlaneseq
    %v4381 = vshrl.u32 %v4380, 7
    %v4382 = vsub.s32 %v4379, %v4381
    %v4383 = vrot.slane %v3813, %v4382
    %v4385 = vunpack.c.l.s4 1966171168
    %v4386 = vunpack.c.0.s8 %v4385
    %v4387 = vlaneseq
    %v4388 = vshrl.u32 %v4387, 7
    %v4389 = vsub.s32 %v4386, %v4388
    %v4390 = vrot.slane %v4383, %v4389
    %v4816 = vunpack.c.l.b16 %v3814
    %v4817 = vunpack.c.h.b16 %v3814
    %v4818 = vunpack.c.l.b16 %v3815
    %v4819 = vunpack.c.h.b16 %v3815
    %v4820 = vunpack.c.l.b16 %v3816
    %v4821 = vunpack.c.h.b16 %v3816
    %v4822 = vunpack.c.l.b16 %v3817
    %v4823 = vunpack.c.h.b16 %v3817
    %v4824 = vunpack.c.l.b16 %v3818
    %v4825 = vunpack.c.h.b16 %v3818
    %v4826 = vunpack.c.l.b16 %v3819
    %v4827 = vunpack.c.h.b16 %v3819
    %v4828 = vunpack.c.l.b16 %v3820
    %v4829 = vunpack.c.h.b16 %v3820
    %v4830 = vunpack.c.l.b16 %v3821
    %v4831 = vunpack.c.h.b16 %v3821
    %v4832 = vunpack.c.l.b16 %v3822
    %v4833 = vunpack.c.h.b16 %v3822
    %v4834 = vunpack.c.l.b16 %v3823
    %v4835 = vunpack.c.h.b16 %v3823
    %v4836 = vunpack.c.l.b16 %v3824
    %v4837 = vunpack.c.h.b16 %v3824
    %v4838 = vunpack.c.l.b16 %v3825
    %v4839 = vunpack.c.h.b16 %v3825
    %v4840 = vunpack.c.l.b16 %v3826
    %v4841 = vunpack.c.h.b16 %v3826
    %v4842 = vunpack.c.l.b16 %v3827
    %v4843 = vunpack.c.h.b16 %v3827
    %v4844 = vunpack.c.l.b16 %v3828
    %v4845 = vunpack.c.h.b16 %v3828
    %v4846 = vunpack.c.l.b16 %v3829
    %v4847 = vunpack.c.h.b16 %v3829
    %v4848 = vunpack.c.l.b16 %v3830
    %v4849 = vunpack.c.h.b16 %v3830
    %v4850 = vunpack.c.l.b16 %v3831
    %v4851 = vunpack.c.h.b16 %v3831
    %v4852 = vunpack.c.l.b16 %v3832
    %v4853 = vunpack.c.h.b16 %v3832
    %v4854 = vunpack.c.l.b16 %v3833
    %v4855 = vunpack.c.h.b16 %v3833
    %v4856 = vunpack.c.l.b16 %v3834
    %v4857 = vunpack.c.h.b16 %v3834
    %v4858 = vunpack.c.l.b16 %v3835
    %v4859 = vunpack.c.h.b16 %v3835
    %v4860 = vunpack.c.l.b16 %v3836
    %v4861 = vunpack.c.h.b16 %v3836
    %v4862 = vunpack.c.l.b16 %v3837
    %v4863 = vunpack.c.h.b16 %v3837
    %v4864 = vunpack.c.l.b16 %v3838
    %v4865 = vunpack.c.h.b16 %v3838
    %v4866 = vunpack.c.l.b16 %v3839
    %v4867 = vunpack.c.h.b16 %v3839
    %v4868 = vunpack.c.l.b16 %v3840
    %v4869 = vunpack.c.h.b16 %v3840
    %v4870 = vunpack.c.l.b16 %v3841
    %v4871 = vunpack.c.h.b16 %v3841
    %v4872 = vunpack.c.l.b16 %v3842
    %v4873 = vunpack.c.h.b16 %v3842
    %v4874 = vunpack.c.l.b16 %v3843
    %v4875 = vunpack.c.h.b16 %v3843
    %v4876 = vunpack.c.l.b16 %v3844
    %v4877 = vunpack.c.h.b16 %v3844
    %v4878 = vunpack.c.l.b16 %v3845
    %v4879 = vunpack.c.h.b16 %v3845
    %v4880 = vunpack.c.l.b16 %v3846
    %v4881 = vunpack.c.h.b16 %v3846
    %v4882 = vunpack.c.l.b16 %v3847
    %v4883 = vunpack.c.h.b16 %v3847
    %v4884 = vunpack.c.l.b16 %v3848
    %v4885 = vunpack.c.h.b16 %v3848
    %v4886 = vunpack.c.l.b16 %v3849
    %v4887 = vunpack.c.h.b16 %v3849
    %v4888 = vunpack.c.l.b16 %v3850
    %v4889 = vunpack.c.h.b16 %v3850
    %v4890 = vunpack.c.l.b16 %v3851
    %v4891 = vunpack.c.h.b16 %v3851
    %v4892 = vunpack.c.l.b16 %v3852
    %v4893 = vunpack.c.h.b16 %v3852
    %v4894 = vunpack.c.l.b16 %v3853
    %v4895 = vunpack.c.h.b16 %v3853
    %v4896 = vunpack.c.l.b16 %v3854
    %v4897 = vunpack.c.h.b16 %v3854
    %v4898 = vunpack.c.l.b16 %v3855
    %v4899 = vunpack.c.h.b16 %v3855
    %v4900 = vunpack.c.l.b16 %v3856
    %v4901 = vunpack.c.h.b16 %v3856
    %v4902 = vunpack.c.l.b16 %v3857
    %v4903 = vunpack.c.h.b16 %v3857
    %v4904 = vunpack.c.l.b16 %v3858
    %v4905 = vunpack.c.h.b16 %v3858
    %v4906 = vunpack.c.l.b16 %v3859
    %v4907 = vunpack.c.h.b16 %v3859
    %v4908 = vunpack.c.l.b16 %v3860
    %v4909 = vunpack.c.h.b16 %v3860
    %v4910 = vunpack.c.l.b16 %v3861
    %v4911 = vunpack.c.h.b16 %v3861
    %v4912 = vunpack.c.l.b16 %v3862
    %v4913 = vunpack.c.h.b16 %v3862
    %v4914 = vunpack.c.l.b16 %v3863
    %v4915 = vunpack.c.h.b16 %v3863
    %v4916 = vunpack.c.l.b16 %v3864
    %v4917 = vunpack.c.h.b16 %v3864
    %v4918 = vunpack.c.l.b16 %v3865
    %v4919 = vunpack.c.h.b16 %v3865
    %v4920 = vunpack.c.l.b16 %v3866
    %v4921 = vunpack.c.h.b16 %v3866
    %v4922 = vunpack.c.l.b16 %v3867
    %v4923 = vunpack.c.h.b16 %v3867
    %v4924 = vunpack.c.l.b16 %v3868
    %v4925 = vunpack.c.h.b16 %v3868
    %v4926 = vunpack.c.l.b16 %v3869
    %v4927 = vunpack.c.h.b16 %v3869
    %v4928 = vunpack.c.l.b16 %v3870
    %v4929 = vunpack.c.h.b16 %v3870
    %v4930 = vunpack.c.l.b16 %v3871
    %v4931 = vunpack.c.h.b16 %v3871
    %v4932 = vunpack.c.l.b16 %v3872
    %v4933 = vunpack.c.h.b16 %v3872
    %v4934 = vunpack.c.l.b16 %v3873
    %v4935 = vunpack.c.h.b16 %v3873
    %v4936 = vunpack.c.l.b16 %v3874
    %v4937 = vunpack.c.h.b16 %v3874
    %v4938 = vunpack.c.l.b16 %v3875
    %v4939 = vunpack.c.h.b16 %v3875
    %v4940 = vunpack.c.l.b16 %v3876
    %v4941 = vunpack.c.h.b16 %v3876
    %v4942 = vunpack.c.l.b16 %v3877
    %v4943 = vunpack.c.h.b16 %v3877
    %v4944 = vunpack.c.l.b16 %v3878
    %v4945 = vunpack.c.h.b16 %v3878
    %v4946 = vunpack.c.l.b16 %v3879
    %v4947 = vunpack.c.h.b16 %v3879
    %v4948 = vunpack.c.l.b16 %v3880
    %v4949 = vunpack.c.h.b16 %v3880
    %v4950 = vunpack.c.l.b16 %v3881
    %v4951 = vunpack.c.h.b16 %v3881
    %v4952 = vunpack.c.l.b16 %v3882
    %v4953 = vunpack.c.h.b16 %v3882
    %v4954 = vunpack.c.l.b16 %v3883
    %v4955 = vunpack.c.h.b16 %v3883
    %v4956 = vunpack.c.l.b16 %v3884
    %v4957 = vunpack.c.h.b16 %v3884
    %v4958 = vunpack.c.l.b16 %v3885
    %v4959 = vunpack.c.h.b16 %v3885
    %v4960 = vunpack.c.l.b16 %v3886
    %v4961 = vunpack.c.h.b16 %v3886
    %v4962 = vunpack.c.l.b16 %v3887
    %v4963 = vunpack.c.h.b16 %v3887
    %v4964 = vunpack.c.l.b16 %v3888
    %v4965 = vunpack.c.h.b16 %v3888
    %v4966 = vunpack.c.l.b16 %v3889
    %v4967 = vunpack.c.h.b16 %v3889
    %v4968 = vunpack.c.l.b16 %v3890
    %v4969 = vunpack.c.h.b16 %v3890
    %v4970 = vunpack.c.l.b16 %v3891
    %v4971 = vunpack.c.h.b16 %v3891
    %v4972 = vunpack.c.l.b16 %v3892
    %v4973 = vunpack.c.h.b16 %v3892
    %v4974 = vunpack.c.l.b16 %v3893
    %v4975 = vunpack.c.h.b16 %v3893
    %v4976 = vunpack.c.l.b16 %v3894
    %v4977 = vunpack.c.h.b16 %v3894
    %v4978 = vunpack.c.l.b16 %v3895
    %v4979 = vunpack.c.h.b16 %v3895
    %v4980 = vunpack.c.l.b16 %v3896
    %v4981 = vunpack.c.h.b16 %v3896
    %v4982 = vunpack.c.l.b16 %v3897
    %v4983 = vunpack.c.h.b16 %v3897
    %v4984 = vunpack.c.l.b16 %v3898
    %v4985 = vunpack.c.h.b16 %v3898
    %v4986 = vunpack.c.l.b16 %v3899
    %v4987 = vunpack.c.h.b16 %v3899
    %v4988 = vunpack.c.l.b16 %v3900
    %v4989 = vunpack.c.h.b16 %v3900
    %v4990 = vunpack.c.l.b16 %v3901
    %v4991 = vunpack.c.h.b16 %v3901
    %v4992 = vunpack.c.l.b16 %v3902
    %v4993 = vunpack.c.h.b16 %v3902
    %v4994 = vunpack.c.l.b16 %v3903
    %v4995 = vunpack.c.h.b16 %v3903
    %v4996 = vunpack.c.l.b16 %v3904
    %v4997 = vunpack.c.h.b16 %v3904
    %v4998 = vunpack.c.l.b16 %v3905
    %v4999 = vunpack.c.h.b16 %v3905
    %v5000 = vunpack.c.l.b16 %v3906
    %v5001 = vunpack.c.h.b16 %v3906
    %v5002 = vunpack.c.l.b16 %v3907
    %v5003 = vunpack.c.h.b16 %v3907
    %v5004 = vunpack.c.l.b16 %v3908
    %v5005 = vunpack.c.h.b16 %v3908
    %v5006 = vunpack.c.l.b16 %v3909
    %v5007 = vunpack.c.h.b16 %v3909
    %v5008 = vunpack.c.l.b16 %v3910
    %v5009 = vunpack.c.h.b16 %v3910
    %v5010 = vunpack.c.l.b16 %v3911
    %v5011 = vunpack.c.h.b16 %v3911
    %v5012 = vunpack.c.l.b16 %v3912
    %v5013 = vunpack.c.h.b16 %v3912
    %v5014 = vunpack.c.l.b16 %v3913
    %v5015 = vunpack.c.h.b16 %v3913
    %v5016 = vunpack.c.l.b16 %v3914
    %v5017 = vunpack.c.h.b16 %v3914
    %v5018 = vunpack.c.l.b16 %v3915
    %v5019 = vunpack.c.h.b16 %v3915
    %v5020 = vunpack.c.l.b16 %v3916
    %v5021 = vunpack.c.h.b16 %v3916
    %v5022 = vunpack.c.l.b16 %v3917
    %v5023 = vunpack.c.h.b16 %v3917
    %v5024 = vunpack.c.l.b16 %v3918
    %v5025 = vunpack.c.h.b16 %v3918
    %v5026 = vunpack.c.l.b16 %v3919
    %v5027 = vunpack.c.h.b16 %v3919
    %v5028 = vunpack.c.l.b16 %v3920
    %v5029 = vunpack.c.h.b16 %v3920
    %v5030 = vunpack.c.l.b16 %v3921
    %v5031 = vunpack.c.h.b16 %v3921
    %v5032 = vunpack.c.l.b16 %v3922
    %v5033 = vunpack.c.h.b16 %v3922
    %v5034 = vunpack.c.l.b16 %v3923
    %v5035 = vunpack.c.h.b16 %v3923
    %v5036 = vunpack.c.l.b16 %v3924
    %v5037 = vunpack.c.h.b16 %v3924
    %v5038 = vunpack.c.l.b16 %v3925
    %v5039 = vunpack.c.h.b16 %v3925
    %v5040 = vunpack.c.l.b16 %v3926
    %v5041 = vunpack.c.h.b16 %v3926
    %v5042 = vunpack.c.l.b16 %v3927
    %v5043 = vunpack.c.h.b16 %v3927
    %v5044 = vunpack.c.l.b16 %v3928
    %v5045 = vunpack.c.h.b16 %v3928
    %v5046 = vunpack.c.l.b16 %v3929
    %v5047 = vunpack.c.h.b16 %v3929
    %v5048 = vunpack.c.l.b16 %v3930
    %v5049 = vunpack.c.h.b16 %v3930
    %v5050 = vunpack.c.l.b16 %v3931
    %v5051 = vunpack.c.h.b16 %v3931
    %v5052 = vunpack.c.l.b16 %v3932
    %v5053 = vunpack.c.h.b16 %v3932
    %v5054 = vunpack.c.l.b16 %v3933
    %v5055 = vunpack.c.h.b16 %v3933
    %v5056 = vunpack.c.l.b16 %v3934
    %v5057 = vunpack.c.h.b16 %v3934
    %v5058 = vunpack.c.l.b16 %v3935
    %v5059 = vunpack.c.h.b16 %v3935
    %v5060 = vunpack.c.l.b16 %v3936
    %v5061 = vunpack.c.h.b16 %v3936
    %v5062 = vunpack.c.l.b16 %v3937
    %v5063 = vunpack.c.h.b16 %v3937
    %v5064 = vunpack.c.l.b16 %v3938
    %v5065 = vunpack.c.h.b16 %v3938
    %v5066 = vunpack.c.l.b16 %v3939
    %v5067 = vunpack.c.h.b16 %v3939
    %v5068 = vunpack.c.l.b16 %v3940
    %v5069 = vunpack.c.h.b16 %v3940
    %v5070 = vunpack.c.l.b16 %v3941
    %v5071 = vunpack.c.h.b16 %v3941
    %v5072 = vunpack.c.l.b16 %v3942
    %v5073 = vunpack.c.h.b16 %v3942
    %v5074 = vunpack.c.l.b16 %v3943
    %v5075 = vunpack.c.h.b16 %v3943
    %v5076 = vunpack.c.l.b16 %v3944
    %v5077 = vunpack.c.h.b16 %v3944
    %v5078 = vunpack.c.l.b16 %v3945
    %v5079 = vunpack.c.h.b16 %v3945
    %v5080 = vunpack.c.l.b16 %v3946
    %v5081 = vunpack.c.h.b16 %v3946
    %v5082 = vunpack.c.l.b16 %v3947
    %v5083 = vunpack.c.h.b16 %v3947
    %v5084 = vunpack.c.l.b16 %v3948
    %v5085 = vunpack.c.h.b16 %v3948
    %v5086 = vunpack.c.l.b16 %v3949
    %v5087 = vunpack.c.h.b16 %v3949
    %v5088 = vunpack.c.l.b16 %v3950
    %v5089 = vunpack.c.h.b16 %v3950
    %v5090 = vunpack.c.l.b16 %v3951
    %v5091 = vunpack.c.h.b16 %v3951
    %v5092 = vunpack.c.l.b16 %v3952
    %v5093 = vunpack.c.h.b16 %v3952
    %v5094 = vunpack.c.l.b16 %v3953
    %v5095 = vunpack.c.h.b16 %v3953
    %v5096 = vunpack.c.l.b16 %v3954
    %v5097 = vunpack.c.h.b16 %v3954
    %v5098 = vunpack.c.l.b16 %v3955
    %v5099 = vunpack.c.h.b16 %v3955
    %v5100 = vunpack.c.l.b16 %v3956
    %v5101 = vunpack.c.h.b16 %v3956
    %v5102 = vunpack.c.l.b16 %v3957
    %v5103 = vunpack.c.h.b16 %v3957
    %v5104 = vunpack.c.l.b16 %v3958
    %v5105 = vunpack.c.h.b16 %v3958
    %v5106 = vunpack.c.l.b16 %v3959
    %v5107 = vunpack.c.h.b16 %v3959
    %v5108 = vunpack.c.l.b16 %v3960
    %v5109 = vunpack.c.h.b16 %v3960
    %v5110 = vunpack.c.l.b16 %v3961
    %v5111 = vunpack.c.h.b16 %v3961
    %v5112 = vunpack.c.l.b16 %v3962
    %v5113 = vunpack.c.h.b16 %v3962
    %v5114 = vunpack.c.l.b16 %v3963
    %v5115 = vunpack.c.h.b16 %v3963
    %v5116 = vunpack.c.l.b16 %v3964
    %v5117 = vunpack.c.h.b16 %v3964
    %v5118 = vunpack.c.l.b16 %v3965
    %v5119 = vunpack.c.h.b16 %v3965
    %v5120 = vunpack.c.l.b16 %v3966
    %v5121 = vunpack.c.h.b16 %v3966
    %v5122 = vunpack.c.l.b16 %v3967
    %v5123 = vunpack.c.h.b16 %v3967
    %v5124 = vunpack.c.l.b16 %v3968
    %v5125 = vunpack.c.h.b16 %v3968
    %v5126 = vunpack.c.l.b16 %v3969
    %v5127 = vunpack.c.h.b16 %v3969
    %v5128 = vunpack.c.l.b16 %v3970
    %v5129 = vunpack.c.h.b16 %v3970
    %v5130 = vunpack.c.l.b16 %v3971
    %v5131 = vunpack.c.h.b16 %v3971
    %v5132 = vunpack.c.l.b16 %v3972
    %v5133 = vunpack.c.h.b16 %v3972
    %v5134 = vunpack.c.l.b16 %v3973
    %v5135 = vunpack.c.h.b16 %v3973
    %v5136 = vunpack.c.l.b16 %v3974
    %v5137 = vunpack.c.h.b16 %v3974
    %v5138 = vunpack.c.l.b16 %v3975
    %v5139 = vunpack.c.h.b16 %v3975
    %v5140 = vunpack.c.l.b16 %v3976
    %v5141 = vunpack.c.h.b16 %v3976
    %v5142 = vunpack.c.l.b16 %v3977
    %v5143 = vunpack.c.h.b16 %v3977
    %v5144 = vunpack.c.l.b16 %v3978
    %v5145 = vunpack.c.h.b16 %v3978
    %v5146 = vunpack.c.l.b16 %v3979
    %v5147 = vunpack.c.h.b16 %v3979
    %v5148 = vunpack.c.l.b16 %v3980
    %v5149 = vunpack.c.h.b16 %v3980
    %v5150 = vunpack.c.l.b16 %v3981
    %v5151 = vunpack.c.h.b16 %v3981
    %v5152 = vunpack.c.l.b16 %v3982
    %v5153 = vunpack.c.h.b16 %v3982
    %v5154 = vunpack.c.l.b16 %v3983
    %v5155 = vunpack.c.h.b16 %v3983
    %v5156 = vunpack.c.l.b16 %v3984
    %v5157 = vunpack.c.h.b16 %v3984
    %v5158 = vunpack.c.l.b16 %v3985
    %v5159 = vunpack.c.h.b16 %v3985
    %v5160 = vunpack.c.l.b16 %v3986
    %v5161 = vunpack.c.h.b16 %v3986
    %v5162 = vunpack.c.l.b16 %v3987
    %v5163 = vunpack.c.h.b16 %v3987
    %v5164 = vunpack.c.l.b16 %v3988
    %v5165 = vunpack.c.h.b16 %v3988
    %v5166 = vunpack.c.l.b16 %v3989
    %v5167 = vunpack.c.h.b16 %v3989
    %v5168 = vunpack.c.l.b16 %v3990
    %v5169 = vunpack.c.h.b16 %v3990
    %v5170 = vunpack.c.l.b16 %v3991
    %v5171 = vunpack.c.h.b16 %v3991
    %v5172 = vunpack.c.l.b16 %v3992
    %v5173 = vunpack.c.h.b16 %v3992
    %v5174 = vunpack.c.l.b16 %v3993
    %v5175 = vunpack.c.h.b16 %v3993
    %v5176 = vunpack.c.l.b16 %v3994
    %v5177 = vunpack.c.h.b16 %v3994
    %v5178 = vunpack.c.l.b16 %v3995
    %v5179 = vunpack.c.h.b16 %v3995
    %v5180 = vunpack.c.l.b16 %v3996
    %v5181 = vunpack.c.h.b16 %v3996
    %v5182 = vunpack.c.l.b16 %v3997
    %v5183 = vunpack.c.h.b16 %v3997
    %v5184 = vunpack.c.l.b16 %v3998
    %v5185 = vunpack.c.h.b16 %v3998
    %v5186 = vunpack.c.l.b16 %v3999
    %v5187 = vunpack.c.h.b16 %v3999
    %v5188 = vunpack.c.l.b16 %v4000
    %v5189 = vunpack.c.h.b16 %v4000
    %v5190 = vunpack.c.l.b16 %v4001
    %v5191 = vunpack.c.h.b16 %v4001
    %v5192 = vunpack.c.l.b16 %v4002
    %v5193 = vunpack.c.h.b16 %v4002
    %v5194 = vunpack.c.l.b16 %v4003
    %v5195 = vunpack.c.h.b16 %v4003
    %v5196 = vunpack.c.l.b16 %v4004
    %v5197 = vunpack.c.h.b16 %v4004
    %v5198 = vunpack.c.l.b16 %v4005
    %v5199 = vunpack.c.h.b16 %v4005
    %v5200 = vunpack.c.l.b16 %v4006
    %v5201 = vunpack.c.h.b16 %v4006
    %v5202 = vunpack.c.l.b16 %v4007
    %v5203 = vunpack.c.h.b16 %v4007
    %v5204 = vunpack.c.l.b16 %v4008
    %v5205 = vunpack.c.h.b16 %v4008
    %v5206 = vunpack.c.l.b16 %v4009
    %v5207 = vunpack.c.h.b16 %v4009
    %v5208 = vunpack.c.l.b16 %v4010
    %v5209 = vunpack.c.h.b16 %v4010
    %v5210 = vunpack.c.l.b16 %v4011
    %v5211 = vunpack.c.h.b16 %v4011
    %v5212 = vunpack.c.l.b16 %v4012
    %v5213 = vunpack.c.h.b16 %v4012
    %v5214 = vunpack.c.l.b16 %v4013
    %v5215 = vunpack.c.h.b16 %v4013
    %v5216 = vunpack.c.l.b16 %v4014
    %v5217 = vunpack.c.h.b16 %v4014
    %v5218 = vunpack.c.l.b16 %v4015
    %v5219 = vunpack.c.h.b16 %v4015
    %v5220 = vunpack.c.l.b16 %v4016
    %v5221 = vunpack.c.h.b16 %v4016
    %v5222 = vunpack.c.l.b16 %v4017
    %v5223 = vunpack.c.h.b16 %v4017
    %v5224 = vunpack.c.l.b16 %v4018
    %v5225 = vunpack.c.h.b16 %v4018
    %v5226 = vunpack.c.l.b16 %v4019
    %v5227 = vunpack.c.h.b16 %v4019
    %v5228 = vunpack.c.l.b16 %v4020
    %v5229 = vunpack.c.h.b16 %v4020
    %v5230 = vunpack.c.l.b16 %v4021
    %v5231 = vunpack.c.h.b16 %v4021
    %v5232 = vunpack.c.l.b16 %v4022
    %v5233 = vunpack.c.h.b16 %v4022
    %v5234 = vunpack.c.l.b16 %v4023
    %v5235 = vunpack.c.h.b16 %v4023
    %v5236 = vunpack.c.l.b16 %v4024
    %v5237 = vunpack.c.h.b16 %v4024
    %v5238 = vunpack.c.l.b16 %v4025
    %v5239 = vunpack.c.h.b16 %v4025
    %v5240 = vunpack.c.l.b16 %v4026
    %v5241 = vunpack.c.h.b16 %v4026
    %v5242 = vunpack.c.l.b16 %v4027
    %v5243 = vunpack.c.h.b16 %v4027
    %v5244 = vunpack.c.l.b16 %v4028
    %v5245 = vunpack.c.h.b16 %v4028
    %v5246 = vunpack.c.l.b16 %v4029
    %v5247 = vunpack.c.h.b16 %v4029
    %v5248 = vunpack.c.l.b16 %v4030
    %v5249 = vunpack.c.h.b16 %v4030
    %v5250 = vunpack.c.l.b16 %v4031
    %v5251 = vunpack.c.h.b16 %v4031
    %v5252 = vunpack.c.l.b16 %v4032
    %v5253 = vunpack.c.h.b16 %v4032
    %v5254 = vunpack.c.l.b16 %v4033
    %v5255 = vunpack.c.h.b16 %v4033
    %v5256 = vunpack.c.l.b16 %v4034
    %v5257 = vunpack.c.h.b16 %v4034
    %v5258 = vunpack.c.l.b16 %v4035
    %v5259 = vunpack.c.h.b16 %v4035
    %v5260 = vunpack.c.l.b16 %v4036
    %v5261 = vunpack.c.h.b16 %v4036
    %v5262 = vunpack.c.l.b16 %v4037
    %v5263 = vunpack.c.h.b16 %v4037
    %v5264 = vunpack.c.l.b16 %v4038
    %v5265 = vunpack.c.h.b16 %v4038
    %v5266 = vunpack.c.l.b16 %v4039
    %v5267 = vunpack.c.h.b16 %v4039
    %v5268 = vunpack.c.l.b16 %v4040
    %v5269 = vunpack.c.h.b16 %v4040
    %v5270 = vunpack.c.l.b16 %v4041
    %v5271 = vunpack.c.h.b16 %v4041
    %v5272 = vunpack.c.l.b16 %v4042
    %v5273 = vunpack.c.h.b16 %v4042
    %v5274 = vunpack.c.l.b16 %v4043
    %v5275 = vunpack.c.h.b16 %v4043
    %v5276 = vunpack.c.l.b16 %v4044
    %v5277 = vunpack.c.h.b16 %v4044
    %v5278 = vunpack.c.l.b16 %v4045
    %v5279 = vunpack.c.h.b16 %v4045
    %v5280 = vunpack.c.l.b16 %v4046
    %v5281 = vunpack.c.h.b16 %v4046
    %v5282 = vunpack.c.l.b16 %v4047
    %v5283 = vunpack.c.h.b16 %v4047
    %v5284 = vunpack.c.l.b16 %v4048
    %v5285 = vunpack.c.h.b16 %v4048
    %v5286 = vunpack.c.l.b16 %v4049
    %v5287 = vunpack.c.h.b16 %v4049
    %v5288 = vunpack.c.l.b16 %v4050
    %v5289 = vunpack.c.h.b16 %v4050
    %v5290 = vunpack.c.l.b16 %v4051
    %v5291 = vunpack.c.h.b16 %v4051
    %v5292 = vunpack.c.l.b16 %v4052
    %v5293 = vunpack.c.h.b16 %v4052
    %v5294 = vunpack.c.l.b16 %v4053
    %v5295 = vunpack.c.h.b16 %v4053
    %v5296 = vunpack.c.l.b16 %v4054
    %v5297 = vunpack.c.h.b16 %v4054
    %v5298 = vunpack.c.l.b16 %v4055
    %v5299 = vunpack.c.h.b16 %v4055
    %v5300 = vunpack.c.l.b16 %v4056
    %v5301 = vunpack.c.h.b16 %v4056
    %v5302 = vunpack.c.l.b16 %v4057
    %v5303 = vunpack.c.h.b16 %v4057
    %v5304 = vunpack.c.l.b16 %v4058
    %v5305 = vunpack.c.h.b16 %v4058
    %v5306 = vunpack.c.l.b16 %v4059
    %v5307 = vunpack.c.h.b16 %v4059
    %v5308 = vunpack.c.l.b16 %v4060
    %v5309 = vunpack.c.h.b16 %v4060
    %v5310 = vunpack.c.l.b16 %v4061
    %v5311 = vunpack.c.h.b16 %v4061
    %v5312 = vunpack.c.l.b16 %v4062
    %v5313 = vunpack.c.h.b16 %v4062
    %v5314 = vunpack.c.l.b16 %v4063
    %v5315 = vunpack.c.h.b16 %v4063
    %v5316 = vunpack.c.l.b16 %v4064
    %v5317 = vunpack.c.h.b16 %v4064
    %v5318 = vunpack.c.l.b16 %v4065
    %v5319 = vunpack.c.h.b16 %v4065
    %v5320 = vunpack.c.l.b16 %v4066
    %v5321 = vunpack.c.h.b16 %v4066
    %v5322 = vunpack.c.l.b16 %v4067
    %v5323 = vunpack.c.h.b16 %v4067
    %v5324 = vunpack.c.l.b16 %v4068
    %v5325 = vunpack.c.h.b16 %v4068
    %v5326 = vunpack.c.l.b16 %v4069
    %v5327 = vunpack.c.h.b16 %v4069
    %v5328 = vunpack.c.l.b16 %v4070
    %v5329 = vunpack.c.h.b16 %v4070
    %v5330 = vunpack.c.l.b16 %v4071
    %v5331 = vunpack.c.h.b16 %v4071
    %v5332 = vunpack.c.l.b16 %v4072
    %v5333 = vunpack.c.h.b16 %v4072
    %v5334 = vunpack.c.l.b16 %v4073
    %v5335 = vunpack.c.h.b16 %v4073
    %v5336 = vunpack.c.l.b16 %v4074
    %v5337 = vunpack.c.h.b16 %v4074
    %v5338 = vunpack.c.l.b16 %v4075
    %v5339 = vunpack.c.h.b16 %v4075
    %v5340 = vunpack.c.l.b16 %v4076
    %v5341 = vunpack.c.h.b16 %v4076
    %v5342 = vunpack.c.l.b16 %v4077
    %v5343 = vunpack.c.h.b16 %v4077
    %v5344 = vunpack.c.l.b16 %v4078
    %v5345 = vunpack.c.h.b16 %v4078
    %v5346 = vunpack.c.l.b16 %v4079
    %v5347 = vunpack.c.h.b16 %v4079
    %v5348 = vunpack.c.l.b16 %v4080
    %v5349 = vunpack.c.h.b16 %v4080
    %v5350 = vunpack.c.l.b16 %v4081
    %v5351 = vunpack.c.h.b16 %v4081
    %v5352 = vunpack.c.l.b16 %v4082
    %v5353 = vunpack.c.h.b16 %v4082
    %v5354 = vunpack.c.l.b16 %v4083
    %v5355 = vunpack.c.h.b16 %v4083
    %v5356 = vunpack.c.l.b16 %v4084
    %v5357 = vunpack.c.h.b16 %v4084
    %v5358 = vunpack.c.l.b16 %v4085
    %v5359 = vunpack.c.h.b16 %v4085
    %v5360 = vunpack.c.l.b16 %v4086
    %v5361 = vunpack.c.h.b16 %v4086
    %v5362 = vunpack.c.l.b16 %v4087
    %v5363 = vunpack.c.h.b16 %v4087
    %v5364 = vunpack.c.l.b16 %v4088
    %v5365 = vunpack.c.h.b16 %v4088
    %v5366 = vunpack.c.l.b16 %v4089
    %v5367 = vunpack.c.h.b16 %v4089
    %v5368 = vunpack.c.l.b16 %v4090
    %v5369 = vunpack.c.h.b16 %v4090
    %v5370 = vunpack.c.l.b16 %v4091
    %v5371 = vunpack.c.h.b16 %v4091
    %v5372 = vunpack.c.l.b16 %v4092
    %v5373 = vunpack.c.h.b16 %v4092
    %v5374 = vunpack.c.l.b16 %v4093
    %v5375 = vunpack.c.h.b16 %v4093
    %v5376 = vunpack.c.l.b16 %v4094
    %v5377 = vunpack.c.h.b16 %v4094
    %v5378 = vunpack.c.l.b16 %v4095
    %v5379 = vunpack.c.h.b16 %v4095
    %v5380 = vunpack.c.l.b16 %v4096
    %v5381 = vunpack.c.h.b16 %v4096
    %v5382 = vunpack.c.l.b16 %v4097
    %v5383 = vunpack.c.h.b16 %v4097
    %v5384 = vunpack.c.l.b16 %v4098
    %v5385 = vunpack.c.h.b16 %v4098
    %v5386 = vunpack.c.l.b16 %v4099
    %v5387 = vunpack.c.h.b16 %v4099
    %v5388 = vunpack.c.l.b16 %v4100
    %v5389 = vunpack.c.h.b16 %v4100
    %v5390 = vunpack.c.l.b16 %v4101
    %v5391 = vunpack.c.h.b16 %v4101
    %v5392 = vunpack.c.l.b16 %v4102
    %v5393 = vunpack.c.h.b16 %v4102
    %v5394 = vunpack.c.l.b16 %v4103
    %v5395 = vunpack.c.h.b16 %v4103
    %v5396 = vunpack.c.l.b16 %v4104
    %v5397 = vunpack.c.h.b16 %v4104
    %v5398 = vunpack.c.l.b16 %v4105
    %v5399 = vunpack.c.h.b16 %v4105
    %v5400 = vunpack.c.l.b16 %v4106
    %v5401 = vunpack.c.h.b16 %v4106
    %v5402 = vunpack.c.l.b16 %v4107
    %v5403 = vunpack.c.h.b16 %v4107
    %v5404 = vunpack.c.l.b16 %v4108
    %v5405 = vunpack.c.h.b16 %v4108
    %v5406 = vunpack.c.l.b16 %v4109
    %v5407 = vunpack.c.h.b16 %v4109
    %v5408 = vunpack.c.l.b16 %v4110
    %v5409 = vunpack.c.h.b16 %v4110
    %v5410 = vunpack.c.l.b16 %v4111
    %v5411 = vunpack.c.h.b16 %v4111
    %v5412 = vunpack.c.l.b16 %v4112
    %v5413 = vunpack.c.h.b16 %v4112
    %v5414 = vunpack.c.l.b16 %v4113
    %v5415 = vunpack.c.h.b16 %v4113
    %v5416 = vunpack.c.l.b16 %v4114
    %v5417 = vunpack.c.h.b16 %v4114
    %v5418 = vunpack.c.l.b16 %v4115
    %v5419 = vunpack.c.h.b16 %v4115
    %v5420 = vunpack.c.l.b16 %v4116
    %v5421 = vunpack.c.h.b16 %v4116
    %v5422 = vunpack.c.l.b16 %v4117
    %v5423 = vunpack.c.h.b16 %v4117
    %v5424 = vunpack.c.l.b16 %v4118
    %v5425 = vunpack.c.h.b16 %v4118
    %v5426 = vunpack.c.l.b16 %v4119
    %v5427 = vunpack.c.h.b16 %v4119
    %v5428 = vunpack.c.l.b16 %v4120
    %v5429 = vunpack.c.h.b16 %v4120
    %v5430 = vunpack.c.l.b16 %v4121
    %v5431 = vunpack.c.h.b16 %v4121
    %v5432 = vunpack.c.l.b16 %v4122
    %v5433 = vunpack.c.h.b16 %v4122
    %v5434 = vunpack.c.l.b16 %v4123
    %v5435 = vunpack.c.h.b16 %v4123
    %v5436 = vunpack.c.l.b16 %v4124
    %v5437 = vunpack.c.h.b16 %v4124
    %v5438 = vunpack.c.l.b16 %v4125
    %v5439 = vunpack.c.h.b16 %v4125
    %v5440 = vunpack.c.l.b16 %v4126
    %v5441 = vunpack.c.h.b16 %v4126
    %v5442 = vunpack.c.l.b16 %v4127
    %v5443 = vunpack.c.h.b16 %v4127
    %v5444 = vunpack.c.l.b16 %v4128
    %v5445 = vunpack.c.h.b16 %v4128
    %v5446 = vunpack.c.l.b16 %v4129
    %v5447 = vunpack.c.h.b16 %v4129
    %v5448 = vunpack.c.l.b16 %v4130
    %v5449 = vunpack.c.h.b16 %v4130
    %v5450 = vunpack.c.l.b16 %v4131
    %v5451 = vunpack.c.h.b16 %v4131
    %v5452 = vunpack.c.l.b16 %v4132
    %v5453 = vunpack.c.h.b16 %v4132
    %v5454 = vunpack.c.l.b16 %v4133
    %v5455 = vunpack.c.h.b16 %v4133
    %v5456 = vunpack.c.l.b16 %v4134
    %v5457 = vunpack.c.h.b16 %v4134
    %v5458 = vunpack.c.l.b16 %v4135
    %v5459 = vunpack.c.h.b16 %v4135
    %v5460 = vunpack.c.l.b16 %v4136
    %v5461 = vunpack.c.h.b16 %v4136
    %v5462 = vunpack.c.l.b16 %v4137
    %v5463 = vunpack.c.h.b16 %v4137
    %v5464 = vunpack.c.l.b16 %v4138
    %v5465 = vunpack.c.h.b16 %v4138
    %v5466 = vunpack.c.l.b16 %v4139
    %v5467 = vunpack.c.h.b16 %v4139
    %v5468 = vunpack.c.l.b16 %v4140
    %v5469 = vunpack.c.h.b16 %v4140
    %v5470 = vunpack.c.l.b16 %v4141
    %v5471 = vunpack.c.h.b16 %v4141
    %v5472 = vunpack.c.l.b16 %v4142
    %v5473 = vunpack.c.h.b16 %v4142
    %v5474 = vunpack.c.l.b16 %v4143
    %v5475 = vunpack.c.h.b16 %v4143
    %v5476 = vunpack.c.l.b16 %v4144
    %v5477 = vunpack.c.h.b16 %v4144
    %v5478 = vunpack.c.l.b16 %v4145
    %v5479 = vunpack.c.h.b16 %v4145
    %v5480 = vunpack.c.l.b16 %v4146
    %v5481 = vunpack.c.h.b16 %v4146
    %v5482 = vunpack.c.l.b16 %v4147
    %v5483 = vunpack.c.h.b16 %v4147
    %v5484 = vunpack.c.l.b16 %v4148
    %v5485 = vunpack.c.h.b16 %v4148
    %v5486 = vunpack.c.l.b16 %v4149
    %v5487 = vunpack.c.h.b16 %v4149
    %v5488 = vunpack.c.l.b16 %v4150
    %v5489 = vunpack.c.h.b16 %v4150
    %v5490 = vunpack.c.l.b16 %v4151
    %v5491 = vunpack.c.h.b16 %v4151
    %v5492 = vunpack.c.l.b16 %v4152
    %v5493 = vunpack.c.h.b16 %v4152
    %v5494 = vunpack.c.l.b16 %v4153
    %v5495 = vunpack.c.h.b16 %v4153
    %v5496 = vunpack.c.l.b16 %v4154
    %v5497 = vunpack.c.h.b16 %v4154
    %v5498 = vunpack.c.l.b16 %v4155
    %v5499 = vunpack.c.h.b16 %v4155
    %v5500 = vunpack.c.l.b16 %v4156
    %v5501 = vunpack.c.h.b16 %v4156
    %v5502 = vunpack.c.l.b16 %v4157
    %v5503 = vunpack.c.h.b16 %v4157
    %v5504 = vunpack.c.l.b16 %v4158
    %v5505 = vunpack.c.h.b16 %v4158
    %v5506 = vunpack.c.l.b16 %v4159
    %v5507 = vunpack.c.h.b16 %v4159
    %v5508 = vunpack.c.l.b16 %v4160
    %v5509 = vunpack.c.h.b16 %v4160
    %v5510 = vunpack.c.l.b16 %v4161
    %v5511 = vunpack.c.h.b16 %v4161
    %v5512 = vunpack.c.l.b16 %v4162
    %v5513 = vunpack.c.h.b16 %v4162
    %v5514 = vunpack.c.l.b16 %v4163
    %v5515 = vunpack.c.h.b16 %v4163
    %v5516 = vunpack.c.l.b16 %v4164
    %v5517 = vunpack.c.h.b16 %v4164
    %v5518 = vunpack.c.l.b16 %v4165
    %v5519 = vunpack.c.h.b16 %v4165
    %v5520 = vunpack.c.l.b16 %v4166
    %v5521 = vunpack.c.h.b16 %v4166
    %v5522 = vunpack.c.l.b16 %v4167
    %v5523 = vunpack.c.h.b16 %v4167
    %v5524 = vunpack.c.l.b16 %v4168
    %v5525 = vunpack.c.h.b16 %v4168
    %v5526 = vunpack.c.l.b16 %v4169
    %v5527 = vunpack.c.h.b16 %v4169
    %v5528 = vunpack.c.l.b16 %v4170
    %v5529 = vunpack.c.h.b16 %v4170
    %v5530 = vunpack.c.l.b16 %v4171
    %v5531 = vunpack.c.h.b16 %v4171
    %v5532 = vunpack.c.l.b16 %v4172
    %v5533 = vunpack.c.h.b16 %v4172
    %v5534 = vunpack.c.l.b16 %v4173
    %v5535 = vunpack.c.h.b16 %v4173
    %v5536 = vunpack.c.l.b16 %v4174
    %v5537 = vunpack.c.h.b16 %v4174
    %v5538 = vunpack.c.l.b16 %v4175
    %v5539 = vunpack.c.h.b16 %v4175
    %v5540 = vunpack.c.l.b16 %v4176
    %v5541 = vunpack.c.h.b16 %v4176
    %v5542 = vunpack.c.l.b16 %v4177
    %v5543 = vunpack.c.h.b16 %v4177
    %v5544 = vunpack.c.l.b16 %v4178
    %v5545 = vunpack.c.h.b16 %v4178
    %v5546 = vunpack.c.l.b16 %v4179
    %v5547 = vunpack.c.h.b16 %v4179
    %v5548 = vunpack.c.l.b16 %v4180
    %v5549 = vunpack.c.h.b16 %v4180
    %v5550 = vunpack.c.l.b16 %v4181
    %v5551 = vunpack.c.h.b16 %v4181
    %v5552 = vunpack.c.l.b16 %v4182
    %v5553 = vunpack.c.h.b16 %v4182
    %v5554 = vunpack.c.l.b16 %v4183
    %v5555 = vunpack.c.h.b16 %v4183
    %v5556 = vunpack.c.l.b16 %v4184
    %v5557 = vunpack.c.h.b16 %v4184
    %v5558 = vunpack.c.l.b16 %v4185
    %v5559 = vunpack.c.h.b16 %v4185
    %v5560 = vunpack.c.l.b16 %v4186
    %v5561 = vunpack.c.h.b16 %v4186
    %v5562 = vunpack.c.l.b16 %v4187
    %v5563 = vunpack.c.h.b16 %v4187
    %v5564 = vunpack.c.l.b16 %v4188
    %v5565 = vunpack.c.h.b16 %v4188
    %v5566 = vunpack.c.l.b16 %v4189
    %v5567 = vunpack.c.h.b16 %v4189
    %v5568 = vunpack.c.l.b16 %v4190
    %v5569 = vunpack.c.h.b16 %v4190
    %v5570 = vunpack.c.l.b16 %v4191
    %v5571 = vunpack.c.h.b16 %v4191
    %v5572 = vunpack.c.l.b16 %v4192
    %v5573 = vunpack.c.h.b16 %v4192
    %v5574 = vunpack.c.l.b16 %v4193
    %v5575 = vunpack.c.h.b16 %v4193
    %v5576 = vunpack.c.l.b16 %v4194
    %v5577 = vunpack.c.h.b16 %v4194
    %v5578 = vunpack.c.l.b16 %v4195
    %v5579 = vunpack.c.h.b16 %v4195
    %v5580 = vunpack.c.l.b16 %v4196
    %v5581 = vunpack.c.h.b16 %v4196
    %v5582 = vunpack.c.l.b16 %v4197
    %v5583 = vunpack.c.h.b16 %v4197
    %v5584 = vunpack.c.l.b16 %v4198
    %v5585 = vunpack.c.h.b16 %v4198
    %v5586 = vunpack.c.l.b16 %v4199
    %v5587 = vunpack.c.h.b16 %v4199
    %v5588 = vunpack.c.l.b16 %v4200
    %v5589 = vunpack.c.h.b16 %v4200
    %v5590 = vunpack.c.l.b16 %v4201
    %v5591 = vunpack.c.h.b16 %v4201
    %v5592 = vunpack.c.l.b16 %v4202
    %v5593 = vunpack.c.h.b16 %v4202
    %v5594 = vunpack.c.l.b16 %v4203
    %v5595 = vunpack.c.h.b16 %v4203
    %v5596 = vunpack.c.l.b16 %v4204
    %v5597 = vunpack.c.h.b16 %v4204
    %v5598 = vunpack.c.l.b16 %v4205
    %v5599 = vunpack.c.h.b16 %v4205
    %v5600 = vunpack.c.l.b16 %v4206
    %v5601 = vunpack.c.h.b16 %v4206
    %v5602 = vunpack.c.l.b16 %v4207
    %v5603 = vunpack.c.h.b16 %v4207
    %v5604 = vunpack.c.l.b16 %v4208
    %v5605 = vunpack.c.h.b16 %v4208
    %v5606 = vunpack.c.l.b16 %v4209
    %v5607 = vunpack.c.h.b16 %v4209
    %v5608 = vunpack.c.l.b16 %v4210
    %v5609 = vunpack.c.h.b16 %v4210
    %v5610 = vunpack.c.l.b16 %v4211
    %v5611 = vunpack.c.h.b16 %v4211
    %v5612 = vunpack.c.l.b16 %v4212
    %v5613 = vunpack.c.h.b16 %v4212
    %v5614 = vunpack.c.l.b16 %v4213
    %v5615 = vunpack.c.h.b16 %v4213
    %v5616 = vpack.c.b16 %v4818, %v4816
    %v5617 = vpack.c.b16 %v4819, %v4817
    %v5618 = vpack.c.b16 %v4822, %v4820
    %v5619 = vpack.c.b16 %v4823, %v4821
    %v5620 = vpack.c.b16 %v4826, %v4824
    %v5621 = vpack.c.b16 %v4827, %v4825
    %v5622 = vpack.c.b16 %v4830, %v4828
    %v5623 = vpack.c.b16 %v4831, %v4829
    %v5624 = vpack.c.b16 %v4834, %v4832
    %v5625 = vpack.c.b16 %v4835, %v4833
    %v5626 = vpack.c.b16 %v4838, %v4836
    %v5627 = vpack.c.b16 %v4839, %v4837
    %v5628 = vpack.c.b16 %v4842, %v4840
    %v5629 = vpack.c.b16 %v4843, %v4841
    %v5630 = vpack.c.b16 %v4846, %v4844
    %v5631 = vpack.c.b16 %v4847, %v4845
    %v5632 = vpack.c.b16 %v4850, %v4848
    %v5633 = vpack.c.b16 %v4851, %v4849
    %v5634 = vpack.c.b16 %v4854, %v4852
    %v5635 = vpack.c.b16 %v4855, %v4853
    %v5636 = vpack.c.b16 %v4858, %v4856
    %v5637 = vpack.c.b16 %v4859, %v4857
    %v5638 = vpack.c.b16 %v4862, %v4860
    %v5639 = vpack.c.b16 %v4863, %v4861
    %v5640 = vpack.c.b16 %v4866, %v4864
    %v5641 = vpack.c.b16 %v4867, %v4865
    %v5642 = vpack.c.b16 %v4870, %v4868
    %v5643 = vpack.c.b16 %v4871, %v4869
    %v5644 = vpack.c.b16 %v4874, %v4872
    %v5645 = vpack.c.b16 %v4875, %v4873
    %v5646 = vpack.c.b16 %v4878, %v4876
    %v5647 = vpack.c.b16 %v4879, %v4877
    %v5648 = vpack.c.b16 %v4882, %v4880
    %v5649 = vpack.c.b16 %v4883, %v4881
    %v5650 = vpack.c.b16 %v4886, %v4884
    %v5651 = vpack.c.b16 %v4887, %v4885
    %v5652 = vpack.c.b16 %v4890, %v4888
    %v5653 = vpack.c.b16 %v4891, %v4889
    %v5654 = vpack.c.b16 %v4894, %v4892
    %v5655 = vpack.c.b16 %v4895, %v4893
    %v5656 = vpack.c.b16 %v4898, %v4896
    %v5657 = vpack.c.b16 %v4899, %v4897
    %v5658 = vpack.c.b16 %v4902, %v4900
    %v5659 = vpack.c.b16 %v4903, %v4901
    %v5660 = vpack.c.b16 %v4906, %v4904
    %v5661 = vpack.c.b16 %v4907, %v4905
    %v5662 = vpack.c.b16 %v4910, %v4908
    %v5663 = vpack.c.b16 %v4911, %v4909
    %v5664 = vpack.c.b16 %v4914, %v4912
    %v5665 = vpack.c.b16 %v4915, %v4913
    %v5666 = vpack.c.b16 %v4918, %v4916
    %v5667 = vpack.c.b16 %v4919, %v4917
    %v5668 = vpack.c.b16 %v4922, %v4920
    %v5669 = vpack.c.b16 %v4923, %v4921
    %v5670 = vpack.c.b16 %v4926, %v4924
    %v5671 = vpack.c.b16 %v4927, %v4925
    %v5672 = vpack.c.b16 %v4930, %v4928
    %v5673 = vpack.c.b16 %v4931, %v4929
    %v5674 = vpack.c.b16 %v4934, %v4932
    %v5675 = vpack.c.b16 %v4935, %v4933
    %v5676 = vpack.c.b16 %v4938, %v4936
    %v5677 = vpack.c.b16 %v4939, %v4937
    %v5678 = vpack.c.b16 %v4942, %v4940
    %v5679 = vpack.c.b16 %v4943, %v4941
    %v5680 = vpack.c.b16 %v4946, %v4944
    %v5681 = vpack.c.b16 %v4947, %v4945
    %v5682 = vpack.c.b16 %v4950, %v4948
    %v5683 = vpack.c.b16 %v4951, %v4949
    %v5684 = vpack.c.b16 %v4954, %v4952
    %v5685 = vpack.c.b16 %v4955, %v4953
    %v5686 = vpack.c.b16 %v4958, %v4956
    %v5687 = vpack.c.b16 %v4959, %v4957
    %v5688 = vpack.c.b16 %v4962, %v4960
    %v5689 = vpack.c.b16 %v4963, %v4961
    %v5690 = vpack.c.b16 %v4966, %v4964
    %v5691 = vpack.c.b16 %v4967, %v4965
    %v5692 = vpack.c.b16 %v4970, %v4968
    %v5693 = vpack.c.b16 %v4971, %v4969
    %v5694 = vpack.c.b16 %v4974, %v4972
    %v5695 = vpack.c.b16 %v4975, %v4973
    %v5696 = vpack.c.b16 %v4978, %v4976
    %v5697 = vpack.c.b16 %v4979, %v4977
    %v5698 = vpack.c.b16 %v4982, %v4980
    %v5699 = vpack.c.b16 %v4983, %v4981
    %v5700 = vpack.c.b16 %v4986, %v4984
    %v5701 = vpack.c.b16 %v4987, %v4985
    %v5702 = vpack.c.b16 %v4990, %v4988
    %v5703 = vpack.c.b16 %v4991, %v4989
    %v5704 = vpack.c.b16 %v4994, %v4992
    %v5705 = vpack.c.b16 %v4995, %v4993
    %v5706 = vpack.c.b16 %v4998, %v4996
    %v5707 = vpack.c.b16 %v4999, %v4997
    %v5708 = vpack.c.b16 %v5002, %v5000
    %v5709 = vpack.c.b16 %v5003, %v5001
    %v5710 = vpack.c.b16 %v5006, %v5004
    %v5711 = vpack.c.b16 %v5007, %v5005
    %v5712 = vpack.c.b16 %v5010, %v5008
    %v5713 = vpack.c.b16 %v5011, %v5009
    %v5714 = vpack.c.b16 %v5014, %v5012
    %v5715 = vpack.c.b16 %v5015, %v5013
    %v5716 = vpack.c.b16 %v5018, %v5016
    %v5717 = vpack.c.b16 %v5019, %v5017
    %v5718 = vpack.c.b16 %v5022, %v5020
    %v5719 = vpack.c.b16 %v5023, %v5021
    %v5720 = vpack.c.b16 %v5026, %v5024
    %v5721 = vpack.c.b16 %v5027, %v5025
    %v5722 = vpack.c.b16 %v5030, %v5028
    %v5723 = vpack.c.b16 %v5031, %v5029
    %v5724 = vpack.c.b16 %v5034, %v5032
    %v5725 = vpack.c.b16 %v5035, %v5033
    %v5726 = vpack.c.b16 %v5038, %v5036
    %v5727 = vpack.c.b16 %v5039, %v5037
    %v5728 = vpack.c.b16 %v5042, %v5040
    %v5729 = vpack.c.b16 %v5043, %v5041
    %v5730 = vpack.c.b16 %v5046, %v5044
    %v5731 = vpack.c.b16 %v5047, %v5045
    %v5732 = vpack.c.b16 %v5050, %v5048
    %v5733 = vpack.c.b16 %v5051, %v5049
    %v5734 = vpack.c.b16 %v5054, %v5052
    %v5735 = vpack.c.b16 %v5055, %v5053
    %v5736 = vpack.c.b16 %v5058, %v5056
    %v5737 = vpack.c.b16 %v5059, %v5057
    %v5738 = vpack.c.b16 %v5062, %v5060
    %v5739 = vpack.c.b16 %v5063, %v5061
    %v5740 = vpack.c.b16 %v5066, %v5064
    %v5741 = vpack.c.b16 %v5067, %v5065
    %v5742 = vpack.c.b16 %v5070, %v5068
    %v5743 = vpack.c.b16 %v5071, %v5069
    %v5744 = vpack.c.b16 %v5074, %v5072
    %v5745 = vpack.c.b16 %v5075, %v5073
    %v5746 = vpack.c.b16 %v5078, %v5076
    %v5747 = vpack.c.b16 %v5079, %v5077
    %v5748 = vpack.c.b16 %v5082, %v5080
    %v5749 = vpack.c.b16 %v5083, %v5081
    %v5750 = vpack.c.b16 %v5086, %v5084
    %v5751 = vpack.c.b16 %v5087, %v5085
    %v5752 = vpack.c.b16 %v5090, %v5088
    %v5753 = vpack.c.b16 %v5091, %v5089
    %v5754 = vpack.c.b16 %v5094, %v5092
    %v5755 = vpack.c.b16 %v5095, %v5093
    %v5756 = vpack.c.b16 %v5098, %v5096
    %v5757 = vpack.c.b16 %v5099, %v5097
    %v5758 = vpack.c.b16 %v5102, %v5100
    %v5759 = vpack.c.b16 %v5103, %v5101
    %v5760 = vpack.c.b16 %v5106, %v5104
    %v5761 = vpack.c.b16 %v5107, %v5105
    %v5762 = vpack.c.b16 %v5110, %v5108
    %v5763 = vpack.c.b16 %v5111, %v5109
    %v5764 = vpack.c.b16 %v5114, %v5112
    %v5765 = vpack.c.b16 %v5115, %v5113
    %v5766 = vpack.c.b16 %v5118, %v5116
    %v5767 = vpack.c.b16 %v5119, %v5117
    %v5768 = vpack.c.b16 %v5122, %v5120
    %v5769 = vpack.c.b16 %v5123, %v5121
    %v5770 = vpack.c.b16 %v5126, %v5124
    %v5771 = vpack.c.b16 %v5127, %v5125
    %v5772 = vpack.c.b16 %v5130, %v5128
    %v5773 = vpack.c.b16 %v5131, %v5129
    %v5774 = vpack.c.b16 %v5134, %v5132
    %v5775 = vpack.c.b16 %v5135, %v5133
    %v5776 = vpack.c.b16 %v5138, %v5136
    %v5777 = vpack.c.b16 %v5139, %v5137
    %v5778 = vpack.c.b16 %v5142, %v5140
    %v5779 = vpack.c.b16 %v5143, %v5141
    %v5780 = vpack.c.b16 %v5146, %v5144
    %v5781 = vpack.c.b16 %v5147, %v5145
    %v5782 = vpack.c.b16 %v5150, %v5148
    %v5783 = vpack.c.b16 %v5151, %v5149
    %v5784 = vpack.c.b16 %v5154, %v5152
    %v5785 = vpack.c.b16 %v5155, %v5153
    %v5786 = vpack.c.b16 %v5158, %v5156
    %v5787 = vpack.c.b16 %v5159, %v5157
    %v5788 = vpack.c.b16 %v5162, %v5160
    %v5789 = vpack.c.b16 %v5163, %v5161
    %v5790 = vpack.c.b16 %v5166, %v5164
    %v5791 = vpack.c.b16 %v5167, %v5165
    %v5792 = vpack.c.b16 %v5170, %v5168
    %v5793 = vpack.c.b16 %v5171, %v5169
    %v5794 = vpack.c.b16 %v5174, %v5172
    %v5795 = vpack.c.b16 %v5175, %v5173
    %v5796 = vpack.c.b16 %v5178, %v5176
    %v5797 = vpack.c.b16 %v5179, %v5177
    %v5798 = vpack.c.b16 %v5182, %v5180
    %v5799 = vpack.c.b16 %v5183, %v5181
    %v5800 = vpack.c.b16 %v5186, %v5184
    %v5801 = vpack.c.b16 %v5187, %v5185
    %v5802 = vpack.c.b16 %v5190, %v5188
    %v5803 = vpack.c.b16 %v5191, %v5189
    %v5804 = vpack.c.b16 %v5194, %v5192
    %v5805 = vpack.c.b16 %v5195, %v5193
    %v5806 = vpack.c.b16 %v5198, %v5196
    %v5807 = vpack.c.b16 %v5199, %v5197
    %v5808 = vpack.c.b16 %v5202, %v5200
    %v5809 = vpack.c.b16 %v5203, %v5201
    %v5810 = vpack.c.b16 %v5206, %v5204
    %v5811 = vpack.c.b16 %v5207, %v5205
    %v5812 = vpack.c.b16 %v5210, %v5208
    %v5813 = vpack.c.b16 %v5211, %v5209
    %v5814 = vpack.c.b16 %v5214, %v5212
    %v5815 = vpack.c.b16 %v5215, %v5213
    %v5816 = vpack.c.b16 %v5218, %v5216
    %v5817 = vpack.c.b16 %v5219, %v5217
    %v5818 = vpack.c.b16 %v5222, %v5220
    %v5819 = vpack.c.b16 %v5223, %v5221
    %v5820 = vpack.c.b16 %v5226, %v5224
    %v5821 = vpack.c.b16 %v5227, %v5225
    %v5822 = vpack.c.b16 %v5230, %v5228
    %v5823 = vpack.c.b16 %v5231, %v5229
    %v5824 = vpack.c.b16 %v5234, %v5232
    %v5825 = vpack.c.b16 %v5235, %v5233
    %v5826 = vpack.c.b16 %v5238, %v5236
    %v5827 = vpack.c.b16 %v5239, %v5237
    %v5828 = vpack.c.b16 %v5242, %v5240
    %v5829 = vpack.c.b16 %v5243, %v5241
    %v5830 = vpack.c.b16 %v5246, %v5244
    %v5831 = vpack.c.b16 %v5247, %v5245
    %v5832 = vpack.c.b16 %v5250, %v5248
    %v5833 = vpack.c.b16 %v5251, %v5249
    %v5834 = vpack.c.b16 %v5254, %v5252
    %v5835 = vpack.c.b16 %v5255, %v5253
    %v5836 = vpack.c.b16 %v5258, %v5256
    %v5837 = vpack.c.b16 %v5259, %v5257
    %v5838 = vpack.c.b16 %v5262, %v5260
    %v5839 = vpack.c.b16 %v5263, %v5261
    %v5840 = vpack.c.b16 %v5266, %v5264
    %v5841 = vpack.c.b16 %v5267, %v5265
    %v5842 = vpack.c.b16 %v5270, %v5268
    %v5843 = vpack.c.b16 %v5271, %v5269
    %v5844 = vpack.c.b16 %v5274, %v5272
    %v5845 = vpack.c.b16 %v5275, %v5273
    %v5846 = vpack.c.b16 %v5278, %v5276
    %v5847 = vpack.c.b16 %v5279, %v5277
    %v5848 = vpack.c.b16 %v5282, %v5280
    %v5849 = vpack.c.b16 %v5283, %v5281
    %v5850 = vpack.c.b16 %v5286, %v5284
    %v5851 = vpack.c.b16 %v5287, %v5285
    %v5852 = vpack.c.b16 %v5290, %v5288
    %v5853 = vpack.c.b16 %v5291, %v5289
    %v5854 = vpack.c.b16 %v5294, %v5292
    %v5855 = vpack.c.b16 %v5295, %v5293
    %v5856 = vpack.c.b16 %v5298, %v5296
    %v5857 = vpack.c.b16 %v5299, %v5297
    %v5858 = vpack.c.b16 %v5302, %v5300
    %v5859 = vpack.c.b16 %v5303, %v5301
    %v5860 = vpack.c.b16 %v5306, %v5304
    %v5861 = vpack.c.b16 %v5307, %v5305
    %v5862 = vpack.c.b16 %v5310, %v5308
    %v5863 = vpack.c.b16 %v5311, %v5309
    %v5864 = vpack.c.b16 %v5314, %v5312
    %v5865 = vpack.c.b16 %v5315, %v5313
    %v5866 = vpack.c.b16 %v5318, %v5316
    %v5867 = vpack.c.b16 %v5319, %v5317
    %v5868 = vpack.c.b16 %v5322, %v5320
    %v5869 = vpack.c.b16 %v5323, %v5321
    %v5870 = vpack.c.b16 %v5326, %v5324
    %v5871 = vpack.c.b16 %v5327, %v5325
    %v5872 = vpack.c.b16 %v5330, %v5328
    %v5873 = vpack.c.b16 %v5331, %v5329
    %v5874 = vpack.c.b16 %v5334, %v5332
    %v5875 = vpack.c.b16 %v5335, %v5333
    %v5876 = vpack.c.b16 %v5338, %v5336
    %v5877 = vpack.c.b16 %v5339, %v5337
    %v5878 = vpack.c.b16 %v5342, %v5340
    %v5879 = vpack.c.b16 %v5343, %v5341
    %v5880 = vpack.c.b16 %v5346, %v5344
    %v5881 = vpack.c.b16 %v5347, %v5345
    %v5882 = vpack.c.b16 %v5350, %v5348
    %v5883 = vpack.c.b16 %v5351, %v5349
    %v5884 = vpack.c.b16 %v5354, %v5352
    %v5885 = vpack.c.b16 %v5355, %v5353
    %v5886 = vpack.c.b16 %v5358, %v5356
    %v5887 = vpack.c.b16 %v5359, %v5357
    %v5888 = vpack.c.b16 %v5362, %v5360
    %v5889 = vpack.c.b16 %v5363, %v5361
    %v5890 = vpack.c.b16 %v5366, %v5364
    %v5891 = vpack.c.b16 %v5367, %v5365
    %v5892 = vpack.c.b16 %v5370, %v5368
    %v5893 = vpack.c.b16 %v5371, %v5369
    %v5894 = vpack.c.b16 %v5374, %v5372
    %v5895 = vpack.c.b16 %v5375, %v5373
    %v5896 = vpack.c.b16 %v5378, %v5376
    %v5897 = vpack.c.b16 %v5379, %v5377
    %v5898 = vpack.c.b16 %v5382, %v5380
    %v5899 = vpack.c.b16 %v5383, %v5381
    %v5900 = vpack.c.b16 %v5386, %v5384
    %v5901 = vpack.c.b16 %v5387, %v5385
    %v5902 = vpack.c.b16 %v5390, %v5388
    %v5903 = vpack.c.b16 %v5391, %v5389
    %v5904 = vpack.c.b16 %v5394, %v5392
    %v5905 = vpack.c.b16 %v5395, %v5393
    %v5906 = vpack.c.b16 %v5398, %v5396
    %v5907 = vpack.c.b16 %v5399, %v5397
    %v5908 = vpack.c.b16 %v5402, %v5400
    %v5909 = vpack.c.b16 %v5403, %v5401
    %v5910 = vpack.c.b16 %v5406, %v5404
    %v5911 = vpack.c.b16 %v5407, %v5405
    %v5912 = vpack.c.b16 %v5410, %v5408
    %v5913 = vpack.c.b16 %v5411, %v5409
    %v5914 = vpack.c.b16 %v5414, %v5412
    %v5915 = vpack.c.b16 %v5415, %v5413
    %v5916 = vpack.c.b16 %v5418, %v5416
    %v5917 = vpack.c.b16 %v5419, %v5417
    %v5918 = vpack.c.b16 %v5422, %v5420
    %v5919 = vpack.c.b16 %v5423, %v5421
    %v5920 = vpack.c.b16 %v5426, %v5424
    %v5921 = vpack.c.b16 %v5427, %v5425
    %v5922 = vpack.c.b16 %v5430, %v5428
    %v5923 = vpack.c.b16 %v5431, %v5429
    %v5924 = vpack.c.b16 %v5434, %v5432
    %v5925 = vpack.c.b16 %v5435, %v5433
    %v5926 = vpack.c.b16 %v5438, %v5436
    %v5927 = vpack.c.b16 %v5439, %v5437
    %v5928 = vpack.c.b16 %v5442, %v5440
    %v5929 = vpack.c.b16 %v5443, %v5441
    %v5930 = vpack.c.b16 %v5446, %v5444
    %v5931 = vpack.c.b16 %v5447, %v5445
    %v5932 = vpack.c.b16 %v5450, %v5448
    %v5933 = vpack.c.b16 %v5451, %v5449
    %v5934 = vpack.c.b16 %v5454, %v5452
    %v5935 = vpack.c.b16 %v5455, %v5453
    %v5936 = vpack.c.b16 %v5458, %v5456
    %v5937 = vpack.c.b16 %v5459, %v5457
    %v5938 = vpack.c.b16 %v5462, %v5460
    %v5939 = vpack.c.b16 %v5463, %v5461
    %v5940 = vpack.c.b16 %v5466, %v5464
    %v5941 = vpack.c.b16 %v5467, %v5465
    %v5942 = vpack.c.b16 %v5470, %v5468
    %v5943 = vpack.c.b16 %v5471, %v5469
    %v5944 = vpack.c.b16 %v5474, %v5472
    %v5945 = vpack.c.b16 %v5475, %v5473
    %v5946 = vpack.c.b16 %v5478, %v5476
    %v5947 = vpack.c.b16 %v5479, %v5477
    %v5948 = vpack.c.b16 %v5482, %v5480
    %v5949 = vpack.c.b16 %v5483, %v5481
    %v5950 = vpack.c.b16 %v5486, %v5484
    %v5951 = vpack.c.b16 %v5487, %v5485
    %v5952 = vpack.c.b16 %v5490, %v5488
    %v5953 = vpack.c.b16 %v5491, %v5489
    %v5954 = vpack.c.b16 %v5494, %v5492
    %v5955 = vpack.c.b16 %v5495, %v5493
    %v5956 = vpack.c.b16 %v5498, %v5496
    %v5957 = vpack.c.b16 %v5499, %v5497
    %v5958 = vpack.c.b16 %v5502, %v5500
    %v5959 = vpack.c.b16 %v5503, %v5501
    %v5960 = vpack.c.b16 %v5506, %v5504
    %v5961 = vpack.c.b16 %v5507, %v5505
    %v5962 = vpack.c.b16 %v5510, %v5508
    %v5963 = vpack.c.b16 %v5511, %v5509
    %v5964 = vpack.c.b16 %v5514, %v5512
    %v5965 = vpack.c.b16 %v5515, %v5513
    %v5966 = vpack.c.b16 %v5518, %v5516
    %v5967 = vpack.c.b16 %v5519, %v5517
    %v5968 = vpack.c.b16 %v5522, %v5520
    %v5969 = vpack.c.b16 %v5523, %v5521
    %v5970 = vpack.c.b16 %v5526, %v5524
    %v5971 = vpack.c.b16 %v5527, %v5525
    %v5972 = vpack.c.b16 %v5530, %v5528
    %v5973 = vpack.c.b16 %v5531, %v5529
    %v5974 = vpack.c.b16 %v5534, %v5532
    %v5975 = vpack.c.b16 %v5535, %v5533
    %v5976 = vpack.c.b16 %v5538, %v5536
    %v5977 = vpack.c.b16 %v5539, %v5537
    %v5978 = vpack.c.b16 %v5542, %v5540
    %v5979 = vpack.c.b16 %v5543, %v5541
    %v5980 = vpack.c.b16 %v5546, %v5544
    %v5981 = vpack.c.b16 %v5547, %v5545
    %v5982 = vpack.c.b16 %v5550, %v5548
    %v5983 = vpack.c.b16 %v5551, %v5549
    %v5984 = vpack.c.b16 %v5554, %v5552
    %v5985 = vpack.c.b16 %v5555, %v5553
    %v5986 = vpack.c.b16 %v5558, %v5556
    %v5987 = vpack.c.b16 %v5559, %v5557
    %v5988 = vpack.c.b16 %v5562, %v5560
    %v5989 = vpack.c.b16 %v5563, %v5561
    %v5990 = vpack.c.b16 %v5566, %v5564
    %v5991 = vpack.c.b16 %v5567, %v5565
    %v5992 = vpack.c.b16 %v5570, %v5568
    %v5993 = vpack.c.b16 %v5571, %v5569
    %v5994 = vpack.c.b16 %v5574, %v5572
    %v5995 = vpack.c.b16 %v5575, %v5573
    %v5996 = vpack.c.b16 %v5578, %v5576
    %v5997 = vpack.c.b16 %v5579, %v5577
    %v5998 = vpack.c.b16 %v5582, %v5580
    %v5999 = vpack.c.b16 %v5583, %v5581
    %v6000 = vpack.c.b16 %v5586, %v5584
    %v6001 = vpack.c.b16 %v5587, %v5585
    %v6002 = vpack.c.b16 %v5590, %v5588
    %v6003 = vpack.c.b16 %v5591, %v5589
    %v6004 = vpack.c.b16 %v5594, %v5592
    %v6005 = vpack.c.b16 %v5595, %v5593
    %v6006 = vpack.c.b16 %v5598, %v5596
    %v6007 = vpack.c.b16 %v5599, %v5597
    %v6008 = vpack.c.b16 %v5602, %v5600
    %v6009 = vpack.c.b16 %v5603, %v5601
    %v6010 = vpack.c.b16 %v5606, %v5604
    %v6011 = vpack.c.b16 %v5607, %v5605
    %v6012 = vpack.c.b16 %v5610, %v5608
    %v6013 = vpack.c.b16 %v5611, %v5609
    %v6014 = vpack.c.b16 %v5614, %v5612
    %v6015 = vpack.c.b16 %v5615, %v5613
    %6416 = vmatprep.subr.bf16.mxu0 %v5631
    %6417 = vmatpush1.bf16.msra.mxu0 %v5630
    %6418 = vmatprep.subr.bf16.mxu0 %v5629
    %6419 = vmatpush1.bf16.msra.mxu0 %v5628
    %6420 = vmatprep.subr.bf16.mxu0 %v5627
    %6421 = vmatpush1.bf16.msra.mxu0 %v5626
    %6422 = vmatprep.subr.bf16.mxu0 %v5625
    %6423 = vmatpush1.bf16.msra.mxu0 %v5624
    %6424 = vmatprep.subr.bf16.mxu0 %v5623
    %6425 = vmatpush1.bf16.msra.mxu0 %v5622
    %6426 = vmatprep.subr.bf16.mxu0 %v5621
    %6427 = vmatpush1.bf16.msra.mxu0 %v5620
    %6428 = vmatprep.subr.bf16.mxu0 %v5619
    %6429 = vmatpush1.bf16.msra.mxu0 %v5618
    %6430 = vmatprep.subr.bf16.mxu0 %v5617
    %6431 = vmatpush1.bf16.msra.mxu0 %v5616
    %6432 = vmatprep.subr.bf16.mxu0 %v5647
    %6433 = vmatpush2.bf16.msra.mxu0 %v5646
    %6434 = vmatprep.subr.bf16.mxu0 %v5645
    %6435 = vmatpush2.bf16.msra.mxu0 %v5644
    %6436 = vmatprep.subr.bf16.mxu0 %v5643
    %6437 = vmatpush2.bf16.msra.mxu0 %v5642
    %6438 = vmatprep.subr.bf16.mxu0 %v5641
    %6439 = vmatpush2.bf16.msra.mxu0 %v5640
    %6440 = vmatprep.subr.bf16.mxu0 %v5639
    %6441 = vmatpush2.bf16.msra.mxu0 %v5638
    %6442 = vmatprep.subr.bf16.mxu0 %v5637
    %6443 = vmatpush2.bf16.msra.mxu0 %v5636
    %6444 = vmatprep.subr.bf16.mxu0 %v5635
    %6445 = vmatpush2.bf16.msra.mxu0 %v5634
    %6446 = vmatprep.subr.bf16.mxu0 %v5633
    %6447 = vmatpush2.bf16.msra.mxu0 %v5632
    %6448 = vmatprep.mubr.bf16.mxu0 %v4267
    %6449 = vmatmul.mubr.bf16.gmra.mxu0 %v4253
    %v6450 = vpop.f32.mrf.mxu0
    %v6451 = vadd.f32 %v4219, %v6450
    %v6452 = vpop.f32.mrf.mxu0
    %v6453 = vadd.f32 %v4223, %v6452
    %v6454 = vpop.f32.mrf.mxu0
    %v6455 = vpop.f32.mrf.mxu0
    %6456 = vdwg.mxu0
    %6457 = vmatprep.subr.bf16.mxu0 %v5663
    %6458 = vmatpush1.bf16.msra.mxu0 %v5662
    %6459 = vmatprep.subr.bf16.mxu0 %v5661
    %6460 = vmatpush1.bf16.msra.mxu0 %v5660
    %6461 = vmatprep.subr.bf16.mxu0 %v5659
    %6462 = vmatpush1.bf16.msra.mxu0 %v5658
    %6463 = vmatprep.subr.bf16.mxu0 %v5657
    %6464 = vmatpush1.bf16.msra.mxu0 %v5656
    %6465 = vmatprep.subr.bf16.mxu0 %v5655
    %6466 = vmatpush1.bf16.msra.mxu0 %v5654
    %6467 = vmatprep.subr.bf16.mxu0 %v5653
    %6468 = vmatpush1.bf16.msra.mxu0 %v5652
    %6469 = vmatprep.subr.bf16.mxu0 %v5651
    %6470 = vmatpush1.bf16.msra.mxu0 %v5650
    %6471 = vmatprep.subr.bf16.mxu0 %v5649
    %6472 = vmatpush1.bf16.msra.mxu0 %v5648
    %6473 = vmatprep.subr.bf16.mxu0 %v5679
    %6474 = vmatpush2.bf16.msra.mxu0 %v5678
    %6475 = vmatprep.subr.bf16.mxu0 %v5677
    %6476 = vmatpush2.bf16.msra.mxu0 %v5676
    %6477 = vmatprep.subr.bf16.mxu0 %v5675
    %6478 = vmatpush2.bf16.msra.mxu0 %v5674
    %6479 = vmatprep.subr.bf16.mxu0 %v5673
    %6480 = vmatpush2.bf16.msra.mxu0 %v5672
    %6481 = vmatprep.subr.bf16.mxu0 %v5671
    %6482 = vmatpush2.bf16.msra.mxu0 %v5670
    %6483 = vmatprep.subr.bf16.mxu0 %v5669
    %6484 = vmatpush2.bf16.msra.mxu0 %v5668
    %6485 = vmatprep.subr.bf16.mxu0 %v5667
    %6486 = vmatpush2.bf16.msra.mxu0 %v5666
    %6487 = vmatprep.subr.bf16.mxu0 %v5665
    %6488 = vmatpush2.bf16.msra.mxu0 %v5664
    %6489 = vmatprep.mubr.bf16.mxu0 %v4277
    %6490 = vmatmul.mubr.bf16.gmra.mxu0 %v4275
    %v6491 = vpop.f32.mrf.mxu0
    %v6492 = vadd.f32 %v6451, %v6491
    %v6493 = vpop.f32.mrf.mxu0
    %v6494 = vadd.f32 %v6453, %v6493
    %v6495 = vpop.f32.mrf.mxu0
    %v6496 = vpop.f32.mrf.mxu0
    %6497 = vdwg.mxu0
    %6498 = vmatprep.subr.bf16.mxu0 %v5695
    %6499 = vmatpush1.bf16.msra.mxu0 %v5694
    %6500 = vmatprep.subr.bf16.mxu0 %v5693
    %6501 = vmatpush1.bf16.msra.mxu0 %v5692
    %6502 = vmatprep.subr.bf16.mxu0 %v5691
    %6503 = vmatpush1.bf16.msra.mxu0 %v5690
    %6504 = vmatprep.subr.bf16.mxu0 %v5689
    %6505 = vmatpush1.bf16.msra.mxu0 %v5688
    %6506 = vmatprep.subr.bf16.mxu0 %v5687
    %6507 = vmatpush1.bf16.msra.mxu0 %v5686
    %6508 = vmatprep.subr.bf16.mxu0 %v5685
    %6509 = vmatpush1.bf16.msra.mxu0 %v5684
    %6510 = vmatprep.subr.bf16.mxu0 %v5683
    %6511 = vmatpush1.bf16.msra.mxu0 %v5682
    %6512 = vmatprep.subr.bf16.mxu0 %v5681
    %6513 = vmatpush1.bf16.msra.mxu0 %v5680
    %6514 = vmatprep.subr.bf16.mxu0 %v5711
    %6515 = vmatpush2.bf16.msra.mxu0 %v5710
    %6516 = vmatprep.subr.bf16.mxu0 %v5709
    %6517 = vmatpush2.bf16.msra.mxu0 %v5708
    %6518 = vmatprep.subr.bf16.mxu0 %v5707
    %6519 = vmatpush2.bf16.msra.mxu0 %v5706
    %6520 = vmatprep.subr.bf16.mxu0 %v5705
    %6521 = vmatpush2.bf16.msra.mxu0 %v5704
    %6522 = vmatprep.subr.bf16.mxu0 %v5703
    %6523 = vmatpush2.bf16.msra.mxu0 %v5702
    %6524 = vmatprep.subr.bf16.mxu0 %v5701
    %6525 = vmatpush2.bf16.msra.mxu0 %v5700
    %6526 = vmatprep.subr.bf16.mxu0 %v5699
    %6527 = vmatpush2.bf16.msra.mxu0 %v5698
    %6528 = vmatprep.subr.bf16.mxu0 %v5697
    %6529 = vmatpush2.bf16.msra.mxu0 %v5696
    %6530 = vmatprep.mubr.bf16.mxu0 %v4274
    %6531 = vmatmul.mubr.bf16.gmra.mxu0 %v4260
    %v6532 = vpop.f32.mrf.mxu0
    %v6533 = vadd.f32 %v6492, %v6532
    %v6534 = vpop.f32.mrf.mxu0
    %v6535 = vadd.f32 %v6494, %v6534
    %v6536 = vpop.f32.mrf.mxu0
    %v6537 = vpop.f32.mrf.mxu0
    %6538 = vdwg.mxu0
    %6539 = vmatprep.subr.bf16.mxu0 %v5727
    %6540 = vmatpush1.bf16.msra.mxu0 %v5726
    %6541 = vmatprep.subr.bf16.mxu0 %v5725
    %6542 = vmatpush1.bf16.msra.mxu0 %v5724
    %6543 = vmatprep.subr.bf16.mxu0 %v5723
    %6544 = vmatpush1.bf16.msra.mxu0 %v5722
    %6545 = vmatprep.subr.bf16.mxu0 %v5721
    %6546 = vmatpush1.bf16.msra.mxu0 %v5720
    %6547 = vmatprep.subr.bf16.mxu0 %v5719
    %6548 = vmatpush1.bf16.msra.mxu0 %v5718
    %6549 = vmatprep.subr.bf16.mxu0 %v5717
    %6550 = vmatpush1.bf16.msra.mxu0 %v5716
    %6551 = vmatprep.subr.bf16.mxu0 %v5715
    %6552 = vmatpush1.bf16.msra.mxu0 %v5714
    %6553 = vmatprep.subr.bf16.mxu0 %v5713
    %6554 = vmatpush1.bf16.msra.mxu0 %v5712
    %6555 = vmatprep.subr.bf16.mxu0 %v5743
    %6556 = vmatpush2.bf16.msra.mxu0 %v5742
    %6557 = vmatprep.subr.bf16.mxu0 %v5741
    %6558 = vmatpush2.bf16.msra.mxu0 %v5740
    %6559 = vmatprep.subr.bf16.mxu0 %v5739
    %6560 = vmatpush2.bf16.msra.mxu0 %v5738
    %6561 = vmatprep.subr.bf16.mxu0 %v5737
    %6562 = vmatpush2.bf16.msra.mxu0 %v5736
    %6563 = vmatprep.subr.bf16.mxu0 %v5735
    %6564 = vmatpush2.bf16.msra.mxu0 %v5734
    %6565 = vmatprep.subr.bf16.mxu0 %v5733
    %6566 = vmatpush2.bf16.msra.mxu0 %v5732
    %6567 = vmatprep.subr.bf16.mxu0 %v5731
    %6568 = vmatpush2.bf16.msra.mxu0 %v5730
    %6569 = vmatprep.subr.bf16.mxu0 %v5729
    %6570 = vmatpush2.bf16.msra.mxu0 %v5728
    %6571 = vmatprep.mubr.bf16.mxu0 %v4278
    %6572 = vmatmul.mubr.bf16.gmra.mxu0 %v4276
    %v6573 = vpop.f32.mrf.mxu0
    %v6574 = vadd.f32 %v6533, %v6573
    %v6575 = vpop.f32.mrf.mxu0
    %v6576 = vadd.f32 %v6535, %v6575
    %v6577 = vpop.f32.mrf.mxu0
    %v6578 = vpop.f32.mrf.mxu0
    %6579 = vdwg.mxu0
    %6580 = vmatprep.subr.bf16.mxu0 %v5759
    %6581 = vmatpush1.bf16.msra.mxu0 %v5758
    %6582 = vmatprep.subr.bf16.mxu0 %v5757
    %6583 = vmatpush1.bf16.msra.mxu0 %v5756
    %6584 = vmatprep.subr.bf16.mxu0 %v5755
    %6585 = vmatpush1.bf16.msra.mxu0 %v5754
    %6586 = vmatprep.subr.bf16.mxu0 %v5753
    %6587 = vmatpush1.bf16.msra.mxu0 %v5752
    %6588 = vmatprep.subr.bf16.mxu0 %v5751
    %6589 = vmatpush1.bf16.msra.mxu0 %v5750
    %6590 = vmatprep.subr.bf16.mxu0 %v5749
    %6591 = vmatpush1.bf16.msra.mxu0 %v5748
    %6592 = vmatprep.subr.bf16.mxu0 %v5747
    %6593 = vmatpush1.bf16.msra.mxu0 %v5746
    %6594 = vmatprep.subr.bf16.mxu0 %v5745
    %6595 = vmatpush1.bf16.msra.mxu0 %v5744
    %6596 = vmatprep.subr.bf16.mxu0 %v5775
    %6597 = vmatpush2.bf16.msra.mxu0 %v5774
    %6598 = vmatprep.subr.bf16.mxu0 %v5773
    %6599 = vmatpush2.bf16.msra.mxu0 %v5772
    %6600 = vmatprep.subr.bf16.mxu0 %v5771
    %6601 = vmatpush2.bf16.msra.mxu0 %v5770
    %6602 = vmatprep.subr.bf16.mxu0 %v5769
    %6603 = vmatpush2.bf16.msra.mxu0 %v5768
    %6604 = vmatprep.subr.bf16.mxu0 %v5767
    %6605 = vmatpush2.bf16.msra.mxu0 %v5766
    %6606 = vmatprep.subr.bf16.mxu0 %v5765
    %6607 = vmatpush2.bf16.msra.mxu0 %v5764
    %6608 = vmatprep.subr.bf16.mxu0 %v5763
    %6609 = vmatpush2.bf16.msra.mxu0 %v5762
    %6610 = vmatprep.subr.bf16.mxu0 %v5761
    %6611 = vmatpush2.bf16.msra.mxu0 %v5760
    %6612 = vmatprep.mubr.bf16.mxu0 %v4316
    %6613 = vmatmul.mubr.bf16.gmra.mxu0 %v4302
    %v6614 = vpop.f32.mrf.mxu0
    %v6615 = vadd.f32 %v6574, %v6614
    %v6616 = vpop.f32.mrf.mxu0
    %v6617 = vadd.f32 %v6576, %v6616
    %v6618 = vpop.f32.mrf.mxu0
    %v6619 = vpop.f32.mrf.mxu0
    %6620 = vdwg.mxu0
    %6621 = vmatprep.subr.bf16.mxu0 %v5791
    %6622 = vmatpush1.bf16.msra.mxu0 %v5790
    %6623 = vmatprep.subr.bf16.mxu0 %v5789
    %6624 = vmatpush1.bf16.msra.mxu0 %v5788
    %6625 = vmatprep.subr.bf16.mxu0 %v5787
    %6626 = vmatpush1.bf16.msra.mxu0 %v5786
    %6627 = vmatprep.subr.bf16.mxu0 %v5785
    %6628 = vmatpush1.bf16.msra.mxu0 %v5784
    %6629 = vmatprep.subr.bf16.mxu0 %v5783
    %6630 = vmatpush1.bf16.msra.mxu0 %v5782
    %6631 = vmatprep.subr.bf16.mxu0 %v5781
    %6632 = vmatpush1.bf16.msra.mxu0 %v5780
    %6633 = vmatprep.subr.bf16.mxu0 %v5779
    %6634 = vmatpush1.bf16.msra.mxu0 %v5778
    %6635 = vmatprep.subr.bf16.mxu0 %v5777
    %6636 = vmatpush1.bf16.msra.mxu0 %v5776
    %6637 = vmatprep.subr.bf16.mxu0 %v5807
    %6638 = vmatpush2.bf16.msra.mxu0 %v5806
    %6639 = vmatprep.subr.bf16.mxu0 %v5805
    %6640 = vmatpush2.bf16.msra.mxu0 %v5804
    %6641 = vmatprep.subr.bf16.mxu0 %v5803
    %6642 = vmatpush2.bf16.msra.mxu0 %v5802
    %6643 = vmatprep.subr.bf16.mxu0 %v5801
    %6644 = vmatpush2.bf16.msra.mxu0 %v5800
    %6645 = vmatprep.subr.bf16.mxu0 %v5799
    %6646 = vmatpush2.bf16.msra.mxu0 %v5798
    %6647 = vmatprep.subr.bf16.mxu0 %v5797
    %6648 = vmatpush2.bf16.msra.mxu0 %v5796
    %6649 = vmatprep.subr.bf16.mxu0 %v5795
    %6650 = vmatpush2.bf16.msra.mxu0 %v5794
    %6651 = vmatprep.subr.bf16.mxu0 %v5793
    %6652 = vmatpush2.bf16.msra.mxu0 %v5792
    %6653 = vmatprep.mubr.bf16.mxu0 %v4326
    %6654 = vmatmul.mubr.bf16.gmra.mxu0 %v4324
    %v6655 = vpop.f32.mrf.mxu0
    %v6656 = vadd.f32 %v6615, %v6655
    %v6657 = vpop.f32.mrf.mxu0
    %v6658 = vadd.f32 %v6617, %v6657
    %v6659 = vpop.f32.mrf.mxu0
    %v6660 = vpop.f32.mrf.mxu0
    %6661 = vdwg.mxu0
    %6662 = vmatprep.subr.bf16.mxu0 %v5823
    %6663 = vmatpush1.bf16.msra.mxu0 %v5822
    %6664 = vmatprep.subr.bf16.mxu0 %v5821
    %6665 = vmatpush1.bf16.msra.mxu0 %v5820
    %6666 = vmatprep.subr.bf16.mxu0 %v5819
    %6667 = vmatpush1.bf16.msra.mxu0 %v5818
    %6668 = vmatprep.subr.bf16.mxu0 %v5817
    %6669 = vmatpush1.bf16.msra.mxu0 %v5816
    %6670 = vmatprep.subr.bf16.mxu0 %v5815
    %6671 = vmatpush1.bf16.msra.mxu0 %v5814
    %6672 = vmatprep.subr.bf16.mxu0 %v5813
    %6673 = vmatpush1.bf16.msra.mxu0 %v5812
    %6674 = vmatprep.subr.bf16.mxu0 %v5811
    %6675 = vmatpush1.bf16.msra.mxu0 %v5810
    %6676 = vmatprep.subr.bf16.mxu0 %v5809
    %6677 = vmatpush1.bf16.msra.mxu0 %v5808
    %6678 = vmatprep.subr.bf16.mxu0 %v5839
    %6679 = vmatpush2.bf16.msra.mxu0 %v5838
    %6680 = vmatprep.subr.bf16.mxu0 %v5837
    %6681 = vmatpush2.bf16.msra.mxu0 %v5836
    %6682 = vmatprep.subr.bf16.mxu0 %v5835
    %6683 = vmatpush2.bf16.msra.mxu0 %v5834
    %6684 = vmatprep.subr.bf16.mxu0 %v5833
    %6685 = vmatpush2.bf16.msra.mxu0 %v5832
    %6686 = vmatprep.subr.bf16.mxu0 %v5831
    %6687 = vmatpush2.bf16.msra.mxu0 %v5830
    %6688 = vmatprep.subr.bf16.mxu0 %v5829
    %6689 = vmatpush2.bf16.msra.mxu0 %v5828
    %6690 = vmatprep.subr.bf16.mxu0 %v5827
    %6691 = vmatpush2.bf16.msra.mxu0 %v5826
    %6692 = vmatprep.subr.bf16.mxu0 %v5825
    %6693 = vmatpush2.bf16.msra.mxu0 %v5824
    %6694 = vmatprep.mubr.bf16.mxu0 %v4323
    %6695 = vmatmul.mubr.bf16.gmra.mxu0 %v4309
    %v6696 = vpop.f32.mrf.mxu0
    %v6697 = vadd.f32 %v6656, %v6696
    %v6698 = vpop.f32.mrf.mxu0
    %v6699 = vadd.f32 %v6658, %v6698
    %v6700 = vpop.f32.mrf.mxu0
    %v6701 = vpop.f32.mrf.mxu0
    %6702 = vdwg.mxu0
    %6703 = vmatprep.subr.bf16.mxu0 %v5855
    %6704 = vmatpush1.bf16.msra.mxu0 %v5854
    %6705 = vmatprep.subr.bf16.mxu0 %v5853
    %6706 = vmatpush1.bf16.msra.mxu0 %v5852
    %6707 = vmatprep.subr.bf16.mxu0 %v5851
    %6708 = vmatpush1.bf16.msra.mxu0 %v5850
    %6709 = vmatprep.subr.bf16.mxu0 %v5849
    %6710 = vmatpush1.bf16.msra.mxu0 %v5848
    %6711 = vmatprep.subr.bf16.mxu0 %v5847
    %6712 = vmatpush1.bf16.msra.mxu0 %v5846
    %6713 = vmatprep.subr.bf16.mxu0 %v5845
    %6714 = vmatpush1.bf16.msra.mxu0 %v5844
    %6715 = vmatprep.subr.bf16.mxu0 %v5843
    %6716 = vmatpush1.bf16.msra.mxu0 %v5842
    %6717 = vmatprep.subr.bf16.mxu0 %v5841
    %6718 = vmatpush1.bf16.msra.mxu0 %v5840
    %6719 = vmatprep.subr.bf16.mxu0 %v5871
    %6720 = vmatpush2.bf16.msra.mxu0 %v5870
    %6721 = vmatprep.subr.bf16.mxu0 %v5869
    %6722 = vmatpush2.bf16.msra.mxu0 %v5868
    %6723 = vmatprep.subr.bf16.mxu0 %v5867
    %6724 = vmatpush2.bf16.msra.mxu0 %v5866
    %6725 = vmatprep.subr.bf16.mxu0 %v5865
    %6726 = vmatpush2.bf16.msra.mxu0 %v5864
    %6727 = vmatprep.subr.bf16.mxu0 %v5863
    %6728 = vmatpush2.bf16.msra.mxu0 %v5862
    %6729 = vmatprep.subr.bf16.mxu0 %v5861
    %6730 = vmatpush2.bf16.msra.mxu0 %v5860
    %6731 = vmatprep.subr.bf16.mxu0 %v5859
    %6732 = vmatpush2.bf16.msra.mxu0 %v5858
    %6733 = vmatprep.subr.bf16.mxu0 %v5857
    %6734 = vmatpush2.bf16.msra.mxu0 %v5856
    %6735 = vmatprep.mubr.bf16.mxu0 %v4327
    %6736 = vmatmul.mubr.bf16.gmra.mxu0 %v4325
    %v6737 = vpop.f32.mrf.mxu0
    %v6738 = vadd.f32 %v6697, %v6737
    %v6739 = vpop.f32.mrf.mxu0
    %v6740 = vadd.f32 %v6699, %v6739
    %v6741 = vpop.f32.mrf.mxu0
    %v6742 = vpop.f32.mrf.mxu0
    %6743 = vdwg.mxu0
    %6744 = vmatprep.subr.bf16.mxu0 %v5887
    %6745 = vmatpush1.bf16.msra.mxu0 %v5886
    %6746 = vmatprep.subr.bf16.mxu0 %v5885
    %6747 = vmatpush1.bf16.msra.mxu0 %v5884
    %6748 = vmatprep.subr.bf16.mxu0 %v5883
    %6749 = vmatpush1.bf16.msra.mxu0 %v5882
    %6750 = vmatprep.subr.bf16.mxu0 %v5881
    %6751 = vmatpush1.bf16.msra.mxu0 %v5880
    %6752 = vmatprep.subr.bf16.mxu0 %v5879
    %6753 = vmatpush1.bf16.msra.mxu0 %v5878
    %6754 = vmatprep.subr.bf16.mxu0 %v5877
    %6755 = vmatpush1.bf16.msra.mxu0 %v5876
    %6756 = vmatprep.subr.bf16.mxu0 %v5875
    %6757 = vmatpush1.bf16.msra.mxu0 %v5874
    %6758 = vmatprep.subr.bf16.mxu0 %v5873
    %6759 = vmatpush1.bf16.msra.mxu0 %v5872
    %6760 = vmatprep.subr.bf16.mxu0 %v5903
    %6761 = vmatpush2.bf16.msra.mxu0 %v5902
    %6762 = vmatprep.subr.bf16.mxu0 %v5901
    %6763 = vmatpush2.bf16.msra.mxu0 %v5900
    %6764 = vmatprep.subr.bf16.mxu0 %v5899
    %6765 = vmatpush2.bf16.msra.mxu0 %v5898
    %6766 = vmatprep.subr.bf16.mxu0 %v5897
    %6767 = vmatpush2.bf16.msra.mxu0 %v5896
    %6768 = vmatprep.subr.bf16.mxu0 %v5895
    %6769 = vmatpush2.bf16.msra.mxu0 %v5894
    %6770 = vmatprep.subr.bf16.mxu0 %v5893
    %6771 = vmatpush2.bf16.msra.mxu0 %v5892
    %6772 = vmatprep.subr.bf16.mxu0 %v5891
    %6773 = vmatpush2.bf16.msra.mxu0 %v5890
    %6774 = vmatprep.subr.bf16.mxu0 %v5889
    %6775 = vmatpush2.bf16.msra.mxu0 %v5888
    %6776 = vmatprep.mubr.bf16.mxu0 %v4365
    %6777 = vmatmul.mubr.bf16.gmra.mxu0 %v4351
    %v6778 = vpop.f32.mrf.mxu0
    %v6779 = vadd.f32 %v6738, %v6778
    %v6780 = vpop.f32.mrf.mxu0
    %v6781 = vadd.f32 %v6740, %v6780
    %v6782 = vpop.f32.mrf.mxu0
    %v6783 = vpop.f32.mrf.mxu0
    %6784 = vdwg.mxu0
    %6785 = vmatprep.subr.bf16.mxu0 %v5919
    %6786 = vmatpush1.bf16.msra.mxu0 %v5918
    %6787 = vmatprep.subr.bf16.mxu0 %v5917
    %6788 = vmatpush1.bf16.msra.mxu0 %v5916
    %6789 = vmatprep.subr.bf16.mxu0 %v5915
    %6790 = vmatpush1.bf16.msra.mxu0 %v5914
    %6791 = vmatprep.subr.bf16.mxu0 %v5913
    %6792 = vmatpush1.bf16.msra.mxu0 %v5912
    %6793 = vmatprep.subr.bf16.mxu0 %v5911
    %6794 = vmatpush1.bf16.msra.mxu0 %v5910
    %6795 = vmatprep.subr.bf16.mxu0 %v5909
    %6796 = vmatpush1.bf16.msra.mxu0 %v5908
    %6797 = vmatprep.subr.bf16.mxu0 %v5907
    %6798 = vmatpush1.bf16.msra.mxu0 %v5906
    %6799 = vmatprep.subr.bf16.mxu0 %v5905
    %6800 = vmatpush1.bf16.msra.mxu0 %v5904
    %6801 = vmatprep.subr.bf16.mxu0 %v5935
    %6802 = vmatpush2.bf16.msra.mxu0 %v5934
    %6803 = vmatprep.subr.bf16.mxu0 %v5933
    %6804 = vmatpush2.bf16.msra.mxu0 %v5932
    %6805 = vmatprep.subr.bf16.mxu0 %v5931
    %6806 = vmatpush2.bf16.msra.mxu0 %v5930
    %6807 = vmatprep.subr.bf16.mxu0 %v5929
    %6808 = vmatpush2.bf16.msra.mxu0 %v5928
    %6809 = vmatprep.subr.bf16.mxu0 %v5927
    %6810 = vmatpush2.bf16.msra.mxu0 %v5926
    %6811 = vmatprep.subr.bf16.mxu0 %v5925
    %6812 = vmatpush2.bf16.msra.mxu0 %v5924
    %6813 = vmatprep.subr.bf16.mxu0 %v5923
    %6814 = vmatpush2.bf16.msra.mxu0 %v5922
    %6815 = vmatprep.subr.bf16.mxu0 %v5921
    %6816 = vmatpush2.bf16.msra.mxu0 %v5920
    %6817 = vmatprep.mubr.bf16.mxu0 %v4375
    %6818 = vmatmul.mubr.bf16.gmra.mxu0 %v4373
    %v6819 = vpop.f32.mrf.mxu0
    %v6820 = vadd.f32 %v6779, %v6819
    %v6821 = vpop.f32.mrf.mxu0
    %v6822 = vadd.f32 %v6781, %v6821
    %v6823 = vpop.f32.mrf.mxu0
    %v6824 = vpop.f32.mrf.mxu0
    %6825 = vdwg.mxu0
    %6826 = vmatprep.subr.bf16.mxu0 %v5951
    %6827 = vmatpush1.bf16.msra.mxu0 %v5950
    %6828 = vmatprep.subr.bf16.mxu0 %v5949
    %6829 = vmatpush1.bf16.msra.mxu0 %v5948
    %6830 = vmatprep.subr.bf16.mxu0 %v5947
    %6831 = vmatpush1.bf16.msra.mxu0 %v5946
    %6832 = vmatprep.subr.bf16.mxu0 %v5945
    %6833 = vmatpush1.bf16.msra.mxu0 %v5944
    %6834 = vmatprep.subr.bf16.mxu0 %v5943
    %6835 = vmatpush1.bf16.msra.mxu0 %v5942
    %6836 = vmatprep.subr.bf16.mxu0 %v5941
    %6837 = vmatpush1.bf16.msra.mxu0 %v5940
    %6838 = vmatprep.subr.bf16.mxu0 %v5939
    %6839 = vmatpush1.bf16.msra.mxu0 %v5938
    %6840 = vmatprep.subr.bf16.mxu0 %v5937
    %6841 = vmatpush1.bf16.msra.mxu0 %v5936
    %6842 = vmatprep.subr.bf16.mxu0 %v5967
    %6843 = vmatpush2.bf16.msra.mxu0 %v5966
    %6844 = vmatprep.subr.bf16.mxu0 %v5965
    %6845 = vmatpush2.bf16.msra.mxu0 %v5964
    %6846 = vmatprep.subr.bf16.mxu0 %v5963
    %6847 = vmatpush2.bf16.msra.mxu0 %v5962
    %6848 = vmatprep.subr.bf16.mxu0 %v5961
    %6849 = vmatpush2.bf16.msra.mxu0 %v5960
    %6850 = vmatprep.subr.bf16.mxu0 %v5959
    %6851 = vmatpush2.bf16.msra.mxu0 %v5958
    %6852 = vmatprep.subr.bf16.mxu0 %v5957
    %6853 = vmatpush2.bf16.msra.mxu0 %v5956
    %6854 = vmatprep.subr.bf16.mxu0 %v5955
    %6855 = vmatpush2.bf16.msra.mxu0 %v5954
    %6856 = vmatprep.subr.bf16.mxu0 %v5953
    %6857 = vmatpush2.bf16.msra.mxu0 %v5952
    %6858 = vmatprep.mubr.bf16.mxu0 %v4372
    %6859 = vmatmul.mubr.bf16.gmra.mxu0 %v4358
    %v6860 = vpop.f32.mrf.mxu0
    %v6861 = vadd.f32 %v6820, %v6860
    %v6862 = vpop.f32.mrf.mxu0
    %v6863 = vadd.f32 %v6822, %v6862
    %v6864 = vpop.f32.mrf.mxu0
    %v6865 = vpop.f32.mrf.mxu0
    %6866 = vdwg.mxu0
    %6867 = vmatprep.subr.bf16.mxu0 %v5983
    %6868 = vmatpush1.bf16.msra.mxu0 %v5982
    %6869 = vmatprep.subr.bf16.mxu0 %v5981
    %6870 = vmatpush1.bf16.msra.mxu0 %v5980
    %6871 = vmatprep.subr.bf16.mxu0 %v5979
    %6872 = vmatpush1.bf16.msra.mxu0 %v5978
    %6873 = vmatprep.subr.bf16.mxu0 %v5977
    %6874 = vmatpush1.bf16.msra.mxu0 %v5976
    %6875 = vmatprep.subr.bf16.mxu0 %v5975
    %6876 = vmatpush1.bf16.msra.mxu0 %v5974
    %6877 = vmatprep.subr.bf16.mxu0 %v5973
    %6878 = vmatpush1.bf16.msra.mxu0 %v5972
    %6879 = vmatprep.subr.bf16.mxu0 %v5971
    %6880 = vmatpush1.bf16.msra.mxu0 %v5970
    %6881 = vmatprep.subr.bf16.mxu0 %v5969
    %6882 = vmatpush1.bf16.msra.mxu0 %v5968
    %6883 = vmatprep.subr.bf16.mxu0 %v5999
    %6884 = vmatpush2.bf16.msra.mxu0 %v5998
    %6885 = vmatprep.subr.bf16.mxu0 %v5997
    %6886 = vmatpush2.bf16.msra.mxu0 %v5996
    %6887 = vmatprep.subr.bf16.mxu0 %v5995
    %6888 = vmatpush2.bf16.msra.mxu0 %v5994
    %6889 = vmatprep.subr.bf16.mxu0 %v5993
    %6890 = vmatpush2.bf16.msra.mxu0 %v5992
    %6891 = vmatprep.subr.bf16.mxu0 %v5991
    %6892 = vmatpush2.bf16.msra.mxu0 %v5990
    %6893 = vmatprep.subr.bf16.mxu0 %v5989
    %6894 = vmatpush2.bf16.msra.mxu0 %v5988
    %6895 = vmatprep.subr.bf16.mxu0 %v5987
    %6896 = vmatpush2.bf16.msra.mxu0 %v5986
    %6897 = vmatprep.subr.bf16.mxu0 %v5985
    %6898 = vmatpush2.bf16.msra.mxu0 %v5984
    %6899 = vmatprep.mubr.bf16.mxu0 %v4376
    %6900 = vmatmul.mubr.bf16.gmra.mxu0 %v4374
    %v6901 = vpop.f32.mrf.mxu0
    %v6902 = vadd.f32 %v6861, %v6901
    %v6903 = vpop.f32.mrf.mxu0
    %v6904 = vadd.f32 %v6863, %v6903
    %v6905 = vpop.f32.mrf.mxu0
    %v6906 = vpop.f32.mrf.mxu0
    %6907 = vdwg.mxu0
    %6908 = vmatprep.subr.bf16.mxu0 %v6015
    %6909 = vmatpush1.bf16.msra.mxu0 %v6014
    %6910 = vmatprep.subr.bf16.mxu0 %v6013
    %6911 = vmatpush1.bf16.msra.mxu0 %v6012
    %6912 = vmatprep.subr.bf16.mxu0 %v6011
    %6913 = vmatpush1.bf16.msra.mxu0 %v6010
    %6914 = vmatprep.subr.bf16.mxu0 %v6009
    %6915 = vmatpush1.bf16.msra.mxu0 %v6008
    %6916 = vmatprep.subr.bf16.mxu0 %v6007
    %6917 = vmatpush1.bf16.msra.mxu0 %v6006
    %6918 = vmatprep.subr.bf16.mxu0 %v6005
    %6919 = vmatpush1.bf16.msra.mxu0 %v6004
    %6920 = vmatprep.subr.bf16.mxu0 %v6003
    %6921 = vmatpush1.bf16.msra.mxu0 %v6002
    %6922 = vmatprep.subr.bf16.mxu0 %v6001
    %6923 = vmatpush1.bf16.msra.mxu0 %v6000
    %6924 = vmatprep.subr.bf16.mxu0 0
    %6925 = vmatpush2.bf16.msra.mxu0 0
    %6926 = vmatprep.subr.bf16.mxu0 0
    %6927 = vmatpush2.bf16.msra.mxu0 0
    %6928 = vmatprep.subr.bf16.mxu0 0
    %6929 = vmatpush2.bf16.msra.mxu0 0
    %6930 = vmatprep.subr.bf16.mxu0 0
    %6931 = vmatpush2.bf16.msra.mxu0 0
    %6932 = vmatprep.subr.bf16.mxu0 0
    %6933 = vmatpush2.bf16.msra.mxu0 0
    %6934 = vmatprep.subr.bf16.mxu0 0
    %6935 = vmatpush2.bf16.msra.mxu0 0
    %6936 = vmatprep.subr.bf16.mxu0 0
    %6937 = vmatpush2.bf16.msra.mxu0 0
    %6938 = vmatprep.subr.bf16.mxu0 0
    %6939 = vmatpush2.bf16.msra.mxu0 0
    %6940 = vmatprep.mubr.bf16.mxu0 0
    %6941 = vmatmul.mubr.bf16.gmra.mxu0 %v4390
    %v6942 = vpop.f32.mrf.mxu0
    %v6943 = vadd.f32 %v6902, %v6942
    %v6944 = vpop.f32.mrf.mxu0
    %v6945 = vadd.f32 %v6904, %v6944
    %v6946 = vpop.f32.mrf.mxu0
    %v6947 = vpop.f32.mrf.mxu0
    %6948 = vdwg.mxu0
    %v6949 = vmax.f32 %v6943, 0.0
    %v6950 = vmax.f32 %v6945, 0.0
    %v6951 = vpack.c.bf16 %v6949, %v6949
    %v6952 = vpack.c.bf16 %v6950, %v6950
    %v6953 = vld [vmem:[%s7] sm:$0xf]
    %v6954 = vld [vmem:[%s7 + $0x4] sm:$0xf]
    %v6955 = vld [vmem:[%s7 + $0x8] sm:$0xf]
    %v6956 = vld [vmem:[%s7 + $0xc] sm:$0xf]
    %v6957 = vld [vmem:[%s7 + $0x10] sm:$0xf]
    %v6958 = vld [vmem:[%s7 + $0x14] sm:$0xf]
    %v6959 = vld [vmem:[%s7 + $0x18] sm:$0xf]
    %v6960 = vld [vmem:[%s7 + $0x1c] sm:$0xf]
    %v6961 = vld [vmem:[%s7 + $0x20] sm:$0xf]
    %v6962 = vld [vmem:[%s7 + $0x24] sm:$0xf]
    %v6963 = vld [vmem:[%s7 + $0x28] sm:$0xf]
    %v6964 = vld [vmem:[%s7 + $0x2c] sm:$0xf]
    %v6965 = vld [vmem:[%s7 + $0x30] sm:$0xf]
    %v6966 = vld [vmem:[%s7 + $0x34] sm:$0xf]
    %v6967 = vld [vmem:[%s7 + $0x38] sm:$0xf]
    %v6968 = vld [vmem:[%s7 + $0x3c] sm:$0xf]
    %v6969 = vld [vmem:[%s7 + $0x40] sm:$0xf]
    %v6970 = vld [vmem:[%s7 + $0x44] sm:$0xf]
    %v6971 = vld [vmem:[%s7 + $0x48] sm:$0xf]
    %v6972 = vld [vmem:[%s7 + $0x4c] sm:$0xf]
    %v6973 = vld [vmem:[%s7 + $0x50] sm:$0xf]
    %v6974 = vld [vmem:[%s7 + $0x54] sm:$0xf]
    %v6975 = vld [vmem:[%s7 + $0x58] sm:$0xf]
    %v6976 = vld [vmem:[%s7 + $0x5c] sm:$0xf]
    %v6977 = vld [vmem:[%s7 + $0x60] sm:$0xf]
    %v6978 = vld [vmem:[%s7 + $0x64] sm:$0xf]
    %v6979 = vld [vmem:[%s7 + $0x68] sm:$0xf]
    %v6980 = vld [vmem:[%s7 + $0x6c] sm:$0xf]
    %v6981 = vld [vmem:[%s7 + $0x70] sm:$0xf]
    %v6982 = vld [vmem:[%s7 + $0x74] sm:$0xf]
    %v6983 = vld [vmem:[%s7 + $0x78] sm:$0xf]
    %v6984 = vld [vmem:[%s7 + $0x7c] sm:$0xf]
    %v6985 = vld [vmem:[%s8] sm:$0x1]
    %v6987 = vlaneseq
    %v6988 = vshrl.u32 %v6987, 7
    %v6989 = vsub.s32 0, %v6988
    %v6990 = vrot.slane %v6985, %v6989
    %v7024 = vunpack.c.l.b16 %v6953
    %v7025 = vunpack.c.l.b16 %v6954
    %v7026 = vunpack.c.l.b16 %v6955
    %v7027 = vunpack.c.l.b16 %v6956
    %v7028 = vunpack.c.l.b16 %v6957
    %v7029 = vunpack.c.l.b16 %v6958
    %v7030 = vunpack.c.l.b16 %v6959
    %v7031 = vunpack.c.l.b16 %v6960
    %v7032 = vunpack.c.l.b16 %v6961
    %v7033 = vunpack.c.l.b16 %v6962
    %v7034 = vunpack.c.l.b16 %v6963
    %v7035 = vunpack.c.l.b16 %v6964
    %v7036 = vunpack.c.l.b16 %v6965
    %v7037 = vunpack.c.l.b16 %v6966
    %v7038 = vunpack.c.l.b16 %v6967
    %v7039 = vunpack.c.l.b16 %v6968
    %v7040 = vunpack.c.l.b16 %v6969
    %v7041 = vunpack.c.l.b16 %v6970
    %v7042 = vunpack.c.l.b16 %v6971
    %v7043 = vunpack.c.l.b16 %v6972
    %v7044 = vunpack.c.l.b16 %v6973
    %v7045 = vunpack.c.l.b16 %v6974
    %v7046 = vunpack.c.l.b16 %v6975
    %v7047 = vunpack.c.l.b16 %v6976
    %v7048 = vunpack.c.l.b16 %v6977
    %v7049 = vunpack.c.l.b16 %v6978
    %v7050 = vunpack.c.l.b16 %v6979
    %v7051 = vunpack.c.l.b16 %v6980
    %v7052 = vunpack.c.l.b16 %v6981
    %v7053 = vunpack.c.l.b16 %v6982
    %v7054 = vunpack.c.l.b16 %v6983
    %v7055 = vunpack.c.l.b16 %v6984
    %v7056 = vpack.c.b16 %v7025, %v7024
    %v7057 = vpack.c.b16 %v7027, %v7026
    %v7058 = vpack.c.b16 %v7029, %v7028
    %v7059 = vpack.c.b16 %v7031, %v7030
    %v7060 = vpack.c.b16 %v7033, %v7032
    %v7061 = vpack.c.b16 %v7035, %v7034
    %v7062 = vpack.c.b16 %v7037, %v7036
    %v7063 = vpack.c.b16 %v7039, %v7038
    %v7064 = vpack.c.b16 %v7041, %v7040
    %v7065 = vpack.c.b16 %v7043, %v7042
    %v7066 = vpack.c.b16 %v7045, %v7044
    %v7067 = vpack.c.b16 %v7047, %v7046
    %v7068 = vpack.c.b16 %v7049, %v7048
    %v7069 = vpack.c.b16 %v7051, %v7050
    %v7070 = vpack.c.b16 %v7053, %v7052
    %v7071 = vpack.c.b16 %v7055, %v7054
    %7088 = vmatprep.subr.bf16.mxu0 0
    %7089 = vmatpush1.bf16.msra.mxu0 %v7063
    %7090 = vmatprep.subr.bf16.mxu0 0
    %7091 = vmatpush1.bf16.msra.mxu0 %v7062
    %7092 = vmatprep.subr.bf16.mxu0 0
    %7093 = vmatpush1.bf16.msra.mxu0 %v7061
    %7094 = vmatprep.subr.bf16.mxu0 0
    %7095 = vmatpush1.bf16.msra.mxu0 %v7060
    %7096 = vmatprep.subr.bf16.mxu0 0
    %7097 = vmatpush1.bf16.msra.mxu0 %v7059
    %7098 = vmatprep.subr.bf16.mxu0 0
    %7099 = vmatpush1.bf16.msra.mxu0 %v7058
    %7100 = vmatprep.subr.bf16.mxu0 0
    %7101 = vmatpush1.bf16.msra.mxu0 %v7057
    %7102 = vmatprep.subr.bf16.mxu0 0
    %7103 = vmatpush1.bf16.msra.mxu0 %v7056
    %7104 = vmatprep.subr.bf16.mxu0 0
    %7105 = vmatpush2.bf16.msra.mxu0 %v7071
    %7106 = vmatprep.subr.bf16.mxu0 0
    %7107 = vmatpush2.bf16.msra.mxu0 %v7070
    %7108 = vmatprep.subr.bf16.mxu0 0
    %7109 = vmatpush2.bf16.msra.mxu0 %v7069
    %7110 = vmatprep.subr.bf16.mxu0 0
    %7111 = vmatpush2.bf16.msra.mxu0 %v7068
    %7112 = vmatprep.subr.bf16.mxu0 0
    %7113 = vmatpush2.bf16.msra.mxu0 %v7067
    %7114 = vmatprep.subr.bf16.mxu0 0
    %7115 = vmatpush2.bf16.msra.mxu0 %v7066
    %7116 = vmatprep.subr.bf16.mxu0 0
    %7117 = vmatpush2.bf16.msra.mxu0 %v7065
    %7118 = vmatprep.subr.bf16.mxu0 0
    %7119 = vmatpush2.bf16.msra.mxu0 %v7064
    %7120 = vmatprep.mubr.bf16.mxu0 %v6952
    %7121 = vmatmul.mubr.bf16.gmra.mxu0 %v6951
    %v7122 = vpop.f32.mrf.mxu0
    %v7123 = vadd.f32 %v6990, %v7122
    %v7124 = vpop.f32.mrf.mxu0
    %v7125 = vpop.f32.mrf.mxu0
    %v7126 = vpop.f32.mrf.mxu0
    %7127 = vdwg.mxu0
    %7128 = vst [vmem:[#allocation6] sm:$0x3] %v7123
    // Predicated region
    $region38: #{dqn_forward.1} parent=1 // pred_check
      _
    $region39: #{dqn_forward.1} parent=1 // pred_check_branch
      %7130 = sbr.rel (0) target = $region41
    $region40: #{dqn_forward.1} parent=1 // pred_region
      %s7132 = ssub.s32 32, 32
      %7133 = vsyncadd [#allocation7], %s7132
      %s7135 = sshll.u32 [#allocation6], 4
      %s7136 = int_to_ptr.vmem [resolvable:$true] %s7135
      %7138 = dma.vmem_to_hbm [thread:$0]  %s7136, 32, %s9, [#allocation7]
    $region41: #{dqn_forward.1} parent=1 // pred_fallthru
      _
    // Predicated region
    $region42: #{dqn_forward.1} parent=1 // pred_check
      _
    $region43: #{dqn_forward.1} parent=1 // pred_check_branch
      %7140 = sbr.rel (0) target = $region45
    $region44: #{dqn_forward.1} parent=1 // pred_region
      %7141 = dma.done [#allocation7], 32
    $region45: #{dqn_forward.1} parent=1 // pred_fallthru
      _
    %7142 = vsyncpa [#allocation7], 1

</llo_original>
